<compile_context>
chip_gen: v7x
topology: tpu7x:2x2x1
jax: 0.10.0
libtpu: 0.0.40
codegen_flags: <defaults>
</compile_context>

<pallas_src>
import functools
import math

import jax
import jax.numpy as jnp
from jax import lax
from jax.experimental import pallas as pl
from jax.experimental.pallas import tpu as pltpu


def _layernorm(v, g, b, eps=1e-5):
    mu = jnp.mean(v, axis=-1, keepdims=True)
    var = jnp.mean(jnp.square(v - mu), axis=-1, keepdims=True)
    return (v - mu) * lax.rsqrt(var + eps) * g + b


def fatigue_kernel(x_ref, conv_w_ref, conv_b_ref, ln1_g_ref, ln1_b_ref,
                   wih_ref, whh_ref, bih_ref, bhh_ref,
                   ln2_g_ref, ln2_b_ref, pool_ref, cls_w_ref, cls_b_ref,
                   out_ref,
                   seq_ref, gates_ref,
                   *, bs, chunk_steps):
    TB, H = seq_ref.shape            # TB = T * bs (time-major, batch-flat rows)
    H2 = 2 * H
    num_layers = wih_ref.shape[0]
    t_len = TB // bs
    chunk_rows = chunk_steps * bs    # sublane-aligned store granularity
    n_chunks = t_len // chunk_steps

    # ---- Conv1d(F -> H, k=3, stride=1, pad=1) as ONE fused matmul + ReLU, then LN1 ----
    conv = (jnp.dot(x_ref[0], conv_w_ref[...], preferred_element_type=jnp.float32)
            + conv_b_ref[...])
    seq_ref[...] = _layernorm(jnp.maximum(conv, 0.0), ln1_g_ref[...], ln1_b_ref[...])
    # TODO(synk): nn.Dropout layers are inference no-ops; not implemented.

    # ---- Multi-layer GRU (batch_first, PyTorch gate order r|z|n, fused 3H weights) ----
    for l in range(num_layers):
        # Input-side gates for the whole sequence: one (TB, H) @ (H, 3H) MXU matmul.
        gates_ref[...] = (jnp.dot(seq_ref[...], wih_ref[l],
                                  preferred_element_type=jnp.float32) + bih_ref[l])
        wh = whh_ref[l]              # (H, 3H) fused recurrent weight, load once per layer
        bh = bhh_ref[l]              # (1, 3H)

        def chunk_body(c, h, wh=wh, bh=bh):
            row0 = pl.multiple_of(c * chunk_rows, chunk_rows)
            gx_chunk = gates_ref[pl.ds(row0, chunk_rows), :]   # one aligned chunk load
            outs = []
            for j in range(chunk_steps):                       # unrolled recurrence steps
                gx = gx_chunk[j * bs:(j + 1) * bs, :]          # (bs, 3H) vreg slice
                gh = jnp.dot(h, wh, preferred_element_type=jnp.float32) + bh
                rz = jax.nn.sigmoid(gx[:, :H2] + gh[:, :H2])   # r|z in one EUP pass
                r, z = rz[:, :H], rz[:, H:]
                n = jnp.tanh(gx[:, H2:] + r * gh[:, H2:])
                h = (1.0 - z) * n + z * h
                outs.append(h)
            # one unmasked, sublane-aligned store per chunk
            seq_ref[pl.ds(row0, chunk_rows), :] = jnp.concatenate(outs, axis=0)
            return h

        lax.fori_loop(0, n_chunks, chunk_body,
                      jnp.zeros((bs, H), jnp.float32), unroll=True)

    # ---- LayerNorm 2 + AdaptiveAvgPool1d (block-diag pool matmul) + classifier ----
    h_seq = _layernorm(seq_ref[...], ln2_g_ref[...], ln2_b_ref[...])
    pooled = jnp.dot(pool_ref[...], h_seq, preferred_element_type=jnp.float32)  # (bs*seq_len, H)
    logits = (jnp.dot(pooled, cls_w_ref[...], preferred_element_type=jnp.float32)
              + cls_b_ref[...])                                                 # (bs*seq_len, 128)
    out_ref[...] = logits[None].astype(out_ref.dtype)


def adaptive_pool_matrix(t_in, t_out):
    """Matrix P (t_out, t_in) reproducing torch.nn.AdaptiveAvgPool1d."""
    rows = []
    for i in range(t_out):
        start = (i * t_in) // t_out
        end = -((-(i + 1) * t_in) // t_out)          # ceil((i+1)*t_in/t_out)
        row = [0.0] * t_in
        for t in range(start, end):
            row[t] = 1.0 / (end - start)
        rows.append(row)
    return jnp.array(rows, dtype=jnp.float32)


def init_params(key, feature_length, d_model, num_layers, num_cls, t_in, seq_len):
    F, H, L, C = feature_length, d_model, num_layers, num_cls
    keys = iter(jax.random.split(key, 4 + 4 * L))

    def u(k, shape, fan_in):
        bound = 1.0 / float(fan_in) ** 0.5
        return jax.random.uniform(k, shape, jnp.float32, -bound, bound)

    # PyTorch native layouts
    conv_w_t = u(next(keys), (H, F, 3), F * 3)       # Conv1d.weight (out, in, k)
    conv_b_t = u(next(keys), (H,), F * 3)
    w_ih, w_hh, b_ih, b_hh = [], [], [], []
    for _ in range(L):
        w_ih.append(u(next(keys), (3 * H, H), H))    # (r|z|n, in)
        w_hh.append(u(next(keys), (3 * H, H), H))
        b_ih.append(u(next(keys), (3 * H,), H))
        b_hh.append(u(next(keys), (3 * H,), H))
    cls_w_t = u(next(keys), (C, H), H)               # Linear.weight (out, in)
    cls_b_t = u(next(keys), (C,), H)

    # Re-arranged / fused for the kernel ("input on rows, fused gates on lanes")
    params = {
        "conv_w": jnp.transpose(conv_w_t, (2, 1, 0)).reshape(3 * F, H),  # (3F, H), row = k*F + f
        "conv_b": conv_b_t[None, :],                                     # (1, H)
        "ln1_g": jnp.ones((1, H), jnp.float32),
        "ln1_b": jnp.zeros((1, H), jnp.float32),
        "gru_wih": jnp.stack([w.T for w in w_ih]),                       # (L, H, 3H), cols r|z|n
        "gru_whh": jnp.stack([w.T for w in w_hh]),                       # (L, H, 3H)
        "gru_bih": jnp.stack([b[None, :] for b in b_ih]),                # (L, 1, 3H)
        "gru_bhh": jnp.stack([b[None, :] for b in b_hh]),                # (L, 1, 3H)
        "ln2_g": jnp.ones((1, H), jnp.float32),
        "ln2_b": jnp.zeros((1, H), jnp.float32),
        "pool_mat": adaptive_pool_matrix(t_in, seq_len),                 # (seq_len, T)
        "cls_w": cls_w_t.T,                                              # (H, C)
        "cls_b": cls_b_t[None, :],                                       # (1, C)
    }
    return params


def _full_spec(arr):
    nd = arr.ndim
    return pl.BlockSpec(arr.shape, lambda s, nd=nd: (0,) * nd)


@functools.partial(jax.jit, static_argnames=("seq_len", "num_shards"))
def fatigue_forward(x, params, seq_len, num_shards=2):
    B, T, F = x.shape
    H = params["conv_b"].shape[1]
    C = params["cls_w"].shape[1]
    F3 = 3 * F

    ns = max(1, math.gcd(B, max(1, num_shards)))     # grid shards (2 -> both v7x TCs)
    bs = B // ns                                     # sequences batched per grid step

    # chunk the time loop so each chunk stores >= 8 sublane-aligned rows
    chunk_steps = max(1, 8 // bs) if bs <= 8 else 1
    while T % chunk_steps != 0:
        chunk_steps -= 1

    C_PAD = max(128, ((C + 127) // 128) * 128)       # lane-dense classifier output

    # ---- wrapper-side layout plumbing (tiny tensors, pure XLA) ----
    # conv input slab: row = t*bs + b per shard, lanes = [k=0|k=1|k=2] features
    x_pad = jnp.pad(x, ((0, 0), (1, 1), (0, 0)))                                   # (B, T+2, F)
    slab = jnp.concatenate([x_pad[:, 0:T], x_pad[:, 1:T + 1], x_pad[:, 2:T + 2]],
                           axis=-1)                                                # (B, T, 3F)
    slab = slab.reshape(ns, bs, T, F3).transpose(0, 2, 1, 3).reshape(ns, T * bs, F3)

    # block-structured pool matrix matching the interleaved (t*bs + b) row layout
    pool = params["pool_mat"]                                                      # (seq_len, T)
    pool_blk = jnp.einsum("it,bc->bitc", pool, jnp.eye(bs, dtype=pool.dtype))
    pool_blk = pool_blk.reshape(bs * seq_len, T * bs)

    cls_w = jnp.pad(params["cls_w"], ((0, 0), (0, C_PAD - C)))
    cls_b = jnp.pad(params["cls_b"], ((0, 0), (0, C_PAD - C)))

    param_args = [params["conv_w"], params["conv_b"], params["ln1_g"], params["ln1_b"],
                  params["gru_wih"], params["gru_whh"], params["gru_bih"], params["gru_bhh"],
                  params["ln2_g"], params["ln2_b"], pool_blk, cls_w, cls_b]

    kernel = functools.partial(fatigue_kernel, bs=bs, chunk_steps=chunk_steps)

    grid_spec = pltpu.PrefetchScalarGridSpec(
        num_scalar_prefetch=0,
        grid=(ns,),
        in_specs=[pl.BlockSpec((1, T * bs, F3), lambda s: (s, 0, 0))]
                 + [_full_spec(a) for a in param_args],
        out_specs=pl.BlockSpec((1, bs * seq_len, C_PAD), lambda s: (s, 0, 0)),
        scratch_shapes=[pltpu.VMEM((T * bs, H), jnp.float32),       # sequence buffer
                        pltpu.VMEM((T * bs, 3 * H), jnp.float32)],  # fused input-side gates
    )
    out = pl.pallas_call(
        kernel,
        out_shape=jax.ShapeDtypeStruct((ns, bs * seq_len, C_PAD), jnp.float32),
        grid_spec=grid_spec,
        compiler_params=pltpu.CompilerParams(dimension_semantics=("parallel",)),
    )(slab, *param_args)

    out = out.reshape(ns, bs, seq_len, C_PAD).reshape(B, seq_len, C_PAD)
    return out[..., :C]


def reference_forward(x, params, seq_len):
    """Pure-JAX mirror of the same math (for validation)."""
    B, T, F = x.shape
    H = params["conv_b"].shape[1]
    L = params["gru_wih"].shape[0]
    xp = jnp.pad(x, ((0, 0), (1, 1), (0, 0)))
    slab = jnp.concatenate([xp[:, 0:T], xp[:, 1:T + 1], xp[:, 2:T + 2]], axis=-1)  # (B,T,3F)
    conv = jnp.maximum(slab @ params["conv_w"] + params["conv_b"], 0.0)
    h = _layernorm(conv, params["ln1_g"], params["ln1_b"])
    for l in range(L):
        wih = params["gru_wih"][l]; whh = params["gru_whh"][l]
        bih = params["gru_bih"][l]; bhh = params["gru_bhh"][l]

        def cell(hprev, xt):
            gx = xt @ wih + bih
            gh = hprev @ whh + bhh
            r = jax.nn.sigmoid(gx[:, :H] + gh[:, :H])
            z = jax.nn.sigmoid(gx[:, H:2 * H] + gh[:, H:2 * H])
            n = jnp.tanh(gx[:, 2 * H:] + r * gh[:, 2 * H:])
            hn = (1.0 - z) * n + z * hprev
            return hn, hn

        _, ys = lax.scan(cell, jnp.zeros((B, H), jnp.float32), jnp.swapaxes(h, 0, 1))
        h = jnp.swapaxes(ys, 0, 1)
    h = _layernorm(h, params["ln2_g"], params["ln2_b"])
    pooled = jnp.einsum("lt,bth->blh", params["pool_mat"], h)
    return pooled @ params["cls_w"] + params["cls_b"]


if __name__ == "__main__":
    # Shapes consistent with the module: d_model=32, num_layers=2, feature_length=7,
    # num_cls=5, seq_len=10, input time length T=20; B=4 so each of the 2 grid
    # shards batches 2 sequences through the recurrence.
    B, T, F = 4, 20, 7
    D_MODEL, NUM_LAYERS, NUM_CLS, SEQ_LEN = 32, 2, 5, 10

    key = jax.random.PRNGKey(0)
    kx, kp = jax.random.split(key)
    x = jax.random.normal(kx, (B, T, F), jnp.float32)
    params = init_params(kp, F, D_MODEL, NUM_LAYERS, NUM_CLS, T, SEQ_LEN)

    out = fatigue_forward(x, params, SEQ_LEN)
    out = jax.block_until_ready(out)

    ref = jax.block_until_ready(reference_forward(x, params, SEQ_LEN))
    assert out.shape == (B, SEQ_LEN, NUM_CLS), out.shape
    max_err = float(jnp.max(jnp.abs(out - ref)))
    assert max_err < 5e-3, f"mismatch vs reference: {max_err}"

    print("KERNEL_OK")
</pallas_src>

<mosaic_0001>
module attributes {stable_mosaic.version = 11 : i64} {
  func.func @fatigue_kernel(%arg0: i32, %arg1: memref<1x40x21xf32, #tpu.memory_space<vmem>>, %arg2: memref<21x32xf32, #tpu.memory_space<vmem>>, %arg3: memref<1x32xf32, #tpu.memory_space<vmem>>, %arg4: memref<1x32xf32, #tpu.memory_space<vmem>>, %arg5: memref<1x32xf32, #tpu.memory_space<vmem>>, %arg6: memref<2x32x96xf32, #tpu.memory_space<vmem>>, %arg7: memref<2x32x96xf32, #tpu.memory_space<vmem>>, %arg8: memref<2x1x96xf32, #tpu.memory_space<vmem>>, %arg9: memref<2x1x96xf32, #tpu.memory_space<vmem>>, %arg10: memref<1x32xf32, #tpu.memory_space<vmem>>, %arg11: memref<1x32xf32, #tpu.memory_space<vmem>>, %arg12: memref<20x40xf32, #tpu.memory_space<vmem>>, %arg13: memref<32x128xf32, #tpu.memory_space<vmem>>, %arg14: memref<1x128xf32, #tpu.memory_space<vmem>>, %arg15: memref<1x20x128xf32, #tpu.memory_space<vmem>>, %arg16: memref<40x32xf32, #tpu.memory_space<vmem>>, %arg17: memref<40x96xf32, #tpu.memory_space<vmem>>) attributes {dimension_semantics = [#tpu.dimension_semantics<parallel>], iteration_bounds = array<i64: 2>, scalar_prefetch = 0 : i64, scratch_operands = 2 : i64, tpu.core_type = #tpu.core_type<tc>, window_params = [{transform_indices = @transform_0, window_bounds = array<i64: 1, 40, 21>}, {pipeline_mode = #tpu.pipeline_mode<synchronous>, transform_indices = @transform_1, window_bounds = array<i64: 21, 32>}, {pipeline_mode = #tpu.pipeline_mode<synchronous>, transform_indices = @transform_2, window_bounds = array<i64: 1, 32>}, {pipeline_mode = #tpu.pipeline_mode<synchronous>, transform_indices = @transform_3, window_bounds = array<i64: 1, 32>}, {pipeline_mode = #tpu.pipeline_mode<synchronous>, transform_indices = @transform_4, window_bounds = array<i64: 1, 32>}, {pipeline_mode = #tpu.pipeline_mode<synchronous>, transform_indices = @transform_5, window_bounds = array<i64: 2, 32, 96>}, {pipeline_mode = #tpu.pipeline_mode<synchronous>, transform_indices = @transform_6, window_bounds = array<i64: 2, 32, 96>}, {pipeline_mode = #tpu.pipeline_mode<synchronous>, transform_indices = @transform_7, window_bounds = array<i64: 2, 1, 96>}, {pipeline_mode = #tpu.pipeline_mode<synchronous>, transform_indices = @transform_8, window_bounds = array<i64: 2, 1, 96>}, {pipeline_mode = #tpu.pipeline_mode<synchronous>, transform_indices = @transform_9, window_bounds = array<i64: 1, 32>}, {pipeline_mode = #tpu.pipeline_mode<synchronous>, transform_indices = @transform_10, window_bounds = array<i64: 1, 32>}, {pipeline_mode = #tpu.pipeline_mode<synchronous>, transform_indices = @transform_11, window_bounds = array<i64: 20, 40>}, {pipeline_mode = #tpu.pipeline_mode<synchronous>, transform_indices = @transform_12, window_bounds = array<i64: 32, 128>}, {pipeline_mode = #tpu.pipeline_mode<synchronous>, transform_indices = @transform_13, window_bounds = array<i64: 1, 128>}, {transform_indices = @transform_14, window_bounds = array<i64: 1, 20, 128>}]} {
    %c0 = arith.constant 0 : index
    %c0_0 = arith.constant 0 : index
    %c0_1 = arith.constant 0 : index
    %0 = vector.load %arg1[%c0, %c0_0, %c0_1] : memref<1x40x21xf32, #tpu.memory_space<vmem>>, vector<1x40x21xf32>
    %1 = vector.shape_cast %0 : vector<1x40x21xf32> to vector<40x21xf32>
    %c0_2 = arith.constant 0 : index
    %c0_3 = arith.constant 0 : index
    %2 = vector.load %arg2[%c0_2, %c0_3] : memref<21x32xf32, #tpu.memory_space<vmem>>, vector<21x32xf32>
    %cst = arith.constant dense<0.000000e+00> : vector<40x32xf32>
    %3 = tpu.matmul %1, %2, %cst {dimension_numbers = #tpu.dot_dimension_numbers<[1], [0], [0], [1], [0, 0, 1, 1], [], []>} : vector<40x21xf32>, vector<21x32xf32>, vector<40x32xf32> -> vector<40x32xf32>
    %c0_4 = arith.constant 0 : index
    %c0_5 = arith.constant 0 : index
    %4 = vector.load %arg3[%c0_4, %c0_5] : memref<1x32xf32, #tpu.memory_space<vmem>>, vector<1x32xf32>
    %5 = vector.broadcast %4 : vector<1x32xf32> to vector<40x32xf32>
    %6 = arith.addf %3, %5 : vector<40x32xf32>
    %cst_6 = arith.constant 0.000000e+00 : f32
    %7 = vector.broadcast %cst_6 : f32 to vector<40x32xf32>
    %8 = arith.maximumf %6, %7 : vector<40x32xf32>
    %c0_7 = arith.constant 0 : index
    %c0_8 = arith.constant 0 : index
    %9 = vector.load %arg4[%c0_7, %c0_8] : memref<1x32xf32, #tpu.memory_space<vmem>>, vector<1x32xf32>
    %c0_9 = arith.constant 0 : index
    %c0_10 = arith.constant 0 : index
    %10 = vector.load %arg5[%c0_9, %c0_10] : memref<1x32xf32, #tpu.memory_space<vmem>>, vector<1x32xf32>
    %cst_11 = arith.constant dense<0.000000e+00> : vector<40xf32>
    %11 = vector.multi_reduction <add>, %8, %cst_11 [1] : vector<40x32xf32> to vector<40xf32>
    %12 = vector.shape_cast %11 : vector<40xf32> to vector<40x1xf32>
    %cst_12 = arith.constant 3.200000e+01 : f32
    %13 = vector.broadcast %cst_12 : f32 to vector<40x1xf32>
    %14 = arith.divf %12, %13 : vector<40x1xf32>
    %15 = vector.broadcast %14 : vector<40x1xf32> to vector<40x32xf32>
    %16 = arith.subf %8, %15 : vector<40x32xf32>
    %17 = arith.mulf %16, %16 : vector<40x32xf32>
    %cst_13 = arith.constant dense<0.000000e+00> : vector<40xf32>
    %18 = vector.multi_reduction <add>, %17, %cst_13 [1] : vector<40x32xf32> to vector<40xf32>
    %19 = vector.shape_cast %18 : vector<40xf32> to vector<40x1xf32>
    %cst_14 = arith.constant 3.200000e+01 : f32
    %20 = vector.broadcast %cst_14 : f32 to vector<40x1xf32>
    %21 = arith.divf %19, %20 : vector<40x1xf32>
    %22 = vector.broadcast %14 : vector<40x1xf32> to vector<40x32xf32>
    %23 = arith.subf %8, %22 : vector<40x32xf32>
    %cst_15 = arith.constant 9.99999974E-6 : f32
    %24 = vector.broadcast %cst_15 : f32 to vector<40x1xf32>
    %25 = arith.addf %21, %24 : vector<40x1xf32>
    %26 = math.rsqrt %25 : vector<40x1xf32>
    %27 = vector.broadcast %26 : vector<40x1xf32> to vector<40x32xf32>
    %28 = arith.mulf %23, %27 : vector<40x32xf32>
    %29 = vector.broadcast %9 : vector<1x32xf32> to vector<40x32xf32>
    %30 = arith.mulf %28, %29 : vector<40x32xf32>
    %31 = vector.broadcast %10 : vector<1x32xf32> to vector<40x32xf32>
    %32 = arith.addf %30, %31 : vector<40x32xf32>
    %c0_16 = arith.constant 0 : index
    %c0_17 = arith.constant 0 : index
    %33 = vector.load %arg16[%c0_16, %c0_17] : memref<40x32xf32, #tpu.memory_space<vmem>>, vector<40x32xf32>
    tpu.vector_store %arg16[%c0_16, %c0_17], %32 {strides = array<i32>} : memref<40x32xf32, #tpu.memory_space<vmem>>, vector<40x32xf32>,
    %c0_18 = arith.constant 0 : index
    %c0_19 = arith.constant 0 : index
    %34 = vector.load %arg16[%c0_18, %c0_19] : memref<40x32xf32, #tpu.memory_space<vmem>>, vector<40x32xf32>
    %c0_20 = arith.constant 0 : index
    %c0_21 = arith.constant 0 : index
    %c0_22 = arith.constant 0 : index
    %35 = vector.load %arg6[%c0_20, %c0_21, %c0_22] : memref<2x32x96xf32, #tpu.memory_space<vmem>>, vector<1x32x96xf32>
    %36 = vector.shape_cast %35 : vector<1x32x96xf32> to vector<32x96xf32>
    %cst_23 = arith.constant dense<0.000000e+00> : vector<40x96xf32>
    %37 = tpu.matmul %34, %36, %cst_23 {dimension_numbers = #tpu.dot_dimension_numbers<[1], [0], [0], [1], [0, 0, 1, 1], [], []>} : vector<40x32xf32>, vector<32x96xf32>, vector<40x96xf32> -> vector<40x96xf32>
    %c0_24 = arith.constant 0 : index
    %c0_25 = arith.constant 0 : index
    %c0_26 = arith.constant 0 : index
    %38 = vector.load %arg8[%c0_24, %c0_25, %c0_26] : memref<2x1x96xf32, #tpu.memory_space<vmem>>, vector<1x1x96xf32>
    %39 = vector.shape_cast %38 : vector<1x1x96xf32> to vector<1x96xf32>
    %40 = vector.broadcast %39 : vector<1x96xf32> to vector<40x96xf32>
    %41 = arith.addf %37, %40 : vector<40x96xf32>
    %c0_27 = arith.constant 0 : index
    %c0_28 = arith.constant 0 : index
    %42 = vector.load %arg17[%c0_27, %c0_28] : memref<40x96xf32, #tpu.memory_space<vmem>>, vector<40x96xf32>
    tpu.vector_store %arg17[%c0_27, %c0_28], %41 {strides = array<i32>} : memref<40x96xf32, #tpu.memory_space<vmem>>, vector<40x96xf32>,
    %c0_29 = arith.constant 0 : index
    %c0_30 = arith.constant 0 : index
    %c0_31 = arith.constant 0 : index
    %43 = vector.load %arg7[%c0_29, %c0_30, %c0_31] : memref<2x32x96xf32, #tpu.memory_space<vmem>>, vector<1x32x96xf32>
    %44 = vector.shape_cast %43 : vector<1x32x96xf32> to vector<32x96xf32>
    %c0_32 = arith.constant 0 : index
    %c0_33 = arith.constant 0 : index
    %c0_34 = arith.constant 0 : index
    %45 = vector.load %arg9[%c0_32, %c0_33, %c0_34] : memref<2x1x96xf32, #tpu.memory_space<vmem>>, vector<1x1x96xf32>
    %46 = vector.shape_cast %45 : vector<1x1x96xf32> to vector<1x96xf32>
    %cst_35 = arith.constant 0.000000e+00 : f32
    %47 = vector.broadcast %cst_35 : f32 to vector<2x32xf32>
    %c0_i32 = arith.constant 0 : i32
    %c8_i32 = arith.constant 8 : i32
    %48 = arith.muli %c0_i32, %c8_i32 : i32
    %49 = tpu.assume_multiple %48, 8 : i32
    %50 = arith.index_cast %49 : i32 to index
    %c0_36 = arith.constant 0 : index
    %51 = vector.load %arg17[%50, %c0_36] : memref<40x96xf32, #tpu.memory_space<vmem>>, vector<8x96xf32>
    %52 = vector.extract_strided_slice %51 {offsets = [0, 0], sizes = [2, 96], strides = [1, 1]} : vector<8x96xf32> to vector<2x96xf32>
    %cst_37 = arith.constant dense<0.000000e+00> : vector<2x96xf32>
    %53 = tpu.matmul %47, %44, %cst_37 {dimension_numbers = #tpu.dot_dimension_numbers<[1], [0], [0], [1], [0, 0, 1, 1], [], []>} : vector<2x32xf32>, vector<32x96xf32>, vector<2x96xf32> -> vector<2x96xf32>
    %54 = vector.broadcast %46 : vector<1x96xf32> to vector<2x96xf32>
    %55 = arith.addf %53, %54 : vector<2x96xf32>
    %56 = vector.extract_strided_slice %52 {offsets = [0, 0], sizes = [2, 64], strides = [1, 1]} : vector<2x96xf32> to vector<2x64xf32>
    %57 = vector.extract_strided_slice %55 {offsets = [0, 0], sizes = [2, 64], strides = [1, 1]} : vector<2x96xf32> to vector<2x64xf32>
    %58 = arith.addf %56, %57 : vector<2x64xf32>
    %59 = arith.negf %58 : vector<2x64xf32>
    %60 = math.exp %59 : vector<2x64xf32>
    %cst_38 = arith.constant 1.000000e+00 : f32
    %61 = vector.broadcast %cst_38 : f32 to vector<2x64xf32>
    %62 = arith.addf %61, %60 : vector<2x64xf32>
    %63 = arith.divf %61, %62 : vector<2x64xf32>
    %64 = vector.extract_strided_slice %63 {offsets = [0, 0], sizes = [2, 32], strides = [1, 1]} : vector<2x64xf32> to vector<2x32xf32>
    %65 = vector.extract_strided_slice %63 {offsets = [0, 32], sizes = [2, 32], strides = [1, 1]} : vector<2x64xf32> to vector<2x32xf32>
    %66 = vector.extract_strided_slice %52 {offsets = [0, 64], sizes = [2, 32], strides = [1, 1]} : vector<2x96xf32> to vector<2x32xf32>
    %67 = vector.extract_strided_slice %55 {offsets = [0, 64], sizes = [2, 32], strides = [1, 1]} : vector<2x96xf32> to vector<2x32xf32>
    %68 = arith.mulf %64, %67 : vector<2x32xf32>
    %69 = arith.addf %66, %68 : vector<2x32xf32>
    %70 = math.tanh %69 : vector<2x32xf32>
    %cst_39 = arith.constant 1.000000e+00 : f32
    %71 = vector.broadcast %cst_39 : f32 to vector<2x32xf32>
    %72 = arith.subf %71, %65 : vector<2x32xf32>
    %73 = arith.mulf %72, %70 : vector<2x32xf32>
    %74 = arith.mulf %65, %47 : vector<2x32xf32>
    %75 = arith.addf %73, %74 : vector<2x32xf32>
    %76 = vector.extract_strided_slice %51 {offsets = [2, 0], sizes = [2, 96], strides = [1, 1]} : vector<8x96xf32> to vector<2x96xf32>
    %cst_40 = arith.constant dense<0.000000e+00> : vector<2x96xf32>
    %77 = tpu.matmul %75, %44, %cst_40 {dimension_numbers = #tpu.dot_dimension_numbers<[1], [0], [0], [1], [0, 0, 1, 1], [], []>} : vector<2x32xf32>, vector<32x96xf32>, vector<2x96xf32> -> vector<2x96xf32>
    %78 = vector.broadcast %46 : vector<1x96xf32> to vector<2x96xf32>
    %79 = arith.addf %77, %78 : vector<2x96xf32>
    %80 = vector.extract_strided_slice %76 {offsets = [0, 0], sizes = [2, 64], strides = [1, 1]} : vector<2x96xf32> to vector<2x64xf32>
    %81 = vector.extract_strided_slice %79 {offsets = [0, 0], sizes = [2, 64], strides = [1, 1]} : vector<2x96xf32> to vector<2x64xf32>
    %82 = arith.addf %80, %81 : vector<2x64xf32>
    %83 = arith.negf %82 : vector<2x64xf32>
    %84 = math.exp %83 : vector<2x64xf32>
    %cst_41 = arith.constant 1.000000e+00 : f32
    %85 = vector.broadcast %cst_41 : f32 to vector<2x64xf32>
    %86 = arith.addf %85, %84 : vector<2x64xf32>
    %87 = arith.divf %85, %86 : vector<2x64xf32>
    %88 = vector.extract_strided_slice %87 {offsets = [0, 0], sizes = [2, 32], strides = [1, 1]} : vector<2x64xf32> to vector<2x32xf32>
    %89 = vector.extract_strided_slice %87 {offsets = [0, 32], sizes = [2, 32], strides = [1, 1]} : vector<2x64xf32> to vector<2x32xf32>
    %90 = vector.extract_strided_slice %76 {offsets = [0, 64], sizes = [2, 32], strides = [1, 1]} : vector<2x96xf32> to vector<2x32xf32>
    %91 = vector.extract_strided_slice %79 {offsets = [0, 64], sizes = [2, 32], strides = [1, 1]} : vector<2x96xf32> to vector<2x32xf32>
    %92 = arith.mulf %88, %91 : vector<2x32xf32>
    %93 = arith.addf %90, %92 : vector<2x32xf32>
    %94 = math.tanh %93 : vector<2x32xf32>
    %cst_42 = arith.constant 1.000000e+00 : f32
    %95 = vector.broadcast %cst_42 : f32 to vector<2x32xf32>
    %96 = arith.subf %95, %89 : vector<2x32xf32>
    %97 = arith.mulf %96, %94 : vector<2x32xf32>
    %98 = arith.mulf %89, %75 : vector<2x32xf32>
    %99 = arith.addf %97, %98 : vector<2x32xf32>
    %100 = vector.extract_strided_slice %51 {offsets = [4, 0], sizes = [2, 96], strides = [1, 1]} : vector<8x96xf32> to vector<2x96xf32>
    %cst_43 = arith.constant dense<0.000000e+00> : vector<2x96xf32>
    %101 = tpu.matmul %99, %44, %cst_43 {dimension_numbers = #tpu.dot_dimension_numbers<[1], [0], [0], [1], [0, 0, 1, 1], [], []>} : vector<2x32xf32>, vector<32x96xf32>, vector<2x96xf32> -> vector<2x96xf32>
    %102 = vector.broadcast %46 : vector<1x96xf32> to vector<2x96xf32>
    %103 = arith.addf %101, %102 : vector<2x96xf32>
    %104 = vector.extract_strided_slice %100 {offsets = [0, 0], sizes = [2, 64], strides = [1, 1]} : vector<2x96xf32> to vector<2x64xf32>
    %105 = vector.extract_strided_slice %103 {offsets = [0, 0], sizes = [2, 64], strides = [1, 1]} : vector<2x96xf32> to vector<2x64xf32>
    %106 = arith.addf %104, %105 : vector<2x64xf32>
    %107 = arith.negf %106 : vector<2x64xf32>
    %108 = math.exp %107 : vector<2x64xf32>
    %cst_44 = arith.constant 1.000000e+00 : f32
    %109 = vector.broadcast %cst_44 : f32 to vector<2x64xf32>
    %110 = arith.addf %109, %108 : vector<2x64xf32>
    %111 = arith.divf %109, %110 : vector<2x64xf32>
    %112 = vector.extract_strided_slice %111 {offsets = [0, 0], sizes = [2, 32], strides = [1, 1]} : vector<2x64xf32> to vector<2x32xf32>
    %113 = vector.extract_strided_slice %111 {offsets = [0, 32], sizes = [2, 32], strides = [1, 1]} : vector<2x64xf32> to vector<2x32xf32>
    %114 = vector.extract_strided_slice %100 {offsets = [0, 64], sizes = [2, 32], strides = [1, 1]} : vector<2x96xf32> to vector<2x32xf32>
    %115 = vector.extract_strided_slice %103 {offsets = [0, 64], sizes = [2, 32], strides = [1, 1]} : vector<2x96xf32> to vector<2x32xf32>
    %116 = arith.mulf %112, %115 : vector<2x32xf32>
    %117 = arith.addf %114, %116 : vector<2x32xf32>
    %118 = math.tanh %117 : vector<2x32xf32>
    %cst_45 = arith.constant 1.000000e+00 : f32
    %119 = vector.broadcast %cst_45 : f32 to vector<2x32xf32>
    %120 = arith.subf %119, %113 : vector<2x32xf32>
    %121 = arith.mulf %120, %118 : vector<2x32xf32>
    %122 = arith.mulf %113, %99 : vector<2x32xf32>
    %123 = arith.addf %121, %122 : vector<2x32xf32>
    %124 = vector.extract_strided_slice %51 {offsets = [6, 0], sizes = [2, 96], strides = [1, 1]} : vector<8x96xf32> to vector<2x96xf32>
    %cst_46 = arith.constant dense<0.000000e+00> : vector<2x96xf32>
    %125 = tpu.matmul %123, %44, %cst_46 {dimension_numbers = #tpu.dot_dimension_numbers<[1], [0], [0], [1], [0, 0, 1, 1], [], []>} : vector<2x32xf32>, vector<32x96xf32>, vector<2x96xf32> -> vector<2x96xf32>
    %126 = vector.broadcast %46 : vector<1x96xf32> to vector<2x96xf32>
    %127 = arith.addf %125, %126 : vector<2x96xf32>
    %128 = vector.extract_strided_slice %124 {offsets = [0, 0], sizes = [2, 64], strides = [1, 1]} : vector<2x96xf32> to vector<2x64xf32>
    %129 = vector.extract_strided_slice %127 {offsets = [0, 0], sizes = [2, 64], strides = [1, 1]} : vector<2x96xf32> to vector<2x64xf32>
    %130 = arith.addf %128, %129 : vector<2x64xf32>
    %131 = arith.negf %130 : vector<2x64xf32>
    %132 = math.exp %131 : vector<2x64xf32>
    %cst_47 = arith.constant 1.000000e+00 : f32
    %133 = vector.broadcast %cst_47 : f32 to vector<2x64xf32>
    %134 = arith.addf %133, %132 : vector<2x64xf32>
    %135 = arith.divf %133, %134 : vector<2x64xf32>
    %136 = vector.extract_strided_slice %135 {offsets = [0, 0], sizes = [2, 32], strides = [1, 1]} : vector<2x64xf32> to vector<2x32xf32>
    %137 = vector.extract_strided_slice %135 {offsets = [0, 32], sizes = [2, 32], strides = [1, 1]} : vector<2x64xf32> to vector<2x32xf32>
    %138 = vector.extract_strided_slice %124 {offsets = [0, 64], sizes = [2, 32], strides = [1, 1]} : vector<2x96xf32> to vector<2x32xf32>
    %139 = vector.extract_strided_slice %127 {offsets = [0, 64], sizes = [2, 32], strides = [1, 1]} : vector<2x96xf32> to vector<2x32xf32>
    %140 = arith.mulf %136, %139 : vector<2x32xf32>
    %141 = arith.addf %138, %140 : vector<2x32xf32>
    %142 = math.tanh %141 : vector<2x32xf32>
    %cst_48 = arith.constant 1.000000e+00 : f32
    %143 = vector.broadcast %cst_48 : f32 to vector<2x32xf32>
    %144 = arith.subf %143, %137 : vector<2x32xf32>
    %145 = arith.mulf %144, %142 : vector<2x32xf32>
    %146 = arith.mulf %137, %123 : vector<2x32xf32>
    %147 = arith.addf %145, %146 : vector<2x32xf32>
    %148 = tpu.concatenate %75, %99, %123, %147 in 0 : vector<2x32xf32>, vector<2x32xf32>, vector<2x32xf32>, vector<2x32xf32> -> vector<8x32xf32>
    %149 = arith.index_cast %49 : i32 to index
    %c0_49 = arith.constant 0 : index
    %150 = vector.load %arg16[%149, %c0_49] : memref<40x32xf32, #tpu.memory_space<vmem>>, vector<8x32xf32>
    tpu.vector_store %arg16[%149, %c0_49], %148 {strides = array<i32>} : memref<40x32xf32, #tpu.memory_space<vmem>>, vector<8x32xf32>,
    %c1_i32 = arith.constant 1 : i32
    %c8_i32_50 = arith.constant 8 : i32
    %151 = arith.muli %c1_i32, %c8_i32_50 : i32
    %152 = tpu.assume_multiple %151, 8 : i32
    %153 = arith.index_cast %152 : i32 to index
    %c0_51 = arith.constant 0 : index
    %154 = vector.load %arg17[%153, %c0_51] : memref<40x96xf32, #tpu.memory_space<vmem>>, vector<8x96xf32>
    %155 = vector.extract_strided_slice %154 {offsets = [0, 0], sizes = [2, 96], strides = [1, 1]} : vector<8x96xf32> to vector<2x96xf32>
    %cst_52 = arith.constant dense<0.000000e+00> : vector<2x96xf32>
    %156 = tpu.matmul %147, %44, %cst_52 {dimension_numbers = #tpu.dot_dimension_numbers<[1], [0], [0], [1], [0, 0, 1, 1], [], []>} : vector<2x32xf32>, vector<32x96xf32>, vector<2x96xf32> -> vector<2x96xf32>
    %157 = vector.broadcast %46 : vector<1x96xf32> to vector<2x96xf32>
    %158 = arith.addf %156, %157 : vector<2x96xf32>
    %159 = vector.extract_strided_slice %155 {offsets = [0, 0], sizes = [2, 64], strides = [1, 1]} : vector<2x96xf32> to vector<2x64xf32>
    %160 = vector.extract_strided_slice %158 {offsets = [0, 0], sizes = [2, 64], strides = [1, 1]} : vector<2x96xf32> to vector<2x64xf32>
    %161 = arith.addf %159, %160 : vector<2x64xf32>
    %162 = arith.negf %161 : vector<2x64xf32>
    %163 = math.exp %162 : vector<2x64xf32>
    %cst_53 = arith.constant 1.000000e+00 : f32
    %164 = vector.broadcast %cst_53 : f32 to vector<2x64xf32>
    %165 = arith.addf %164, %163 : vector<2x64xf32>
    %166 = arith.divf %164, %165 : vector<2x64xf32>
    %167 = vector.extract_strided_slice %166 {offsets = [0, 0], sizes = [2, 32], strides = [1, 1]} : vector<2x64xf32> to vector<2x32xf32>
    %168 = vector.extract_strided_slice %166 {offsets = [0, 32], sizes = [2, 32], strides = [1, 1]} : vector<2x64xf32> to vector<2x32xf32>
    %169 = vector.extract_strided_slice %155 {offsets = [0, 64], sizes = [2, 32], strides = [1, 1]} : vector<2x96xf32> to vector<2x32xf32>
    %170 = vector.extract_strided_slice %158 {offsets = [0, 64], sizes = [2, 32], strides = [1, 1]} : vector<2x96xf32> to vector<2x32xf32>
    %171 = arith.mulf %167, %170 : vector<2x32xf32>
    %172 = arith.addf %169, %171 : vector<2x32xf32>
    %173 = math.tanh %172 : vector<2x32xf32>
    %cst_54 = arith.constant 1.000000e+00 : f32
    %174 = vector.broadcast %cst_54 : f32 to vector<2x32xf32>
    %175 = arith.subf %174, %168 : vector<2x32xf32>
    %176 = arith.mulf %175, %173 : vector<2x32xf32>
    %177 = arith.mulf %168, %147 : vector<2x32xf32>
    %178 = arith.addf %176, %177 : vector<2x32xf32>
    %179 = vector.extract_strided_slice %154 {offsets = [2, 0], sizes = [2, 96], strides = [1, 1]} : vector<8x96xf32> to vector<2x96xf32>
    %cst_55 = arith.constant dense<0.000000e+00> : vector<2x96xf32>
    %180 = tpu.matmul %178, %44, %cst_55 {dimension_numbers = #tpu.dot_dimension_numbers<[1], [0], [0], [1], [0, 0, 1, 1], [], []>} : vector<2x32xf32>, vector<32x96xf32>, vector<2x96xf32> -> vector<2x96xf32>
    %181 = vector.broadcast %46 : vector<1x96xf32> to vector<2x96xf32>
    %182 = arith.addf %180, %181 : vector<2x96xf32>
    %183 = vector.extract_strided_slice %179 {offsets = [0, 0], sizes = [2, 64], strides = [1, 1]} : vector<2x96xf32> to vector<2x64xf32>
    %184 = vector.extract_strided_slice %182 {offsets = [0, 0], sizes = [2, 64], strides = [1, 1]} : vector<2x96xf32> to vector<2x64xf32>
    %185 = arith.addf %183, %184 : vector<2x64xf32>
    %186 = arith.negf %185 : vector<2x64xf32>
    %187 = math.exp %186 : vector<2x64xf32>
    %cst_56 = arith.constant 1.000000e+00 : f32
    %188 = vector.broadcast %cst_56 : f32 to vector<2x64xf32>
    %189 = arith.addf %188, %187 : vector<2x64xf32>
    %190 = arith.divf %188, %189 : vector<2x64xf32>
    %191 = vector.extract_strided_slice %190 {offsets = [0, 0], sizes = [2, 32], strides = [1, 1]} : vector<2x64xf32> to vector<2x32xf32>
    %192 = vector.extract_strided_slice %190 {offsets = [0, 32], sizes = [2, 32], strides = [1, 1]} : vector<2x64xf32> to vector<2x32xf32>
    %193 = vector.extract_strided_slice %179 {offsets = [0, 64], sizes = [2, 32], strides = [1, 1]} : vector<2x96xf32> to vector<2x32xf32>
    %194 = vector.extract_strided_slice %182 {offsets = [0, 64], sizes = [2, 32], strides = [1, 1]} : vector<2x96xf32> to vector<2x32xf32>
    %195 = arith.mulf %191, %194 : vector<2x32xf32>
    %196 = arith.addf %193, %195 : vector<2x32xf32>
    %197 = math.tanh %196 : vector<2x32xf32>
    %cst_57 = arith.constant 1.000000e+00 : f32
    %198 = vector.broadcast %cst_57 : f32 to vector<2x32xf32>
    %199 = arith.subf %198, %192 : vector<2x32xf32>
    %200 = arith.mulf %199, %197 : vector<2x32xf32>
    %201 = arith.mulf %192, %178 : vector<2x32xf32>
    %202 = arith.addf %200, %201 : vector<2x32xf32>
    %203 = vector.extract_strided_slice %154 {offsets = [4, 0], sizes = [2, 96], strides = [1, 1]} : vector<8x96xf32> to vector<2x96xf32>
    %cst_58 = arith.constant dense<0.000000e+00> : vector<2x96xf32>
    %204 = tpu.matmul %202, %44, %cst_58 {dimension_numbers = #tpu.dot_dimension_numbers<[1], [0], [0], [1], [0, 0, 1, 1], [], []>} : vector<2x32xf32>, vector<32x96xf32>, vector<2x96xf32> -> vector<2x96xf32>
    %205 = vector.broadcast %46 : vector<1x96xf32> to vector<2x96xf32>
    %206 = arith.addf %204, %205 : vector<2x96xf32>
    %207 = vector.extract_strided_slice %203 {offsets = [0, 0], sizes = [2, 64], strides = [1, 1]} : vector<2x96xf32> to vector<2x64xf32>
    %208 = vector.extract_strided_slice %206 {offsets = [0, 0], sizes = [2, 64], strides = [1, 1]} : vector<2x96xf32> to vector<2x64xf32>
    %209 = arith.addf %207, %208 : vector<2x64xf32>
    %210 = arith.negf %209 : vector<2x64xf32>
    %211 = math.exp %210 : vector<2x64xf32>
    %cst_59 = arith.constant 1.000000e+00 : f32
    %212 = vector.broadcast %cst_59 : f32 to vector<2x64xf32>
    %213 = arith.addf %212, %211 : vector<2x64xf32>
    %214 = arith.divf %212, %213 : vector<2x64xf32>
    %215 = vector.extract_strided_slice %214 {offsets = [0, 0], sizes = [2, 32], strides = [1, 1]} : vector<2x64xf32> to vector<2x32xf32>
    %216 = vector.extract_strided_slice %214 {offsets = [0, 32], sizes = [2, 32], strides = [1, 1]} : vector<2x64xf32> to vector<2x32xf32>
    %217 = vector.extract_strided_slice %203 {offsets = [0, 64], sizes = [2, 32], strides = [1, 1]} : vector<2x96xf32> to vector<2x32xf32>
    %218 = vector.extract_strided_slice %206 {offsets = [0, 64], sizes = [2, 32], strides = [1, 1]} : vector<2x96xf32> to vector<2x32xf32>
    %219 = arith.mulf %215, %218 : vector<2x32xf32>
    %220 = arith.addf %217, %219 : vector<2x32xf32>
    %221 = math.tanh %220 : vector<2x32xf32>
    %cst_60 = arith.constant 1.000000e+00 : f32
    %222 = vector.broadcast %cst_60 : f32 to vector<2x32xf32>
    %223 = arith.subf %222, %216 : vector<2x32xf32>
    %224 = arith.mulf %223, %221 : vector<2x32xf32>
    %225 = arith.mulf %216, %202 : vector<2x32xf32>
    %226 = arith.addf %224, %225 : vector<2x32xf32>
    %227 = vector.extract_strided_slice %154 {offsets = [6, 0], sizes = [2, 96], strides = [1, 1]} : vector<8x96xf32> to vector<2x96xf32>
    %cst_61 = arith.constant dense<0.000000e+00> : vector<2x96xf32>
    %228 = tpu.matmul %226, %44, %cst_61 {dimension_numbers = #tpu.dot_dimension_numbers<[1], [0], [0], [1], [0, 0, 1, 1], [], []>} : vector<2x32xf32>, vector<32x96xf32>, vector<2x96xf32> -> vector<2x96xf32>
    %229 = vector.broadcast %46 : vector<1x96xf32> to vector<2x96xf32>
    %230 = arith.addf %228, %229 : vector<2x96xf32>
    %231 = vector.extract_strided_slice %227 {offsets = [0, 0], sizes = [2, 64], strides = [1, 1]} : vector<2x96xf32> to vector<2x64xf32>
    %232 = vector.extract_strided_slice %230 {offsets = [0, 0], sizes = [2, 64], strides = [1, 1]} : vector<2x96xf32> to vector<2x64xf32>
    %233 = arith.addf %231, %232 : vector<2x64xf32>
    %234 = arith.negf %233 : vector<2x64xf32>
    %235 = math.exp %234 : vector<2x64xf32>
    %cst_62 = arith.constant 1.000000e+00 : f32
    %236 = vector.broadcast %cst_62 : f32 to vector<2x64xf32>
    %237 = arith.addf %236, %235 : vector<2x64xf32>
    %238 = arith.divf %236, %237 : vector<2x64xf32>
    %239 = vector.extract_strided_slice %238 {offsets = [0, 0], sizes = [2, 32], strides = [1, 1]} : vector<2x64xf32> to vector<2x32xf32>
    %240 = vector.extract_strided_slice %238 {offsets = [0, 32], sizes = [2, 32], strides = [1, 1]} : vector<2x64xf32> to vector<2x32xf32>
    %241 = vector.extract_strided_slice %227 {offsets = [0, 64], sizes = [2, 32], strides = [1, 1]} : vector<2x96xf32> to vector<2x32xf32>
    %242 = vector.extract_strided_slice %230 {offsets = [0, 64], sizes = [2, 32], strides = [1, 1]} : vector<2x96xf32> to vector<2x32xf32>
    %243 = arith.mulf %239, %242 : vector<2x32xf32>
    %244 = arith.addf %241, %243 : vector<2x32xf32>
    %245 = math.tanh %244 : vector<2x32xf32>
    %cst_63 = arith.constant 1.000000e+00 : f32
    %246 = vector.broadcast %cst_63 : f32 to vector<2x32xf32>
    %247 = arith.subf %246, %240 : vector<2x32xf32>
    %248 = arith.mulf %247, %245 : vector<2x32xf32>
    %249 = arith.mulf %240, %226 : vector<2x32xf32>
    %250 = arith.addf %248, %249 : vector<2x32xf32>
    %251 = tpu.concatenate %178, %202, %226, %250 in 0 : vector<2x32xf32>, vector<2x32xf32>, vector<2x32xf32>, vector<2x32xf32> -> vector<8x32xf32>
    %252 = arith.index_cast %152 : i32 to index
    %c0_64 = arith.constant 0 : index
    %253 = vector.load %arg16[%252, %c0_64] : memref<40x32xf32, #tpu.memory_space<vmem>>, vector<8x32xf32>
    tpu.vector_store %arg16[%252, %c0_64], %251 {strides = array<i32>} : memref<40x32xf32, #tpu.memory_space<vmem>>, vector<8x32xf32>,
    %c2_i32 = arith.constant 2 : i32
    %c8_i32_65 = arith.constant 8 : i32
    %254 = arith.muli %c2_i32, %c8_i32_65 : i32
    %255 = tpu.assume_multiple %254, 8 : i32
    %256 = arith.index_cast %255 : i32 to index
    %c0_66 = arith.constant 0 : index
    %257 = vector.load %arg17[%256, %c0_66] : memref<40x96xf32, #tpu.memory_space<vmem>>, vector<8x96xf32>
    %258 = vector.extract_strided_slice %257 {offsets = [0, 0], sizes = [2, 96], strides = [1, 1]} : vector<8x96xf32> to vector<2x96xf32>
    %cst_67 = arith.constant dense<0.000000e+00> : vector<2x96xf32>
    %259 = tpu.matmul %250, %44, %cst_67 {dimension_numbers = #tpu.dot_dimension_numbers<[1], [0], [0], [1], [0, 0, 1, 1], [], []>} : vector<2x32xf32>, vector<32x96xf32>, vector<2x96xf32> -> vector<2x96xf32>
    %260 = vector.broadcast %46 : vector<1x96xf32> to vector<2x96xf32>
    %261 = arith.addf %259, %260 : vector<2x96xf32>
    %262 = vector.extract_strided_slice %258 {offsets = [0, 0], sizes = [2, 64], strides = [1, 1]} : vector<2x96xf32> to vector<2x64xf32>
    %263 = vector.extract_strided_slice %261 {offsets = [0, 0], sizes = [2, 64], strides = [1, 1]} : vector<2x96xf32> to vector<2x64xf32>
    %264 = arith.addf %262, %263 : vector<2x64xf32>
    %265 = arith.negf %264 : vector<2x64xf32>
    %266 = math.exp %265 : vector<2x64xf32>
    %cst_68 = arith.constant 1.000000e+00 : f32
    %267 = vector.broadcast %cst_68 : f32 to vector<2x64xf32>
    %268 = arith.addf %267, %266 : vector<2x64xf32>
    %269 = arith.divf %267, %268 : vector<2x64xf32>
    %270 = vector.extract_strided_slice %269 {offsets = [0, 0], sizes = [2, 32], strides = [1, 1]} : vector<2x64xf32> to vector<2x32xf32>
    %271 = vector.extract_strided_slice %269 {offsets = [0, 32], sizes = [2, 32], strides = [1, 1]} : vector<2x64xf32> to vector<2x32xf32>
    %272 = vector.extract_strided_slice %258 {offsets = [0, 64], sizes = [2, 32], strides = [1, 1]} : vector<2x96xf32> to vector<2x32xf32>
    %273 = vector.extract_strided_slice %261 {offsets = [0, 64], sizes = [2, 32], strides = [1, 1]} : vector<2x96xf32> to vector<2x32xf32>
    %274 = arith.mulf %270, %273 : vector<2x32xf32>
    %275 = arith.addf %272, %274 : vector<2x32xf32>
    %276 = math.tanh %275 : vector<2x32xf32>
    %cst_69 = arith.constant 1.000000e+00 : f32
    %277 = vector.broadcast %cst_69 : f32 to vector<2x32xf32>
    %278 = arith.subf %277, %271 : vector<2x32xf32>
    %279 = arith.mulf %278, %276 : vector<2x32xf32>
    %280 = arith.mulf %271, %250 : vector<2x32xf32>
    %281 = arith.addf %279, %280 : vector<2x32xf32>
    %282 = vector.extract_strided_slice %257 {offsets = [2, 0], sizes = [2, 96], strides = [1, 1]} : vector<8x96xf32> to vector<2x96xf32>
    %cst_70 = arith.constant dense<0.000000e+00> : vector<2x96xf32>
    %283 = tpu.matmul %281, %44, %cst_70 {dimension_numbers = #tpu.dot_dimension_numbers<[1], [0], [0], [1], [0, 0, 1, 1], [], []>} : vector<2x32xf32>, vector<32x96xf32>, vector<2x96xf32> -> vector<2x96xf32>
    %284 = vector.broadcast %46 : vector<1x96xf32> to vector<2x96xf32>
    %285 = arith.addf %283, %284 : vector<2x96xf32>
    %286 = vector.extract_strided_slice %282 {offsets = [0, 0], sizes = [2, 64], strides = [1, 1]} : vector<2x96xf32> to vector<2x64xf32>
    %287 = vector.extract_strided_slice %285 {offsets = [0, 0], sizes = [2, 64], strides = [1, 1]} : vector<2x96xf32> to vector<2x64xf32>
    %288 = arith.addf %286, %287 : vector<2x64xf32>
    %289 = arith.negf %288 : vector<2x64xf32>
    %290 = math.exp %289 : vector<2x64xf32>
    %cst_71 = arith.constant 1.000000e+00 : f32
    %291 = vector.broadcast %cst_71 : f32 to vector<2x64xf32>
    %292 = arith.addf %291, %290 : vector<2x64xf32>
    %293 = arith.divf %291, %292 : vector<2x64xf32>
    %294 = vector.extract_strided_slice %293 {offsets = [0, 0], sizes = [2, 32], strides = [1, 1]} : vector<2x64xf32> to vector<2x32xf32>
    %295 = vector.extract_strided_slice %293 {offsets = [0, 32], sizes = [2, 32], strides = [1, 1]} : vector<2x64xf32> to vector<2x32xf32>
    %296 = vector.extract_strided_slice %282 {offsets = [0, 64], sizes = [2, 32], strides = [1, 1]} : vector<2x96xf32> to vector<2x32xf32>
    %297 = vector.extract_strided_slice %285 {offsets = [0, 64], sizes = [2, 32], strides = [1, 1]} : vector<2x96xf32> to vector<2x32xf32>
    %298 = arith.mulf %294, %297 : vector<2x32xf32>
    %299 = arith.addf %296, %298 : vector<2x32xf32>
    %300 = math.tanh %299 : vector<2x32xf32>
    %cst_72 = arith.constant 1.000000e+00 : f32
    %301 = vector.broadcast %cst_72 : f32 to vector<2x32xf32>
    %302 = arith.subf %301, %295 : vector<2x32xf32>
    %303 = arith.mulf %302, %300 : vector<2x32xf32>
    %304 = arith.mulf %295, %281 : vector<2x32xf32>
    %305 = arith.addf %303, %304 : vector<2x32xf32>
    %306 = vector.extract_strided_slice %257 {offsets = [4, 0], sizes = [2, 96], strides = [1, 1]} : vector<8x96xf32> to vector<2x96xf32>
    %cst_73 = arith.constant dense<0.000000e+00> : vector<2x96xf32>
    %307 = tpu.matmul %305, %44, %cst_73 {dimension_numbers = #tpu.dot_dimension_numbers<[1], [0], [0], [1], [0, 0, 1, 1], [], []>} : vector<2x32xf32>, vector<32x96xf32>, vector<2x96xf32> -> vector<2x96xf32>
    %308 = vector.broadcast %46 : vector<1x96xf32> to vector<2x96xf32>
    %309 = arith.addf %307, %308 : vector<2x96xf32>
    %310 = vector.extract_strided_slice %306 {offsets = [0, 0], sizes = [2, 64], strides = [1, 1]} : vector<2x96xf32> to vector<2x64xf32>
    %311 = vector.extract_strided_slice %309 {offsets = [0, 0], sizes = [2, 64], strides = [1, 1]} : vector<2x96xf32> to vector<2x64xf32>
    %312 = arith.addf %310, %311 : vector<2x64xf32>
    %313 = arith.negf %312 : vector<2x64xf32>
    %314 = math.exp %313 : vector<2x64xf32>
    %cst_74 = arith.constant 1.000000e+00 : f32
    %315 = vector.broadcast %cst_74 : f32 to vector<2x64xf32>
    %316 = arith.addf %315, %314 : vector<2x64xf32>
    %317 = arith.divf %315, %316 : vector<2x64xf32>
    %318 = vector.extract_strided_slice %317 {offsets = [0, 0], sizes = [2, 32], strides = [1, 1]} : vector<2x64xf32> to vector<2x32xf32>
    %319 = vector.extract_strided_slice %317 {offsets = [0, 32], sizes = [2, 32], strides = [1, 1]} : vector<2x64xf32> to vector<2x32xf32>
    %320 = vector.extract_strided_slice %306 {offsets = [0, 64], sizes = [2, 32], strides = [1, 1]} : vector<2x96xf32> to vector<2x32xf32>
    %321 = vector.extract_strided_slice %309 {offsets = [0, 64], sizes = [2, 32], strides = [1, 1]} : vector<2x96xf32> to vector<2x32xf32>
    %322 = arith.mulf %318, %321 : vector<2x32xf32>
    %323 = arith.addf %320, %322 : vector<2x32xf32>
    %324 = math.tanh %323 : vector<2x32xf32>
    %cst_75 = arith.constant 1.000000e+00 : f32
    %325 = vector.broadcast %cst_75 : f32 to vector<2x32xf32>
    %326 = arith.subf %325, %319 : vector<2x32xf32>
    %327 = arith.mulf %326, %324 : vector<2x32xf32>
    %328 = arith.mulf %319, %305 : vector<2x32xf32>
    %329 = arith.addf %327, %328 : vector<2x32xf32>
    %330 = vector.extract_strided_slice %257 {offsets = [6, 0], sizes = [2, 96], strides = [1, 1]} : vector<8x96xf32> to vector<2x96xf32>
    %cst_76 = arith.constant dense<0.000000e+00> : vector<2x96xf32>
    %331 = tpu.matmul %329, %44, %cst_76 {dimension_numbers = #tpu.dot_dimension_numbers<[1], [0], [0], [1], [0, 0, 1, 1], [], []>} : vector<2x32xf32>, vector<32x96xf32>, vector<2x96xf32> -> vector<2x96xf32>
    %332 = vector.broadcast %46 : vector<1x96xf32> to vector<2x96xf32>
    %333 = arith.addf %331, %332 : vector<2x96xf32>
    %334 = vector.extract_strided_slice %330 {offsets = [0, 0], sizes = [2, 64], strides = [1, 1]} : vector<2x96xf32> to vector<2x64xf32>
    %335 = vector.extract_strided_slice %333 {offsets = [0, 0], sizes = [2, 64], strides = [1, 1]} : vector<2x96xf32> to vector<2x64xf32>
    %336 = arith.addf %334, %335 : vector<2x64xf32>
    %337 = arith.negf %336 : vector<2x64xf32>
    %338 = math.exp %337 : vector<2x64xf32>
    %cst_77 = arith.constant 1.000000e+00 : f32
    %339 = vector.broadcast %cst_77 : f32 to vector<2x64xf32>
    %340 = arith.addf %339, %338 : vector<2x64xf32>
    %341 = arith.divf %339, %340 : vector<2x64xf32>
    %342 = vector.extract_strided_slice %341 {offsets = [0, 0], sizes = [2, 32], strides = [1, 1]} : vector<2x64xf32> to vector<2x32xf32>
    %343 = vector.extract_strided_slice %341 {offsets = [0, 32], sizes = [2, 32], strides = [1, 1]} : vector<2x64xf32> to vector<2x32xf32>
    %344 = vector.extract_strided_slice %330 {offsets = [0, 64], sizes = [2, 32], strides = [1, 1]} : vector<2x96xf32> to vector<2x32xf32>
    %345 = vector.extract_strided_slice %333 {offsets = [0, 64], sizes = [2, 32], strides = [1, 1]} : vector<2x96xf32> to vector<2x32xf32>
    %346 = arith.mulf %342, %345 : vector<2x32xf32>
    %347 = arith.addf %344, %346 : vector<2x32xf32>
    %348 = math.tanh %347 : vector<2x32xf32>
    %cst_78 = arith.constant 1.000000e+00 : f32
    %349 = vector.broadcast %cst_78 : f32 to vector<2x32xf32>
    %350 = arith.subf %349, %343 : vector<2x32xf32>
    %351 = arith.mulf %350, %348 : vector<2x32xf32>
    %352 = arith.mulf %343, %329 : vector<2x32xf32>
    %353 = arith.addf %351, %352 : vector<2x32xf32>
    %354 = tpu.concatenate %281, %305, %329, %353 in 0 : vector<2x32xf32>, vector<2x32xf32>, vector<2x32xf32>, vector<2x32xf32> -> vector<8x32xf32>
    %355 = arith.index_cast %255 : i32 to index
    %c0_79 = arith.constant 0 : index
    %356 = vector.load %arg16[%355, %c0_79] : memref<40x32xf32, #tpu.memory_space<vmem>>, vector<8x32xf32>
    tpu.vector_store %arg16[%355, %c0_79], %354 {strides = array<i32>} : memref<40x32xf32, #tpu.memory_space<vmem>>, vector<8x32xf32>,
    %c3_i32 = arith.constant 3 : i32
    %c8_i32_80 = arith.constant 8 : i32
    %357 = arith.muli %c3_i32, %c8_i32_80 : i32
    %358 = tpu.assume_multiple %357, 8 : i32
    %359 = arith.index_cast %358 : i32 to index
    %c0_81 = arith.constant 0 : index
    %360 = vector.load %arg17[%359, %c0_81] : memref<40x96xf32, #tpu.memory_space<vmem>>, vector<8x96xf32>
    %361 = vector.extract_strided_slice %360 {offsets = [0, 0], sizes = [2, 96], strides = [1, 1]} : vector<8x96xf32> to vector<2x96xf32>
    %cst_82 = arith.constant dense<0.000000e+00> : vector<2x96xf32>
    %362 = tpu.matmul %353, %44, %cst_82 {dimension_numbers = #tpu.dot_dimension_numbers<[1], [0], [0], [1], [0, 0, 1, 1], [], []>} : vector<2x32xf32>, vector<32x96xf32>, vector<2x96xf32> -> vector<2x96xf32>
    %363 = vector.broadcast %46 : vector<1x96xf32> to vector<2x96xf32>
    %364 = arith.addf %362, %363 : vector<2x96xf32>
    %365 = vector.extract_strided_slice %361 {offsets = [0, 0], sizes = [2, 64], strides = [1, 1]} : vector<2x96xf32> to vector<2x64xf32>
    %366 = vector.extract_strided_slice %364 {offsets = [0, 0], sizes = [2, 64], strides = [1, 1]} : vector<2x96xf32> to vector<2x64xf32>
    %367 = arith.addf %365, %366 : vector<2x64xf32>
    %368 = arith.negf %367 : vector<2x64xf32>
    %369 = math.exp %368 : vector<2x64xf32>
    %cst_83 = arith.constant 1.000000e+00 : f32
    %370 = vector.broadcast %cst_83 : f32 to vector<2x64xf32>
    %371 = arith.addf %370, %369 : vector<2x64xf32>
    %372 = arith.divf %370, %371 : vector<2x64xf32>
    %373 = vector.extract_strided_slice %372 {offsets = [0, 0], sizes = [2, 32], strides = [1, 1]} : vector<2x64xf32> to vector<2x32xf32>
    %374 = vector.extract_strided_slice %372 {offsets = [0, 32], sizes = [2, 32], strides = [1, 1]} : vector<2x64xf32> to vector<2x32xf32>
    %375 = vector.extract_strided_slice %361 {offsets = [0, 64], sizes = [2, 32], strides = [1, 1]} : vector<2x96xf32> to vector<2x32xf32>
    %376 = vector.extract_strided_slice %364 {offsets = [0, 64], sizes = [2, 32], strides = [1, 1]} : vector<2x96xf32> to vector<2x32xf32>
    %377 = arith.mulf %373, %376 : vector<2x32xf32>
    %378 = arith.addf %375, %377 : vector<2x32xf32>
    %379 = math.tanh %378 : vector<2x32xf32>
    %cst_84 = arith.constant 1.000000e+00 : f32
    %380 = vector.broadcast %cst_84 : f32 to vector<2x32xf32>
    %381 = arith.subf %380, %374 : vector<2x32xf32>
    %382 = arith.mulf %381, %379 : vector<2x32xf32>
    %383 = arith.mulf %374, %353 : vector<2x32xf32>
    %384 = arith.addf %382, %383 : vector<2x32xf32>
    %385 = vector.extract_strided_slice %360 {offsets = [2, 0], sizes = [2, 96], strides = [1, 1]} : vector<8x96xf32> to vector<2x96xf32>
    %cst_85 = arith.constant dense<0.000000e+00> : vector<2x96xf32>
    %386 = tpu.matmul %384, %44, %cst_85 {dimension_numbers = #tpu.dot_dimension_numbers<[1], [0], [0], [1], [0, 0, 1, 1], [], []>} : vector<2x32xf32>, vector<32x96xf32>, vector<2x96xf32> -> vector<2x96xf32>
    %387 = vector.broadcast %46 : vector<1x96xf32> to vector<2x96xf32>
    %388 = arith.addf %386, %387 : vector<2x96xf32>
    %389 = vector.extract_strided_slice %385 {offsets = [0, 0], sizes = [2, 64], strides = [1, 1]} : vector<2x96xf32> to vector<2x64xf32>
    %390 = vector.extract_strided_slice %388 {offsets = [0, 0], sizes = [2, 64], strides = [1, 1]} : vector<2x96xf32> to vector<2x64xf32>
    %391 = arith.addf %389, %390 : vector<2x64xf32>
    %392 = arith.negf %391 : vector<2x64xf32>
    %393 = math.exp %392 : vector<2x64xf32>
    %cst_86 = arith.constant 1.000000e+00 : f32
    %394 = vector.broadcast %cst_86 : f32 to vector<2x64xf32>
    %395 = arith.addf %394, %393 : vector<2x64xf32>
    %396 = arith.divf %394, %395 : vector<2x64xf32>
    %397 = vector.extract_strided_slice %396 {offsets = [0, 0], sizes = [2, 32], strides = [1, 1]} : vector<2x64xf32> to vector<2x32xf32>
    %398 = vector.extract_strided_slice %396 {offsets = [0, 32], sizes = [2, 32], strides = [1, 1]} : vector<2x64xf32> to vector<2x32xf32>
    %399 = vector.extract_strided_slice %385 {offsets = [0, 64], sizes = [2, 32], strides = [1, 1]} : vector<2x96xf32> to vector<2x32xf32>
    %400 = vector.extract_strided_slice %388 {offsets = [0, 64], sizes = [2, 32], strides = [1, 1]} : vector<2x96xf32> to vector<2x32xf32>
    %401 = arith.mulf %397, %400 : vector<2x32xf32>
    %402 = arith.addf %399, %401 : vector<2x32xf32>
    %403 = math.tanh %402 : vector<2x32xf32>
    %cst_87 = arith.constant 1.000000e+00 : f32
    %404 = vector.broadcast %cst_87 : f32 to vector<2x32xf32>
    %405 = arith.subf %404, %398 : vector<2x32xf32>
    %406 = arith.mulf %405, %403 : vector<2x32xf32>
    %407 = arith.mulf %398, %384 : vector<2x32xf32>
    %408 = arith.addf %406, %407 : vector<2x32xf32>
    %409 = vector.extract_strided_slice %360 {offsets = [4, 0], sizes = [2, 96], strides = [1, 1]} : vector<8x96xf32> to vector<2x96xf32>
    %cst_88 = arith.constant dense<0.000000e+00> : vector<2x96xf32>
    %410 = tpu.matmul %408, %44, %cst_88 {dimension_numbers = #tpu.dot_dimension_numbers<[1], [0], [0], [1], [0, 0, 1, 1], [], []>} : vector<2x32xf32>, vector<32x96xf32>, vector<2x96xf32> -> vector<2x96xf32>
    %411 = vector.broadcast %46 : vector<1x96xf32> to vector<2x96xf32>
    %412 = arith.addf %410, %411 : vector<2x96xf32>
    %413 = vector.extract_strided_slice %409 {offsets = [0, 0], sizes = [2, 64], strides = [1, 1]} : vector<2x96xf32> to vector<2x64xf32>
    %414 = vector.extract_strided_slice %412 {offsets = [0, 0], sizes = [2, 64], strides = [1, 1]} : vector<2x96xf32> to vector<2x64xf32>
    %415 = arith.addf %413, %414 : vector<2x64xf32>
    %416 = arith.negf %415 : vector<2x64xf32>
    %417 = math.exp %416 : vector<2x64xf32>
    %cst_89 = arith.constant 1.000000e+00 : f32
    %418 = vector.broadcast %cst_89 : f32 to vector<2x64xf32>
    %419 = arith.addf %418, %417 : vector<2x64xf32>
    %420 = arith.divf %418, %419 : vector<2x64xf32>
    %421 = vector.extract_strided_slice %420 {offsets = [0, 0], sizes = [2, 32], strides = [1, 1]} : vector<2x64xf32> to vector<2x32xf32>
    %422 = vector.extract_strided_slice %420 {offsets = [0, 32], sizes = [2, 32], strides = [1, 1]} : vector<2x64xf32> to vector<2x32xf32>
    %423 = vector.extract_strided_slice %409 {offsets = [0, 64], sizes = [2, 32], strides = [1, 1]} : vector<2x96xf32> to vector<2x32xf32>
    %424 = vector.extract_strided_slice %412 {offsets = [0, 64], sizes = [2, 32], strides = [1, 1]} : vector<2x96xf32> to vector<2x32xf32>
    %425 = arith.mulf %421, %424 : vector<2x32xf32>
    %426 = arith.addf %423, %425 : vector<2x32xf32>
    %427 = math.tanh %426 : vector<2x32xf32>
    %cst_90 = arith.constant 1.000000e+00 : f32
    %428 = vector.broadcast %cst_90 : f32 to vector<2x32xf32>
    %429 = arith.subf %428, %422 : vector<2x32xf32>
    %430 = arith.mulf %429, %427 : vector<2x32xf32>
    %431 = arith.mulf %422, %408 : vector<2x32xf32>
    %432 = arith.addf %430, %431 : vector<2x32xf32>
    %433 = vector.extract_strided_slice %360 {offsets = [6, 0], sizes = [2, 96], strides = [1, 1]} : vector<8x96xf32> to vector<2x96xf32>
    %cst_91 = arith.constant dense<0.000000e+00> : vector<2x96xf32>
    %434 = tpu.matmul %432, %44, %cst_91 {dimension_numbers = #tpu.dot_dimension_numbers<[1], [0], [0], [1], [0, 0, 1, 1], [], []>} : vector<2x32xf32>, vector<32x96xf32>, vector<2x96xf32> -> vector<2x96xf32>
    %435 = vector.broadcast %46 : vector<1x96xf32> to vector<2x96xf32>
    %436 = arith.addf %434, %435 : vector<2x96xf32>
    %437 = vector.extract_strided_slice %433 {offsets = [0, 0], sizes = [2, 64], strides = [1, 1]} : vector<2x96xf32> to vector<2x64xf32>
    %438 = vector.extract_strided_slice %436 {offsets = [0, 0], sizes = [2, 64], strides = [1, 1]} : vector<2x96xf32> to vector<2x64xf32>
    %439 = arith.addf %437, %438 : vector<2x64xf32>
    %440 = arith.negf %439 : vector<2x64xf32>
    %441 = math.exp %440 : vector<2x64xf32>
    %cst_92 = arith.constant 1.000000e+00 : f32
    %442 = vector.broadcast %cst_92 : f32 to vector<2x64xf32>
    %443 = arith.addf %442, %441 : vector<2x64xf32>
    %444 = arith.divf %442, %443 : vector<2x64xf32>
    %445 = vector.extract_strided_slice %444 {offsets = [0, 0], sizes = [2, 32], strides = [1, 1]} : vector<2x64xf32> to vector<2x32xf32>
    %446 = vector.extract_strided_slice %444 {offsets = [0, 32], sizes = [2, 32], strides = [1, 1]} : vector<2x64xf32> to vector<2x32xf32>
    %447 = vector.extract_strided_slice %433 {offsets = [0, 64], sizes = [2, 32], strides = [1, 1]} : vector<2x96xf32> to vector<2x32xf32>
    %448 = vector.extract_strided_slice %436 {offsets = [0, 64], sizes = [2, 32], strides = [1, 1]} : vector<2x96xf32> to vector<2x32xf32>
    %449 = arith.mulf %445, %448 : vector<2x32xf32>
    %450 = arith.addf %447, %449 : vector<2x32xf32>
    %451 = math.tanh %450 : vector<2x32xf32>
    %cst_93 = arith.constant 1.000000e+00 : f32
    %452 = vector.broadcast %cst_93 : f32 to vector<2x32xf32>
    %453 = arith.subf %452, %446 : vector<2x32xf32>
    %454 = arith.mulf %453, %451 : vector<2x32xf32>
    %455 = arith.mulf %446, %432 : vector<2x32xf32>
    %456 = arith.addf %454, %455 : vector<2x32xf32>
    %457 = tpu.concatenate %384, %408, %432, %456 in 0 : vector<2x32xf32>, vector<2x32xf32>, vector<2x32xf32>, vector<2x32xf32> -> vector<8x32xf32>
    %458 = arith.index_cast %358 : i32 to index
    %c0_94 = arith.constant 0 : index
    %459 = vector.load %arg16[%458, %c0_94] : memref<40x32xf32, #tpu.memory_space<vmem>>, vector<8x32xf32>
    tpu.vector_store %arg16[%458, %c0_94], %457 {strides = array<i32>} : memref<40x32xf32, #tpu.memory_space<vmem>>, vector<8x32xf32>,
    %c4_i32 = arith.constant 4 : i32
    %c8_i32_95 = arith.constant 8 : i32
    %460 = arith.muli %c4_i32, %c8_i32_95 : i32
    %461 = tpu.assume_multiple %460, 8 : i32
    %462 = arith.index_cast %461 : i32 to index
    %c0_96 = arith.constant 0 : index
    %463 = vector.load %arg17[%462, %c0_96] : memref<40x96xf32, #tpu.memory_space<vmem>>, vector<8x96xf32>
    %464 = vector.extract_strided_slice %463 {offsets = [0, 0], sizes = [2, 96], strides = [1, 1]} : vector<8x96xf32> to vector<2x96xf32>
    %cst_97 = arith.constant dense<0.000000e+00> : vector<2x96xf32>
    %465 = tpu.matmul %456, %44, %cst_97 {dimension_numbers = #tpu.dot_dimension_numbers<[1], [0], [0], [1], [0, 0, 1, 1], [], []>} : vector<2x32xf32>, vector<32x96xf32>, vector<2x96xf32> -> vector<2x96xf32>
    %466 = vector.broadcast %46 : vector<1x96xf32> to vector<2x96xf32>
    %467 = arith.addf %465, %466 : vector<2x96xf32>
    %468 = vector.extract_strided_slice %464 {offsets = [0, 0], sizes = [2, 64], strides = [1, 1]} : vector<2x96xf32> to vector<2x64xf32>
    %469 = vector.extract_strided_slice %467 {offsets = [0, 0], sizes = [2, 64], strides = [1, 1]} : vector<2x96xf32> to vector<2x64xf32>
    %470 = arith.addf %468, %469 : vector<2x64xf32>
    %471 = arith.negf %470 : vector<2x64xf32>
    %472 = math.exp %471 : vector<2x64xf32>
    %cst_98 = arith.constant 1.000000e+00 : f32
    %473 = vector.broadcast %cst_98 : f32 to vector<2x64xf32>
    %474 = arith.addf %473, %472 : vector<2x64xf32>
    %475 = arith.divf %473, %474 : vector<2x64xf32>
    %476 = vector.extract_strided_slice %475 {offsets = [0, 0], sizes = [2, 32], strides = [1, 1]} : vector<2x64xf32> to vector<2x32xf32>
    %477 = vector.extract_strided_slice %475 {offsets = [0, 32], sizes = [2, 32], strides = [1, 1]} : vector<2x64xf32> to vector<2x32xf32>
    %478 = vector.extract_strided_slice %464 {offsets = [0, 64], sizes = [2, 32], strides = [1, 1]} : vector<2x96xf32> to vector<2x32xf32>
    %479 = vector.extract_strided_slice %467 {offsets = [0, 64], sizes = [2, 32], strides = [1, 1]} : vector<2x96xf32> to vector<2x32xf32>
    %480 = arith.mulf %476, %479 : vector<2x32xf32>
    %481 = arith.addf %478, %480 : vector<2x32xf32>
    %482 = math.tanh %481 : vector<2x32xf32>
    %cst_99 = arith.constant 1.000000e+00 : f32
    %483 = vector.broadcast %cst_99 : f32 to vector<2x32xf32>
    %484 = arith.subf %483, %477 : vector<2x32xf32>
    %485 = arith.mulf %484, %482 : vector<2x32xf32>
    %486 = arith.mulf %477, %456 : vector<2x32xf32>
    %487 = arith.addf %485, %486 : vector<2x32xf32>
    %488 = vector.extract_strided_slice %463 {offsets = [2, 0], sizes = [2, 96], strides = [1, 1]} : vector<8x96xf32> to vector<2x96xf32>
    %cst_100 = arith.constant dense<0.000000e+00> : vector<2x96xf32>
    %489 = tpu.matmul %487, %44, %cst_100 {dimension_numbers = #tpu.dot_dimension_numbers<[1], [0], [0], [1], [0, 0, 1, 1], [], []>} : vector<2x32xf32>, vector<32x96xf32>, vector<2x96xf32> -> vector<2x96xf32>
    %490 = vector.broadcast %46 : vector<1x96xf32> to vector<2x96xf32>
    %491 = arith.addf %489, %490 : vector<2x96xf32>
    %492 = vector.extract_strided_slice %488 {offsets = [0, 0], sizes = [2, 64], strides = [1, 1]} : vector<2x96xf32> to vector<2x64xf32>
    %493 = vector.extract_strided_slice %491 {offsets = [0, 0], sizes = [2, 64], strides = [1, 1]} : vector<2x96xf32> to vector<2x64xf32>
    %494 = arith.addf %492, %493 : vector<2x64xf32>
    %495 = arith.negf %494 : vector<2x64xf32>
    %496 = math.exp %495 : vector<2x64xf32>
    %cst_101 = arith.constant 1.000000e+00 : f32
    %497 = vector.broadcast %cst_101 : f32 to vector<2x64xf32>
    %498 = arith.addf %497, %496 : vector<2x64xf32>
    %499 = arith.divf %497, %498 : vector<2x64xf32>
    %500 = vector.extract_strided_slice %499 {offsets = [0, 0], sizes = [2, 32], strides = [1, 1]} : vector<2x64xf32> to vector<2x32xf32>
    %501 = vector.extract_strided_slice %499 {offsets = [0, 32], sizes = [2, 32], strides = [1, 1]} : vector<2x64xf32> to vector<2x32xf32>
    %502 = vector.extract_strided_slice %488 {offsets = [0, 64], sizes = [2, 32], strides = [1, 1]} : vector<2x96xf32> to vector<2x32xf32>
    %503 = vector.extract_strided_slice %491 {offsets = [0, 64], sizes = [2, 32], strides = [1, 1]} : vector<2x96xf32> to vector<2x32xf32>
    %504 = arith.mulf %500, %503 : vector<2x32xf32>
    %505 = arith.addf %502, %504 : vector<2x32xf32>
    %506 = math.tanh %505 : vector<2x32xf32>
    %cst_102 = arith.constant 1.000000e+00 : f32
    %507 = vector.broadcast %cst_102 : f32 to vector<2x32xf32>
    %508 = arith.subf %507, %501 : vector<2x32xf32>
    %509 = arith.mulf %508, %506 : vector<2x32xf32>
    %510 = arith.mulf %501, %487 : vector<2x32xf32>
    %511 = arith.addf %509, %510 : vector<2x32xf32>
    %512 = vector.extract_strided_slice %463 {offsets = [4, 0], sizes = [2, 96], strides = [1, 1]} : vector<8x96xf32> to vector<2x96xf32>
    %cst_103 = arith.constant dense<0.000000e+00> : vector<2x96xf32>
    %513 = tpu.matmul %511, %44, %cst_103 {dimension_numbers = #tpu.dot_dimension_numbers<[1], [0], [0], [1], [0, 0, 1, 1], [], []>} : vector<2x32xf32>, vector<32x96xf32>, vector<2x96xf32> -> vector<2x96xf32>
    %514 = vector.broadcast %46 : vector<1x96xf32> to vector<2x96xf32>
    %515 = arith.addf %513, %514 : vector<2x96xf32>
    %516 = vector.extract_strided_slice %512 {offsets = [0, 0], sizes = [2, 64], strides = [1, 1]} : vector<2x96xf32> to vector<2x64xf32>
    %517 = vector.extract_strided_slice %515 {offsets = [0, 0], sizes = [2, 64], strides = [1, 1]} : vector<2x96xf32> to vector<2x64xf32>
    %518 = arith.addf %516, %517 : vector<2x64xf32>
    %519 = arith.negf %518 : vector<2x64xf32>
    %520 = math.exp %519 : vector<2x64xf32>
    %cst_104 = arith.constant 1.000000e+00 : f32
    %521 = vector.broadcast %cst_104 : f32 to vector<2x64xf32>
    %522 = arith.addf %521, %520 : vector<2x64xf32>
    %523 = arith.divf %521, %522 : vector<2x64xf32>
    %524 = vector.extract_strided_slice %523 {offsets = [0, 0], sizes = [2, 32], strides = [1, 1]} : vector<2x64xf32> to vector<2x32xf32>
    %525 = vector.extract_strided_slice %523 {offsets = [0, 32], sizes = [2, 32], strides = [1, 1]} : vector<2x64xf32> to vector<2x32xf32>
    %526 = vector.extract_strided_slice %512 {offsets = [0, 64], sizes = [2, 32], strides = [1, 1]} : vector<2x96xf32> to vector<2x32xf32>
    %527 = vector.extract_strided_slice %515 {offsets = [0, 64], sizes = [2, 32], strides = [1, 1]} : vector<2x96xf32> to vector<2x32xf32>
    %528 = arith.mulf %524, %527 : vector<2x32xf32>
    %529 = arith.addf %526, %528 : vector<2x32xf32>
    %530 = math.tanh %529 : vector<2x32xf32>
    %cst_105 = arith.constant 1.000000e+00 : f32
    %531 = vector.broadcast %cst_105 : f32 to vector<2x32xf32>
    %532 = arith.subf %531, %525 : vector<2x32xf32>
    %533 = arith.mulf %532, %530 : vector<2x32xf32>
    %534 = arith.mulf %525, %511 : vector<2x32xf32>
    %535 = arith.addf %533, %534 : vector<2x32xf32>
    %536 = vector.extract_strided_slice %463 {offsets = [6, 0], sizes = [2, 96], strides = [1, 1]} : vector<8x96xf32> to vector<2x96xf32>
    %cst_106 = arith.constant dense<0.000000e+00> : vector<2x96xf32>
    %537 = tpu.matmul %535, %44, %cst_106 {dimension_numbers = #tpu.dot_dimension_numbers<[1], [0], [0], [1], [0, 0, 1, 1], [], []>} : vector<2x32xf32>, vector<32x96xf32>, vector<2x96xf32> -> vector<2x96xf32>
    %538 = vector.broadcast %46 : vector<1x96xf32> to vector<2x96xf32>
    %539 = arith.addf %537, %538 : vector<2x96xf32>
    %540 = vector.extract_strided_slice %536 {offsets = [0, 0], sizes = [2, 64], strides = [1, 1]} : vector<2x96xf32> to vector<2x64xf32>
    %541 = vector.extract_strided_slice %539 {offsets = [0, 0], sizes = [2, 64], strides = [1, 1]} : vector<2x96xf32> to vector<2x64xf32>
    %542 = arith.addf %540, %541 : vector<2x64xf32>
    %543 = arith.negf %542 : vector<2x64xf32>
    %544 = math.exp %543 : vector<2x64xf32>
    %cst_107 = arith.constant 1.000000e+00 : f32
    %545 = vector.broadcast %cst_107 : f32 to vector<2x64xf32>
    %546 = arith.addf %545, %544 : vector<2x64xf32>
    %547 = arith.divf %545, %546 : vector<2x64xf32>
    %548 = vector.extract_strided_slice %547 {offsets = [0, 0], sizes = [2, 32], strides = [1, 1]} : vector<2x64xf32> to vector<2x32xf32>
    %549 = vector.extract_strided_slice %547 {offsets = [0, 32], sizes = [2, 32], strides = [1, 1]} : vector<2x64xf32> to vector<2x32xf32>
    %550 = vector.extract_strided_slice %536 {offsets = [0, 64], sizes = [2, 32], strides = [1, 1]} : vector<2x96xf32> to vector<2x32xf32>
    %551 = vector.extract_strided_slice %539 {offsets = [0, 64], sizes = [2, 32], strides = [1, 1]} : vector<2x96xf32> to vector<2x32xf32>
    %552 = arith.mulf %548, %551 : vector<2x32xf32>
    %553 = arith.addf %550, %552 : vector<2x32xf32>
    %554 = math.tanh %553 : vector<2x32xf32>
    %cst_108 = arith.constant 1.000000e+00 : f32
    %555 = vector.broadcast %cst_108 : f32 to vector<2x32xf32>
    %556 = arith.subf %555, %549 : vector<2x32xf32>
    %557 = arith.mulf %556, %554 : vector<2x32xf32>
    %558 = arith.mulf %549, %535 : vector<2x32xf32>
    %559 = arith.addf %557, %558 : vector<2x32xf32>
    %560 = tpu.concatenate %487, %511, %535, %559 in 0 : vector<2x32xf32>, vector<2x32xf32>, vector<2x32xf32>, vector<2x32xf32> -> vector<8x32xf32>
    %561 = arith.index_cast %461 : i32 to index
    %c0_109 = arith.constant 0 : index
    %562 = vector.load %arg16[%561, %c0_109] : memref<40x32xf32, #tpu.memory_space<vmem>>, vector<8x32xf32>
    tpu.vector_store %arg16[%561, %c0_109], %560 {strides = array<i32>} : memref<40x32xf32, #tpu.memory_space<vmem>>, vector<8x32xf32>,
    %c5_i32 = arith.constant 5 : i32
    %c0_110 = arith.constant 0 : index
    %c0_111 = arith.constant 0 : index
    %563 = vector.load %arg16[%c0_110, %c0_111] : memref<40x32xf32, #tpu.memory_space<vmem>>, vector<40x32xf32>
    %c1 = arith.constant 1 : index
    %c0_112 = arith.constant 0 : index
    %c0_113 = arith.constant 0 : index
    %564 = vector.load %arg6[%c1, %c0_112, %c0_113] : memref<2x32x96xf32, #tpu.memory_space<vmem>>, vector<1x32x96xf32>
    %565 = vector.shape_cast %564 : vector<1x32x96xf32> to vector<32x96xf32>
    %cst_114 = arith.constant dense<0.000000e+00> : vector<40x96xf32>
    %566 = tpu.matmul %563, %565, %cst_114 {dimension_numbers = #tpu.dot_dimension_numbers<[1], [0], [0], [1], [0, 0, 1, 1], [], []>} : vector<40x32xf32>, vector<32x96xf32>, vector<40x96xf32> -> vector<40x96xf32>
    %c1_115 = arith.constant 1 : index
    %c0_116 = arith.constant 0 : index
    %c0_117 = arith.constant 0 : index
    %567 = vector.load %arg8[%c1_115, %c0_116, %c0_117] : memref<2x1x96xf32, #tpu.memory_space<vmem>>, vector<1x1x96xf32>
    %568 = vector.shape_cast %567 : vector<1x1x96xf32> to vector<1x96xf32>
    %569 = vector.broadcast %568 : vector<1x96xf32> to vector<40x96xf32>
    %570 = arith.addf %566, %569 : vector<40x96xf32>
    %c0_118 = arith.constant 0 : index
    %c0_119 = arith.constant 0 : index
    %571 = vector.load %arg17[%c0_118, %c0_119] : memref<40x96xf32, #tpu.memory_space<vmem>>, vector<40x96xf32>
    tpu.vector_store %arg17[%c0_118, %c0_119], %570 {strides = array<i32>} : memref<40x96xf32, #tpu.memory_space<vmem>>, vector<40x96xf32>,
    %c1_120 = arith.constant 1 : index
    %c0_121 = arith.constant 0 : index
    %c0_122 = arith.constant 0 : index
    %572 = vector.load %arg7[%c1_120, %c0_121, %c0_122] : memref<2x32x96xf32, #tpu.memory_space<vmem>>, vector<1x32x96xf32>
    %573 = vector.shape_cast %572 : vector<1x32x96xf32> to vector<32x96xf32>
    %c1_123 = arith.constant 1 : index
    %c0_124 = arith.constant 0 : index
    %c0_125 = arith.constant 0 : index
    %574 = vector.load %arg9[%c1_123, %c0_124, %c0_125] : memref<2x1x96xf32, #tpu.memory_space<vmem>>, vector<1x1x96xf32>
    %575 = vector.shape_cast %574 : vector<1x1x96xf32> to vector<1x96xf32>
    %cst_126 = arith.constant 0.000000e+00 : f32
    %576 = vector.broadcast %cst_126 : f32 to vector<2x32xf32>
    %c0_i32_127 = arith.constant 0 : i32
    %c8_i32_128 = arith.constant 8 : i32
    %577 = arith.muli %c0_i32_127, %c8_i32_128 : i32
    %578 = tpu.assume_multiple %577, 8 : i32
    %579 = arith.index_cast %578 : i32 to index
    %c0_129 = arith.constant 0 : index
    %580 = vector.load %arg17[%579, %c0_129] : memref<40x96xf32, #tpu.memory_space<vmem>>, vector<8x96xf32>
    %581 = vector.extract_strided_slice %580 {offsets = [0, 0], sizes = [2, 96], strides = [1, 1]} : vector<8x96xf32> to vector<2x96xf32>
    %cst_130 = arith.constant dense<0.000000e+00> : vector<2x96xf32>
    %582 = tpu.matmul %576, %573, %cst_130 {dimension_numbers = #tpu.dot_dimension_numbers<[1], [0], [0], [1], [0, 0, 1, 1], [], []>} : vector<2x32xf32>, vector<32x96xf32>, vector<2x96xf32> -> vector<2x96xf32>
    %583 = vector.broadcast %575 : vector<1x96xf32> to vector<2x96xf32>
    %584 = arith.addf %582, %583 : vector<2x96xf32>
    %585 = vector.extract_strided_slice %581 {offsets = [0, 0], sizes = [2, 64], strides = [1, 1]} : vector<2x96xf32> to vector<2x64xf32>
    %586 = vector.extract_strided_slice %584 {offsets = [0, 0], sizes = [2, 64], strides = [1, 1]} : vector<2x96xf32> to vector<2x64xf32>
    %587 = arith.addf %585, %586 : vector<2x64xf32>
    %588 = arith.negf %587 : vector<2x64xf32>
    %589 = math.exp %588 : vector<2x64xf32>
    %cst_131 = arith.constant 1.000000e+00 : f32
    %590 = vector.broadcast %cst_131 : f32 to vector<2x64xf32>
    %591 = arith.addf %590, %589 : vector<2x64xf32>
    %592 = arith.divf %590, %591 : vector<2x64xf32>
    %593 = vector.extract_strided_slice %592 {offsets = [0, 0], sizes = [2, 32], strides = [1, 1]} : vector<2x64xf32> to vector<2x32xf32>
    %594 = vector.extract_strided_slice %592 {offsets = [0, 32], sizes = [2, 32], strides = [1, 1]} : vector<2x64xf32> to vector<2x32xf32>
    %595 = vector.extract_strided_slice %581 {offsets = [0, 64], sizes = [2, 32], strides = [1, 1]} : vector<2x96xf32> to vector<2x32xf32>
    %596 = vector.extract_strided_slice %584 {offsets = [0, 64], sizes = [2, 32], strides = [1, 1]} : vector<2x96xf32> to vector<2x32xf32>
    %597 = arith.mulf %593, %596 : vector<2x32xf32>
    %598 = arith.addf %595, %597 : vector<2x32xf32>
    %599 = math.tanh %598 : vector<2x32xf32>
    %cst_132 = arith.constant 1.000000e+00 : f32
    %600 = vector.broadcast %cst_132 : f32 to vector<2x32xf32>
    %601 = arith.subf %600, %594 : vector<2x32xf32>
    %602 = arith.mulf %601, %599 : vector<2x32xf32>
    %603 = arith.mulf %594, %576 : vector<2x32xf32>
    %604 = arith.addf %602, %603 : vector<2x32xf32>
    %605 = vector.extract_strided_slice %580 {offsets = [2, 0], sizes = [2, 96], strides = [1, 1]} : vector<8x96xf32> to vector<2x96xf32>
    %cst_133 = arith.constant dense<0.000000e+00> : vector<2x96xf32>
    %606 = tpu.matmul %604, %573, %cst_133 {dimension_numbers = #tpu.dot_dimension_numbers<[1], [0], [0], [1], [0, 0, 1, 1], [], []>} : vector<2x32xf32>, vector<32x96xf32>, vector<2x96xf32> -> vector<2x96xf32>
    %607 = vector.broadcast %575 : vector<1x96xf32> to vector<2x96xf32>
    %608 = arith.addf %606, %607 : vector<2x96xf32>
    %609 = vector.extract_strided_slice %605 {offsets = [0, 0], sizes = [2, 64], strides = [1, 1]} : vector<2x96xf32> to vector<2x64xf32>
    %610 = vector.extract_strided_slice %608 {offsets = [0, 0], sizes = [2, 64], strides = [1, 1]} : vector<2x96xf32> to vector<2x64xf32>
    %611 = arith.addf %609, %610 : vector<2x64xf32>
    %612 = arith.negf %611 : vector<2x64xf32>
    %613 = math.exp %612 : vector<2x64xf32>
    %cst_134 = arith.constant 1.000000e+00 : f32
    %614 = vector.broadcast %cst_134 : f32 to vector<2x64xf32>
    %615 = arith.addf %614, %613 : vector<2x64xf32>
    %616 = arith.divf %614, %615 : vector<2x64xf32>
    %617 = vector.extract_strided_slice %616 {offsets = [0, 0], sizes = [2, 32], strides = [1, 1]} : vector<2x64xf32> to vector<2x32xf32>
    %618 = vector.extract_strided_slice %616 {offsets = [0, 32], sizes = [2, 32], strides = [1, 1]} : vector<2x64xf32> to vector<2x32xf32>
    %619 = vector.extract_strided_slice %605 {offsets = [0, 64], sizes = [2, 32], strides = [1, 1]} : vector<2x96xf32> to vector<2x32xf32>
    %620 = vector.extract_strided_slice %608 {offsets = [0, 64], sizes = [2, 32], strides = [1, 1]} : vector<2x96xf32> to vector<2x32xf32>
    %621 = arith.mulf %617, %620 : vector<2x32xf32>
    %622 = arith.addf %619, %621 : vector<2x32xf32>
    %623 = math.tanh %622 : vector<2x32xf32>
    %cst_135 = arith.constant 1.000000e+00 : f32
    %624 = vector.broadcast %cst_135 : f32 to vector<2x32xf32>
    %625 = arith.subf %624, %618 : vector<2x32xf32>
    %626 = arith.mulf %625, %623 : vector<2x32xf32>
    %627 = arith.mulf %618, %604 : vector<2x32xf32>
    %628 = arith.addf %626, %627 : vector<2x32xf32>
    %629 = vector.extract_strided_slice %580 {offsets = [4, 0], sizes = [2, 96], strides = [1, 1]} : vector<8x96xf32> to vector<2x96xf32>
    %cst_136 = arith.constant dense<0.000000e+00> : vector<2x96xf32>
    %630 = tpu.matmul %628, %573, %cst_136 {dimension_numbers = #tpu.dot_dimension_numbers<[1], [0], [0], [1], [0, 0, 1, 1], [], []>} : vector<2x32xf32>, vector<32x96xf32>, vector<2x96xf32> -> vector<2x96xf32>
    %631 = vector.broadcast %575 : vector<1x96xf32> to vector<2x96xf32>
    %632 = arith.addf %630, %631 : vector<2x96xf32>
    %633 = vector.extract_strided_slice %629 {offsets = [0, 0], sizes = [2, 64], strides = [1, 1]} : vector<2x96xf32> to vector<2x64xf32>
    %634 = vector.extract_strided_slice %632 {offsets = [0, 0], sizes = [2, 64], strides = [1, 1]} : vector<2x96xf32> to vector<2x64xf32>
    %635 = arith.addf %633, %634 : vector<2x64xf32>
    %636 = arith.negf %635 : vector<2x64xf32>
    %637 = math.exp %636 : vector<2x64xf32>
    %cst_137 = arith.constant 1.000000e+00 : f32
    %638 = vector.broadcast %cst_137 : f32 to vector<2x64xf32>
    %639 = arith.addf %638, %637 : vector<2x64xf32>
    %640 = arith.divf %638, %639 : vector<2x64xf32>
    %641 = vector.extract_strided_slice %640 {offsets = [0, 0], sizes = [2, 32], strides = [1, 1]} : vector<2x64xf32> to vector<2x32xf32>
    %642 = vector.extract_strided_slice %640 {offsets = [0, 32], sizes = [2, 32], strides = [1, 1]} : vector<2x64xf32> to vector<2x32xf32>
    %643 = vector.extract_strided_slice %629 {offsets = [0, 64], sizes = [2, 32], strides = [1, 1]} : vector<2x96xf32> to vector<2x32xf32>
    %644 = vector.extract_strided_slice %632 {offsets = [0, 64], sizes = [2, 32], strides = [1, 1]} : vector<2x96xf32> to vector<2x32xf32>
    %645 = arith.mulf %641, %644 : vector<2x32xf32>
    %646 = arith.addf %643, %645 : vector<2x32xf32>
    %647 = math.tanh %646 : vector<2x32xf32>
    %cst_138 = arith.constant 1.000000e+00 : f32
    %648 = vector.broadcast %cst_138 : f32 to vector<2x32xf32>
    %649 = arith.subf %648, %642 : vector<2x32xf32>
    %650 = arith.mulf %649, %647 : vector<2x32xf32>
    %651 = arith.mulf %642, %628 : vector<2x32xf32>
    %652 = arith.addf %650, %651 : vector<2x32xf32>
    %653 = vector.extract_strided_slice %580 {offsets = [6, 0], sizes = [2, 96], strides = [1, 1]} : vector<8x96xf32> to vector<2x96xf32>
    %cst_139 = arith.constant dense<0.000000e+00> : vector<2x96xf32>
    %654 = tpu.matmul %652, %573, %cst_139 {dimension_numbers = #tpu.dot_dimension_numbers<[1], [0], [0], [1], [0, 0, 1, 1], [], []>} : vector<2x32xf32>, vector<32x96xf32>, vector<2x96xf32> -> vector<2x96xf32>
    %655 = vector.broadcast %575 : vector<1x96xf32> to vector<2x96xf32>
    %656 = arith.addf %654, %655 : vector<2x96xf32>
    %657 = vector.extract_strided_slice %653 {offsets = [0, 0], sizes = [2, 64], strides = [1, 1]} : vector<2x96xf32> to vector<2x64xf32>
    %658 = vector.extract_strided_slice %656 {offsets = [0, 0], sizes = [2, 64], strides = [1, 1]} : vector<2x96xf32> to vector<2x64xf32>
    %659 = arith.addf %657, %658 : vector<2x64xf32>
    %660 = arith.negf %659 : vector<2x64xf32>
    %661 = math.exp %660 : vector<2x64xf32>
    %cst_140 = arith.constant 1.000000e+00 : f32
    %662 = vector.broadcast %cst_140 : f32 to vector<2x64xf32>
    %663 = arith.addf %662, %661 : vector<2x64xf32>
    %664 = arith.divf %662, %663 : vector<2x64xf32>
    %665 = vector.extract_strided_slice %664 {offsets = [0, 0], sizes = [2, 32], strides = [1, 1]} : vector<2x64xf32> to vector<2x32xf32>
    %666 = vector.extract_strided_slice %664 {offsets = [0, 32], sizes = [2, 32], strides = [1, 1]} : vector<2x64xf32> to vector<2x32xf32>
    %667 = vector.extract_strided_slice %653 {offsets = [0, 64], sizes = [2, 32], strides = [1, 1]} : vector<2x96xf32> to vector<2x32xf32>
    %668 = vector.extract_strided_slice %656 {offsets = [0, 64], sizes = [2, 32], strides = [1, 1]} : vector<2x96xf32> to vector<2x32xf32>
    %669 = arith.mulf %665, %668 : vector<2x32xf32>
    %670 = arith.addf %667, %669 : vector<2x32xf32>
    %671 = math.tanh %670 : vector<2x32xf32>
    %cst_141 = arith.constant 1.000000e+00 : f32
    %672 = vector.broadcast %cst_141 : f32 to vector<2x32xf32>
    %673 = arith.subf %672, %666 : vector<2x32xf32>
    %674 = arith.mulf %673, %671 : vector<2x32xf32>
    %675 = arith.mulf %666, %652 : vector<2x32xf32>
    %676 = arith.addf %674, %675 : vector<2x32xf32>
    %677 = tpu.concatenate %604, %628, %652, %676 in 0 : vector<2x32xf32>, vector<2x32xf32>, vector<2x32xf32>, vector<2x32xf32> -> vector<8x32xf32>
    %678 = arith.index_cast %578 : i32 to index
    %c0_142 = arith.constant 0 : index
    %679 = vector.load %arg16[%678, %c0_142] : memref<40x32xf32, #tpu.memory_space<vmem>>, vector<8x32xf32>
    tpu.vector_store %arg16[%678, %c0_142], %677 {strides = array<i32>} : memref<40x32xf32, #tpu.memory_space<vmem>>, vector<8x32xf32>,
    %c1_i32_143 = arith.constant 1 : i32
    %c8_i32_144 = arith.constant 8 : i32
    %680 = arith.muli %c1_i32_143, %c8_i32_144 : i32
    %681 = tpu.assume_multiple %680, 8 : i32
    %682 = arith.index_cast %681 : i32 to index
    %c0_145 = arith.constant 0 : index
    %683 = vector.load %arg17[%682, %c0_145] : memref<40x96xf32, #tpu.memory_space<vmem>>, vector<8x96xf32>
    %684 = vector.extract_strided_slice %683 {offsets = [0, 0], sizes = [2, 96], strides = [1, 1]} : vector<8x96xf32> to vector<2x96xf32>
    %cst_146 = arith.constant dense<0.000000e+00> : vector<2x96xf32>
    %685 = tpu.matmul %676, %573, %cst_146 {dimension_numbers = #tpu.dot_dimension_numbers<[1], [0], [0], [1], [0, 0, 1, 1], [], []>} : vector<2x32xf32>, vector<32x96xf32>, vector<2x96xf32> -> vector<2x96xf32>
    %686 = vector.broadcast %575 : vector<1x96xf32> to vector<2x96xf32>
    %687 = arith.addf %685, %686 : vector<2x96xf32>
    %688 = vector.extract_strided_slice %684 {offsets = [0, 0], sizes = [2, 64], strides = [1, 1]} : vector<2x96xf32> to vector<2x64xf32>
    %689 = vector.extract_strided_slice %687 {offsets = [0, 0], sizes = [2, 64], strides = [1, 1]} : vector<2x96xf32> to vector<2x64xf32>
    %690 = arith.addf %688, %689 : vector<2x64xf32>
    %691 = arith.negf %690 : vector<2x64xf32>
    %692 = math.exp %691 : vector<2x64xf32>
    %cst_147 = arith.constant 1.000000e+00 : f32
    %693 = vector.broadcast %cst_147 : f32 to vector<2x64xf32>
    %694 = arith.addf %693, %692 : vector<2x64xf32>
    %695 = arith.divf %693, %694 : vector<2x64xf32>
    %696 = vector.extract_strided_slice %695 {offsets = [0, 0], sizes = [2, 32], strides = [1, 1]} : vector<2x64xf32> to vector<2x32xf32>
    %697 = vector.extract_strided_slice %695 {offsets = [0, 32], sizes = [2, 32], strides = [1, 1]} : vector<2x64xf32> to vector<2x32xf32>
    %698 = vector.extract_strided_slice %684 {offsets = [0, 64], sizes = [2, 32], strides = [1, 1]} : vector<2x96xf32> to vector<2x32xf32>
    %699 = vector.extract_strided_slice %687 {offsets = [0, 64], sizes = [2, 32], strides = [1, 1]} : vector<2x96xf32> to vector<2x32xf32>
    %700 = arith.mulf %696, %699 : vector<2x32xf32>
    %701 = arith.addf %698, %700 : vector<2x32xf32>
    %702 = math.tanh %701 : vector<2x32xf32>
    %cst_148 = arith.constant 1.000000e+00 : f32
    %703 = vector.broadcast %cst_148 : f32 to vector<2x32xf32>
    %704 = arith.subf %703, %697 : vector<2x32xf32>
    %705 = arith.mulf %704, %702 : vector<2x32xf32>
    %706 = arith.mulf %697, %676 : vector<2x32xf32>
    %707 = arith.addf %705, %706 : vector<2x32xf32>
    %708 = vector.extract_strided_slice %683 {offsets = [2, 0], sizes = [2, 96], strides = [1, 1]} : vector<8x96xf32> to vector<2x96xf32>
    %cst_149 = arith.constant dense<0.000000e+00> : vector<2x96xf32>
    %709 = tpu.matmul %707, %573, %cst_149 {dimension_numbers = #tpu.dot_dimension_numbers<[1], [0], [0], [1], [0, 0, 1, 1], [], []>} : vector<2x32xf32>, vector<32x96xf32>, vector<2x96xf32> -> vector<2x96xf32>
    %710 = vector.broadcast %575 : vector<1x96xf32> to vector<2x96xf32>
    %711 = arith.addf %709, %710 : vector<2x96xf32>
    %712 = vector.extract_strided_slice %708 {offsets = [0, 0], sizes = [2, 64], strides = [1, 1]} : vector<2x96xf32> to vector<2x64xf32>
    %713 = vector.extract_strided_slice %711 {offsets = [0, 0], sizes = [2, 64], strides = [1, 1]} : vector<2x96xf32> to vector<2x64xf32>
    %714 = arith.addf %712, %713 : vector<2x64xf32>
    %715 = arith.negf %714 : vector<2x64xf32>
    %716 = math.exp %715 : vector<2x64xf32>
    %cst_150 = arith.constant 1.000000e+00 : f32
    %717 = vector.broadcast %cst_150 : f32 to vector<2x64xf32>
    %718 = arith.addf %717, %716 : vector<2x64xf32>
    %719 = arith.divf %717, %718 : vector<2x64xf32>
    %720 = vector.extract_strided_slice %719 {offsets = [0, 0], sizes = [2, 32], strides = [1, 1]} : vector<2x64xf32> to vector<2x32xf32>
    %721 = vector.extract_strided_slice %719 {offsets = [0, 32], sizes = [2, 32], strides = [1, 1]} : vector<2x64xf32> to vector<2x32xf32>
    %722 = vector.extract_strided_slice %708 {offsets = [0, 64], sizes = [2, 32], strides = [1, 1]} : vector<2x96xf32> to vector<2x32xf32>
    %723 = vector.extract_strided_slice %711 {offsets = [0, 64], sizes = [2, 32], strides = [1, 1]} : vector<2x96xf32> to vector<2x32xf32>
    %724 = arith.mulf %720, %723 : vector<2x32xf32>
    %725 = arith.addf %722, %724 : vector<2x32xf32>
    %726 = math.tanh %725 : vector<2x32xf32>
    %cst_151 = arith.constant 1.000000e+00 : f32
    %727 = vector.broadcast %cst_151 : f32 to vector<2x32xf32>
    %728 = arith.subf %727, %721 : vector<2x32xf32>
    %729 = arith.mulf %728, %726 : vector<2x32xf32>
    %730 = arith.mulf %721, %707 : vector<2x32xf32>
    %731 = arith.addf %729, %730 : vector<2x32xf32>
    %732 = vector.extract_strided_slice %683 {offsets = [4, 0], sizes = [2, 96], strides = [1, 1]} : vector<8x96xf32> to vector<2x96xf32>
    %cst_152 = arith.constant dense<0.000000e+00> : vector<2x96xf32>
    %733 = tpu.matmul %731, %573, %cst_152 {dimension_numbers = #tpu.dot_dimension_numbers<[1], [0], [0], [1], [0, 0, 1, 1], [], []>} : vector<2x32xf32>, vector<32x96xf32>, vector<2x96xf32> -> vector<2x96xf32>
    %734 = vector.broadcast %575 : vector<1x96xf32> to vector<2x96xf32>
    %735 = arith.addf %733, %734 : vector<2x96xf32>
    %736 = vector.extract_strided_slice %732 {offsets = [0, 0], sizes = [2, 64], strides = [1, 1]} : vector<2x96xf32> to vector<2x64xf32>
    %737 = vector.extract_strided_slice %735 {offsets = [0, 0], sizes = [2, 64], strides = [1, 1]} : vector<2x96xf32> to vector<2x64xf32>
    %738 = arith.addf %736, %737 : vector<2x64xf32>
    %739 = arith.negf %738 : vector<2x64xf32>
    %740 = math.exp %739 : vector<2x64xf32>
    %cst_153 = arith.constant 1.000000e+00 : f32
    %741 = vector.broadcast %cst_153 : f32 to vector<2x64xf32>
    %742 = arith.addf %741, %740 : vector<2x64xf32>
    %743 = arith.divf %741, %742 : vector<2x64xf32>
    %744 = vector.extract_strided_slice %743 {offsets = [0, 0], sizes = [2, 32], strides = [1, 1]} : vector<2x64xf32> to vector<2x32xf32>
    %745 = vector.extract_strided_slice %743 {offsets = [0, 32], sizes = [2, 32], strides = [1, 1]} : vector<2x64xf32> to vector<2x32xf32>
    %746 = vector.extract_strided_slice %732 {offsets = [0, 64], sizes = [2, 32], strides = [1, 1]} : vector<2x96xf32> to vector<2x32xf32>
    %747 = vector.extract_strided_slice %735 {offsets = [0, 64], sizes = [2, 32], strides = [1, 1]} : vector<2x96xf32> to vector<2x32xf32>
    %748 = arith.mulf %744, %747 : vector<2x32xf32>
    %749 = arith.addf %746, %748 : vector<2x32xf32>
    %750 = math.tanh %749 : vector<2x32xf32>
    %cst_154 = arith.constant 1.000000e+00 : f32
    %751 = vector.broadcast %cst_154 : f32 to vector<2x32xf32>
    %752 = arith.subf %751, %745 : vector<2x32xf32>
    %753 = arith.mulf %752, %750 : vector<2x32xf32>
    %754 = arith.mulf %745, %731 : vector<2x32xf32>
    %755 = arith.addf %753, %754 : vector<2x32xf32>
    %756 = vector.extract_strided_slice %683 {offsets = [6, 0], sizes = [2, 96], strides = [1, 1]} : vector<8x96xf32> to vector<2x96xf32>
    %cst_155 = arith.constant dense<0.000000e+00> : vector<2x96xf32>
    %757 = tpu.matmul %755, %573, %cst_155 {dimension_numbers = #tpu.dot_dimension_numbers<[1], [0], [0], [1], [0, 0, 1, 1], [], []>} : vector<2x32xf32>, vector<32x96xf32>, vector<2x96xf32> -> vector<2x96xf32>
    %758 = vector.broadcast %575 : vector<1x96xf32> to vector<2x96xf32>
    %759 = arith.addf %757, %758 : vector<2x96xf32>
    %760 = vector.extract_strided_slice %756 {offsets = [0, 0], sizes = [2, 64], strides = [1, 1]} : vector<2x96xf32> to vector<2x64xf32>
    %761 = vector.extract_strided_slice %759 {offsets = [0, 0], sizes = [2, 64], strides = [1, 1]} : vector<2x96xf32> to vector<2x64xf32>
    %762 = arith.addf %760, %761 : vector<2x64xf32>
    %763 = arith.negf %762 : vector<2x64xf32>
    %764 = math.exp %763 : vector<2x64xf32>
    %cst_156 = arith.constant 1.000000e+00 : f32
    %765 = vector.broadcast %cst_156 : f32 to vector<2x64xf32>
    %766 = arith.addf %765, %764 : vector<2x64xf32>
    %767 = arith.divf %765, %766 : vector<2x64xf32>
    %768 = vector.extract_strided_slice %767 {offsets = [0, 0], sizes = [2, 32], strides = [1, 1]} : vector<2x64xf32> to vector<2x32xf32>
    %769 = vector.extract_strided_slice %767 {offsets = [0, 32], sizes = [2, 32], strides = [1, 1]} : vector<2x64xf32> to vector<2x32xf32>
    %770 = vector.extract_strided_slice %756 {offsets = [0, 64], sizes = [2, 32], strides = [1, 1]} : vector<2x96xf32> to vector<2x32xf32>
    %771 = vector.extract_strided_slice %759 {offsets = [0, 64], sizes = [2, 32], strides = [1, 1]} : vector<2x96xf32> to vector<2x32xf32>
    %772 = arith.mulf %768, %771 : vector<2x32xf32>
    %773 = arith.addf %770, %772 : vector<2x32xf32>
    %774 = math.tanh %773 : vector<2x32xf32>
    %cst_157 = arith.constant 1.000000e+00 : f32
    %775 = vector.broadcast %cst_157 : f32 to vector<2x32xf32>
    %776 = arith.subf %775, %769 : vector<2x32xf32>
    %777 = arith.mulf %776, %774 : vector<2x32xf32>
    %778 = arith.mulf %769, %755 : vector<2x32xf32>
    %779 = arith.addf %777, %778 : vector<2x32xf32>
    %780 = tpu.concatenate %707, %731, %755, %779 in 0 : vector<2x32xf32>, vector<2x32xf32>, vector<2x32xf32>, vector<2x32xf32> -> vector<8x32xf32>
    %781 = arith.index_cast %681 : i32 to index
    %c0_158 = arith.constant 0 : index
    %782 = vector.load %arg16[%781, %c0_158] : memref<40x32xf32, #tpu.memory_space<vmem>>, vector<8x32xf32>
    tpu.vector_store %arg16[%781, %c0_158], %780 {strides = array<i32>} : memref<40x32xf32, #tpu.memory_space<vmem>>, vector<8x32xf32>,
    %c2_i32_159 = arith.constant 2 : i32
    %c8_i32_160 = arith.constant 8 : i32
    %783 = arith.muli %c2_i32_159, %c8_i32_160 : i32
    %784 = tpu.assume_multiple %783, 8 : i32
    %785 = arith.index_cast %784 : i32 to index
    %c0_161 = arith.constant 0 : index
    %786 = vector.load %arg17[%785, %c0_161] : memref<40x96xf32, #tpu.memory_space<vmem>>, vector<8x96xf32>
    %787 = vector.extract_strided_slice %786 {offsets = [0, 0], sizes = [2, 96], strides = [1, 1]} : vector<8x96xf32> to vector<2x96xf32>
    %cst_162 = arith.constant dense<0.000000e+00> : vector<2x96xf32>
    %788 = tpu.matmul %779, %573, %cst_162 {dimension_numbers = #tpu.dot_dimension_numbers<[1], [0], [0], [1], [0, 0, 1, 1], [], []>} : vector<2x32xf32>, vector<32x96xf32>, vector<2x96xf32> -> vector<2x96xf32>
    %789 = vector.broadcast %575 : vector<1x96xf32> to vector<2x96xf32>
    %790 = arith.addf %788, %789 : vector<2x96xf32>
    %791 = vector.extract_strided_slice %787 {offsets = [0, 0], sizes = [2, 64], strides = [1, 1]} : vector<2x96xf32> to vector<2x64xf32>
    %792 = vector.extract_strided_slice %790 {offsets = [0, 0], sizes = [2, 64], strides = [1, 1]} : vector<2x96xf32> to vector<2x64xf32>
    %793 = arith.addf %791, %792 : vector<2x64xf32>
    %794 = arith.negf %793 : vector<2x64xf32>
    %795 = math.exp %794 : vector<2x64xf32>
    %cst_163 = arith.constant 1.000000e+00 : f32
    %796 = vector.broadcast %cst_163 : f32 to vector<2x64xf32>
    %797 = arith.addf %796, %795 : vector<2x64xf32>
    %798 = arith.divf %796, %797 : vector<2x64xf32>
    %799 = vector.extract_strided_slice %798 {offsets = [0, 0], sizes = [2, 32], strides = [1, 1]} : vector<2x64xf32> to vector<2x32xf32>
    %800 = vector.extract_strided_slice %798 {offsets = [0, 32], sizes = [2, 32], strides = [1, 1]} : vector<2x64xf32> to vector<2x32xf32>
    %801 = vector.extract_strided_slice %787 {offsets = [0, 64], sizes = [2, 32], strides = [1, 1]} : vector<2x96xf32> to vector<2x32xf32>
    %802 = vector.extract_strided_slice %790 {offsets = [0, 64], sizes = [2, 32], strides = [1, 1]} : vector<2x96xf32> to vector<2x32xf32>
    %803 = arith.mulf %799, %802 : vector<2x32xf32>
    %804 = arith.addf %801, %803 : vector<2x32xf32>
    %805 = math.tanh %804 : vector<2x32xf32>
    %cst_164 = arith.constant 1.000000e+00 : f32
    %806 = vector.broadcast %cst_164 : f32 to vector<2x32xf32>
    %807 = arith.subf %806, %800 : vector<2x32xf32>
    %808 = arith.mulf %807, %805 : vector<2x32xf32>
    %809 = arith.mulf %800, %779 : vector<2x32xf32>
    %810 = arith.addf %808, %809 : vector<2x32xf32>
    %811 = vector.extract_strided_slice %786 {offsets = [2, 0], sizes = [2, 96], strides = [1, 1]} : vector<8x96xf32> to vector<2x96xf32>
    %cst_165 = arith.constant dense<0.000000e+00> : vector<2x96xf32>
    %812 = tpu.matmul %810, %573, %cst_165 {dimension_numbers = #tpu.dot_dimension_numbers<[1], [0], [0], [1], [0, 0, 1, 1], [], []>} : vector<2x32xf32>, vector<32x96xf32>, vector<2x96xf32> -> vector<2x96xf32>
    %813 = vector.broadcast %575 : vector<1x96xf32> to vector<2x96xf32>
    %814 = arith.addf %812, %813 : vector<2x96xf32>
    %815 = vector.extract_strided_slice %811 {offsets = [0, 0], sizes = [2, 64], strides = [1, 1]} : vector<2x96xf32> to vector<2x64xf32>
    %816 = vector.extract_strided_slice %814 {offsets = [0, 0], sizes = [2, 64], strides = [1, 1]} : vector<2x96xf32> to vector<2x64xf32>
    %817 = arith.addf %815, %816 : vector<2x64xf32>
    %818 = arith.negf %817 : vector<2x64xf32>
    %819 = math.exp %818 : vector<2x64xf32>
    %cst_166 = arith.constant 1.000000e+00 : f32
    %820 = vector.broadcast %cst_166 : f32 to vector<2x64xf32>
    %821 = arith.addf %820, %819 : vector<2x64xf32>
    %822 = arith.divf %820, %821 : vector<2x64xf32>
    %823 = vector.extract_strided_slice %822 {offsets = [0, 0], sizes = [2, 32], strides = [1, 1]} : vector<2x64xf32> to vector<2x32xf32>
    %824 = vector.extract_strided_slice %822 {offsets = [0, 32], sizes = [2, 32], strides = [1, 1]} : vector<2x64xf32> to vector<2x32xf32>
    %825 = vector.extract_strided_slice %811 {offsets = [0, 64], sizes = [2, 32], strides = [1, 1]} : vector<2x96xf32> to vector<2x32xf32>
    %826 = vector.extract_strided_slice %814 {offsets = [0, 64], sizes = [2, 32], strides = [1, 1]} : vector<2x96xf32> to vector<2x32xf32>
    %827 = arith.mulf %823, %826 : vector<2x32xf32>
    %828 = arith.addf %825, %827 : vector<2x32xf32>
    %829 = math.tanh %828 : vector<2x32xf32>
    %cst_167 = arith.constant 1.000000e+00 : f32
    %830 = vector.broadcast %cst_167 : f32 to vector<2x32xf32>
    %831 = arith.subf %830, %824 : vector<2x32xf32>
    %832 = arith.mulf %831, %829 : vector<2x32xf32>
    %833 = arith.mulf %824, %810 : vector<2x32xf32>
    %834 = arith.addf %832, %833 : vector<2x32xf32>
    %835 = vector.extract_strided_slice %786 {offsets = [4, 0], sizes = [2, 96], strides = [1, 1]} : vector<8x96xf32> to vector<2x96xf32>
    %cst_168 = arith.constant dense<0.000000e+00> : vector<2x96xf32>
    %836 = tpu.matmul %834, %573, %cst_168 {dimension_numbers = #tpu.dot_dimension_numbers<[1], [0], [0], [1], [0, 0, 1, 1], [], []>} : vector<2x32xf32>, vector<32x96xf32>, vector<2x96xf32> -> vector<2x96xf32>
    %837 = vector.broadcast %575 : vector<1x96xf32> to vector<2x96xf32>
    %838 = arith.addf %836, %837 : vector<2x96xf32>
    %839 = vector.extract_strided_slice %835 {offsets = [0, 0], sizes = [2, 64], strides = [1, 1]} : vector<2x96xf32> to vector<2x64xf32>
    %840 = vector.extract_strided_slice %838 {offsets = [0, 0], sizes = [2, 64], strides = [1, 1]} : vector<2x96xf32> to vector<2x64xf32>
    %841 = arith.addf %839, %840 : vector<2x64xf32>
    %842 = arith.negf %841 : vector<2x64xf32>
    %843 = math.exp %842 : vector<2x64xf32>
    %cst_169 = arith.constant 1.000000e+00 : f32
    %844 = vector.broadcast %cst_169 : f32 to vector<2x64xf32>
    %845 = arith.addf %844, %843 : vector<2x64xf32>
    %846 = arith.divf %844, %845 : vector<2x64xf32>
    %847 = vector.extract_strided_slice %846 {offsets = [0, 0], sizes = [2, 32], strides = [1, 1]} : vector<2x64xf32> to vector<2x32xf32>
    %848 = vector.extract_strided_slice %846 {offsets = [0, 32], sizes = [2, 32], strides = [1, 1]} : vector<2x64xf32> to vector<2x32xf32>
    %849 = vector.extract_strided_slice %835 {offsets = [0, 64], sizes = [2, 32], strides = [1, 1]} : vector<2x96xf32> to vector<2x32xf32>
    %850 = vector.extract_strided_slice %838 {offsets = [0, 64], sizes = [2, 32], strides = [1, 1]} : vector<2x96xf32> to vector<2x32xf32>
    %851 = arith.mulf %847, %850 : vector<2x32xf32>
    %852 = arith.addf %849, %851 : vector<2x32xf32>
    %853 = math.tanh %852 : vector<2x32xf32>
    %cst_170 = arith.constant 1.000000e+00 : f32
    %854 = vector.broadcast %cst_170 : f32 to vector<2x32xf32>
    %855 = arith.subf %854, %848 : vector<2x32xf32>
    %856 = arith.mulf %855, %853 : vector<2x32xf32>
    %857 = arith.mulf %848, %834 : vector<2x32xf32>
    %858 = arith.addf %856, %857 : vector<2x32xf32>
    %859 = vector.extract_strided_slice %786 {offsets = [6, 0], sizes = [2, 96], strides = [1, 1]} : vector<8x96xf32> to vector<2x96xf32>
    %cst_171 = arith.constant dense<0.000000e+00> : vector<2x96xf32>
    %860 = tpu.matmul %858, %573, %cst_171 {dimension_numbers = #tpu.dot_dimension_numbers<[1], [0], [0], [1], [0, 0, 1, 1], [], []>} : vector<2x32xf32>, vector<32x96xf32>, vector<2x96xf32> -> vector<2x96xf32>
    %861 = vector.broadcast %575 : vector<1x96xf32> to vector<2x96xf32>
    %862 = arith.addf %860, %861 : vector<2x96xf32>
    %863 = vector.extract_strided_slice %859 {offsets = [0, 0], sizes = [2, 64], strides = [1, 1]} : vector<2x96xf32> to vector<2x64xf32>
    %864 = vector.extract_strided_slice %862 {offsets = [0, 0], sizes = [2, 64], strides = [1, 1]} : vector<2x96xf32> to vector<2x64xf32>
    %865 = arith.addf %863, %864 : vector<2x64xf32>
    %866 = arith.negf %865 : vector<2x64xf32>
    %867 = math.exp %866 : vector<2x64xf32>
    %cst_172 = arith.constant 1.000000e+00 : f32
    %868 = vector.broadcast %cst_172 : f32 to vector<2x64xf32>
    %869 = arith.addf %868, %867 : vector<2x64xf32>
    %870 = arith.divf %868, %869 : vector<2x64xf32>
    %871 = vector.extract_strided_slice %870 {offsets = [0, 0], sizes = [2, 32], strides = [1, 1]} : vector<2x64xf32> to vector<2x32xf32>
    %872 = vector.extract_strided_slice %870 {offsets = [0, 32], sizes = [2, 32], strides = [1, 1]} : vector<2x64xf32> to vector<2x32xf32>
    %873 = vector.extract_strided_slice %859 {offsets = [0, 64], sizes = [2, 32], strides = [1, 1]} : vector<2x96xf32> to vector<2x32xf32>
    %874 = vector.extract_strided_slice %862 {offsets = [0, 64], sizes = [2, 32], strides = [1, 1]} : vector<2x96xf32> to vector<2x32xf32>
    %875 = arith.mulf %871, %874 : vector<2x32xf32>
    %876 = arith.addf %873, %875 : vector<2x32xf32>
    %877 = math.tanh %876 : vector<2x32xf32>
    %cst_173 = arith.constant 1.000000e+00 : f32
    %878 = vector.broadcast %cst_173 : f32 to vector<2x32xf32>
    %879 = arith.subf %878, %872 : vector<2x32xf32>
    %880 = arith.mulf %879, %877 : vector<2x32xf32>
    %881 = arith.mulf %872, %858 : vector<2x32xf32>
    %882 = arith.addf %880, %881 : vector<2x32xf32>
    %883 = tpu.concatenate %810, %834, %858, %882 in 0 : vector<2x32xf32>, vector<2x32xf32>, vector<2x32xf32>, vector<2x32xf32> -> vector<8x32xf32>
    %884 = arith.index_cast %784 : i32 to index
    %c0_174 = arith.constant 0 : index
    %885 = vector.load %arg16[%884, %c0_174] : memref<40x32xf32, #tpu.memory_space<vmem>>, vector<8x32xf32>
    tpu.vector_store %arg16[%884, %c0_174], %883 {strides = array<i32>} : memref<40x32xf32, #tpu.memory_space<vmem>>, vector<8x32xf32>,
    %c3_i32_175 = arith.constant 3 : i32
    %c8_i32_176 = arith.constant 8 : i32
    %886 = arith.muli %c3_i32_175, %c8_i32_176 : i32
    %887 = tpu.assume_multiple %886, 8 : i32
    %888 = arith.index_cast %887 : i32 to index
    %c0_177 = arith.constant 0 : index
    %889 = vector.load %arg17[%888, %c0_177] : memref<40x96xf32, #tpu.memory_space<vmem>>, vector<8x96xf32>
    %890 = vector.extract_strided_slice %889 {offsets = [0, 0], sizes = [2, 96], strides = [1, 1]} : vector<8x96xf32> to vector<2x96xf32>
    %cst_178 = arith.constant dense<0.000000e+00> : vector<2x96xf32>
    %891 = tpu.matmul %882, %573, %cst_178 {dimension_numbers = #tpu.dot_dimension_numbers<[1], [0], [0], [1], [0, 0, 1, 1], [], []>} : vector<2x32xf32>, vector<32x96xf32>, vector<2x96xf32> -> vector<2x96xf32>
    %892 = vector.broadcast %575 : vector<1x96xf32> to vector<2x96xf32>
    %893 = arith.addf %891, %892 : vector<2x96xf32>
    %894 = vector.extract_strided_slice %890 {offsets = [0, 0], sizes = [2, 64], strides = [1, 1]} : vector<2x96xf32> to vector<2x64xf32>
    %895 = vector.extract_strided_slice %893 {offsets = [0, 0], sizes = [2, 64], strides = [1, 1]} : vector<2x96xf32> to vector<2x64xf32>
    %896 = arith.addf %894, %895 : vector<2x64xf32>
    %897 = arith.negf %896 : vector<2x64xf32>
    %898 = math.exp %897 : vector<2x64xf32>
    %cst_179 = arith.constant 1.000000e+00 : f32
    %899 = vector.broadcast %cst_179 : f32 to vector<2x64xf32>
    %900 = arith.addf %899, %898 : vector<2x64xf32>
    %901 = arith.divf %899, %900 : vector<2x64xf32>
    %902 = vector.extract_strided_slice %901 {offsets = [0, 0], sizes = [2, 32], strides = [1, 1]} : vector<2x64xf32> to vector<2x32xf32>
    %903 = vector.extract_strided_slice %901 {offsets = [0, 32], sizes = [2, 32], strides = [1, 1]} : vector<2x64xf32> to vector<2x32xf32>
    %904 = vector.extract_strided_slice %890 {offsets = [0, 64], sizes = [2, 32], strides = [1, 1]} : vector<2x96xf32> to vector<2x32xf32>
    %905 = vector.extract_strided_slice %893 {offsets = [0, 64], sizes = [2, 32], strides = [1, 1]} : vector<2x96xf32> to vector<2x32xf32>
    %906 = arith.mulf %902, %905 : vector<2x32xf32>
    %907 = arith.addf %904, %906 : vector<2x32xf32>
    %908 = math.tanh %907 : vector<2x32xf32>
    %cst_180 = arith.constant 1.000000e+00 : f32
    %909 = vector.broadcast %cst_180 : f32 to vector<2x32xf32>
    %910 = arith.subf %909, %903 : vector<2x32xf32>
    %911 = arith.mulf %910, %908 : vector<2x32xf32>
    %912 = arith.mulf %903, %882 : vector<2x32xf32>
    %913 = arith.addf %911, %912 : vector<2x32xf32>
    %914 = vector.extract_strided_slice %889 {offsets = [2, 0], sizes = [2, 96], strides = [1, 1]} : vector<8x96xf32> to vector<2x96xf32>
    %cst_181 = arith.constant dense<0.000000e+00> : vector<2x96xf32>
    %915 = tpu.matmul %913, %573, %cst_181 {dimension_numbers = #tpu.dot_dimension_numbers<[1], [0], [0], [1], [0, 0, 1, 1], [], []>} : vector<2x32xf32>, vector<32x96xf32>, vector<2x96xf32> -> vector<2x96xf32>
    %916 = vector.broadcast %575 : vector<1x96xf32> to vector<2x96xf32>
    %917 = arith.addf %915, %916 : vector<2x96xf32>
    %918 = vector.extract_strided_slice %914 {offsets = [0, 0], sizes = [2, 64], strides = [1, 1]} : vector<2x96xf32> to vector<2x64xf32>
    %919 = vector.extract_strided_slice %917 {offsets = [0, 0], sizes = [2, 64], strides = [1, 1]} : vector<2x96xf32> to vector<2x64xf32>
    %920 = arith.addf %918, %919 : vector<2x64xf32>
    %921 = arith.negf %920 : vector<2x64xf32>
    %922 = math.exp %921 : vector<2x64xf32>
    %cst_182 = arith.constant 1.000000e+00 : f32
    %923 = vector.broadcast %cst_182 : f32 to vector<2x64xf32>
    %924 = arith.addf %923, %922 : vector<2x64xf32>
    %925 = arith.divf %923, %924 : vector<2x64xf32>
    %926 = vector.extract_strided_slice %925 {offsets = [0, 0], sizes = [2, 32], strides = [1, 1]} : vector<2x64xf32> to vector<2x32xf32>
    %927 = vector.extract_strided_slice %925 {offsets = [0, 32], sizes = [2, 32], strides = [1, 1]} : vector<2x64xf32> to vector<2x32xf32>
    %928 = vector.extract_strided_slice %914 {offsets = [0, 64], sizes = [2, 32], strides = [1, 1]} : vector<2x96xf32> to vector<2x32xf32>
    %929 = vector.extract_strided_slice %917 {offsets = [0, 64], sizes = [2, 32], strides = [1, 1]} : vector<2x96xf32> to vector<2x32xf32>
    %930 = arith.mulf %926, %929 : vector<2x32xf32>
    %931 = arith.addf %928, %930 : vector<2x32xf32>
    %932 = math.tanh %931 : vector<2x32xf32>
    %cst_183 = arith.constant 1.000000e+00 : f32
    %933 = vector.broadcast %cst_183 : f32 to vector<2x32xf32>
    %934 = arith.subf %933, %927 : vector<2x32xf32>
    %935 = arith.mulf %934, %932 : vector<2x32xf32>
    %936 = arith.mulf %927, %913 : vector<2x32xf32>
    %937 = arith.addf %935, %936 : vector<2x32xf32>
    %938 = vector.extract_strided_slice %889 {offsets = [4, 0], sizes = [2, 96], strides = [1, 1]} : vector<8x96xf32> to vector<2x96xf32>
    %cst_184 = arith.constant dense<0.000000e+00> : vector<2x96xf32>
    %939 = tpu.matmul %937, %573, %cst_184 {dimension_numbers = #tpu.dot_dimension_numbers<[1], [0], [0], [1], [0, 0, 1, 1], [], []>} : vector<2x32xf32>, vector<32x96xf32>, vector<2x96xf32> -> vector<2x96xf32>
    %940 = vector.broadcast %575 : vector<1x96xf32> to vector<2x96xf32>
    %941 = arith.addf %939, %940 : vector<2x96xf32>
    %942 = vector.extract_strided_slice %938 {offsets = [0, 0], sizes = [2, 64], strides = [1, 1]} : vector<2x96xf32> to vector<2x64xf32>
    %943 = vector.extract_strided_slice %941 {offsets = [0, 0], sizes = [2, 64], strides = [1, 1]} : vector<2x96xf32> to vector<2x64xf32>
    %944 = arith.addf %942, %943 : vector<2x64xf32>
    %945 = arith.negf %944 : vector<2x64xf32>
    %946 = math.exp %945 : vector<2x64xf32>
    %cst_185 = arith.constant 1.000000e+00 : f32
    %947 = vector.broadcast %cst_185 : f32 to vector<2x64xf32>
    %948 = arith.addf %947, %946 : vector<2x64xf32>
    %949 = arith.divf %947, %948 : vector<2x64xf32>
    %950 = vector.extract_strided_slice %949 {offsets = [0, 0], sizes = [2, 32], strides = [1, 1]} : vector<2x64xf32> to vector<2x32xf32>
    %951 = vector.extract_strided_slice %949 {offsets = [0, 32], sizes = [2, 32], strides = [1, 1]} : vector<2x64xf32> to vector<2x32xf32>
    %952 = vector.extract_strided_slice %938 {offsets = [0, 64], sizes = [2, 32], strides = [1, 1]} : vector<2x96xf32> to vector<2x32xf32>
    %953 = vector.extract_strided_slice %941 {offsets = [0, 64], sizes = [2, 32], strides = [1, 1]} : vector<2x96xf32> to vector<2x32xf32>
    %954 = arith.mulf %950, %953 : vector<2x32xf32>
    %955 = arith.addf %952, %954 : vector<2x32xf32>
    %956 = math.tanh %955 : vector<2x32xf32>
    %cst_186 = arith.constant 1.000000e+00 : f32
    %957 = vector.broadcast %cst_186 : f32 to vector<2x32xf32>
    %958 = arith.subf %957, %951 : vector<2x32xf32>
    %959 = arith.mulf %958, %956 : vector<2x32xf32>
    %960 = arith.mulf %951, %937 : vector<2x32xf32>
    %961 = arith.addf %959, %960 : vector<2x32xf32>
    %962 = vector.extract_strided_slice %889 {offsets = [6, 0], sizes = [2, 96], strides = [1, 1]} : vector<8x96xf32> to vector<2x96xf32>
    %cst_187 = arith.constant dense<0.000000e+00> : vector<2x96xf32>
    %963 = tpu.matmul %961, %573, %cst_187 {dimension_numbers = #tpu.dot_dimension_numbers<[1], [0], [0], [1], [0, 0, 1, 1], [], []>} : vector<2x32xf32>, vector<32x96xf32>, vector<2x96xf32> -> vector<2x96xf32>
    %964 = vector.broadcast %575 : vector<1x96xf32> to vector<2x96xf32>
    %965 = arith.addf %963, %964 : vector<2x96xf32>
    %966 = vector.extract_strided_slice %962 {offsets = [0, 0], sizes = [2, 64], strides = [1, 1]} : vector<2x96xf32> to vector<2x64xf32>
    %967 = vector.extract_strided_slice %965 {offsets = [0, 0], sizes = [2, 64], strides = [1, 1]} : vector<2x96xf32> to vector<2x64xf32>
    %968 = arith.addf %966, %967 : vector<2x64xf32>
    %969 = arith.negf %968 : vector<2x64xf32>
    %970 = math.exp %969 : vector<2x64xf32>
    %cst_188 = arith.constant 1.000000e+00 : f32
    %971 = vector.broadcast %cst_188 : f32 to vector<2x64xf32>
    %972 = arith.addf %971, %970 : vector<2x64xf32>
    %973 = arith.divf %971, %972 : vector<2x64xf32>
    %974 = vector.extract_strided_slice %973 {offsets = [0, 0], sizes = [2, 32], strides = [1, 1]} : vector<2x64xf32> to vector<2x32xf32>
    %975 = vector.extract_strided_slice %973 {offsets = [0, 32], sizes = [2, 32], strides = [1, 1]} : vector<2x64xf32> to vector<2x32xf32>
    %976 = vector.extract_strided_slice %962 {offsets = [0, 64], sizes = [2, 32], strides = [1, 1]} : vector<2x96xf32> to vector<2x32xf32>
    %977 = vector.extract_strided_slice %965 {offsets = [0, 64], sizes = [2, 32], strides = [1, 1]} : vector<2x96xf32> to vector<2x32xf32>
    %978 = arith.mulf %974, %977 : vector<2x32xf32>
    %979 = arith.addf %976, %978 : vector<2x32xf32>
    %980 = math.tanh %979 : vector<2x32xf32>
    %cst_189 = arith.constant 1.000000e+00 : f32
    %981 = vector.broadcast %cst_189 : f32 to vector<2x32xf32>
    %982 = arith.subf %981, %975 : vector<2x32xf32>
    %983 = arith.mulf %982, %980 : vector<2x32xf32>
    %984 = arith.mulf %975, %961 : vector<2x32xf32>
    %985 = arith.addf %983, %984 : vector<2x32xf32>
    %986 = tpu.concatenate %913, %937, %961, %985 in 0 : vector<2x32xf32>, vector<2x32xf32>, vector<2x32xf32>, vector<2x32xf32> -> vector<8x32xf32>
    %987 = arith.index_cast %887 : i32 to index
    %c0_190 = arith.constant 0 : index
    %988 = vector.load %arg16[%987, %c0_190] : memref<40x32xf32, #tpu.memory_space<vmem>>, vector<8x32xf32>
    tpu.vector_store %arg16[%987, %c0_190], %986 {strides = array<i32>} : memref<40x32xf32, #tpu.memory_space<vmem>>, vector<8x32xf32>,
    %c4_i32_191 = arith.constant 4 : i32
    %c8_i32_192 = arith.constant 8 : i32
    %989 = arith.muli %c4_i32_191, %c8_i32_192 : i32
    %990 = tpu.assume_multiple %989, 8 : i32
    %991 = arith.index_cast %990 : i32 to index
    %c0_193 = arith.constant 0 : index
    %992 = vector.load %arg17[%991, %c0_193] : memref<40x96xf32, #tpu.memory_space<vmem>>, vector<8x96xf32>
    %993 = vector.extract_strided_slice %992 {offsets = [0, 0], sizes = [2, 96], strides = [1, 1]} : vector<8x96xf32> to vector<2x96xf32>
    %cst_194 = arith.constant dense<0.000000e+00> : vector<2x96xf32>
    %994 = tpu.matmul %985, %573, %cst_194 {dimension_numbers = #tpu.dot_dimension_numbers<[1], [0], [0], [1], [0, 0, 1, 1], [], []>} : vector<2x32xf32>, vector<32x96xf32>, vector<2x96xf32> -> vector<2x96xf32>
    %995 = vector.broadcast %575 : vector<1x96xf32> to vector<2x96xf32>
    %996 = arith.addf %994, %995 : vector<2x96xf32>
    %997 = vector.extract_strided_slice %993 {offsets = [0, 0], sizes = [2, 64], strides = [1, 1]} : vector<2x96xf32> to vector<2x64xf32>
    %998 = vector.extract_strided_slice %996 {offsets = [0, 0], sizes = [2, 64], strides = [1, 1]} : vector<2x96xf32> to vector<2x64xf32>
    %999 = arith.addf %997, %998 : vector<2x64xf32>
    %1000 = arith.negf %999 : vector<2x64xf32>
    %1001 = math.exp %1000 : vector<2x64xf32>
    %cst_195 = arith.constant 1.000000e+00 : f32
    %1002 = vector.broadcast %cst_195 : f32 to vector<2x64xf32>
    %1003 = arith.addf %1002, %1001 : vector<2x64xf32>
    %1004 = arith.divf %1002, %1003 : vector<2x64xf32>
    %1005 = vector.extract_strided_slice %1004 {offsets = [0, 0], sizes = [2, 32], strides = [1, 1]} : vector<2x64xf32> to vector<2x32xf32>
    %1006 = vector.extract_strided_slice %1004 {offsets = [0, 32], sizes = [2, 32], strides = [1, 1]} : vector<2x64xf32> to vector<2x32xf32>
    %1007 = vector.extract_strided_slice %993 {offsets = [0, 64], sizes = [2, 32], strides = [1, 1]} : vector<2x96xf32> to vector<2x32xf32>
    %1008 = vector.extract_strided_slice %996 {offsets = [0, 64], sizes = [2, 32], strides = [1, 1]} : vector<2x96xf32> to vector<2x32xf32>
    %1009 = arith.mulf %1005, %1008 : vector<2x32xf32>
    %1010 = arith.addf %1007, %1009 : vector<2x32xf32>
    %1011 = math.tanh %1010 : vector<2x32xf32>
    %cst_196 = arith.constant 1.000000e+00 : f32
    %1012 = vector.broadcast %cst_196 : f32 to vector<2x32xf32>
    %1013 = arith.subf %1012, %1006 : vector<2x32xf32>
    %1014 = arith.mulf %1013, %1011 : vector<2x32xf32>
    %1015 = arith.mulf %1006, %985 : vector<2x32xf32>
    %1016 = arith.addf %1014, %1015 : vector<2x32xf32>
    %1017 = vector.extract_strided_slice %992 {offsets = [2, 0], sizes = [2, 96], strides = [1, 1]} : vector<8x96xf32> to vector<2x96xf32>
    %cst_197 = arith.constant dense<0.000000e+00> : vector<2x96xf32>
    %1018 = tpu.matmul %1016, %573, %cst_197 {dimension_numbers = #tpu.dot_dimension_numbers<[1], [0], [0], [1], [0, 0, 1, 1], [], []>} : vector<2x32xf32>, vector<32x96xf32>, vector<2x96xf32> -> vector<2x96xf32>
    %1019 = vector.broadcast %575 : vector<1x96xf32> to vector<2x96xf32>
    %1020 = arith.addf %1018, %1019 : vector<2x96xf32>
    %1021 = vector.extract_strided_slice %1017 {offsets = [0, 0], sizes = [2, 64], strides = [1, 1]} : vector<2x96xf32> to vector<2x64xf32>
    %1022 = vector.extract_strided_slice %1020 {offsets = [0, 0], sizes = [2, 64], strides = [1, 1]} : vector<2x96xf32> to vector<2x64xf32>
    %1023 = arith.addf %1021, %1022 : vector<2x64xf32>
    %1024 = arith.negf %1023 : vector<2x64xf32>
    %1025 = math.exp %1024 : vector<2x64xf32>
    %cst_198 = arith.constant 1.000000e+00 : f32
    %1026 = vector.broadcast %cst_198 : f32 to vector<2x64xf32>
    %1027 = arith.addf %1026, %1025 : vector<2x64xf32>
    %1028 = arith.divf %1026, %1027 : vector<2x64xf32>
    %1029 = vector.extract_strided_slice %1028 {offsets = [0, 0], sizes = [2, 32], strides = [1, 1]} : vector<2x64xf32> to vector<2x32xf32>
    %1030 = vector.extract_strided_slice %1028 {offsets = [0, 32], sizes = [2, 32], strides = [1, 1]} : vector<2x64xf32> to vector<2x32xf32>
    %1031 = vector.extract_strided_slice %1017 {offsets = [0, 64], sizes = [2, 32], strides = [1, 1]} : vector<2x96xf32> to vector<2x32xf32>
    %1032 = vector.extract_strided_slice %1020 {offsets = [0, 64], sizes = [2, 32], strides = [1, 1]} : vector<2x96xf32> to vector<2x32xf32>
    %1033 = arith.mulf %1029, %1032 : vector<2x32xf32>
    %1034 = arith.addf %1031, %1033 : vector<2x32xf32>
    %1035 = math.tanh %1034 : vector<2x32xf32>
    %cst_199 = arith.constant 1.000000e+00 : f32
    %1036 = vector.broadcast %cst_199 : f32 to vector<2x32xf32>
    %1037 = arith.subf %1036, %1030 : vector<2x32xf32>
    %1038 = arith.mulf %1037, %1035 : vector<2x32xf32>
    %1039 = arith.mulf %1030, %1016 : vector<2x32xf32>
    %1040 = arith.addf %1038, %1039 : vector<2x32xf32>
    %1041 = vector.extract_strided_slice %992 {offsets = [4, 0], sizes = [2, 96], strides = [1, 1]} : vector<8x96xf32> to vector<2x96xf32>
    %cst_200 = arith.constant dense<0.000000e+00> : vector<2x96xf32>
    %1042 = tpu.matmul %1040, %573, %cst_200 {dimension_numbers = #tpu.dot_dimension_numbers<[1], [0], [0], [1], [0, 0, 1, 1], [], []>} : vector<2x32xf32>, vector<32x96xf32>, vector<2x96xf32> -> vector<2x96xf32>
    %1043 = vector.broadcast %575 : vector<1x96xf32> to vector<2x96xf32>
    %1044 = arith.addf %1042, %1043 : vector<2x96xf32>
    %1045 = vector.extract_strided_slice %1041 {offsets = [0, 0], sizes = [2, 64], strides = [1, 1]} : vector<2x96xf32> to vector<2x64xf32>
    %1046 = vector.extract_strided_slice %1044 {offsets = [0, 0], sizes = [2, 64], strides = [1, 1]} : vector<2x96xf32> to vector<2x64xf32>
    %1047 = arith.addf %1045, %1046 : vector<2x64xf32>
    %1048 = arith.negf %1047 : vector<2x64xf32>
    %1049 = math.exp %1048 : vector<2x64xf32>
    %cst_201 = arith.constant 1.000000e+00 : f32
    %1050 = vector.broadcast %cst_201 : f32 to vector<2x64xf32>
    %1051 = arith.addf %1050, %1049 : vector<2x64xf32>
    %1052 = arith.divf %1050, %1051 : vector<2x64xf32>
    %1053 = vector.extract_strided_slice %1052 {offsets = [0, 0], sizes = [2, 32], strides = [1, 1]} : vector<2x64xf32> to vector<2x32xf32>
    %1054 = vector.extract_strided_slice %1052 {offsets = [0, 32], sizes = [2, 32], strides = [1, 1]} : vector<2x64xf32> to vector<2x32xf32>
    %1055 = vector.extract_strided_slice %1041 {offsets = [0, 64], sizes = [2, 32], strides = [1, 1]} : vector<2x96xf32> to vector<2x32xf32>
    %1056 = vector.extract_strided_slice %1044 {offsets = [0, 64], sizes = [2, 32], strides = [1, 1]} : vector<2x96xf32> to vector<2x32xf32>
    %1057 = arith.mulf %1053, %1056 : vector<2x32xf32>
    %1058 = arith.addf %1055, %1057 : vector<2x32xf32>
    %1059 = math.tanh %1058 : vector<2x32xf32>
    %cst_202 = arith.constant 1.000000e+00 : f32
    %1060 = vector.broadcast %cst_202 : f32 to vector<2x32xf32>
    %1061 = arith.subf %1060, %1054 : vector<2x32xf32>
    %1062 = arith.mulf %1061, %1059 : vector<2x32xf32>
    %1063 = arith.mulf %1054, %1040 : vector<2x32xf32>
    %1064 = arith.addf %1062, %1063 : vector<2x32xf32>
    %1065 = vector.extract_strided_slice %992 {offsets = [6, 0], sizes = [2, 96], strides = [1, 1]} : vector<8x96xf32> to vector<2x96xf32>
    %cst_203 = arith.constant dense<0.000000e+00> : vector<2x96xf32>
    %1066 = tpu.matmul %1064, %573, %cst_203 {dimension_numbers = #tpu.dot_dimension_numbers<[1], [0], [0], [1], [0, 0, 1, 1], [], []>} : vector<2x32xf32>, vector<32x96xf32>, vector<2x96xf32> -> vector<2x96xf32>
    %1067 = vector.broadcast %575 : vector<1x96xf32> to vector<2x96xf32>
    %1068 = arith.addf %1066, %1067 : vector<2x96xf32>
    %1069 = vector.extract_strided_slice %1065 {offsets = [0, 0], sizes = [2, 64], strides = [1, 1]} : vector<2x96xf32> to vector<2x64xf32>
    %1070 = vector.extract_strided_slice %1068 {offsets = [0, 0], sizes = [2, 64], strides = [1, 1]} : vector<2x96xf32> to vector<2x64xf32>
    %1071 = arith.addf %1069, %1070 : vector<2x64xf32>
    %1072 = arith.negf %1071 : vector<2x64xf32>
    %1073 = math.exp %1072 : vector<2x64xf32>
    %cst_204 = arith.constant 1.000000e+00 : f32
    %1074 = vector.broadcast %cst_204 : f32 to vector<2x64xf32>
    %1075 = arith.addf %1074, %1073 : vector<2x64xf32>
    %1076 = arith.divf %1074, %1075 : vector<2x64xf32>
    %1077 = vector.extract_strided_slice %1076 {offsets = [0, 0], sizes = [2, 32], strides = [1, 1]} : vector<2x64xf32> to vector<2x32xf32>
    %1078 = vector.extract_strided_slice %1076 {offsets = [0, 32], sizes = [2, 32], strides = [1, 1]} : vector<2x64xf32> to vector<2x32xf32>
    %1079 = vector.extract_strided_slice %1065 {offsets = [0, 64], sizes = [2, 32], strides = [1, 1]} : vector<2x96xf32> to vector<2x32xf32>
    %1080 = vector.extract_strided_slice %1068 {offsets = [0, 64], sizes = [2, 32], strides = [1, 1]} : vector<2x96xf32> to vector<2x32xf32>
    %1081 = arith.mulf %1077, %1080 : vector<2x32xf32>
    %1082 = arith.addf %1079, %1081 : vector<2x32xf32>
    %1083 = math.tanh %1082 : vector<2x32xf32>
    %cst_205 = arith.constant 1.000000e+00 : f32
    %1084 = vector.broadcast %cst_205 : f32 to vector<2x32xf32>
    %1085 = arith.subf %1084, %1078 : vector<2x32xf32>
    %1086 = arith.mulf %1085, %1083 : vector<2x32xf32>
    %1087 = arith.mulf %1078, %1064 : vector<2x32xf32>
    %1088 = arith.addf %1086, %1087 : vector<2x32xf32>
    %1089 = tpu.concatenate %1016, %1040, %1064, %1088 in 0 : vector<2x32xf32>, vector<2x32xf32>, vector<2x32xf32>, vector<2x32xf32> -> vector<8x32xf32>
    %1090 = arith.index_cast %990 : i32 to index
    %c0_206 = arith.constant 0 : index
    %1091 = vector.load %arg16[%1090, %c0_206] : memref<40x32xf32, #tpu.memory_space<vmem>>, vector<8x32xf32>
    tpu.vector_store %arg16[%1090, %c0_206], %1089 {strides = array<i32>} : memref<40x32xf32, #tpu.memory_space<vmem>>, vector<8x32xf32>,
    %c5_i32_207 = arith.constant 5 : i32
    %c0_208 = arith.constant 0 : index
    %c0_209 = arith.constant 0 : index
    %1092 = vector.load %arg16[%c0_208, %c0_209] : memref<40x32xf32, #tpu.memory_space<vmem>>, vector<40x32xf32>
    %c0_210 = arith.constant 0 : index
    %c0_211 = arith.constant 0 : index
    %1093 = vector.load %arg10[%c0_210, %c0_211] : memref<1x32xf32, #tpu.memory_space<vmem>>, vector<1x32xf32>
    %c0_212 = arith.constant 0 : index
    %c0_213 = arith.constant 0 : index
    %1094 = vector.load %arg11[%c0_212, %c0_213] : memref<1x32xf32, #tpu.memory_space<vmem>>, vector<1x32xf32>
    %cst_214 = arith.constant dense<0.000000e+00> : vector<40xf32>
    %1095 = vector.multi_reduction <add>, %1092, %cst_214 [1] : vector<40x32xf32> to vector<40xf32>
    %1096 = vector.shape_cast %1095 : vector<40xf32> to vector<40x1xf32>
    %cst_215 = arith.constant 3.200000e+01 : f32
    %1097 = vector.broadcast %cst_215 : f32 to vector<40x1xf32>
    %1098 = arith.divf %1096, %1097 : vector<40x1xf32>
    %1099 = vector.broadcast %1098 : vector<40x1xf32> to vector<40x32xf32>
    %1100 = arith.subf %1092, %1099 : vector<40x32xf32>
    %1101 = arith.mulf %1100, %1100 : vector<40x32xf32>
    %cst_216 = arith.constant dense<0.000000e+00> : vector<40xf32>
    %1102 = vector.multi_reduction <add>, %1101, %cst_216 [1] : vector<40x32xf32> to vector<40xf32>
    %1103 = vector.shape_cast %1102 : vector<40xf32> to vector<40x1xf32>
    %cst_217 = arith.constant 3.200000e+01 : f32
    %1104 = vector.broadcast %cst_217 : f32 to vector<40x1xf32>
    %1105 = arith.divf %1103, %1104 : vector<40x1xf32>
    %1106 = vector.broadcast %1098 : vector<40x1xf32> to vector<40x32xf32>
    %1107 = arith.subf %1092, %1106 : vector<40x32xf32>
    %cst_218 = arith.constant 9.99999974E-6 : f32
    %1108 = vector.broadcast %cst_218 : f32 to vector<40x1xf32>
    %1109 = arith.addf %1105, %1108 : vector<40x1xf32>
    %1110 = math.rsqrt %1109 : vector<40x1xf32>
    %1111 = vector.broadcast %1110 : vector<40x1xf32> to vector<40x32xf32>
    %1112 = arith.mulf %1107, %1111 : vector<40x32xf32>
    %1113 = vector.broadcast %1093 : vector<1x32xf32> to vector<40x32xf32>
    %1114 = arith.mulf %1112, %1113 : vector<40x32xf32>
    %1115 = vector.broadcast %1094 : vector<1x32xf32> to vector<40x32xf32>
    %1116 = arith.addf %1114, %1115 : vector<40x32xf32>
    %c0_219 = arith.constant 0 : index
    %c0_220 = arith.constant 0 : index
    %1117 = vector.load %arg12[%c0_219, %c0_220] : memref<20x40xf32, #tpu.memory_space<vmem>>, vector<20x40xf32>
    %cst_221 = arith.constant dense<0.000000e+00> : vector<20x32xf32>
    %1118 = tpu.matmul %1117, %1116, %cst_221 {dimension_numbers = #tpu.dot_dimension_numbers<[1], [0], [0], [1], [0, 0, 1, 1], [], []>} : vector<20x40xf32>, vector<40x32xf32>, vector<20x32xf32> -> vector<20x32xf32>
    %c0_222 = arith.constant 0 : index
    %c0_223 = arith.constant 0 : index
    %1119 = vector.load %arg13[%c0_222, %c0_223] : memref<32x128xf32, #tpu.memory_space<vmem>>, vector<32x128xf32>
    %cst_224 = arith.constant dense<0.000000e+00> : vector<20x128xf32>
    %1120 = tpu.matmul %1118, %1119, %cst_224 {dimension_numbers = #tpu.dot_dimension_numbers<[1], [0], [0], [1], [0, 0, 1, 1], [], []>} : vector<20x32xf32>, vector<32x128xf32>, vector<20x128xf32> -> vector<20x128xf32>
    %c0_225 = arith.constant 0 : index
    %c0_226 = arith.constant 0 : index
    %1121 = vector.load %arg14[%c0_225, %c0_226] : memref<1x128xf32, #tpu.memory_space<vmem>>, vector<1x128xf32>
    %1122 = vector.broadcast %1121 : vector<1x128xf32> to vector<20x128xf32>
    %1123 = arith.addf %1120, %1122 : vector<20x128xf32>
    %1124 = vector.shape_cast %1123 : vector<20x128xf32> to vector<1x20x128xf32>
    %c0_227 = arith.constant 0 : index
    %c0_228 = arith.constant 0 : index
    %c0_229 = arith.constant 0 : index
    %1125 = vector.load %arg15[%c0_227, %c0_228, %c0_229] : memref<1x20x128xf32, #tpu.memory_space<vmem>>, vector<1x20x128xf32>
    tpu.vector_store %arg15[%c0_227, %c0_228, %c0_229], %1124 {strides = array<i32>} : memref<1x20x128xf32, #tpu.memory_space<vmem>>, vector<1x20x128xf32>,
    return
  }
  func.func @transform_0(%arg0: i32) -> (i32, i32, i32) {
    %c0_i32 = arith.constant 0 : i32
    %c0_i32_0 = arith.constant 0 : i32
    %c0_i32_1 = arith.constant 0 : i32
    return %arg0, %c0_i32, %c0_i32_0 : i32, i32, i32
  }
  func.func @transform_1(%arg0: i32) -> (i32, i32) {
    %c0_i32 = arith.constant 0 : i32
    %c0_i32_0 = arith.constant 0 : i32
    %c0_i32_1 = arith.constant 0 : i32
    return %c0_i32, %c0_i32_0 : i32, i32
  }
  func.func @transform_2(%arg0: i32) -> (i32, i32) {
    %c0_i32 = arith.constant 0 : i32
    %c0_i32_0 = arith.constant 0 : i32
    %c0_i32_1 = arith.constant 0 : i32
    return %c0_i32, %c0_i32_0 : i32, i32
  }
  func.func @transform_3(%arg0: i32) -> (i32, i32) {
    %c0_i32 = arith.constant 0 : i32
    %c0_i32_0 = arith.constant 0 : i32
    %c0_i32_1 = arith.constant 0 : i32
    return %c0_i32, %c0_i32_0 : i32, i32
  }
  func.func @transform_4(%arg0: i32) -> (i32, i32) {
    %c0_i32 = arith.constant 0 : i32
    %c0_i32_0 = arith.constant 0 : i32
    %c0_i32_1 = arith.constant 0 : i32
    return %c0_i32, %c0_i32_0 : i32, i32
  }
  func.func @transform_5(%arg0: i32) -> (i32, i32, i32) {
    %c0_i32 = arith.constant 0 : i32
    %c0_i32_0 = arith.constant 0 : i32
    %c0_i32_1 = arith.constant 0 : i32
    %c0_i32_2 = arith.constant 0 : i32
    return %c0_i32, %c0_i32_0, %c0_i32_1 : i32, i32, i32
  }
  func.func @transform_6(%arg0: i32) -> (i32, i32, i32) {
    %c0_i32 = arith.constant 0 : i32
    %c0_i32_0 = arith.constant 0 : i32
    %c0_i32_1 = arith.constant 0 : i32
    %c0_i32_2 = arith.constant 0 : i32
    return %c0_i32, %c0_i32_0, %c0_i32_1 : i32, i32, i32
  }
  func.func @transform_7(%arg0: i32) -> (i32, i32, i32) {
    %c0_i32 = arith.constant 0 : i32
    %c0_i32_0 = arith.constant 0 : i32
    %c0_i32_1 = arith.constant 0 : i32
    %c0_i32_2 = arith.constant 0 : i32
    return %c0_i32, %c0_i32_0, %c0_i32_1 : i32, i32, i32
  }
  func.func @transform_8(%arg0: i32) -> (i32, i32, i32) {
    %c0_i32 = arith.constant 0 : i32
    %c0_i32_0 = arith.constant 0 : i32
    %c0_i32_1 = arith.constant 0 : i32
    %c0_i32_2 = arith.constant 0 : i32
    return %c0_i32, %c0_i32_0, %c0_i32_1 : i32, i32, i32
  }
  func.func @transform_9(%arg0: i32) -> (i32, i32) {
    %c0_i32 = arith.constant 0 : i32
    %c0_i32_0 = arith.constant 0 : i32
    %c0_i32_1 = arith.constant 0 : i32
    return %c0_i32, %c0_i32_0 : i32, i32
  }
  func.func @transform_10(%arg0: i32) -> (i32, i32) {
    %c0_i32 = arith.constant 0 : i32
    %c0_i32_0 = arith.constant 0 : i32
    %c0_i32_1 = arith.constant 0 : i32
    return %c0_i32, %c0_i32_0 : i32, i32
  }
  func.func @transform_11(%arg0: i32) -> (i32, i32) {
    %c0_i32 = arith.constant 0 : i32
    %c0_i32_0 = arith.constant 0 : i32
    %c0_i32_1 = arith.constant 0 : i32
    return %c0_i32, %c0_i32_0 : i32, i32
  }
  func.func @transform_12(%arg0: i32) -> (i32, i32) {
    %c0_i32 = arith.constant 0 : i32
    %c0_i32_0 = arith.constant 0 : i32
    %c0_i32_1 = arith.constant 0 : i32
    return %c0_i32, %c0_i32_0 : i32, i32
  }
  func.func @transform_13(%arg0: i32) -> (i32, i32) {
    %c0_i32 = arith.constant 0 : i32
    %c0_i32_0 = arith.constant 0 : i32
    %c0_i32_1 = arith.constant 0 : i32
    return %c0_i32, %c0_i32_0 : i32, i32
  }
  func.func @transform_14(%arg0: i32) -> (i32, i32, i32) {
    %c0_i32 = arith.constant 0 : i32
    %c0_i32_0 = arith.constant 0 : i32
    %c0_i32_1 = arith.constant 0 : i32
    return %arg0, %c0_i32, %c0_i32_0 : i32, i32, i32
  }
}

</mosaic_0001>

<llo_original>
// kernel: fatigue_forward.1
$region0: #{fatigue_forward.1}
  #allocation0 [shape = 'u32[]', space=smem, size = 0x4, offset = 0x4, fixed_abs, tag = 'smem constant byte address 0x4 - core index']
  #allocation1 [shape = 'u32[144,128]{1,0:T(1,128)}', space=vmem, size = 0x12000, scoped, tag = 'internal scratch']
  #allocation2 [shape = 'f32[40,32]{1,0:T(8,128)}', space=vmem, size = 0x5000, scoped, tag = 'scratch operand']
  #allocation3 [shape = 'f32[40,96]{1,0:T(8,128)}', space=vmem, size = 0x5000, scoped, tag = 'scratch operand']
  %s0 = inlined_call_operand.vmem [shape: f32[2,40,21], index: 0, kind: input, shape index: {}]
  %s1 = inlined_call_operand.vmem [shape: f32[21,32], index: 1, kind: input, shape index: {}]
  %s2 = inlined_call_operand.vmem [shape: f32[1,32], index: 2, kind: input, shape index: {}]
  %s3 = inlined_call_operand.vmem [shape: f32[1,32], index: 3, kind: input, shape index: {}]
  %s4 = inlined_call_operand.vmem [shape: f32[1,32], index: 4, kind: input, shape index: {}]
  %s5 = inlined_call_operand.vmem [shape: f32[2,32,96], index: 5, kind: input, shape index: {}]
  %s6 = inlined_call_operand.vmem [shape: f32[2,32,96], index: 6, kind: input, shape index: {}]
  %s7 = inlined_call_operand.vmem [shape: f32[2,1,96], index: 7, kind: input, shape index: {}]
  %s8 = inlined_call_operand.vmem [shape: f32[2,1,96], index: 8, kind: input, shape index: {}]
  %s9 = inlined_call_operand.vmem [shape: f32[1,32], index: 9, kind: input, shape index: {}]
  %s10 = inlined_call_operand.vmem [shape: f32[1,32], index: 10, kind: input, shape index: {}]
  %s11 = inlined_call_operand.vmem [shape: f32[20,40], index: 11, kind: input, shape index: {}]
  %s12 = inlined_call_operand.vmem [shape: f32[32,128], index: 12, kind: input, shape index: {}]
  %s13 = inlined_call_operand.vmem [shape: f32[1,128], index: 13, kind: input, shape index: {}]
  %s14 = inlined_call_operand.vmem [shape: f32[2,20,128], index: 14, kind: output, shape index: {}]
  %s15 = sld [smem:[#allocation0]]
  $region89: #{fatigue_forward.1} parent=0
    _
  %s17 = ssub.s32 1, %s15
  %s18 = scalar_select 0, %s17, %s15
  loop: start=0, step=1, limit=4
  $region2: #{fatigue_forward.1} parent=0 // loop_pre_header
    _
  $region3: #{fatigue_forward.1} parent=0 // loop_header
    %s20 = sphi 0, %s24
    %p21 = scmp.ge.s32.totalorder %s20, 4
    %s30 = sphi 0, %s32
    %s33 = sphi 0, %s30
    %s34 = sphi 0, %s33
    %s50 = sphi 0, %s34
    %s54 = sphi 0, %s54
    %s56 = sphi 0, %s54
    %s57 = sphi 0, %s56
    %s71 = sphi 0, %s57
    %s75 = sphi 0, %s75
    %s77 = sphi 0, %s75
    %s78 = sphi 0, %s77
    %s92 = sphi 0, %s78
    %s96 = sphi 0, %s96
    %s98 = sphi 0, %s96
    %s99 = sphi 0, %s98
    %s113 = sphi 0, %s99
    %s117 = sphi 0, %s117
    %s119 = sphi 0, %s117
    %s120 = sphi 0, %s119
    %s134 = sphi 0, %s120
    %s138 = sphi 0, %s138
    %s140 = sphi 0, %s138
    %s141 = sphi 0, %s140
    %s155 = sphi 0, %s141
    %s159 = sphi 0, %s159
    %s161 = sphi 0, %s159
    %s162 = sphi 0, %s161
    %s176 = sphi 0, %s162
    %s180 = sphi 0, %s180
    %s182 = sphi 0, %s180
    %s183 = sphi 0, %s182
    %s197 = sphi 0, %s183
    %s201 = sphi 0, %s201
    %s203 = sphi 0, %s201
    %s204 = sphi 0, %s203
    %s218 = sphi 0, %s204
    %s222 = sphi 0, %s222
    %s224 = sphi 0, %s222
    %s225 = sphi 0, %s224
    %s239 = sphi 0, %s225
    %s243 = sphi 0, %s243
    %s245 = sphi 0, %s243
    %s246 = sphi 0, %s245
    %s260 = sphi 0, %s246
    %s264 = sphi 0, %s264
    %s266 = sphi 0, %s264
    %s267 = sphi 0, %s266
    %s281 = sphi 0, %s267
    %s285 = sphi 0, %s285
    %s287 = sphi 0, %s285
    %s288 = sphi 0, %s287
    %s302 = sphi 0, %s288
    %s306 = sphi 0, %s306
    %s308 = sphi 0, %s306
    %s309 = sphi 0, %s308
    %s323 = sphi 0, %s309
    %s329 = sphi 0, %s331
    %s332 = sphi 0, %s329
    %s333 = sphi 0, %s332
    %s349 = sphi 0, %s333
  $region4: #{fatigue_forward.1} parent=0 // loop_header_branch
    %23 = sbr.rel (%p21) target = $region8
  $region5: #{fatigue_forward.1} parent=0 // loop_body
    %s25 = ssub.s32 %s20, 1
    %s26 = ssub.s32 %s20, 2
    %s27 = sadd.s32 %s20, 1
    %s28 = ssub.s32 %s20, %s27
    %p29 = scmp.eq.s32.totalorder %s28, 0
    %s31 = sadd.s32 %s30, 1
    %s32 = scalar_select %p29, %s30, %s31
    %p35 = pneg %p29
    %p36 = scmp.eq.s32.totalorder %s20, 1
    %p37 = por %p35, %p36
    %p38 = scmp.ne.s32.totalorder %s30, %s33
    %p39 = scmp.eq.s32.totalorder %s20, 0
    %p40 = por %p38, %p39
    %p41 = scmp.ne.s32.totalorder %s30, %s33
    %p42 = scmp.eq.s32.totalorder %s25, 1
    %p43 = por %p41, %p42
    %p44 = scmp.ne.s32.totalorder %s33, %s34
    %p45 = scmp.eq.s32.totalorder %s25, 0
    %p46 = por %p44, %p45
    %p47 = scmp.ne.s32.totalorder %s33, %s34
    %p48 = scmp.eq.s32.totalorder %s26, 1
    %p49 = por %p47, %p48
    %p51 = scmp.ne.s32.totalorder %s34, %s50
    %p52 = scmp.eq.s32.totalorder %s26, 0
    %p53 = por %p51, %p52
    %s55 = sadd.s32 %s54, 1
    %p58 = scmp.eq.s32.totalorder %s20, 1
    %p59 = scmp.ne.s32.totalorder %s54, %s56
    %p60 = scmp.eq.s32.totalorder %s20, 0
    %p61 = por %p59, %p60
    %p62 = scmp.ne.s32.totalorder %s54, %s56
    %p63 = scmp.eq.s32.totalorder %s25, 1
    %p64 = por %p62, %p63
    %p65 = scmp.ne.s32.totalorder %s56, %s57
    %p66 = scmp.eq.s32.totalorder %s25, 0
    %p67 = por %p65, %p66
    %p68 = scmp.ne.s32.totalorder %s56, %s57
    %p69 = scmp.eq.s32.totalorder %s26, 1
    %p70 = por %p68, %p69
    %p72 = scmp.ne.s32.totalorder %s57, %s71
    %p73 = scmp.eq.s32.totalorder %s26, 0
    %p74 = por %p72, %p73
    %s76 = sadd.s32 %s75, 1
    %p79 = scmp.eq.s32.totalorder %s20, 1
    %p80 = scmp.ne.s32.totalorder %s75, %s77
    %p81 = scmp.eq.s32.totalorder %s20, 0
    %p82 = por %p80, %p81
    %p83 = scmp.ne.s32.totalorder %s75, %s77
    %p84 = scmp.eq.s32.totalorder %s25, 1
    %p85 = por %p83, %p84
    %p86 = scmp.ne.s32.totalorder %s77, %s78
    %p87 = scmp.eq.s32.totalorder %s25, 0
    %p88 = por %p86, %p87
    %p89 = scmp.ne.s32.totalorder %s77, %s78
    %p90 = scmp.eq.s32.totalorder %s26, 1
    %p91 = por %p89, %p90
    %p93 = scmp.ne.s32.totalorder %s78, %s92
    %p94 = scmp.eq.s32.totalorder %s26, 0
    %p95 = por %p93, %p94
    %s97 = sadd.s32 %s96, 1
    %p100 = scmp.eq.s32.totalorder %s20, 1
    %p101 = scmp.ne.s32.totalorder %s96, %s98
    %p102 = scmp.eq.s32.totalorder %s20, 0
    %p103 = por %p101, %p102
    %p104 = scmp.ne.s32.totalorder %s96, %s98
    %p105 = scmp.eq.s32.totalorder %s25, 1
    %p106 = por %p104, %p105
    %p107 = scmp.ne.s32.totalorder %s98, %s99
    %p108 = scmp.eq.s32.totalorder %s25, 0
    %p109 = por %p107, %p108
    %p110 = scmp.ne.s32.totalorder %s98, %s99
    %p111 = scmp.eq.s32.totalorder %s26, 1
    %p112 = por %p110, %p111
    %p114 = scmp.ne.s32.totalorder %s99, %s113
    %p115 = scmp.eq.s32.totalorder %s26, 0
    %p116 = por %p114, %p115
    %s118 = sadd.s32 %s117, 1
    %p121 = scmp.eq.s32.totalorder %s20, 1
    %p122 = scmp.ne.s32.totalorder %s117, %s119
    %p123 = scmp.eq.s32.totalorder %s20, 0
    %p124 = por %p122, %p123
    %p125 = scmp.ne.s32.totalorder %s117, %s119
    %p126 = scmp.eq.s32.totalorder %s25, 1
    %p127 = por %p125, %p126
    %p128 = scmp.ne.s32.totalorder %s119, %s120
    %p129 = scmp.eq.s32.totalorder %s25, 0
    %p130 = por %p128, %p129
    %p131 = scmp.ne.s32.totalorder %s119, %s120
    %p132 = scmp.eq.s32.totalorder %s26, 1
    %p133 = por %p131, %p132
    %p135 = scmp.ne.s32.totalorder %s120, %s134
    %p136 = scmp.eq.s32.totalorder %s26, 0
    %p137 = por %p135, %p136
    %s139 = sadd.s32 %s138, 1
    %p142 = scmp.eq.s32.totalorder %s20, 1
    %p143 = scmp.ne.s32.totalorder %s138, %s140
    %p144 = scmp.eq.s32.totalorder %s20, 0
    %p145 = por %p143, %p144
    %p146 = scmp.ne.s32.totalorder %s138, %s140
    %p147 = scmp.eq.s32.totalorder %s25, 1
    %p148 = por %p146, %p147
    %p149 = scmp.ne.s32.totalorder %s140, %s141
    %p150 = scmp.eq.s32.totalorder %s25, 0
    %p151 = por %p149, %p150
    %p152 = scmp.ne.s32.totalorder %s140, %s141
    %p153 = scmp.eq.s32.totalorder %s26, 1
    %p154 = por %p152, %p153
    %p156 = scmp.ne.s32.totalorder %s141, %s155
    %p157 = scmp.eq.s32.totalorder %s26, 0
    %p158 = por %p156, %p157
    %s160 = sadd.s32 %s159, 1
    %p163 = scmp.eq.s32.totalorder %s20, 1
    %p164 = scmp.ne.s32.totalorder %s159, %s161
    %p165 = scmp.eq.s32.totalorder %s20, 0
    %p166 = por %p164, %p165
    %p167 = scmp.ne.s32.totalorder %s159, %s161
    %p168 = scmp.eq.s32.totalorder %s25, 1
    %p169 = por %p167, %p168
    %p170 = scmp.ne.s32.totalorder %s161, %s162
    %p171 = scmp.eq.s32.totalorder %s25, 0
    %p172 = por %p170, %p171
    %p173 = scmp.ne.s32.totalorder %s161, %s162
    %p174 = scmp.eq.s32.totalorder %s26, 1
    %p175 = por %p173, %p174
    %p177 = scmp.ne.s32.totalorder %s162, %s176
    %p178 = scmp.eq.s32.totalorder %s26, 0
    %p179 = por %p177, %p178
    %s181 = sadd.s32 %s180, 1
    %p184 = scmp.eq.s32.totalorder %s20, 1
    %p185 = scmp.ne.s32.totalorder %s180, %s182
    %p186 = scmp.eq.s32.totalorder %s20, 0
    %p187 = por %p185, %p186
    %p188 = scmp.ne.s32.totalorder %s180, %s182
    %p189 = scmp.eq.s32.totalorder %s25, 1
    %p190 = por %p188, %p189
    %p191 = scmp.ne.s32.totalorder %s182, %s183
    %p192 = scmp.eq.s32.totalorder %s25, 0
    %p193 = por %p191, %p192
    %p194 = scmp.ne.s32.totalorder %s182, %s183
    %p195 = scmp.eq.s32.totalorder %s26, 1
    %p196 = por %p194, %p195
    %p198 = scmp.ne.s32.totalorder %s183, %s197
    %p199 = scmp.eq.s32.totalorder %s26, 0
    %p200 = por %p198, %p199
    %s202 = sadd.s32 %s201, 1
    %p205 = scmp.eq.s32.totalorder %s20, 1
    %p206 = scmp.ne.s32.totalorder %s201, %s203
    %p207 = scmp.eq.s32.totalorder %s20, 0
    %p208 = por %p206, %p207
    %p209 = scmp.ne.s32.totalorder %s201, %s203
    %p210 = scmp.eq.s32.totalorder %s25, 1
    %p211 = por %p209, %p210
    %p212 = scmp.ne.s32.totalorder %s203, %s204
    %p213 = scmp.eq.s32.totalorder %s25, 0
    %p214 = por %p212, %p213
    %p215 = scmp.ne.s32.totalorder %s203, %s204
    %p216 = scmp.eq.s32.totalorder %s26, 1
    %p217 = por %p215, %p216
    %p219 = scmp.ne.s32.totalorder %s204, %s218
    %p220 = scmp.eq.s32.totalorder %s26, 0
    %p221 = por %p219, %p220
    %s223 = sadd.s32 %s222, 1
    %p226 = scmp.eq.s32.totalorder %s20, 1
    %p227 = scmp.ne.s32.totalorder %s222, %s224
    %p228 = scmp.eq.s32.totalorder %s20, 0
    %p229 = por %p227, %p228
    %p230 = scmp.ne.s32.totalorder %s222, %s224
    %p231 = scmp.eq.s32.totalorder %s25, 1
    %p232 = por %p230, %p231
    %p233 = scmp.ne.s32.totalorder %s224, %s225
    %p234 = scmp.eq.s32.totalorder %s25, 0
    %p235 = por %p233, %p234
    %p236 = scmp.ne.s32.totalorder %s224, %s225
    %p237 = scmp.eq.s32.totalorder %s26, 1
    %p238 = por %p236, %p237
    %p240 = scmp.ne.s32.totalorder %s225, %s239
    %p241 = scmp.eq.s32.totalorder %s26, 0
    %p242 = por %p240, %p241
    %s244 = sadd.s32 %s243, 1
    %p247 = scmp.eq.s32.totalorder %s20, 1
    %p248 = scmp.ne.s32.totalorder %s243, %s245
    %p249 = scmp.eq.s32.totalorder %s20, 0
    %p250 = por %p248, %p249
    %p251 = scmp.ne.s32.totalorder %s243, %s245
    %p252 = scmp.eq.s32.totalorder %s25, 1
    %p253 = por %p251, %p252
    %p254 = scmp.ne.s32.totalorder %s245, %s246
    %p255 = scmp.eq.s32.totalorder %s25, 0
    %p256 = por %p254, %p255
    %p257 = scmp.ne.s32.totalorder %s245, %s246
    %p258 = scmp.eq.s32.totalorder %s26, 1
    %p259 = por %p257, %p258
    %p261 = scmp.ne.s32.totalorder %s246, %s260
    %p262 = scmp.eq.s32.totalorder %s26, 0
    %p263 = por %p261, %p262
    %s265 = sadd.s32 %s264, 1
    %p268 = scmp.eq.s32.totalorder %s20, 1
    %p269 = scmp.ne.s32.totalorder %s264, %s266
    %p270 = scmp.eq.s32.totalorder %s20, 0
    %p271 = por %p269, %p270
    %p272 = scmp.ne.s32.totalorder %s264, %s266
    %p273 = scmp.eq.s32.totalorder %s25, 1
    %p274 = por %p272, %p273
    %p275 = scmp.ne.s32.totalorder %s266, %s267
    %p276 = scmp.eq.s32.totalorder %s25, 0
    %p277 = por %p275, %p276
    %p278 = scmp.ne.s32.totalorder %s266, %s267
    %p279 = scmp.eq.s32.totalorder %s26, 1
    %p280 = por %p278, %p279
    %p282 = scmp.ne.s32.totalorder %s267, %s281
    %p283 = scmp.eq.s32.totalorder %s26, 0
    %p284 = por %p282, %p283
    %s286 = sadd.s32 %s285, 1
    %p289 = scmp.eq.s32.totalorder %s20, 1
    %p290 = scmp.ne.s32.totalorder %s285, %s287
    %p291 = scmp.eq.s32.totalorder %s20, 0
    %p292 = por %p290, %p291
    %p293 = scmp.ne.s32.totalorder %s285, %s287
    %p294 = scmp.eq.s32.totalorder %s25, 1
    %p295 = por %p293, %p294
    %p296 = scmp.ne.s32.totalorder %s287, %s288
    %p297 = scmp.eq.s32.totalorder %s25, 0
    %p298 = por %p296, %p297
    %p299 = scmp.ne.s32.totalorder %s287, %s288
    %p300 = scmp.eq.s32.totalorder %s26, 1
    %p301 = por %p299, %p300
    %p303 = scmp.ne.s32.totalorder %s288, %s302
    %p304 = scmp.eq.s32.totalorder %s26, 0
    %p305 = por %p303, %p304
    %s307 = sadd.s32 %s306, 1
    %p310 = scmp.eq.s32.totalorder %s20, 1
    %p311 = scmp.ne.s32.totalorder %s306, %s308
    %p312 = scmp.eq.s32.totalorder %s20, 0
    %p313 = por %p311, %p312
    %p314 = scmp.ne.s32.totalorder %s306, %s308
    %p315 = scmp.eq.s32.totalorder %s25, 1
    %p316 = por %p314, %p315
    %p317 = scmp.ne.s32.totalorder %s308, %s309
    %p318 = scmp.eq.s32.totalorder %s25, 0
    %p319 = por %p317, %p318
    %p320 = scmp.ne.s32.totalorder %s308, %s309
    %p321 = scmp.eq.s32.totalorder %s26, 1
    %p322 = por %p320, %p321
    %p324 = scmp.ne.s32.totalorder %s309, %s323
    %p325 = scmp.eq.s32.totalorder %s26, 0
    %p326 = por %p324, %p325
    %s327 = ssub.s32 %s20, %s27
    %p328 = scmp.eq.s32.totalorder %s327, 0
    %s330 = sadd.s32 %s329, 1
    %s331 = scalar_select %p328, %s329, %s330
    %p334 = pneg %p328
    %p335 = scmp.eq.s32.totalorder %s20, 1
    %p336 = por %p334, %p335
    %p337 = scmp.ne.s32.totalorder %s329, %s332
    %p338 = scmp.eq.s32.totalorder %s20, 0
    %p339 = por %p337, %p338
    %p340 = scmp.ne.s32.totalorder %s329, %s332
    %p341 = scmp.eq.s32.totalorder %s25, 1
    %p342 = por %p340, %p341
    %p343 = scmp.ne.s32.totalorder %s332, %s333
    %p344 = scmp.eq.s32.totalorder %s25, 0
    %p345 = por %p343, %p344
    %p346 = scmp.ne.s32.totalorder %s332, %s333
    %p347 = scmp.eq.s32.totalorder %s26, 1
    %p348 = por %p346, %p347
    %p350 = scmp.ne.s32.totalorder %s333, %s349
    %p351 = scmp.eq.s32.totalorder %s26, 0
    %p352 = por %p350, %p351
    %p353 = scmp.le.s32.totalorder 1, %s20
    %p354 = scmp.lt.s32.totalorder %s20, 3
    %p355 = pnand %p353, %p354
    %p356 = pneg %p355
    // Predicated region
    $region9: #{fatigue_forward.1} parent=5 // pred_check
      _
    $region10: #{fatigue_forward.1} parent=5 // pred_check_branch
      %358 = sbr.rel (%p355) target = $region12
    $region11: #{fatigue_forward.1} parent=5 // pred_region
      %s359 = ssub.s32 %s20, 1
      // Predicated region
      $region13: #{fatigue_forward.1} parent=11 // pred_check
        %p360 = pneg %p67
      $region14: #{fatigue_forward.1} parent=11 // pred_check_branch
        %362 = sbr.rel (%p360) target = $region16
      $region15: #{fatigue_forward.1} parent=11 // pred_region
        _
      $region16: #{fatigue_forward.1} parent=11 // pred_fallthru
        _
      // Predicated region
      $region17: #{fatigue_forward.1} parent=11 // pred_check
        %p363 = pneg %p88
      $region18: #{fatigue_forward.1} parent=11 // pred_check_branch
        %365 = sbr.rel (%p363) target = $region20
      $region19: #{fatigue_forward.1} parent=11 // pred_region
        _
      $region20: #{fatigue_forward.1} parent=11 // pred_fallthru
        _
      // Predicated region
      $region21: #{fatigue_forward.1} parent=11 // pred_check
        %p366 = pneg %p109
      $region22: #{fatigue_forward.1} parent=11 // pred_check_branch
        %368 = sbr.rel (%p366) target = $region24
      $region23: #{fatigue_forward.1} parent=11 // pred_region
        _
      $region24: #{fatigue_forward.1} parent=11 // pred_fallthru
        _
      // Predicated region
      $region25: #{fatigue_forward.1} parent=11 // pred_check
        %p369 = pneg %p130
      $region26: #{fatigue_forward.1} parent=11 // pred_check_branch
        %371 = sbr.rel (%p369) target = $region28
      $region27: #{fatigue_forward.1} parent=11 // pred_region
        _
      $region28: #{fatigue_forward.1} parent=11 // pred_fallthru
        _
      // Predicated region
      $region29: #{fatigue_forward.1} parent=11 // pred_check
        %p372 = pneg %p151
      $region30: #{fatigue_forward.1} parent=11 // pred_check_branch
        %374 = sbr.rel (%p372) target = $region32
      $region31: #{fatigue_forward.1} parent=11 // pred_region
        _
      $region32: #{fatigue_forward.1} parent=11 // pred_fallthru
        _
      // Predicated region
      $region33: #{fatigue_forward.1} parent=11 // pred_check
        %p375 = pneg %p172
      $region34: #{fatigue_forward.1} parent=11 // pred_check_branch
        %377 = sbr.rel (%p375) target = $region36
      $region35: #{fatigue_forward.1} parent=11 // pred_region
        _
      $region36: #{fatigue_forward.1} parent=11 // pred_fallthru
        _
      // Predicated region
      $region37: #{fatigue_forward.1} parent=11 // pred_check
        %p378 = pneg %p193
      $region38: #{fatigue_forward.1} parent=11 // pred_check_branch
        %380 = sbr.rel (%p378) target = $region40
      $region39: #{fatigue_forward.1} parent=11 // pred_region
        _
      $region40: #{fatigue_forward.1} parent=11 // pred_fallthru
        _
      // Predicated region
      $region41: #{fatigue_forward.1} parent=11 // pred_check
        %p381 = pneg %p214
      $region42: #{fatigue_forward.1} parent=11 // pred_check_branch
        %383 = sbr.rel (%p381) target = $region44
      $region43: #{fatigue_forward.1} parent=11 // pred_region
        _
      $region44: #{fatigue_forward.1} parent=11 // pred_fallthru
        _
      // Predicated region
      $region45: #{fatigue_forward.1} parent=11 // pred_check
        %p384 = pneg %p235
      $region46: #{fatigue_forward.1} parent=11 // pred_check_branch
        %386 = sbr.rel (%p384) target = $region48
      $region47: #{fatigue_forward.1} parent=11 // pred_region
        _
      $region48: #{fatigue_forward.1} parent=11 // pred_fallthru
        _
      // Predicated region
      $region49: #{fatigue_forward.1} parent=11 // pred_check
        %p387 = pneg %p256
      $region50: #{fatigue_forward.1} parent=11 // pred_check_branch
        %389 = sbr.rel (%p387) target = $region52
      $region51: #{fatigue_forward.1} parent=11 // pred_region
        _
      $region52: #{fatigue_forward.1} parent=11 // pred_fallthru
        _
      // Predicated region
      $region53: #{fatigue_forward.1} parent=11 // pred_check
        %p390 = pneg %p277
      $region54: #{fatigue_forward.1} parent=11 // pred_check_branch
        %392 = sbr.rel (%p390) target = $region56
      $region55: #{fatigue_forward.1} parent=11 // pred_region
        _
      $region56: #{fatigue_forward.1} parent=11 // pred_fallthru
        _
      // Predicated region
      $region57: #{fatigue_forward.1} parent=11 // pred_check
        %p393 = pneg %p298
      $region58: #{fatigue_forward.1} parent=11 // pred_check_branch
        %395 = sbr.rel (%p393) target = $region60
      $region59: #{fatigue_forward.1} parent=11 // pred_region
        _
      $region60: #{fatigue_forward.1} parent=11 // pred_fallthru
        _
      // Predicated region
      $region61: #{fatigue_forward.1} parent=11 // pred_check
        %p396 = pneg %p319
      $region62: #{fatigue_forward.1} parent=11 // pred_check_branch
        %398 = sbr.rel (%p396) target = $region64
      $region63: #{fatigue_forward.1} parent=11 // pred_region
        _
      $region64: #{fatigue_forward.1} parent=11 // pred_fallthru
        _
    $region12: #{fatigue_forward.1} parent=5 // pred_fallthru
      _
    %p399 = scmp.lt.s32.totalorder %s20, 2
    // Predicated region
    $region65: #{fatigue_forward.1} parent=5 // pred_check
      %p400 = pneg %p399
    $region66: #{fatigue_forward.1} parent=5 // pred_check_branch
      %402 = sbr.rel (%p400) target = $region68
    $region67: #{fatigue_forward.1} parent=5 // pred_region
      // Predicated region
      $region69: #{fatigue_forward.1} parent=67 // pred_check
        %p403 = pneg %p40
      $region70: #{fatigue_forward.1} parent=67 // pred_check_branch
        %405 = sbr.rel (%p403) target = $region72
      $region71: #{fatigue_forward.1} parent=67 // pred_region
        %p406 = scmp.lt.s32.totalorder %s20, 1
        %s407 = scalar_select %p406, %s20, 1
        %s408 = smul.addr %s407, 5
        %s409 = smul.addr %s408, 8
        %s410 = scalar_lea.vmem %s0, %s409
      $region72: #{fatigue_forward.1} parent=67 // pred_fallthru
        _
    $region68: #{fatigue_forward.1} parent=5 // pred_fallthru
      _
    %p411 = scmp.le.s32.totalorder 1, %s20
    %p412 = scmp.lt.s32.totalorder %s20, 3
    %p413 = pnand %p411, %p412
    %p414 = pneg %p413
    // Predicated region
    $region73: #{fatigue_forward.1} parent=5 // pred_check
      _
    $region74: #{fatigue_forward.1} parent=5 // pred_check_branch
      %416 = sbr.rel (%p413) target = $region76
    $region75: #{fatigue_forward.1} parent=5 // pred_region
      %s417 = ssub.s32 %s20, 1
      %p418 = scmp.lt.s32.totalorder %s25, 1
      %s419 = scalar_select %p418, %s25, 1
      %s420 = smul.addr %s419, 5
      %s421 = smul.addr %s420, 8
      %s422 = scalar_lea.vmem %s0, %s421
      %p423 = pneg %p46
      %p424 = pneg %p43
      %p425 = pneg %p67
      %p426 = pneg %p64
      %p427 = pneg %p88
      %p428 = pneg %p85
      %p429 = pneg %p109
      %p430 = pneg %p106
      %p431 = pneg %p130
      %p432 = pneg %p127
      %p433 = pneg %p151
      %p434 = pneg %p148
      %p435 = pneg %p172
      %p436 = pneg %p169
      %p437 = pneg %p193
      %p438 = pneg %p190
      %p439 = pneg %p214
      %p440 = pneg %p211
      %p441 = pneg %p235
      %p442 = pneg %p232
      %p443 = pneg %p256
      %p444 = pneg %p253
      %p445 = pneg %p277
      %p446 = pneg %p274
      %p447 = pneg %p298
      %p448 = pneg %p295
      %p449 = pneg %p319
      %p450 = pneg %p316
      %p451 = pneg %p345
      %p452 = pneg %p342
      %p453 = scmp.lt.s32.totalorder %s25, 1
      %s454 = scalar_select %p453, %s25, 1
      %s455 = smul.addr %s454, 3
      %s456 = smul.addr %s455, 8
      %s457 = scalar_lea.vmem %s14, %s456
      %p458 = scmp.lt.s32.totalorder %s25, 1
      %s459 = scalar_select %p458, %s25, 1
      %s460 = smul.addr %s459, 5
      %s461 = smul.addr %s460, 8
      %s462 = scalar_lea.vmem %s0, %s461
      %p463 = scmp.lt.s32.totalorder %s25, 1
      %s464 = scalar_select %p463, %s25, 1
      %s465 = smul.addr %s464, 3
      %s466 = smul.addr %s465, 8
      %s467 = scalar_lea.vmem %s14, %s466
      %v468 = vld [vmem:[%s462] sm:$0xff]
      %v469 = vld [vmem:[%s462 + $0x8] sm:$0xff]
      %v470 = vld [vmem:[%s462 + $0x10] sm:$0xff]
      %v471 = vld [vmem:[%s462 + $0x18] sm:$0xff]
      %v472 = vld [vmem:[%s462 + $0x20] sm:$0xff]
      %v473 = vld [vmem:[%s1] sm:$0xff]
      %v474 = vld [vmem:[%s1 + $0x8] sm:$0xff]
      %v475 = vld [vmem:[%s1 + $0x10] sm:$0x1f]
      %v476 = vld [vmem:[%s2] sm:$0x1]
      %v478 = vlaneseq
      %v479 = vshrl.u32 %v478, 7
      %v480 = vsub.s32 0, %v479
      %v481 = vrot.slane %v476, %v480
      %vm483 = vcmask 171008
      %v485 = vsel %vm483, %v468, 0
      %v488 = vsel %vm483, %v469, 0
      %v491 = vsel %vm483, %v470, 0
      %v494 = vsel %vm483, %v471, 0
      %v497 = vsel %vm483, %v472, 0
      %vm499 = vcmask 1044480
      %v501 = vsel %vm499, %v475, 0
      %503 = vmatprep.subr.mxu0 0.0
      %504 = vmatpush1.msra.mxu0 %v473
      %505 = vmatprep.subr.mxu0 0.0
      %506 = vmatpush1.msra.mxu0 %v474
      %507 = vmatprep.subr.mxu0 0.0
      %508 = vmatpush1.msra.mxu0 %v501
      %509 = vmatprep.subr.mxu0 0.0
      %510 = vmatpush1.msra.mxu0 0.0
      %511 = vmatprep.subr.mxu0 0.0
      %512 = vmatpush1.msra.mxu0 0.0
      %513 = vmatprep.subr.mxu0 0.0
      %514 = vmatpush1.msra.mxu0 0.0
      %515 = vmatprep.subr.mxu0 0.0
      %516 = vmatpush1.msra.mxu0 0.0
      %517 = vmatprep.subr.mxu0 0.0
      %518 = vmatpush1.msra.mxu0 0.0
      %519 = vmatprep.subr.mxu0 0.0
      %520 = vmatpush1.msra.mxu0 0.0
      %521 = vmatprep.subr.mxu0 0.0
      %522 = vmatpush1.msra.mxu0 0.0
      %523 = vmatprep.subr.mxu0 0.0
      %524 = vmatpush1.msra.mxu0 0.0
      %525 = vmatprep.subr.mxu0 0.0
      %526 = vmatpush1.msra.mxu0 0.0
      %527 = vmatprep.subr.mxu0 0.0
      %528 = vmatpush1.msra.mxu0 0.0
      %529 = vmatprep.subr.mxu0 0.0
      %530 = vmatpush1.msra.mxu0 0.0
      %531 = vmatprep.subr.mxu0 0.0
      %532 = vmatpush1.msra.mxu0 0.0
      %533 = vmatprep.subr.mxu0 0.0
      %534 = vmatpush1.msra.mxu0 0.0
      %535 = vmatprep.subr.mxu0 0.0
      %536 = vmatpush1.msra.mxu0 0.0
      %537 = vmatprep.subr.mxu0 0.0
      %538 = vmatpush1.msra.mxu0 0.0
      %539 = vmatprep.subr.mxu0 0.0
      %540 = vmatpush1.msra.mxu0 0.0
      %541 = vmatprep.subr.mxu0 0.0
      %542 = vmatpush1.msra.mxu0 0.0
      %543 = vmatprep.subr.mxu0 0.0
      %544 = vmatpush1.msra.mxu0 0.0
      %545 = vmatprep.subr.mxu0 0.0
      %546 = vmatpush1.msra.mxu0 0.0
      %547 = vmatprep.subr.mxu0 0.0
      %548 = vmatpush1.msra.mxu0 0.0
      %549 = vmatprep.subr.mxu0 0.0
      %550 = vmatpush1.msra.mxu0 0.0
      %551 = vmatprep.subr.mxu0 0.0
      %552 = vmatpush1.msra.mxu0 0.0
      %553 = vmatprep.subr.mxu0 0.0
      %554 = vmatpush1.msra.mxu0 0.0
      %555 = vmatprep.subr.mxu0 0.0
      %556 = vmatpush1.msra.mxu0 0.0
      %557 = vmatprep.subr.mxu0 0.0
      %558 = vmatpush1.msra.mxu0 0.0
      %559 = vmatprep.subr.mxu0 0.0
      %560 = vmatpush1.msra.mxu0 0.0
      %561 = vmatprep.subr.mxu0 0.0
      %562 = vmatpush1.msra.mxu0 0.0
      %563 = vmatprep.subr.mxu0 0.0
      %564 = vmatpush1.msra.mxu0 0.0
      %565 = vmatprep.subr.mxu0 0.0
      %566 = vmatpush1.msra.mxu0 0.0
      %567 = vmatprep.mubr.f32.mxu0 0.0
      %568 = vmatmul.mubr.f32.gmra.mrb[0].mxu0 %v485
      %v569 = vpop.f32.mrb[0].mxu0
      %v570 = vadd.f32 %v481, %v569
      %v571 = vpop.f32.mrb[0].mxu0
      %572 = vmatprep.mubr.f32.mxu0 0.0
      %573 = vmatmul.mubr.f32.gmra.mrb[0].mxu0 %v488
      %v574 = vpop.f32.mrb[0].mxu0
      %v575 = vadd.f32 %v481, %v574
      %v576 = vpop.f32.mrb[0].mxu0
      %577 = vmatprep.mubr.f32.mxu0 0.0
      %578 = vmatmul.mubr.f32.gmra.mrb[0].mxu0 %v491
      %v579 = vpop.f32.mrb[0].mxu0
      %v580 = vadd.f32 %v481, %v579
      %v581 = vpop.f32.mrb[0].mxu0
      %582 = vmatprep.mubr.f32.mxu0 0.0
      %583 = vmatmul.mubr.f32.gmra.mrb[0].mxu0 %v494
      %v584 = vpop.f32.mrb[0].mxu0
      %v585 = vadd.f32 %v481, %v584
      %v586 = vpop.f32.mrb[0].mxu0
      %587 = vmatprep.mubr.f32.mxu0 0.0
      %588 = vmatmul.mubr.f32.gmra.mrb[0].mxu0 %v497
      %v589 = vpop.f32.mrb[0].mxu0
      %v590 = vadd.f32 %v481, %v589
      %v591 = vpop.f32.mrb[0].mxu0
      %592 = vdwg.mxu0
      %v593 = vmax.f32 %v570, 0.0
      %v594 = vmax.f32 %v575, 0.0
      %v595 = vmax.f32 %v580, 0.0
      %v596 = vmax.f32 %v585, 0.0
      %v597 = vmax.f32 %v590, 0.0
      %v598 = vld [vmem:[%s3] sm:$0x1]
      %v599 = vld [vmem:[%s4] sm:$0x1]
      %vm600 = vcmask 261120
      %v601 = vsel %vm600, %v593, 0.0
      %602 = vadd.xlane.f32.xlu0 %v601
      %v603 = vpop.xlane.xlu0 %602
      %v604 = vsel %vm600, %v594, 0.0
      %605 = vadd.xlane.f32.xlu0 %v604
      %v606 = vpop.xlane.xlu0 %605
      %v607 = vsel %vm600, %v595, 0.0
      %608 = vadd.xlane.f32.xlu0 %v607
      %v609 = vpop.xlane.xlu0 %608
      %v610 = vsel %vm600, %v596, 0.0
      %611 = vadd.xlane.f32.xlu0 %v610
      %v612 = vpop.xlane.xlu0 %611
      %v613 = vsel %vm600, %v597, 0.0
      %614 = vadd.xlane.f32.xlu0 %v613
      %v615 = vpop.xlane.xlu0 %614
      %v616 = vrcp.pop 32.0
      %v617 = vmul.f32 %v603, %v616
      %v618 = vmul.f32 %v606, %v616
      %v619 = vmul.f32 %v609, %v616
      %v620 = vmul.f32 %v612, %v616
      %v621 = vmul.f32 %v615, %v616
      %v622 = vsub.f32 %v593, %v617
      %v623 = vsub.f32 %v594, %v618
      %v624 = vsub.f32 %v595, %v619
      %v625 = vsub.f32 %v596, %v620
      %v626 = vsub.f32 %v597, %v621
      %v627 = vmul.f32 %v622, %v622
      %v628 = vmul.f32 %v623, %v623
      %v629 = vmul.f32 %v624, %v624
      %v630 = vmul.f32 %v625, %v625
      %v631 = vmul.f32 %v626, %v626
      %v632 = vsel %vm600, %v627, 0.0
      %633 = vadd.xlane.f32.xlu0 %v632
      %v634 = vpop.xlane.xlu0 %633
      %v635 = vsel %vm600, %v628, 0.0
      %636 = vadd.xlane.f32.xlu0 %v635
      %v637 = vpop.xlane.xlu0 %636
      %v638 = vsel %vm600, %v629, 0.0
      %639 = vadd.xlane.f32.xlu0 %v638
      %v640 = vpop.xlane.xlu0 %639
      %v641 = vsel %vm600, %v630, 0.0
      %642 = vadd.xlane.f32.xlu0 %v641
      %v643 = vpop.xlane.xlu0 %642
      %v644 = vsel %vm600, %v631, 0.0
      %645 = vadd.xlane.f32.xlu0 %v644
      %v646 = vpop.xlane.xlu0 %645
      %v647 = vmul.f32 %v634, %v616
      %v648 = vmul.f32 %v637, %v616
      %v649 = vmul.f32 %v640, %v616
      %v650 = vmul.f32 %v643, %v616
      %v651 = vmul.f32 %v646, %v616
      %v652 = vadd.f32 %v647, 1e-05
      %v653 = vadd.f32 %v648, 1e-05
      %v654 = vadd.f32 %v649, 1e-05
      %v655 = vadd.f32 %v650, 1e-05
      %v656 = vadd.f32 %v651, 1e-05
      %v657 = vrsqrt.pop %v652
      %v658 = vrsqrt.pop %v653
      %v659 = vrsqrt.pop %v654
      %v660 = vrsqrt.pop %v655
      %v661 = vrsqrt.pop %v656
      %v662 = vmul.f32 %v622, %v657
      %v663 = vmul.f32 %v623, %v658
      %v664 = vmul.f32 %v624, %v659
      %v665 = vmul.f32 %v625, %v660
      %v666 = vmul.f32 %v626, %v661
      %v668 = vlaneseq
      %v669 = vshrl.u32 %v668, 7
      %v670 = vsub.s32 0, %v669
      %v671 = vrot.slane %v598, %v670
      %v673 = vmul.f32 %v662, %v671
      %v674 = vmul.f32 %v663, %v671
      %v675 = vmul.f32 %v664, %v671
      %v676 = vmul.f32 %v665, %v671
      %v677 = vmul.f32 %v666, %v671
      %v679 = vlaneseq
      %v680 = vshrl.u32 %v679, 7
      %v681 = vsub.s32 0, %v680
      %v682 = vrot.slane %v599, %v681
      %v684 = vadd.f32 %v673, %v682
      %v685 = vadd.f32 %v674, %v682
      %v686 = vadd.f32 %v675, %v682
      %v687 = vadd.f32 %v676, %v682
      %v688 = vadd.f32 %v677, %v682
      %689 = vst.msk [vmem:[#allocation2] sm:$0xff] %vm600, %v684
      %690 = vst.msk [vmem:[#allocation2 + $0x8] sm:$0xff] %vm600, %v685
      %691 = vst.msk [vmem:[#allocation2 + $0x10] sm:$0xff] %vm600, %v686
      %692 = vst.msk [vmem:[#allocation2 + $0x18] sm:$0xff] %vm600, %v687
      %693 = vst.msk [vmem:[#allocation2 + $0x20] sm:$0xff] %vm600, %v688
      %v694 = vld [vmem:[#allocation2] sm:$0xff]
      %v695 = vld [vmem:[#allocation2 + $0x8] sm:$0xff]
      %v696 = vld [vmem:[#allocation2 + $0x10] sm:$0xff]
      %v697 = vld [vmem:[#allocation2 + $0x18] sm:$0xff]
      %v698 = vld [vmem:[#allocation2 + $0x20] sm:$0xff]
      %v699 = vld [vmem:[%s5] sm:$0xff]
      %v700 = vld [vmem:[%s5 + $0x8] sm:$0xff]
      %v701 = vld [vmem:[%s5 + $0x10] sm:$0xff]
      %v702 = vld [vmem:[%s5 + $0x18] sm:$0xff]
      %v703 = vld [vmem:[%s7] sm:$0x1]
      %v705 = vlaneseq
      %v706 = vshrl.u32 %v705, 7
      %v707 = vsub.s32 0, %v706
      %v708 = vrot.slane %v703, %v707
      %v711 = vsel %vm600, %v694, 0
      %v714 = vsel %vm600, %v695, 0
      %v717 = vsel %vm600, %v696, 0
      %v720 = vsel %vm600, %v697, 0
      %v723 = vsel %vm600, %v698, 0
      %725 = vmatprep.subr.mxu0 0.0
      %726 = vmatpush1.msra.mxu0 %v699
      %727 = vmatprep.subr.mxu0 0.0
      %728 = vmatpush1.msra.mxu0 %v700
      %729 = vmatprep.subr.mxu0 0.0
      %730 = vmatpush1.msra.mxu0 %v701
      %731 = vmatprep.subr.mxu0 0.0
      %732 = vmatpush1.msra.mxu0 %v702
      %733 = vmatprep.subr.mxu0 0.0
      %734 = vmatpush1.msra.mxu0 0.0
      %735 = vmatprep.subr.mxu0 0.0
      %736 = vmatpush1.msra.mxu0 0.0
      %737 = vmatprep.subr.mxu0 0.0
      %738 = vmatpush1.msra.mxu0 0.0
      %739 = vmatprep.subr.mxu0 0.0
      %740 = vmatpush1.msra.mxu0 0.0
      %741 = vmatprep.subr.mxu0 0.0
      %742 = vmatpush1.msra.mxu0 0.0
      %743 = vmatprep.subr.mxu0 0.0
      %744 = vmatpush1.msra.mxu0 0.0
      %745 = vmatprep.subr.mxu0 0.0
      %746 = vmatpush1.msra.mxu0 0.0
      %747 = vmatprep.subr.mxu0 0.0
      %748 = vmatpush1.msra.mxu0 0.0
      %749 = vmatprep.subr.mxu0 0.0
      %750 = vmatpush1.msra.mxu0 0.0
      %751 = vmatprep.subr.mxu0 0.0
      %752 = vmatpush1.msra.mxu0 0.0
      %753 = vmatprep.subr.mxu0 0.0
      %754 = vmatpush1.msra.mxu0 0.0
      %755 = vmatprep.subr.mxu0 0.0
      %756 = vmatpush1.msra.mxu0 0.0
      %757 = vmatprep.subr.mxu0 0.0
      %758 = vmatpush1.msra.mxu0 0.0
      %759 = vmatprep.subr.mxu0 0.0
      %760 = vmatpush1.msra.mxu0 0.0
      %761 = vmatprep.subr.mxu0 0.0
      %762 = vmatpush1.msra.mxu0 0.0
      %763 = vmatprep.subr.mxu0 0.0
      %764 = vmatpush1.msra.mxu0 0.0
      %765 = vmatprep.subr.mxu0 0.0
      %766 = vmatpush1.msra.mxu0 0.0
      %767 = vmatprep.subr.mxu0 0.0
      %768 = vmatpush1.msra.mxu0 0.0
      %769 = vmatprep.subr.mxu0 0.0
      %770 = vmatpush1.msra.mxu0 0.0
      %771 = vmatprep.subr.mxu0 0.0
      %772 = vmatpush1.msra.mxu0 0.0
      %773 = vmatprep.subr.mxu0 0.0
      %774 = vmatpush1.msra.mxu0 0.0
      %775 = vmatprep.subr.mxu0 0.0
      %776 = vmatpush1.msra.mxu0 0.0
      %777 = vmatprep.subr.mxu0 0.0
      %778 = vmatpush1.msra.mxu0 0.0
      %779 = vmatprep.subr.mxu0 0.0
      %780 = vmatpush1.msra.mxu0 0.0
      %781 = vmatprep.subr.mxu0 0.0
      %782 = vmatpush1.msra.mxu0 0.0
      %783 = vmatprep.subr.mxu0 0.0
      %784 = vmatpush1.msra.mxu0 0.0
      %785 = vmatprep.subr.mxu0 0.0
      %786 = vmatpush1.msra.mxu0 0.0
      %787 = vmatprep.subr.mxu0 0.0
      %788 = vmatpush1.msra.mxu0 0.0
      %789 = vmatprep.mubr.f32.mxu0 0.0
      %790 = vmatmul.mubr.f32.gmra.mrb[0].mxu0 %v711
      %v791 = vpop.f32.mrb[0].mxu0
      %v792 = vadd.f32 %v708, %v791
      %v793 = vpop.f32.mrb[0].mxu0
      %794 = vmatprep.mubr.f32.mxu0 0.0
      %795 = vmatmul.mubr.f32.gmra.mrb[0].mxu0 %v714
      %v796 = vpop.f32.mrb[0].mxu0
      %v797 = vadd.f32 %v708, %v796
      %v798 = vpop.f32.mrb[0].mxu0
      %799 = vmatprep.mubr.f32.mxu0 0.0
      %800 = vmatmul.mubr.f32.gmra.mrb[0].mxu0 %v717
      %v801 = vpop.f32.mrb[0].mxu0
      %v802 = vadd.f32 %v708, %v801
      %v803 = vpop.f32.mrb[0].mxu0
      %804 = vmatprep.mubr.f32.mxu0 0.0
      %805 = vmatmul.mubr.f32.gmra.mrb[0].mxu0 %v720
      %v806 = vpop.f32.mrb[0].mxu0
      %v807 = vadd.f32 %v708, %v806
      %v808 = vpop.f32.mrb[0].mxu0
      %809 = vmatprep.mubr.f32.mxu0 0.0
      %810 = vmatmul.mubr.f32.gmra.mrb[0].mxu0 %v723
      %v811 = vpop.f32.mrb[0].mxu0
      %v812 = vadd.f32 %v708, %v811
      %v813 = vpop.f32.mrb[0].mxu0
      %814 = vdwg.mxu0
      %vm815 = vcmask 785408
      %816 = vst.msk [vmem:[#allocation3] sm:$0xff] %vm815, %v792
      %817 = vst.msk [vmem:[#allocation3 + $0x8] sm:$0xff] %vm815, %v797
      %818 = vst.msk [vmem:[#allocation3 + $0x10] sm:$0xff] %vm815, %v802
      %819 = vst.msk [vmem:[#allocation3 + $0x18] sm:$0xff] %vm815, %v807
      %820 = vst.msk [vmem:[#allocation3 + $0x20] sm:$0xff] %vm815, %v812
      %v821 = vld [vmem:[%s6] sm:$0xff]
      %v822 = vld [vmem:[%s6 + $0x8] sm:$0xff]
      %v823 = vld [vmem:[%s6 + $0x10] sm:$0xff]
      %v824 = vld [vmem:[%s6 + $0x18] sm:$0xff]
      %v825 = vld [vmem:[%s8] sm:$0x1]
      %v826 = vld [vmem:[#allocation3] sm:$0xff]
      %v828 = vlaneseq
      %v829 = vshrl.u32 %v828, 7
      %v830 = vsub.s32 0, %v829
      %v831 = vrot.slane %v825, %v830
      %v834 = vsel %vm600, 0.0, 0
      %836 = vmatprep.subr.mxu0 0.0
      %837 = vmatpush1.msra.mxu0 %v821
      %838 = vmatprep.subr.mxu0 0.0
      %839 = vmatpush1.msra.mxu0 %v822
      %840 = vmatprep.subr.mxu0 0.0
      %841 = vmatpush1.msra.mxu0 %v823
      %842 = vmatprep.subr.mxu0 0.0
      %843 = vmatpush1.msra.mxu0 %v824
      %844 = vmatprep.subr.mxu0 0.0
      %845 = vmatpush1.msra.mxu0 0.0
      %846 = vmatprep.subr.mxu0 0.0
      %847 = vmatpush1.msra.mxu0 0.0
      %848 = vmatprep.subr.mxu0 0.0
      %849 = vmatpush1.msra.mxu0 0.0
      %850 = vmatprep.subr.mxu0 0.0
      %851 = vmatpush1.msra.mxu0 0.0
      %852 = vmatprep.subr.mxu0 0.0
      %853 = vmatpush1.msra.mxu0 0.0
      %854 = vmatprep.subr.mxu0 0.0
      %855 = vmatpush1.msra.mxu0 0.0
      %856 = vmatprep.subr.mxu0 0.0
      %857 = vmatpush1.msra.mxu0 0.0
      %858 = vmatprep.subr.mxu0 0.0
      %859 = vmatpush1.msra.mxu0 0.0
      %860 = vmatprep.subr.mxu0 0.0
      %861 = vmatpush1.msra.mxu0 0.0
      %862 = vmatprep.subr.mxu0 0.0
      %863 = vmatpush1.msra.mxu0 0.0
      %864 = vmatprep.subr.mxu0 0.0
      %865 = vmatpush1.msra.mxu0 0.0
      %866 = vmatprep.subr.mxu0 0.0
      %867 = vmatpush1.msra.mxu0 0.0
      %868 = vmatprep.subr.mxu0 0.0
      %869 = vmatpush1.msra.mxu0 0.0
      %870 = vmatprep.subr.mxu0 0.0
      %871 = vmatpush1.msra.mxu0 0.0
      %872 = vmatprep.subr.mxu0 0.0
      %873 = vmatpush1.msra.mxu0 0.0
      %874 = vmatprep.subr.mxu0 0.0
      %875 = vmatpush1.msra.mxu0 0.0
      %876 = vmatprep.subr.mxu0 0.0
      %877 = vmatpush1.msra.mxu0 0.0
      %878 = vmatprep.subr.mxu0 0.0
      %879 = vmatpush1.msra.mxu0 0.0
      %880 = vmatprep.subr.mxu0 0.0
      %881 = vmatpush1.msra.mxu0 0.0
      %882 = vmatprep.subr.mxu0 0.0
      %883 = vmatpush1.msra.mxu0 0.0
      %884 = vmatprep.subr.mxu0 0.0
      %885 = vmatpush1.msra.mxu0 0.0
      %886 = vmatprep.subr.mxu0 0.0
      %887 = vmatpush1.msra.mxu0 0.0
      %888 = vmatprep.subr.mxu0 0.0
      %889 = vmatpush1.msra.mxu0 0.0
      %890 = vmatprep.subr.mxu0 0.0
      %891 = vmatpush1.msra.mxu0 0.0
      %892 = vmatprep.subr.mxu0 0.0
      %893 = vmatpush1.msra.mxu0 0.0
      %894 = vmatprep.subr.mxu0 0.0
      %895 = vmatpush1.msra.mxu0 0.0
      %896 = vmatprep.subr.mxu0 0.0
      %897 = vmatpush1.msra.mxu0 0.0
      %898 = vmatprep.subr.mxu0 0.0
      %899 = vmatpush1.msra.mxu0 0.0
      %900 = vmatprep.mubr.f32.mxu0 0.0
      %901 = vmatmul.mubr.f32.gmra.mrb[0].mxu0 %v834
      %v902 = vpop.f32.mrb[0].mxu0
      %v903 = vadd.f32 %v831, %v902
      %v904 = vpop.f32.mrb[0].mxu0
      %905 = vdwg.mxu0
      %v906 = vadd.f32 %v826, %v903
      %v907 = vxor.u32 %v906, 2147483648
      %v908 = vmul.f32 %v907, 1.442695
      %v909 = vpow.pop %v908
      %v910 = vadd.f32 %v909, 1.0
      %v911 = vrcp.pop %v910
      %v912 = vmul.f32 1.0, %v911
      %914 = vrot.lane.b32.xlu0 %v903, 64
      %v915 = vpop.permute.xlu0 %914
      %v917 = vmul.f32 %v912, %v915
      %919 = vrot.lane.b32.xlu0 %v917, 64
      %v920 = vpop.permute.xlu0 %919
      %v922 = vadd.f32 %v826, %v920
      %v923 = vtanh.pop %v922
      %v924 = vsub.f32 1.0, %v912
      %926 = vrot.lane.b32.xlu0 %v923, 96
      %v927 = vpop.permute.xlu0 %926
      %v929 = vmul.f32 %v924, %v927
      %v930 = vmul.f32 %v912, 0.0
      %v931 = vadd.f32 %v929, %v930
      %933 = vrot.lane.b32.xlu0 %v931, 96
      %v934 = vpop.permute.xlu0 %933
      %v935 = vsel %vm600, %v934, 0
      %937 = vmatprep.subr.mxu0 0.0
      %938 = vmatpush1.msra.mxu0 %v821
      %939 = vmatprep.subr.mxu0 0.0
      %940 = vmatpush1.msra.mxu0 %v822
      %941 = vmatprep.subr.mxu0 0.0
      %942 = vmatpush1.msra.mxu0 %v823
      %943 = vmatprep.subr.mxu0 0.0
      %944 = vmatpush1.msra.mxu0 %v824
      %945 = vmatprep.subr.mxu0 0.0
      %946 = vmatpush1.msra.mxu0 0.0
      %947 = vmatprep.subr.mxu0 0.0
      %948 = vmatpush1.msra.mxu0 0.0
      %949 = vmatprep.subr.mxu0 0.0
      %950 = vmatpush1.msra.mxu0 0.0
      %951 = vmatprep.subr.mxu0 0.0
      %952 = vmatpush1.msra.mxu0 0.0
      %953 = vmatprep.subr.mxu0 0.0
      %954 = vmatpush1.msra.mxu0 0.0
      %955 = vmatprep.subr.mxu0 0.0
      %956 = vmatpush1.msra.mxu0 0.0
      %957 = vmatprep.subr.mxu0 0.0
      %958 = vmatpush1.msra.mxu0 0.0
      %959 = vmatprep.subr.mxu0 0.0
      %960 = vmatpush1.msra.mxu0 0.0
      %961 = vmatprep.subr.mxu0 0.0
      %962 = vmatpush1.msra.mxu0 0.0
      %963 = vmatprep.subr.mxu0 0.0
      %964 = vmatpush1.msra.mxu0 0.0
      %965 = vmatprep.subr.mxu0 0.0
      %966 = vmatpush1.msra.mxu0 0.0
      %967 = vmatprep.subr.mxu0 0.0
      %968 = vmatpush1.msra.mxu0 0.0
      %969 = vmatprep.subr.mxu0 0.0
      %970 = vmatpush1.msra.mxu0 0.0
      %971 = vmatprep.subr.mxu0 0.0
      %972 = vmatpush1.msra.mxu0 0.0
      %973 = vmatprep.subr.mxu0 0.0
      %974 = vmatpush1.msra.mxu0 0.0
      %975 = vmatprep.subr.mxu0 0.0
      %976 = vmatpush1.msra.mxu0 0.0
      %977 = vmatprep.subr.mxu0 0.0
      %978 = vmatpush1.msra.mxu0 0.0
      %979 = vmatprep.subr.mxu0 0.0
      %980 = vmatpush1.msra.mxu0 0.0
      %981 = vmatprep.subr.mxu0 0.0
      %982 = vmatpush1.msra.mxu0 0.0
      %983 = vmatprep.subr.mxu0 0.0
      %984 = vmatpush1.msra.mxu0 0.0
      %985 = vmatprep.subr.mxu0 0.0
      %986 = vmatpush1.msra.mxu0 0.0
      %987 = vmatprep.subr.mxu0 0.0
      %988 = vmatpush1.msra.mxu0 0.0
      %989 = vmatprep.subr.mxu0 0.0
      %990 = vmatpush1.msra.mxu0 0.0
      %991 = vmatprep.subr.mxu0 0.0
      %992 = vmatpush1.msra.mxu0 0.0
      %993 = vmatprep.subr.mxu0 0.0
      %994 = vmatpush1.msra.mxu0 0.0
      %995 = vmatprep.subr.mxu0 0.0
      %996 = vmatpush1.msra.mxu0 0.0
      %997 = vmatprep.subr.mxu0 0.0
      %998 = vmatpush1.msra.mxu0 0.0
      %999 = vmatprep.subr.mxu0 0.0
      %1000 = vmatpush1.msra.mxu0 0.0
      %1001 = vmatprep.mubr.f32.mxu0 0.0
      %1002 = vmatmul.mubr.f32.gmra.mrb[0].mxu0 %v935
      %v1003 = vpop.f32.mrb[0].mxu0
      %v1004 = vadd.f32 %v831, %v1003
      %v1005 = vpop.f32.mrb[0].mxu0
      %1006 = vdwg.mxu0
      %v1008 = vrot.slane %v1004, 6
      %v1010 = vadd.f32 %v826, %v1008
      %v1011 = vxor.u32 %v1010, 2147483648
      %v1012 = vmul.f32 %v1011, 1.442695
      %v1013 = vpow.pop %v1012
      %v1014 = vadd.f32 %v1013, 1.0
      %v1015 = vrcp.pop %v1014
      %v1016 = vmul.f32 1.0, %v1015
      %1017 = vrot.lane.b32.xlu0 %v1008, 64
      %v1018 = vpop.permute.xlu0 %1017
      %v1020 = vmul.f32 %v1016, %v1018
      %1022 = vrot.lane.b32.xlu0 %v1020, 64
      %v1023 = vpop.permute.xlu0 %1022
      %v1025 = vadd.f32 %v826, %v1023
      %v1026 = vtanh.pop %v1025
      %v1027 = vsub.f32 1.0, %v1016
      %1029 = vrot.lane.b32.xlu0 %v1026, 96
      %v1030 = vpop.permute.xlu0 %1029
      %v1032 = vmul.f32 %v1027, %v1030
      %v1033 = vrot.slane %v931, 6
      %v1035 = vmul.f32 %v1016, %v1033
      %v1036 = vadd.f32 %v1032, %v1035
      %v1038 = vrot.slane %v1036, 2
      %1039 = vrot.lane.b32.xlu0 %v1038, 96
      %v1040 = vpop.permute.xlu0 %1039
      %v1041 = vsel %vm600, %v1040, 0
      %1043 = vmatprep.subr.mxu0 0.0
      %1044 = vmatpush1.msra.mxu0 %v821
      %1045 = vmatprep.subr.mxu0 0.0
      %1046 = vmatpush1.msra.mxu0 %v822
      %1047 = vmatprep.subr.mxu0 0.0
      %1048 = vmatpush1.msra.mxu0 %v823
      %1049 = vmatprep.subr.mxu0 0.0
      %1050 = vmatpush1.msra.mxu0 %v824
      %1051 = vmatprep.subr.mxu0 0.0
      %1052 = vmatpush1.msra.mxu0 0.0
      %1053 = vmatprep.subr.mxu0 0.0
      %1054 = vmatpush1.msra.mxu0 0.0
      %1055 = vmatprep.subr.mxu0 0.0
      %1056 = vmatpush1.msra.mxu0 0.0
      %1057 = vmatprep.subr.mxu0 0.0
      %1058 = vmatpush1.msra.mxu0 0.0
      %1059 = vmatprep.subr.mxu0 0.0
      %1060 = vmatpush1.msra.mxu0 0.0
      %1061 = vmatprep.subr.mxu0 0.0
      %1062 = vmatpush1.msra.mxu0 0.0
      %1063 = vmatprep.subr.mxu0 0.0
      %1064 = vmatpush1.msra.mxu0 0.0
      %1065 = vmatprep.subr.mxu0 0.0
      %1066 = vmatpush1.msra.mxu0 0.0
      %1067 = vmatprep.subr.mxu0 0.0
      %1068 = vmatpush1.msra.mxu0 0.0
      %1069 = vmatprep.subr.mxu0 0.0
      %1070 = vmatpush1.msra.mxu0 0.0
      %1071 = vmatprep.subr.mxu0 0.0
      %1072 = vmatpush1.msra.mxu0 0.0
      %1073 = vmatprep.subr.mxu0 0.0
      %1074 = vmatpush1.msra.mxu0 0.0
      %1075 = vmatprep.subr.mxu0 0.0
      %1076 = vmatpush1.msra.mxu0 0.0
      %1077 = vmatprep.subr.mxu0 0.0
      %1078 = vmatpush1.msra.mxu0 0.0
      %1079 = vmatprep.subr.mxu0 0.0
      %1080 = vmatpush1.msra.mxu0 0.0
      %1081 = vmatprep.subr.mxu0 0.0
      %1082 = vmatpush1.msra.mxu0 0.0
      %1083 = vmatprep.subr.mxu0 0.0
      %1084 = vmatpush1.msra.mxu0 0.0
      %1085 = vmatprep.subr.mxu0 0.0
      %1086 = vmatpush1.msra.mxu0 0.0
      %1087 = vmatprep.subr.mxu0 0.0
      %1088 = vmatpush1.msra.mxu0 0.0
      %1089 = vmatprep.subr.mxu0 0.0
      %1090 = vmatpush1.msra.mxu0 0.0
      %1091 = vmatprep.subr.mxu0 0.0
      %1092 = vmatpush1.msra.mxu0 0.0
      %1093 = vmatprep.subr.mxu0 0.0
      %1094 = vmatpush1.msra.mxu0 0.0
      %1095 = vmatprep.subr.mxu0 0.0
      %1096 = vmatpush1.msra.mxu0 0.0
      %1097 = vmatprep.subr.mxu0 0.0
      %1098 = vmatpush1.msra.mxu0 0.0
      %1099 = vmatprep.subr.mxu0 0.0
      %1100 = vmatpush1.msra.mxu0 0.0
      %1101 = vmatprep.subr.mxu0 0.0
      %1102 = vmatpush1.msra.mxu0 0.0
      %1103 = vmatprep.subr.mxu0 0.0
      %1104 = vmatpush1.msra.mxu0 0.0
      %1105 = vmatprep.subr.mxu0 0.0
      %1106 = vmatpush1.msra.mxu0 0.0
      %1107 = vmatprep.mubr.f32.mxu0 0.0
      %1108 = vmatmul.mubr.f32.gmra.mrb[0].mxu0 %v1041
      %v1109 = vpop.f32.mrb[0].mxu0
      %v1110 = vadd.f32 %v831, %v1109
      %v1111 = vpop.f32.mrb[0].mxu0
      %1112 = vdwg.mxu0
      %v1114 = vrot.slane %v1110, 4
      %v1116 = vadd.f32 %v826, %v1114
      %v1117 = vxor.u32 %v1116, 2147483648
      %v1118 = vmul.f32 %v1117, 1.442695
      %v1119 = vpow.pop %v1118
      %v1120 = vadd.f32 %v1119, 1.0
      %v1121 = vrcp.pop %v1120
      %v1122 = vmul.f32 1.0, %v1121
      %1123 = vrot.lane.b32.xlu0 %v1114, 64
      %v1124 = vpop.permute.xlu0 %1123
      %v1126 = vmul.f32 %v1122, %v1124
      %1128 = vrot.lane.b32.xlu0 %v1126, 64
      %v1129 = vpop.permute.xlu0 %1128
      %v1131 = vadd.f32 %v826, %v1129
      %v1132 = vtanh.pop %v1131
      %v1133 = vsub.f32 1.0, %v1122
      %1135 = vrot.lane.b32.xlu0 %v1132, 96
      %v1136 = vpop.permute.xlu0 %1135
      %v1138 = vmul.f32 %v1133, %v1136
      %v1139 = vrot.slane %v1036, 6
      %v1141 = vmul.f32 %v1122, %v1139
      %v1142 = vadd.f32 %v1138, %v1141
      %v1144 = vrot.slane %v1142, 4
      %1145 = vrot.lane.b32.xlu0 %v1144, 96
      %v1146 = vpop.permute.xlu0 %1145
      %v1147 = vsel %vm600, %v1146, 0
      %1149 = vmatprep.subr.mxu0 0.0
      %1150 = vmatpush1.msra.mxu0 %v821
      %1151 = vmatprep.subr.mxu0 0.0
      %1152 = vmatpush1.msra.mxu0 %v822
      %1153 = vmatprep.subr.mxu0 0.0
      %1154 = vmatpush1.msra.mxu0 %v823
      %1155 = vmatprep.subr.mxu0 0.0
      %1156 = vmatpush1.msra.mxu0 %v824
      %1157 = vmatprep.subr.mxu0 0.0
      %1158 = vmatpush1.msra.mxu0 0.0
      %1159 = vmatprep.subr.mxu0 0.0
      %1160 = vmatpush1.msra.mxu0 0.0
      %1161 = vmatprep.subr.mxu0 0.0
      %1162 = vmatpush1.msra.mxu0 0.0
      %1163 = vmatprep.subr.mxu0 0.0
      %1164 = vmatpush1.msra.mxu0 0.0
      %1165 = vmatprep.subr.mxu0 0.0
      %1166 = vmatpush1.msra.mxu0 0.0
      %1167 = vmatprep.subr.mxu0 0.0
      %1168 = vmatpush1.msra.mxu0 0.0
      %1169 = vmatprep.subr.mxu0 0.0
      %1170 = vmatpush1.msra.mxu0 0.0
      %1171 = vmatprep.subr.mxu0 0.0
      %1172 = vmatpush1.msra.mxu0 0.0
      %1173 = vmatprep.subr.mxu0 0.0
      %1174 = vmatpush1.msra.mxu0 0.0
      %1175 = vmatprep.subr.mxu0 0.0
      %1176 = vmatpush1.msra.mxu0 0.0
      %1177 = vmatprep.subr.mxu0 0.0
      %1178 = vmatpush1.msra.mxu0 0.0
      %1179 = vmatprep.subr.mxu0 0.0
      %1180 = vmatpush1.msra.mxu0 0.0
      %1181 = vmatprep.subr.mxu0 0.0
      %1182 = vmatpush1.msra.mxu0 0.0
      %1183 = vmatprep.subr.mxu0 0.0
      %1184 = vmatpush1.msra.mxu0 0.0
      %1185 = vmatprep.subr.mxu0 0.0
      %1186 = vmatpush1.msra.mxu0 0.0
      %1187 = vmatprep.subr.mxu0 0.0
      %1188 = vmatpush1.msra.mxu0 0.0
      %1189 = vmatprep.subr.mxu0 0.0
      %1190 = vmatpush1.msra.mxu0 0.0
      %1191 = vmatprep.subr.mxu0 0.0
      %1192 = vmatpush1.msra.mxu0 0.0
      %1193 = vmatprep.subr.mxu0 0.0
      %1194 = vmatpush1.msra.mxu0 0.0
      %1195 = vmatprep.subr.mxu0 0.0
      %1196 = vmatpush1.msra.mxu0 0.0
      %1197 = vmatprep.subr.mxu0 0.0
      %1198 = vmatpush1.msra.mxu0 0.0
      %1199 = vmatprep.subr.mxu0 0.0
      %1200 = vmatpush1.msra.mxu0 0.0
      %1201 = vmatprep.subr.mxu0 0.0
      %1202 = vmatpush1.msra.mxu0 0.0
      %1203 = vmatprep.subr.mxu0 0.0
      %1204 = vmatpush1.msra.mxu0 0.0
      %1205 = vmatprep.subr.mxu0 0.0
      %1206 = vmatpush1.msra.mxu0 0.0
      %1207 = vmatprep.subr.mxu0 0.0
      %1208 = vmatpush1.msra.mxu0 0.0
      %1209 = vmatprep.subr.mxu0 0.0
      %1210 = vmatpush1.msra.mxu0 0.0
      %1211 = vmatprep.subr.mxu0 0.0
      %1212 = vmatpush1.msra.mxu0 0.0
      %1213 = vmatprep.mubr.f32.mxu0 0.0
      %1214 = vmatmul.mubr.f32.gmra.mrb[0].mxu0 %v1147
      %v1215 = vpop.f32.mrb[0].mxu0
      %v1216 = vadd.f32 %v831, %v1215
      %v1217 = vpop.f32.mrb[0].mxu0
      %1218 = vdwg.mxu0
      %v1220 = vrot.slane %v1216, 2
      %v1222 = vadd.f32 %v826, %v1220
      %v1223 = vxor.u32 %v1222, 2147483648
      %v1224 = vmul.f32 %v1223, 1.442695
      %v1225 = vpow.pop %v1224
      %v1226 = vadd.f32 %v1225, 1.0
      %v1227 = vrcp.pop %v1226
      %v1228 = vmul.f32 1.0, %v1227
      %1229 = vrot.lane.b32.xlu0 %v1220, 64
      %v1230 = vpop.permute.xlu0 %1229
      %v1232 = vmul.f32 %v1228, %v1230
      %1234 = vrot.lane.b32.xlu0 %v1232, 64
      %v1235 = vpop.permute.xlu0 %1234
      %v1237 = vadd.f32 %v826, %v1235
      %v1238 = vtanh.pop %v1237
      %v1239 = vsub.f32 1.0, %v1228
      %1241 = vrot.lane.b32.xlu0 %v1238, 96
      %v1242 = vpop.permute.xlu0 %1241
      %v1244 = vmul.f32 %v1239, %v1242
      %v1245 = vrot.slane %v1142, 6
      %v1247 = vmul.f32 %v1228, %v1245
      %v1248 = vadd.f32 %v1244, %v1247
      %vm1249 = vcmask 1041408
      %v1250 = vsel %vm1249, %v931, %v1036
      %vm1251 = vcmask 1043456
      %v1252 = vsel %vm1251, %v1250, %v1142
      %vm1253 = vcmask 1045504
      %v1254 = vsel %vm1253, %v1252, %v1248
      %1256 = vrot.lane.b32.xlu0 %v1254, 96
      %v1257 = vpop.permute.xlu0 %1256
      %1259 = vst.msk [vmem:[#allocation2] sm:$0xff] %vm600, %v1257
      %s1260 = scalar_lea.vmem [#allocation3], 8
      %v1261 = vld [vmem:[%s1260] sm:$0xff]
      %v1263 = vrot.slane %v1248, 6
      %1264 = vrot.lane.b32.xlu0 %v1263, 96
      %v1265 = vpop.permute.xlu0 %1264
      %v1266 = vsel %vm600, %v1265, 0
      %1268 = vmatprep.subr.mxu0 0.0
      %1269 = vmatpush1.msra.mxu0 %v821
      %1270 = vmatprep.subr.mxu0 0.0
      %1271 = vmatpush1.msra.mxu0 %v822
      %1272 = vmatprep.subr.mxu0 0.0
      %1273 = vmatpush1.msra.mxu0 %v823
      %1274 = vmatprep.subr.mxu0 0.0
      %1275 = vmatpush1.msra.mxu0 %v824
      %1276 = vmatprep.subr.mxu0 0.0
      %1277 = vmatpush1.msra.mxu0 0.0
      %1278 = vmatprep.subr.mxu0 0.0
      %1279 = vmatpush1.msra.mxu0 0.0
      %1280 = vmatprep.subr.mxu0 0.0
      %1281 = vmatpush1.msra.mxu0 0.0
      %1282 = vmatprep.subr.mxu0 0.0
      %1283 = vmatpush1.msra.mxu0 0.0
      %1284 = vmatprep.subr.mxu0 0.0
      %1285 = vmatpush1.msra.mxu0 0.0
      %1286 = vmatprep.subr.mxu0 0.0
      %1287 = vmatpush1.msra.mxu0 0.0
      %1288 = vmatprep.subr.mxu0 0.0
      %1289 = vmatpush1.msra.mxu0 0.0
      %1290 = vmatprep.subr.mxu0 0.0
      %1291 = vmatpush1.msra.mxu0 0.0
      %1292 = vmatprep.subr.mxu0 0.0
      %1293 = vmatpush1.msra.mxu0 0.0
      %1294 = vmatprep.subr.mxu0 0.0
      %1295 = vmatpush1.msra.mxu0 0.0
      %1296 = vmatprep.subr.mxu0 0.0
      %1297 = vmatpush1.msra.mxu0 0.0
      %1298 = vmatprep.subr.mxu0 0.0
      %1299 = vmatpush1.msra.mxu0 0.0
      %1300 = vmatprep.subr.mxu0 0.0
      %1301 = vmatpush1.msra.mxu0 0.0
      %1302 = vmatprep.subr.mxu0 0.0
      %1303 = vmatpush1.msra.mxu0 0.0
      %1304 = vmatprep.subr.mxu0 0.0
      %1305 = vmatpush1.msra.mxu0 0.0
      %1306 = vmatprep.subr.mxu0 0.0
      %1307 = vmatpush1.msra.mxu0 0.0
      %1308 = vmatprep.subr.mxu0 0.0
      %1309 = vmatpush1.msra.mxu0 0.0
      %1310 = vmatprep.subr.mxu0 0.0
      %1311 = vmatpush1.msra.mxu0 0.0
      %1312 = vmatprep.subr.mxu0 0.0
      %1313 = vmatpush1.msra.mxu0 0.0
      %1314 = vmatprep.subr.mxu0 0.0
      %1315 = vmatpush1.msra.mxu0 0.0
      %1316 = vmatprep.subr.mxu0 0.0
      %1317 = vmatpush1.msra.mxu0 0.0
      %1318 = vmatprep.subr.mxu0 0.0
      %1319 = vmatpush1.msra.mxu0 0.0
      %1320 = vmatprep.subr.mxu0 0.0
      %1321 = vmatpush1.msra.mxu0 0.0
      %1322 = vmatprep.subr.mxu0 0.0
      %1323 = vmatpush1.msra.mxu0 0.0
      %1324 = vmatprep.subr.mxu0 0.0
      %1325 = vmatpush1.msra.mxu0 0.0
      %1326 = vmatprep.subr.mxu0 0.0
      %1327 = vmatpush1.msra.mxu0 0.0
      %1328 = vmatprep.subr.mxu0 0.0
      %1329 = vmatpush1.msra.mxu0 0.0
      %1330 = vmatprep.subr.mxu0 0.0
      %1331 = vmatpush1.msra.mxu0 0.0
      %1332 = vmatprep.mubr.f32.mxu0 0.0
      %1333 = vmatmul.mubr.f32.gmra.mrb[0].mxu0 %v1266
      %v1334 = vpop.f32.mrb[0].mxu0
      %v1335 = vadd.f32 %v831, %v1334
      %v1336 = vpop.f32.mrb[0].mxu0
      %1337 = vdwg.mxu0
      %v1338 = vadd.f32 %v1261, %v1335
      %v1339 = vxor.u32 %v1338, 2147483648
      %v1340 = vmul.f32 %v1339, 1.442695
      %v1341 = vpow.pop %v1340
      %v1342 = vadd.f32 %v1341, 1.0
      %v1343 = vrcp.pop %v1342
      %v1344 = vmul.f32 1.0, %v1343
      %1346 = vrot.lane.b32.xlu0 %v1335, 64
      %v1347 = vpop.permute.xlu0 %1346
      %v1349 = vmul.f32 %v1344, %v1347
      %1351 = vrot.lane.b32.xlu0 %v1349, 64
      %v1352 = vpop.permute.xlu0 %1351
      %v1354 = vadd.f32 %v1261, %v1352
      %v1355 = vtanh.pop %v1354
      %v1356 = vsub.f32 1.0, %v1344
      %1358 = vrot.lane.b32.xlu0 %v1355, 96
      %v1359 = vpop.permute.xlu0 %1358
      %v1361 = vmul.f32 %v1356, %v1359
      %v1363 = vmul.f32 %v1344, %v1263
      %v1364 = vadd.f32 %v1361, %v1363
      %1366 = vrot.lane.b32.xlu0 %v1364, 96
      %v1367 = vpop.permute.xlu0 %1366
      %v1368 = vsel %vm600, %v1367, 0
      %1370 = vmatprep.subr.mxu0 0.0
      %1371 = vmatpush1.msra.mxu0 %v821
      %1372 = vmatprep.subr.mxu0 0.0
      %1373 = vmatpush1.msra.mxu0 %v822
      %1374 = vmatprep.subr.mxu0 0.0
      %1375 = vmatpush1.msra.mxu0 %v823
      %1376 = vmatprep.subr.mxu0 0.0
      %1377 = vmatpush1.msra.mxu0 %v824
      %1378 = vmatprep.subr.mxu0 0.0
      %1379 = vmatpush1.msra.mxu0 0.0
      %1380 = vmatprep.subr.mxu0 0.0
      %1381 = vmatpush1.msra.mxu0 0.0
      %1382 = vmatprep.subr.mxu0 0.0
      %1383 = vmatpush1.msra.mxu0 0.0
      %1384 = vmatprep.subr.mxu0 0.0
      %1385 = vmatpush1.msra.mxu0 0.0
      %1386 = vmatprep.subr.mxu0 0.0
      %1387 = vmatpush1.msra.mxu0 0.0
      %1388 = vmatprep.subr.mxu0 0.0
      %1389 = vmatpush1.msra.mxu0 0.0
      %1390 = vmatprep.subr.mxu0 0.0
      %1391 = vmatpush1.msra.mxu0 0.0
      %1392 = vmatprep.subr.mxu0 0.0
      %1393 = vmatpush1.msra.mxu0 0.0
      %1394 = vmatprep.subr.mxu0 0.0
      %1395 = vmatpush1.msra.mxu0 0.0
      %1396 = vmatprep.subr.mxu0 0.0
      %1397 = vmatpush1.msra.mxu0 0.0
      %1398 = vmatprep.subr.mxu0 0.0
      %1399 = vmatpush1.msra.mxu0 0.0
      %1400 = vmatprep.subr.mxu0 0.0
      %1401 = vmatpush1.msra.mxu0 0.0
      %1402 = vmatprep.subr.mxu0 0.0
      %1403 = vmatpush1.msra.mxu0 0.0
      %1404 = vmatprep.subr.mxu0 0.0
      %1405 = vmatpush1.msra.mxu0 0.0
      %1406 = vmatprep.subr.mxu0 0.0
      %1407 = vmatpush1.msra.mxu0 0.0
      %1408 = vmatprep.subr.mxu0 0.0
      %1409 = vmatpush1.msra.mxu0 0.0
      %1410 = vmatprep.subr.mxu0 0.0
      %1411 = vmatpush1.msra.mxu0 0.0
      %1412 = vmatprep.subr.mxu0 0.0
      %1413 = vmatpush1.msra.mxu0 0.0
      %1414 = vmatprep.subr.mxu0 0.0
      %1415 = vmatpush1.msra.mxu0 0.0
      %1416 = vmatprep.subr.mxu0 0.0
      %1417 = vmatpush1.msra.mxu0 0.0
      %1418 = vmatprep.subr.mxu0 0.0
      %1419 = vmatpush1.msra.mxu0 0.0
      %1420 = vmatprep.subr.mxu0 0.0
      %1421 = vmatpush1.msra.mxu0 0.0
      %1422 = vmatprep.subr.mxu0 0.0
      %1423 = vmatpush1.msra.mxu0 0.0
      %1424 = vmatprep.subr.mxu0 0.0
      %1425 = vmatpush1.msra.mxu0 0.0
      %1426 = vmatprep.subr.mxu0 0.0
      %1427 = vmatpush1.msra.mxu0 0.0
      %1428 = vmatprep.subr.mxu0 0.0
      %1429 = vmatpush1.msra.mxu0 0.0
      %1430 = vmatprep.subr.mxu0 0.0
      %1431 = vmatpush1.msra.mxu0 0.0
      %1432 = vmatprep.subr.mxu0 0.0
      %1433 = vmatpush1.msra.mxu0 0.0
      %1434 = vmatprep.mubr.f32.mxu0 0.0
      %1435 = vmatmul.mubr.f32.gmra.mrb[0].mxu0 %v1368
      %v1436 = vpop.f32.mrb[0].mxu0
      %v1437 = vadd.f32 %v831, %v1436
      %v1438 = vpop.f32.mrb[0].mxu0
      %1439 = vdwg.mxu0
      %v1441 = vrot.slane %v1437, 6
      %v1443 = vadd.f32 %v1261, %v1441
      %v1444 = vxor.u32 %v1443, 2147483648
      %v1445 = vmul.f32 %v1444, 1.442695
      %v1446 = vpow.pop %v1445
      %v1447 = vadd.f32 %v1446, 1.0
      %v1448 = vrcp.pop %v1447
      %v1449 = vmul.f32 1.0, %v1448
      %1450 = vrot.lane.b32.xlu0 %v1441, 64
      %v1451 = vpop.permute.xlu0 %1450
      %v1453 = vmul.f32 %v1449, %v1451
      %1455 = vrot.lane.b32.xlu0 %v1453, 64
      %v1456 = vpop.permute.xlu0 %1455
      %v1458 = vadd.f32 %v1261, %v1456
      %v1459 = vtanh.pop %v1458
      %v1460 = vsub.f32 1.0, %v1449
      %1462 = vrot.lane.b32.xlu0 %v1459, 96
      %v1463 = vpop.permute.xlu0 %1462
      %v1465 = vmul.f32 %v1460, %v1463
      %v1466 = vrot.slane %v1364, 6
      %v1468 = vmul.f32 %v1449, %v1466
      %v1469 = vadd.f32 %v1465, %v1468
      %v1471 = vrot.slane %v1469, 2
      %1472 = vrot.lane.b32.xlu0 %v1471, 96
      %v1473 = vpop.permute.xlu0 %1472
      %v1474 = vsel %vm600, %v1473, 0
      %1476 = vmatprep.subr.mxu0 0.0
      %1477 = vmatpush1.msra.mxu0 %v821
      %1478 = vmatprep.subr.mxu0 0.0
      %1479 = vmatpush1.msra.mxu0 %v822
      %1480 = vmatprep.subr.mxu0 0.0
      %1481 = vmatpush1.msra.mxu0 %v823
      %1482 = vmatprep.subr.mxu0 0.0
      %1483 = vmatpush1.msra.mxu0 %v824
      %1484 = vmatprep.subr.mxu0 0.0
      %1485 = vmatpush1.msra.mxu0 0.0
      %1486 = vmatprep.subr.mxu0 0.0
      %1487 = vmatpush1.msra.mxu0 0.0
      %1488 = vmatprep.subr.mxu0 0.0
      %1489 = vmatpush1.msra.mxu0 0.0
      %1490 = vmatprep.subr.mxu0 0.0
      %1491 = vmatpush1.msra.mxu0 0.0
      %1492 = vmatprep.subr.mxu0 0.0
      %1493 = vmatpush1.msra.mxu0 0.0
      %1494 = vmatprep.subr.mxu0 0.0
      %1495 = vmatpush1.msra.mxu0 0.0
      %1496 = vmatprep.subr.mxu0 0.0
      %1497 = vmatpush1.msra.mxu0 0.0
      %1498 = vmatprep.subr.mxu0 0.0
      %1499 = vmatpush1.msra.mxu0 0.0
      %1500 = vmatprep.subr.mxu0 0.0
      %1501 = vmatpush1.msra.mxu0 0.0
      %1502 = vmatprep.subr.mxu0 0.0
      %1503 = vmatpush1.msra.mxu0 0.0
      %1504 = vmatprep.subr.mxu0 0.0
      %1505 = vmatpush1.msra.mxu0 0.0
      %1506 = vmatprep.subr.mxu0 0.0
      %1507 = vmatpush1.msra.mxu0 0.0
      %1508 = vmatprep.subr.mxu0 0.0
      %1509 = vmatpush1.msra.mxu0 0.0
      %1510 = vmatprep.subr.mxu0 0.0
      %1511 = vmatpush1.msra.mxu0 0.0
      %1512 = vmatprep.subr.mxu0 0.0
      %1513 = vmatpush1.msra.mxu0 0.0
      %1514 = vmatprep.subr.mxu0 0.0
      %1515 = vmatpush1.msra.mxu0 0.0
      %1516 = vmatprep.subr.mxu0 0.0
      %1517 = vmatpush1.msra.mxu0 0.0
      %1518 = vmatprep.subr.mxu0 0.0
      %1519 = vmatpush1.msra.mxu0 0.0
      %1520 = vmatprep.subr.mxu0 0.0
      %1521 = vmatpush1.msra.mxu0 0.0
      %1522 = vmatprep.subr.mxu0 0.0
      %1523 = vmatpush1.msra.mxu0 0.0
      %1524 = vmatprep.subr.mxu0 0.0
      %1525 = vmatpush1.msra.mxu0 0.0
      %1526 = vmatprep.subr.mxu0 0.0
      %1527 = vmatpush1.msra.mxu0 0.0
      %1528 = vmatprep.subr.mxu0 0.0
      %1529 = vmatpush1.msra.mxu0 0.0
      %1530 = vmatprep.subr.mxu0 0.0
      %1531 = vmatpush1.msra.mxu0 0.0
      %1532 = vmatprep.subr.mxu0 0.0
      %1533 = vmatpush1.msra.mxu0 0.0
      %1534 = vmatprep.subr.mxu0 0.0
      %1535 = vmatpush1.msra.mxu0 0.0
      %1536 = vmatprep.subr.mxu0 0.0
      %1537 = vmatpush1.msra.mxu0 0.0
      %1538 = vmatprep.subr.mxu0 0.0
      %1539 = vmatpush1.msra.mxu0 0.0
      %1540 = vmatprep.mubr.f32.mxu0 0.0
      %1541 = vmatmul.mubr.f32.gmra.mrb[0].mxu0 %v1474
      %v1542 = vpop.f32.mrb[0].mxu0
      %v1543 = vadd.f32 %v831, %v1542
      %v1544 = vpop.f32.mrb[0].mxu0
      %1545 = vdwg.mxu0
      %v1547 = vrot.slane %v1543, 4
      %v1549 = vadd.f32 %v1261, %v1547
      %v1550 = vxor.u32 %v1549, 2147483648
      %v1551 = vmul.f32 %v1550, 1.442695
      %v1552 = vpow.pop %v1551
      %v1553 = vadd.f32 %v1552, 1.0
      %v1554 = vrcp.pop %v1553
      %v1555 = vmul.f32 1.0, %v1554
      %1556 = vrot.lane.b32.xlu0 %v1547, 64
      %v1557 = vpop.permute.xlu0 %1556
      %v1559 = vmul.f32 %v1555, %v1557
      %1561 = vrot.lane.b32.xlu0 %v1559, 64
      %v1562 = vpop.permute.xlu0 %1561
      %v1564 = vadd.f32 %v1261, %v1562
      %v1565 = vtanh.pop %v1564
      %v1566 = vsub.f32 1.0, %v1555
      %1568 = vrot.lane.b32.xlu0 %v1565, 96
      %v1569 = vpop.permute.xlu0 %1568
      %v1571 = vmul.f32 %v1566, %v1569
      %v1572 = vrot.slane %v1469, 6
      %v1574 = vmul.f32 %v1555, %v1572
      %v1575 = vadd.f32 %v1571, %v1574
      %v1577 = vrot.slane %v1575, 4
      %1578 = vrot.lane.b32.xlu0 %v1577, 96
      %v1579 = vpop.permute.xlu0 %1578
      %v1580 = vsel %vm600, %v1579, 0
      %1582 = vmatprep.subr.mxu0 0.0
      %1583 = vmatpush1.msra.mxu0 %v821
      %1584 = vmatprep.subr.mxu0 0.0
      %1585 = vmatpush1.msra.mxu0 %v822
      %1586 = vmatprep.subr.mxu0 0.0
      %1587 = vmatpush1.msra.mxu0 %v823
      %1588 = vmatprep.subr.mxu0 0.0
      %1589 = vmatpush1.msra.mxu0 %v824
      %1590 = vmatprep.subr.mxu0 0.0
      %1591 = vmatpush1.msra.mxu0 0.0
      %1592 = vmatprep.subr.mxu0 0.0
      %1593 = vmatpush1.msra.mxu0 0.0
      %1594 = vmatprep.subr.mxu0 0.0
      %1595 = vmatpush1.msra.mxu0 0.0
      %1596 = vmatprep.subr.mxu0 0.0
      %1597 = vmatpush1.msra.mxu0 0.0
      %1598 = vmatprep.subr.mxu0 0.0
      %1599 = vmatpush1.msra.mxu0 0.0
      %1600 = vmatprep.subr.mxu0 0.0
      %1601 = vmatpush1.msra.mxu0 0.0
      %1602 = vmatprep.subr.mxu0 0.0
      %1603 = vmatpush1.msra.mxu0 0.0
      %1604 = vmatprep.subr.mxu0 0.0
      %1605 = vmatpush1.msra.mxu0 0.0
      %1606 = vmatprep.subr.mxu0 0.0
      %1607 = vmatpush1.msra.mxu0 0.0
      %1608 = vmatprep.subr.mxu0 0.0
      %1609 = vmatpush1.msra.mxu0 0.0
      %1610 = vmatprep.subr.mxu0 0.0
      %1611 = vmatpush1.msra.mxu0 0.0
      %1612 = vmatprep.subr.mxu0 0.0
      %1613 = vmatpush1.msra.mxu0 0.0
      %1614 = vmatprep.subr.mxu0 0.0
      %1615 = vmatpush1.msra.mxu0 0.0
      %1616 = vmatprep.subr.mxu0 0.0
      %1617 = vmatpush1.msra.mxu0 0.0
      %1618 = vmatprep.subr.mxu0 0.0
      %1619 = vmatpush1.msra.mxu0 0.0
      %1620 = vmatprep.subr.mxu0 0.0
      %1621 = vmatpush1.msra.mxu0 0.0
      %1622 = vmatprep.subr.mxu0 0.0
      %1623 = vmatpush1.msra.mxu0 0.0
      %1624 = vmatprep.subr.mxu0 0.0
      %1625 = vmatpush1.msra.mxu0 0.0
      %1626 = vmatprep.subr.mxu0 0.0
      %1627 = vmatpush1.msra.mxu0 0.0
      %1628 = vmatprep.subr.mxu0 0.0
      %1629 = vmatpush1.msra.mxu0 0.0
      %1630 = vmatprep.subr.mxu0 0.0
      %1631 = vmatpush1.msra.mxu0 0.0
      %1632 = vmatprep.subr.mxu0 0.0
      %1633 = vmatpush1.msra.mxu0 0.0
      %1634 = vmatprep.subr.mxu0 0.0
      %1635 = vmatpush1.msra.mxu0 0.0
      %1636 = vmatprep.subr.mxu0 0.0
      %1637 = vmatpush1.msra.mxu0 0.0
      %1638 = vmatprep.subr.mxu0 0.0
      %1639 = vmatpush1.msra.mxu0 0.0
      %1640 = vmatprep.subr.mxu0 0.0
      %1641 = vmatpush1.msra.mxu0 0.0
      %1642 = vmatprep.subr.mxu0 0.0
      %1643 = vmatpush1.msra.mxu0 0.0
      %1644 = vmatprep.subr.mxu0 0.0
      %1645 = vmatpush1.msra.mxu0 0.0
      %1646 = vmatprep.mubr.f32.mxu0 0.0
      %1647 = vmatmul.mubr.f32.gmra.mrb[0].mxu0 %v1580
      %v1648 = vpop.f32.mrb[0].mxu0
      %v1649 = vadd.f32 %v831, %v1648
      %v1650 = vpop.f32.mrb[0].mxu0
      %1651 = vdwg.mxu0
      %v1653 = vrot.slane %v1649, 2
      %v1655 = vadd.f32 %v1261, %v1653
      %v1656 = vxor.u32 %v1655, 2147483648
      %v1657 = vmul.f32 %v1656, 1.442695
      %v1658 = vpow.pop %v1657
      %v1659 = vadd.f32 %v1658, 1.0
      %v1660 = vrcp.pop %v1659
      %v1661 = vmul.f32 1.0, %v1660
      %1662 = vrot.lane.b32.xlu0 %v1653, 64
      %v1663 = vpop.permute.xlu0 %1662
      %v1665 = vmul.f32 %v1661, %v1663
      %1667 = vrot.lane.b32.xlu0 %v1665, 64
      %v1668 = vpop.permute.xlu0 %1667
      %v1670 = vadd.f32 %v1261, %v1668
      %v1671 = vtanh.pop %v1670
      %v1672 = vsub.f32 1.0, %v1661
      %1674 = vrot.lane.b32.xlu0 %v1671, 96
      %v1675 = vpop.permute.xlu0 %1674
      %v1677 = vmul.f32 %v1672, %v1675
      %v1678 = vrot.slane %v1575, 6
      %v1680 = vmul.f32 %v1661, %v1678
      %v1681 = vadd.f32 %v1677, %v1680
      %v1682 = vsel %vm1249, %v1364, %v1469
      %v1683 = vsel %vm1251, %v1682, %v1575
      %v1684 = vsel %vm1253, %v1683, %v1681
      %1686 = vrot.lane.b32.xlu0 %v1684, 96
      %v1687 = vpop.permute.xlu0 %1686
      %s1689 = scalar_lea.vmem [#allocation2], 8
      %1690 = vst.msk [vmem:[%s1689] sm:$0xff] %vm600, %v1687
      %s1691 = scalar_lea.vmem [#allocation3], 16
      %v1692 = vld [vmem:[%s1691] sm:$0xff]
      %v1694 = vrot.slane %v1681, 6
      %1695 = vrot.lane.b32.xlu0 %v1694, 96
      %v1696 = vpop.permute.xlu0 %1695
      %v1697 = vsel %vm600, %v1696, 0
      %1699 = vmatprep.subr.mxu0 0.0
      %1700 = vmatpush1.msra.mxu0 %v821
      %1701 = vmatprep.subr.mxu0 0.0
      %1702 = vmatpush1.msra.mxu0 %v822
      %1703 = vmatprep.subr.mxu0 0.0
      %1704 = vmatpush1.msra.mxu0 %v823
      %1705 = vmatprep.subr.mxu0 0.0
      %1706 = vmatpush1.msra.mxu0 %v824
      %1707 = vmatprep.subr.mxu0 0.0
      %1708 = vmatpush1.msra.mxu0 0.0
      %1709 = vmatprep.subr.mxu0 0.0
      %1710 = vmatpush1.msra.mxu0 0.0
      %1711 = vmatprep.subr.mxu0 0.0
      %1712 = vmatpush1.msra.mxu0 0.0
      %1713 = vmatprep.subr.mxu0 0.0
      %1714 = vmatpush1.msra.mxu0 0.0
      %1715 = vmatprep.subr.mxu0 0.0
      %1716 = vmatpush1.msra.mxu0 0.0
      %1717 = vmatprep.subr.mxu0 0.0
      %1718 = vmatpush1.msra.mxu0 0.0
      %1719 = vmatprep.subr.mxu0 0.0
      %1720 = vmatpush1.msra.mxu0 0.0
      %1721 = vmatprep.subr.mxu0 0.0
      %1722 = vmatpush1.msra.mxu0 0.0
      %1723 = vmatprep.subr.mxu0 0.0
      %1724 = vmatpush1.msra.mxu0 0.0
      %1725 = vmatprep.subr.mxu0 0.0
      %1726 = vmatpush1.msra.mxu0 0.0
      %1727 = vmatprep.subr.mxu0 0.0
      %1728 = vmatpush1.msra.mxu0 0.0
      %1729 = vmatprep.subr.mxu0 0.0
      %1730 = vmatpush1.msra.mxu0 0.0
      %1731 = vmatprep.subr.mxu0 0.0
      %1732 = vmatpush1.msra.mxu0 0.0
      %1733 = vmatprep.subr.mxu0 0.0
      %1734 = vmatpush1.msra.mxu0 0.0
      %1735 = vmatprep.subr.mxu0 0.0
      %1736 = vmatpush1.msra.mxu0 0.0
      %1737 = vmatprep.subr.mxu0 0.0
      %1738 = vmatpush1.msra.mxu0 0.0
      %1739 = vmatprep.subr.mxu0 0.0
      %1740 = vmatpush1.msra.mxu0 0.0
      %1741 = vmatprep.subr.mxu0 0.0
      %1742 = vmatpush1.msra.mxu0 0.0
      %1743 = vmatprep.subr.mxu0 0.0
      %1744 = vmatpush1.msra.mxu0 0.0
      %1745 = vmatprep.subr.mxu0 0.0
      %1746 = vmatpush1.msra.mxu0 0.0
      %1747 = vmatprep.subr.mxu0 0.0
      %1748 = vmatpush1.msra.mxu0 0.0
      %1749 = vmatprep.subr.mxu0 0.0
      %1750 = vmatpush1.msra.mxu0 0.0
      %1751 = vmatprep.subr.mxu0 0.0
      %1752 = vmatpush1.msra.mxu0 0.0
      %1753 = vmatprep.subr.mxu0 0.0
      %1754 = vmatpush1.msra.mxu0 0.0
      %1755 = vmatprep.subr.mxu0 0.0
      %1756 = vmatpush1.msra.mxu0 0.0
      %1757 = vmatprep.subr.mxu0 0.0
      %1758 = vmatpush1.msra.mxu0 0.0
      %1759 = vmatprep.subr.mxu0 0.0
      %1760 = vmatpush1.msra.mxu0 0.0
      %1761 = vmatprep.subr.mxu0 0.0
      %1762 = vmatpush1.msra.mxu0 0.0
      %1763 = vmatprep.mubr.f32.mxu0 0.0
      %1764 = vmatmul.mubr.f32.gmra.mrb[0].mxu0 %v1697
      %v1765 = vpop.f32.mrb[0].mxu0
      %v1766 = vadd.f32 %v831, %v1765
      %v1767 = vpop.f32.mrb[0].mxu0
      %1768 = vdwg.mxu0
      %v1769 = vadd.f32 %v1692, %v1766
      %v1770 = vxor.u32 %v1769, 2147483648
      %v1771 = vmul.f32 %v1770, 1.442695
      %v1772 = vpow.pop %v1771
      %v1773 = vadd.f32 %v1772, 1.0
      %v1774 = vrcp.pop %v1773
      %v1775 = vmul.f32 1.0, %v1774
      %1777 = vrot.lane.b32.xlu0 %v1766, 64
      %v1778 = vpop.permute.xlu0 %1777
      %v1780 = vmul.f32 %v1775, %v1778
      %1782 = vrot.lane.b32.xlu0 %v1780, 64
      %v1783 = vpop.permute.xlu0 %1782
      %v1785 = vadd.f32 %v1692, %v1783
      %v1786 = vtanh.pop %v1785
      %v1787 = vsub.f32 1.0, %v1775
      %1789 = vrot.lane.b32.xlu0 %v1786, 96
      %v1790 = vpop.permute.xlu0 %1789
      %v1792 = vmul.f32 %v1787, %v1790
      %v1794 = vmul.f32 %v1775, %v1694
      %v1795 = vadd.f32 %v1792, %v1794
      %1797 = vrot.lane.b32.xlu0 %v1795, 96
      %v1798 = vpop.permute.xlu0 %1797
      %v1799 = vsel %vm600, %v1798, 0
      %1801 = vmatprep.subr.mxu0 0.0
      %1802 = vmatpush1.msra.mxu0 %v821
      %1803 = vmatprep.subr.mxu0 0.0
      %1804 = vmatpush1.msra.mxu0 %v822
      %1805 = vmatprep.subr.mxu0 0.0
      %1806 = vmatpush1.msra.mxu0 %v823
      %1807 = vmatprep.subr.mxu0 0.0
      %1808 = vmatpush1.msra.mxu0 %v824
      %1809 = vmatprep.subr.mxu0 0.0
      %1810 = vmatpush1.msra.mxu0 0.0
      %1811 = vmatprep.subr.mxu0 0.0
      %1812 = vmatpush1.msra.mxu0 0.0
      %1813 = vmatprep.subr.mxu0 0.0
      %1814 = vmatpush1.msra.mxu0 0.0
      %1815 = vmatprep.subr.mxu0 0.0
      %1816 = vmatpush1.msra.mxu0 0.0
      %1817 = vmatprep.subr.mxu0 0.0
      %1818 = vmatpush1.msra.mxu0 0.0
      %1819 = vmatprep.subr.mxu0 0.0
      %1820 = vmatpush1.msra.mxu0 0.0
      %1821 = vmatprep.subr.mxu0 0.0
      %1822 = vmatpush1.msra.mxu0 0.0
      %1823 = vmatprep.subr.mxu0 0.0
      %1824 = vmatpush1.msra.mxu0 0.0
      %1825 = vmatprep.subr.mxu0 0.0
      %1826 = vmatpush1.msra.mxu0 0.0
      %1827 = vmatprep.subr.mxu0 0.0
      %1828 = vmatpush1.msra.mxu0 0.0
      %1829 = vmatprep.subr.mxu0 0.0
      %1830 = vmatpush1.msra.mxu0 0.0
      %1831 = vmatprep.subr.mxu0 0.0
      %1832 = vmatpush1.msra.mxu0 0.0
      %1833 = vmatprep.subr.mxu0 0.0
      %1834 = vmatpush1.msra.mxu0 0.0
      %1835 = vmatprep.subr.mxu0 0.0
      %1836 = vmatpush1.msra.mxu0 0.0
      %1837 = vmatprep.subr.mxu0 0.0
      %1838 = vmatpush1.msra.mxu0 0.0
      %1839 = vmatprep.subr.mxu0 0.0
      %1840 = vmatpush1.msra.mxu0 0.0
      %1841 = vmatprep.subr.mxu0 0.0
      %1842 = vmatpush1.msra.mxu0 0.0
      %1843 = vmatprep.subr.mxu0 0.0
      %1844 = vmatpush1.msra.mxu0 0.0
      %1845 = vmatprep.subr.mxu0 0.0
      %1846 = vmatpush1.msra.mxu0 0.0
      %1847 = vmatprep.subr.mxu0 0.0
      %1848 = vmatpush1.msra.mxu0 0.0
      %1849 = vmatprep.subr.mxu0 0.0
      %1850 = vmatpush1.msra.mxu0 0.0
      %1851 = vmatprep.subr.mxu0 0.0
      %1852 = vmatpush1.msra.mxu0 0.0
      %1853 = vmatprep.subr.mxu0 0.0
      %1854 = vmatpush1.msra.mxu0 0.0
      %1855 = vmatprep.subr.mxu0 0.0
      %1856 = vmatpush1.msra.mxu0 0.0
      %1857 = vmatprep.subr.mxu0 0.0
      %1858 = vmatpush1.msra.mxu0 0.0
      %1859 = vmatprep.subr.mxu0 0.0
      %1860 = vmatpush1.msra.mxu0 0.0
      %1861 = vmatprep.subr.mxu0 0.0
      %1862 = vmatpush1.msra.mxu0 0.0
      %1863 = vmatprep.subr.mxu0 0.0
      %1864 = vmatpush1.msra.mxu0 0.0
      %1865 = vmatprep.mubr.f32.mxu0 0.0
      %1866 = vmatmul.mubr.f32.gmra.mrb[0].mxu0 %v1799
      %v1867 = vpop.f32.mrb[0].mxu0
      %v1868 = vadd.f32 %v831, %v1867
      %v1869 = vpop.f32.mrb[0].mxu0
      %1870 = vdwg.mxu0
      %v1872 = vrot.slane %v1868, 6
      %v1874 = vadd.f32 %v1692, %v1872
      %v1875 = vxor.u32 %v1874, 2147483648
      %v1876 = vmul.f32 %v1875, 1.442695
      %v1877 = vpow.pop %v1876
      %v1878 = vadd.f32 %v1877, 1.0
      %v1879 = vrcp.pop %v1878
      %v1880 = vmul.f32 1.0, %v1879
      %1881 = vrot.lane.b32.xlu0 %v1872, 64
      %v1882 = vpop.permute.xlu0 %1881
      %v1884 = vmul.f32 %v1880, %v1882
      %1886 = vrot.lane.b32.xlu0 %v1884, 64
      %v1887 = vpop.permute.xlu0 %1886
      %v1889 = vadd.f32 %v1692, %v1887
      %v1890 = vtanh.pop %v1889
      %v1891 = vsub.f32 1.0, %v1880
      %1893 = vrot.lane.b32.xlu0 %v1890, 96
      %v1894 = vpop.permute.xlu0 %1893
      %v1896 = vmul.f32 %v1891, %v1894
      %v1897 = vrot.slane %v1795, 6
      %v1899 = vmul.f32 %v1880, %v1897
      %v1900 = vadd.f32 %v1896, %v1899
      %v1902 = vrot.slane %v1900, 2
      %1903 = vrot.lane.b32.xlu0 %v1902, 96
      %v1904 = vpop.permute.xlu0 %1903
      %v1905 = vsel %vm600, %v1904, 0
      %1907 = vmatprep.subr.mxu0 0.0
      %1908 = vmatpush1.msra.mxu0 %v821
      %1909 = vmatprep.subr.mxu0 0.0
      %1910 = vmatpush1.msra.mxu0 %v822
      %1911 = vmatprep.subr.mxu0 0.0
      %1912 = vmatpush1.msra.mxu0 %v823
      %1913 = vmatprep.subr.mxu0 0.0
      %1914 = vmatpush1.msra.mxu0 %v824
      %1915 = vmatprep.subr.mxu0 0.0
      %1916 = vmatpush1.msra.mxu0 0.0
      %1917 = vmatprep.subr.mxu0 0.0
      %1918 = vmatpush1.msra.mxu0 0.0
      %1919 = vmatprep.subr.mxu0 0.0
      %1920 = vmatpush1.msra.mxu0 0.0
      %1921 = vmatprep.subr.mxu0 0.0
      %1922 = vmatpush1.msra.mxu0 0.0
      %1923 = vmatprep.subr.mxu0 0.0
      %1924 = vmatpush1.msra.mxu0 0.0
      %1925 = vmatprep.subr.mxu0 0.0
      %1926 = vmatpush1.msra.mxu0 0.0
      %1927 = vmatprep.subr.mxu0 0.0
      %1928 = vmatpush1.msra.mxu0 0.0
      %1929 = vmatprep.subr.mxu0 0.0
      %1930 = vmatpush1.msra.mxu0 0.0
      %1931 = vmatprep.subr.mxu0 0.0
      %1932 = vmatpush1.msra.mxu0 0.0
      %1933 = vmatprep.subr.mxu0 0.0
      %1934 = vmatpush1.msra.mxu0 0.0
      %1935 = vmatprep.subr.mxu0 0.0
      %1936 = vmatpush1.msra.mxu0 0.0
      %1937 = vmatprep.subr.mxu0 0.0
      %1938 = vmatpush1.msra.mxu0 0.0
      %1939 = vmatprep.subr.mxu0 0.0
      %1940 = vmatpush1.msra.mxu0 0.0
      %1941 = vmatprep.subr.mxu0 0.0
      %1942 = vmatpush1.msra.mxu0 0.0
      %1943 = vmatprep.subr.mxu0 0.0
      %1944 = vmatpush1.msra.mxu0 0.0
      %1945 = vmatprep.subr.mxu0 0.0
      %1946 = vmatpush1.msra.mxu0 0.0
      %1947 = vmatprep.subr.mxu0 0.0
      %1948 = vmatpush1.msra.mxu0 0.0
      %1949 = vmatprep.subr.mxu0 0.0
      %1950 = vmatpush1.msra.mxu0 0.0
      %1951 = vmatprep.subr.mxu0 0.0
      %1952 = vmatpush1.msra.mxu0 0.0
      %1953 = vmatprep.subr.mxu0 0.0
      %1954 = vmatpush1.msra.mxu0 0.0
      %1955 = vmatprep.subr.mxu0 0.0
      %1956 = vmatpush1.msra.mxu0 0.0
      %1957 = vmatprep.subr.mxu0 0.0
      %1958 = vmatpush1.msra.mxu0 0.0
      %1959 = vmatprep.subr.mxu0 0.0
      %1960 = vmatpush1.msra.mxu0 0.0
      %1961 = vmatprep.subr.mxu0 0.0
      %1962 = vmatpush1.msra.mxu0 0.0
      %1963 = vmatprep.subr.mxu0 0.0
      %1964 = vmatpush1.msra.mxu0 0.0
      %1965 = vmatprep.subr.mxu0 0.0
      %1966 = vmatpush1.msra.mxu0 0.0
      %1967 = vmatprep.subr.mxu0 0.0
      %1968 = vmatpush1.msra.mxu0 0.0
      %1969 = vmatprep.subr.mxu0 0.0
      %1970 = vmatpush1.msra.mxu0 0.0
      %1971 = vmatprep.mubr.f32.mxu0 0.0
      %1972 = vmatmul.mubr.f32.gmra.mrb[0].mxu0 %v1905
      %v1973 = vpop.f32.mrb[0].mxu0
      %v1974 = vadd.f32 %v831, %v1973
      %v1975 = vpop.f32.mrb[0].mxu0
      %1976 = vdwg.mxu0
      %v1978 = vrot.slane %v1974, 4
      %v1980 = vadd.f32 %v1692, %v1978
      %v1981 = vxor.u32 %v1980, 2147483648
      %v1982 = vmul.f32 %v1981, 1.442695
      %v1983 = vpow.pop %v1982
      %v1984 = vadd.f32 %v1983, 1.0
      %v1985 = vrcp.pop %v1984
      %v1986 = vmul.f32 1.0, %v1985
      %1987 = vrot.lane.b32.xlu0 %v1978, 64
      %v1988 = vpop.permute.xlu0 %1987
      %v1990 = vmul.f32 %v1986, %v1988
      %1992 = vrot.lane.b32.xlu0 %v1990, 64
      %v1993 = vpop.permute.xlu0 %1992
      %v1995 = vadd.f32 %v1692, %v1993
      %v1996 = vtanh.pop %v1995
      %v1997 = vsub.f32 1.0, %v1986
      %1999 = vrot.lane.b32.xlu0 %v1996, 96
      %v2000 = vpop.permute.xlu0 %1999
      %v2002 = vmul.f32 %v1997, %v2000
      %v2003 = vrot.slane %v1900, 6
      %v2005 = vmul.f32 %v1986, %v2003
      %v2006 = vadd.f32 %v2002, %v2005
      %v2008 = vrot.slane %v2006, 4
      %2009 = vrot.lane.b32.xlu0 %v2008, 96
      %v2010 = vpop.permute.xlu0 %2009
      %v2011 = vsel %vm600, %v2010, 0
      %2013 = vmatprep.subr.mxu0 0.0
      %2014 = vmatpush1.msra.mxu0 %v821
      %2015 = vmatprep.subr.mxu0 0.0
      %2016 = vmatpush1.msra.mxu0 %v822
      %2017 = vmatprep.subr.mxu0 0.0
      %2018 = vmatpush1.msra.mxu0 %v823
      %2019 = vmatprep.subr.mxu0 0.0
      %2020 = vmatpush1.msra.mxu0 %v824
      %2021 = vmatprep.subr.mxu0 0.0
      %2022 = vmatpush1.msra.mxu0 0.0
      %2023 = vmatprep.subr.mxu0 0.0
      %2024 = vmatpush1.msra.mxu0 0.0
      %2025 = vmatprep.subr.mxu0 0.0
      %2026 = vmatpush1.msra.mxu0 0.0
      %2027 = vmatprep.subr.mxu0 0.0
      %2028 = vmatpush1.msra.mxu0 0.0
      %2029 = vmatprep.subr.mxu0 0.0
      %2030 = vmatpush1.msra.mxu0 0.0
      %2031 = vmatprep.subr.mxu0 0.0
      %2032 = vmatpush1.msra.mxu0 0.0
      %2033 = vmatprep.subr.mxu0 0.0
      %2034 = vmatpush1.msra.mxu0 0.0
      %2035 = vmatprep.subr.mxu0 0.0
      %2036 = vmatpush1.msra.mxu0 0.0
      %2037 = vmatprep.subr.mxu0 0.0
      %2038 = vmatpush1.msra.mxu0 0.0
      %2039 = vmatprep.subr.mxu0 0.0
      %2040 = vmatpush1.msra.mxu0 0.0
      %2041 = vmatprep.subr.mxu0 0.0
      %2042 = vmatpush1.msra.mxu0 0.0
      %2043 = vmatprep.subr.mxu0 0.0
      %2044 = vmatpush1.msra.mxu0 0.0
      %2045 = vmatprep.subr.mxu0 0.0
      %2046 = vmatpush1.msra.mxu0 0.0
      %2047 = vmatprep.subr.mxu0 0.0
      %2048 = vmatpush1.msra.mxu0 0.0
      %2049 = vmatprep.subr.mxu0 0.0
      %2050 = vmatpush1.msra.mxu0 0.0
      %2051 = vmatprep.subr.mxu0 0.0
      %2052 = vmatpush1.msra.mxu0 0.0
      %2053 = vmatprep.subr.mxu0 0.0
      %2054 = vmatpush1.msra.mxu0 0.0
      %2055 = vmatprep.subr.mxu0 0.0
      %2056 = vmatpush1.msra.mxu0 0.0
      %2057 = vmatprep.subr.mxu0 0.0
      %2058 = vmatpush1.msra.mxu0 0.0
      %2059 = vmatprep.subr.mxu0 0.0
      %2060 = vmatpush1.msra.mxu0 0.0
      %2061 = vmatprep.subr.mxu0 0.0
      %2062 = vmatpush1.msra.mxu0 0.0
      %2063 = vmatprep.subr.mxu0 0.0
      %2064 = vmatpush1.msra.mxu0 0.0
      %2065 = vmatprep.subr.mxu0 0.0
      %2066 = vmatpush1.msra.mxu0 0.0
      %2067 = vmatprep.subr.mxu0 0.0
      %2068 = vmatpush1.msra.mxu0 0.0
      %2069 = vmatprep.subr.mxu0 0.0
      %2070 = vmatpush1.msra.mxu0 0.0
      %2071 = vmatprep.subr.mxu0 0.0
      %2072 = vmatpush1.msra.mxu0 0.0
      %2073 = vmatprep.subr.mxu0 0.0
      %2074 = vmatpush1.msra.mxu0 0.0
      %2075 = vmatprep.subr.mxu0 0.0
      %2076 = vmatpush1.msra.mxu0 0.0
      %2077 = vmatprep.mubr.f32.mxu0 0.0
      %2078 = vmatmul.mubr.f32.gmra.mrb[0].mxu0 %v2011
      %v2079 = vpop.f32.mrb[0].mxu0
      %v2080 = vadd.f32 %v831, %v2079
      %v2081 = vpop.f32.mrb[0].mxu0
      %2082 = vdwg.mxu0
      %v2084 = vrot.slane %v2080, 2
      %v2086 = vadd.f32 %v1692, %v2084
      %v2087 = vxor.u32 %v2086, 2147483648
      %v2088 = vmul.f32 %v2087, 1.442695
      %v2089 = vpow.pop %v2088
      %v2090 = vadd.f32 %v2089, 1.0
      %v2091 = vrcp.pop %v2090
      %v2092 = vmul.f32 1.0, %v2091
      %2093 = vrot.lane.b32.xlu0 %v2084, 64
      %v2094 = vpop.permute.xlu0 %2093
      %v2096 = vmul.f32 %v2092, %v2094
      %2098 = vrot.lane.b32.xlu0 %v2096, 64
      %v2099 = vpop.permute.xlu0 %2098
      %v2101 = vadd.f32 %v1692, %v2099
      %v2102 = vtanh.pop %v2101
      %v2103 = vsub.f32 1.0, %v2092
      %2105 = vrot.lane.b32.xlu0 %v2102, 96
      %v2106 = vpop.permute.xlu0 %2105
      %v2108 = vmul.f32 %v2103, %v2106
      %v2109 = vrot.slane %v2006, 6
      %v2111 = vmul.f32 %v2092, %v2109
      %v2112 = vadd.f32 %v2108, %v2111
      %v2113 = vsel %vm1249, %v1795, %v1900
      %v2114 = vsel %vm1251, %v2113, %v2006
      %v2115 = vsel %vm1253, %v2114, %v2112
      %2117 = vrot.lane.b32.xlu0 %v2115, 96
      %v2118 = vpop.permute.xlu0 %2117
      %s2120 = scalar_lea.vmem [#allocation2], 16
      %2121 = vst.msk [vmem:[%s2120] sm:$0xff] %vm600, %v2118
      %s2122 = scalar_lea.vmem [#allocation3], 24
      %v2123 = vld [vmem:[%s2122] sm:$0xff]
      %v2125 = vrot.slane %v2112, 6
      %2126 = vrot.lane.b32.xlu0 %v2125, 96
      %v2127 = vpop.permute.xlu0 %2126
      %v2128 = vsel %vm600, %v2127, 0
      %2130 = vmatprep.subr.mxu0 0.0
      %2131 = vmatpush1.msra.mxu0 %v821
      %2132 = vmatprep.subr.mxu0 0.0
      %2133 = vmatpush1.msra.mxu0 %v822
      %2134 = vmatprep.subr.mxu0 0.0
      %2135 = vmatpush1.msra.mxu0 %v823
      %2136 = vmatprep.subr.mxu0 0.0
      %2137 = vmatpush1.msra.mxu0 %v824
      %2138 = vmatprep.subr.mxu0 0.0
      %2139 = vmatpush1.msra.mxu0 0.0
      %2140 = vmatprep.subr.mxu0 0.0
      %2141 = vmatpush1.msra.mxu0 0.0
      %2142 = vmatprep.subr.mxu0 0.0
      %2143 = vmatpush1.msra.mxu0 0.0
      %2144 = vmatprep.subr.mxu0 0.0
      %2145 = vmatpush1.msra.mxu0 0.0
      %2146 = vmatprep.subr.mxu0 0.0
      %2147 = vmatpush1.msra.mxu0 0.0
      %2148 = vmatprep.subr.mxu0 0.0
      %2149 = vmatpush1.msra.mxu0 0.0
      %2150 = vmatprep.subr.mxu0 0.0
      %2151 = vmatpush1.msra.mxu0 0.0
      %2152 = vmatprep.subr.mxu0 0.0
      %2153 = vmatpush1.msra.mxu0 0.0
      %2154 = vmatprep.subr.mxu0 0.0
      %2155 = vmatpush1.msra.mxu0 0.0
      %2156 = vmatprep.subr.mxu0 0.0
      %2157 = vmatpush1.msra.mxu0 0.0
      %2158 = vmatprep.subr.mxu0 0.0
      %2159 = vmatpush1.msra.mxu0 0.0
      %2160 = vmatprep.subr.mxu0 0.0
      %2161 = vmatpush1.msra.mxu0 0.0
      %2162 = vmatprep.subr.mxu0 0.0
      %2163 = vmatpush1.msra.mxu0 0.0
      %2164 = vmatprep.subr.mxu0 0.0
      %2165 = vmatpush1.msra.mxu0 0.0
      %2166 = vmatprep.subr.mxu0 0.0
      %2167 = vmatpush1.msra.mxu0 0.0
      %2168 = vmatprep.subr.mxu0 0.0
      %2169 = vmatpush1.msra.mxu0 0.0
      %2170 = vmatprep.subr.mxu0 0.0
      %2171 = vmatpush1.msra.mxu0 0.0
      %2172 = vmatprep.subr.mxu0 0.0
      %2173 = vmatpush1.msra.mxu0 0.0
      %2174 = vmatprep.subr.mxu0 0.0
      %2175 = vmatpush1.msra.mxu0 0.0
      %2176 = vmatprep.subr.mxu0 0.0
      %2177 = vmatpush1.msra.mxu0 0.0
      %2178 = vmatprep.subr.mxu0 0.0
      %2179 = vmatpush1.msra.mxu0 0.0
      %2180 = vmatprep.subr.mxu0 0.0
      %2181 = vmatpush1.msra.mxu0 0.0
      %2182 = vmatprep.subr.mxu0 0.0
      %2183 = vmatpush1.msra.mxu0 0.0
      %2184 = vmatprep.subr.mxu0 0.0
      %2185 = vmatpush1.msra.mxu0 0.0
      %2186 = vmatprep.subr.mxu0 0.0
      %2187 = vmatpush1.msra.mxu0 0.0
      %2188 = vmatprep.subr.mxu0 0.0
      %2189 = vmatpush1.msra.mxu0 0.0
      %2190 = vmatprep.subr.mxu0 0.0
      %2191 = vmatpush1.msra.mxu0 0.0
      %2192 = vmatprep.subr.mxu0 0.0
      %2193 = vmatpush1.msra.mxu0 0.0
      %2194 = vmatprep.mubr.f32.mxu0 0.0
      %2195 = vmatmul.mubr.f32.gmra.mrb[0].mxu0 %v2128
      %v2196 = vpop.f32.mrb[0].mxu0
      %v2197 = vadd.f32 %v831, %v2196
      %v2198 = vpop.f32.mrb[0].mxu0
      %2199 = vdwg.mxu0
      %v2200 = vadd.f32 %v2123, %v2197
      %v2201 = vxor.u32 %v2200, 2147483648
      %v2202 = vmul.f32 %v2201, 1.442695
      %v2203 = vpow.pop %v2202
      %v2204 = vadd.f32 %v2203, 1.0
      %v2205 = vrcp.pop %v2204
      %v2206 = vmul.f32 1.0, %v2205
      %2208 = vrot.lane.b32.xlu0 %v2197, 64
      %v2209 = vpop.permute.xlu0 %2208
      %v2211 = vmul.f32 %v2206, %v2209
      %2213 = vrot.lane.b32.xlu0 %v2211, 64
      %v2214 = vpop.permute.xlu0 %2213
      %v2216 = vadd.f32 %v2123, %v2214
      %v2217 = vtanh.pop %v2216
      %v2218 = vsub.f32 1.0, %v2206
      %2220 = vrot.lane.b32.xlu0 %v2217, 96
      %v2221 = vpop.permute.xlu0 %2220
      %v2223 = vmul.f32 %v2218, %v2221
      %v2225 = vmul.f32 %v2206, %v2125
      %v2226 = vadd.f32 %v2223, %v2225
      %2228 = vrot.lane.b32.xlu0 %v2226, 96
      %v2229 = vpop.permute.xlu0 %2228
      %v2230 = vsel %vm600, %v2229, 0
      %2232 = vmatprep.subr.mxu0 0.0
      %2233 = vmatpush1.msra.mxu0 %v821
      %2234 = vmatprep.subr.mxu0 0.0
      %2235 = vmatpush1.msra.mxu0 %v822
      %2236 = vmatprep.subr.mxu0 0.0
      %2237 = vmatpush1.msra.mxu0 %v823
      %2238 = vmatprep.subr.mxu0 0.0
      %2239 = vmatpush1.msra.mxu0 %v824
      %2240 = vmatprep.subr.mxu0 0.0
      %2241 = vmatpush1.msra.mxu0 0.0
      %2242 = vmatprep.subr.mxu0 0.0
      %2243 = vmatpush1.msra.mxu0 0.0
      %2244 = vmatprep.subr.mxu0 0.0
      %2245 = vmatpush1.msra.mxu0 0.0
      %2246 = vmatprep.subr.mxu0 0.0
      %2247 = vmatpush1.msra.mxu0 0.0
      %2248 = vmatprep.subr.mxu0 0.0
      %2249 = vmatpush1.msra.mxu0 0.0
      %2250 = vmatprep.subr.mxu0 0.0
      %2251 = vmatpush1.msra.mxu0 0.0
      %2252 = vmatprep.subr.mxu0 0.0
      %2253 = vmatpush1.msra.mxu0 0.0
      %2254 = vmatprep.subr.mxu0 0.0
      %2255 = vmatpush1.msra.mxu0 0.0
      %2256 = vmatprep.subr.mxu0 0.0
      %2257 = vmatpush1.msra.mxu0 0.0
      %2258 = vmatprep.subr.mxu0 0.0
      %2259 = vmatpush1.msra.mxu0 0.0
      %2260 = vmatprep.subr.mxu0 0.0
      %2261 = vmatpush1.msra.mxu0 0.0
      %2262 = vmatprep.subr.mxu0 0.0
      %2263 = vmatpush1.msra.mxu0 0.0
      %2264 = vmatprep.subr.mxu0 0.0
      %2265 = vmatpush1.msra.mxu0 0.0
      %2266 = vmatprep.subr.mxu0 0.0
      %2267 = vmatpush1.msra.mxu0 0.0
      %2268 = vmatprep.subr.mxu0 0.0
      %2269 = vmatpush1.msra.mxu0 0.0
      %2270 = vmatprep.subr.mxu0 0.0
      %2271 = vmatpush1.msra.mxu0 0.0
      %2272 = vmatprep.subr.mxu0 0.0
      %2273 = vmatpush1.msra.mxu0 0.0
      %2274 = vmatprep.subr.mxu0 0.0
      %2275 = vmatpush1.msra.mxu0 0.0
      %2276 = vmatprep.subr.mxu0 0.0
      %2277 = vmatpush1.msra.mxu0 0.0
      %2278 = vmatprep.subr.mxu0 0.0
      %2279 = vmatpush1.msra.mxu0 0.0
      %2280 = vmatprep.subr.mxu0 0.0
      %2281 = vmatpush1.msra.mxu0 0.0
      %2282 = vmatprep.subr.mxu0 0.0
      %2283 = vmatpush1.msra.mxu0 0.0
      %2284 = vmatprep.subr.mxu0 0.0
      %2285 = vmatpush1.msra.mxu0 0.0
      %2286 = vmatprep.subr.mxu0 0.0
      %2287 = vmatpush1.msra.mxu0 0.0
      %2288 = vmatprep.subr.mxu0 0.0
      %2289 = vmatpush1.msra.mxu0 0.0
      %2290 = vmatprep.subr.mxu0 0.0
      %2291 = vmatpush1.msra.mxu0 0.0
      %2292 = vmatprep.subr.mxu0 0.0
      %2293 = vmatpush1.msra.mxu0 0.0
      %2294 = vmatprep.subr.mxu0 0.0
      %2295 = vmatpush1.msra.mxu0 0.0
      %2296 = vmatprep.mubr.f32.mxu0 0.0
      %2297 = vmatmul.mubr.f32.gmra.mrb[0].mxu0 %v2230
      %v2298 = vpop.f32.mrb[0].mxu0
      %v2299 = vadd.f32 %v831, %v2298
      %v2300 = vpop.f32.mrb[0].mxu0
      %2301 = vdwg.mxu0
      %v2303 = vrot.slane %v2299, 6
      %v2305 = vadd.f32 %v2123, %v2303
      %v2306 = vxor.u32 %v2305, 2147483648
      %v2307 = vmul.f32 %v2306, 1.442695
      %v2308 = vpow.pop %v2307
      %v2309 = vadd.f32 %v2308, 1.0
      %v2310 = vrcp.pop %v2309
      %v2311 = vmul.f32 1.0, %v2310
      %2312 = vrot.lane.b32.xlu0 %v2303, 64
      %v2313 = vpop.permute.xlu0 %2312
      %v2315 = vmul.f32 %v2311, %v2313
      %2317 = vrot.lane.b32.xlu0 %v2315, 64
      %v2318 = vpop.permute.xlu0 %2317
      %v2320 = vadd.f32 %v2123, %v2318
      %v2321 = vtanh.pop %v2320
      %v2322 = vsub.f32 1.0, %v2311
      %2324 = vrot.lane.b32.xlu0 %v2321, 96
      %v2325 = vpop.permute.xlu0 %2324
      %v2327 = vmul.f32 %v2322, %v2325
      %v2328 = vrot.slane %v2226, 6
      %v2330 = vmul.f32 %v2311, %v2328
      %v2331 = vadd.f32 %v2327, %v2330
      %v2333 = vrot.slane %v2331, 2
      %2334 = vrot.lane.b32.xlu0 %v2333, 96
      %v2335 = vpop.permute.xlu0 %2334
      %v2336 = vsel %vm600, %v2335, 0
      %2338 = vmatprep.subr.mxu0 0.0
      %2339 = vmatpush1.msra.mxu0 %v821
      %2340 = vmatprep.subr.mxu0 0.0
      %2341 = vmatpush1.msra.mxu0 %v822
      %2342 = vmatprep.subr.mxu0 0.0
      %2343 = vmatpush1.msra.mxu0 %v823
      %2344 = vmatprep.subr.mxu0 0.0
      %2345 = vmatpush1.msra.mxu0 %v824
      %2346 = vmatprep.subr.mxu0 0.0
      %2347 = vmatpush1.msra.mxu0 0.0
      %2348 = vmatprep.subr.mxu0 0.0
      %2349 = vmatpush1.msra.mxu0 0.0
      %2350 = vmatprep.subr.mxu0 0.0
      %2351 = vmatpush1.msra.mxu0 0.0
      %2352 = vmatprep.subr.mxu0 0.0
      %2353 = vmatpush1.msra.mxu0 0.0
      %2354 = vmatprep.subr.mxu0 0.0
      %2355 = vmatpush1.msra.mxu0 0.0
      %2356 = vmatprep.subr.mxu0 0.0
      %2357 = vmatpush1.msra.mxu0 0.0
      %2358 = vmatprep.subr.mxu0 0.0
      %2359 = vmatpush1.msra.mxu0 0.0
      %2360 = vmatprep.subr.mxu0 0.0
      %2361 = vmatpush1.msra.mxu0 0.0
      %2362 = vmatprep.subr.mxu0 0.0
      %2363 = vmatpush1.msra.mxu0 0.0
      %2364 = vmatprep.subr.mxu0 0.0
      %2365 = vmatpush1.msra.mxu0 0.0
      %2366 = vmatprep.subr.mxu0 0.0
      %2367 = vmatpush1.msra.mxu0 0.0
      %2368 = vmatprep.subr.mxu0 0.0
      %2369 = vmatpush1.msra.mxu0 0.0
      %2370 = vmatprep.subr.mxu0 0.0
      %2371 = vmatpush1.msra.mxu0 0.0
      %2372 = vmatprep.subr.mxu0 0.0
      %2373 = vmatpush1.msra.mxu0 0.0
      %2374 = vmatprep.subr.mxu0 0.0
      %2375 = vmatpush1.msra.mxu0 0.0
      %2376 = vmatprep.subr.mxu0 0.0
      %2377 = vmatpush1.msra.mxu0 0.0
      %2378 = vmatprep.subr.mxu0 0.0
      %2379 = vmatpush1.msra.mxu0 0.0
      %2380 = vmatprep.subr.mxu0 0.0
      %2381 = vmatpush1.msra.mxu0 0.0
      %2382 = vmatprep.subr.mxu0 0.0
      %2383 = vmatpush1.msra.mxu0 0.0
      %2384 = vmatprep.subr.mxu0 0.0
      %2385 = vmatpush1.msra.mxu0 0.0
      %2386 = vmatprep.subr.mxu0 0.0
      %2387 = vmatpush1.msra.mxu0 0.0
      %2388 = vmatprep.subr.mxu0 0.0
      %2389 = vmatpush1.msra.mxu0 0.0
      %2390 = vmatprep.subr.mxu0 0.0
      %2391 = vmatpush1.msra.mxu0 0.0
      %2392 = vmatprep.subr.mxu0 0.0
      %2393 = vmatpush1.msra.mxu0 0.0
      %2394 = vmatprep.subr.mxu0 0.0
      %2395 = vmatpush1.msra.mxu0 0.0
      %2396 = vmatprep.subr.mxu0 0.0
      %2397 = vmatpush1.msra.mxu0 0.0
      %2398 = vmatprep.subr.mxu0 0.0
      %2399 = vmatpush1.msra.mxu0 0.0
      %2400 = vmatprep.subr.mxu0 0.0
      %2401 = vmatpush1.msra.mxu0 0.0
      %2402 = vmatprep.mubr.f32.mxu0 0.0
      %2403 = vmatmul.mubr.f32.gmra.mrb[0].mxu0 %v2336
      %v2404 = vpop.f32.mrb[0].mxu0
      %v2405 = vadd.f32 %v831, %v2404
      %v2406 = vpop.f32.mrb[0].mxu0
      %2407 = vdwg.mxu0
      %v2409 = vrot.slane %v2405, 4
      %v2411 = vadd.f32 %v2123, %v2409
      %v2412 = vxor.u32 %v2411, 2147483648
      %v2413 = vmul.f32 %v2412, 1.442695
      %v2414 = vpow.pop %v2413
      %v2415 = vadd.f32 %v2414, 1.0
      %v2416 = vrcp.pop %v2415
      %v2417 = vmul.f32 1.0, %v2416
      %2418 = vrot.lane.b32.xlu0 %v2409, 64
      %v2419 = vpop.permute.xlu0 %2418
      %v2421 = vmul.f32 %v2417, %v2419
      %2423 = vrot.lane.b32.xlu0 %v2421, 64
      %v2424 = vpop.permute.xlu0 %2423
      %v2426 = vadd.f32 %v2123, %v2424
      %v2427 = vtanh.pop %v2426
      %v2428 = vsub.f32 1.0, %v2417
      %2430 = vrot.lane.b32.xlu0 %v2427, 96
      %v2431 = vpop.permute.xlu0 %2430
      %v2433 = vmul.f32 %v2428, %v2431
      %v2434 = vrot.slane %v2331, 6
      %v2436 = vmul.f32 %v2417, %v2434
      %v2437 = vadd.f32 %v2433, %v2436
      %v2439 = vrot.slane %v2437, 4
      %2440 = vrot.lane.b32.xlu0 %v2439, 96
      %v2441 = vpop.permute.xlu0 %2440
      %v2442 = vsel %vm600, %v2441, 0
      %2444 = vmatprep.subr.mxu0 0.0
      %2445 = vmatpush1.msra.mxu0 %v821
      %2446 = vmatprep.subr.mxu0 0.0
      %2447 = vmatpush1.msra.mxu0 %v822
      %2448 = vmatprep.subr.mxu0 0.0
      %2449 = vmatpush1.msra.mxu0 %v823
      %2450 = vmatprep.subr.mxu0 0.0
      %2451 = vmatpush1.msra.mxu0 %v824
      %2452 = vmatprep.subr.mxu0 0.0
      %2453 = vmatpush1.msra.mxu0 0.0
      %2454 = vmatprep.subr.mxu0 0.0
      %2455 = vmatpush1.msra.mxu0 0.0
      %2456 = vmatprep.subr.mxu0 0.0
      %2457 = vmatpush1.msra.mxu0 0.0
      %2458 = vmatprep.subr.mxu0 0.0
      %2459 = vmatpush1.msra.mxu0 0.0
      %2460 = vmatprep.subr.mxu0 0.0
      %2461 = vmatpush1.msra.mxu0 0.0
      %2462 = vmatprep.subr.mxu0 0.0
      %2463 = vmatpush1.msra.mxu0 0.0
      %2464 = vmatprep.subr.mxu0 0.0
      %2465 = vmatpush1.msra.mxu0 0.0
      %2466 = vmatprep.subr.mxu0 0.0
      %2467 = vmatpush1.msra.mxu0 0.0
      %2468 = vmatprep.subr.mxu0 0.0
      %2469 = vmatpush1.msra.mxu0 0.0
      %2470 = vmatprep.subr.mxu0 0.0
      %2471 = vmatpush1.msra.mxu0 0.0
      %2472 = vmatprep.subr.mxu0 0.0
      %2473 = vmatpush1.msra.mxu0 0.0
      %2474 = vmatprep.subr.mxu0 0.0
      %2475 = vmatpush1.msra.mxu0 0.0
      %2476 = vmatprep.subr.mxu0 0.0
      %2477 = vmatpush1.msra.mxu0 0.0
      %2478 = vmatprep.subr.mxu0 0.0
      %2479 = vmatpush1.msra.mxu0 0.0
      %2480 = vmatprep.subr.mxu0 0.0
      %2481 = vmatpush1.msra.mxu0 0.0
      %2482 = vmatprep.subr.mxu0 0.0
      %2483 = vmatpush1.msra.mxu0 0.0
      %2484 = vmatprep.subr.mxu0 0.0
      %2485 = vmatpush1.msra.mxu0 0.0
      %2486 = vmatprep.subr.mxu0 0.0
      %2487 = vmatpush1.msra.mxu0 0.0
      %2488 = vmatprep.subr.mxu0 0.0
      %2489 = vmatpush1.msra.mxu0 0.0
      %2490 = vmatprep.subr.mxu0 0.0
      %2491 = vmatpush1.msra.mxu0 0.0
      %2492 = vmatprep.subr.mxu0 0.0
      %2493 = vmatpush1.msra.mxu0 0.0
      %2494 = vmatprep.subr.mxu0 0.0
      %2495 = vmatpush1.msra.mxu0 0.0
      %2496 = vmatprep.subr.mxu0 0.0
      %2497 = vmatpush1.msra.mxu0 0.0
      %2498 = vmatprep.subr.mxu0 0.0
      %2499 = vmatpush1.msra.mxu0 0.0
      %2500 = vmatprep.subr.mxu0 0.0
      %2501 = vmatpush1.msra.mxu0 0.0
      %2502 = vmatprep.subr.mxu0 0.0
      %2503 = vmatpush1.msra.mxu0 0.0
      %2504 = vmatprep.subr.mxu0 0.0
      %2505 = vmatpush1.msra.mxu0 0.0
      %2506 = vmatprep.subr.mxu0 0.0
      %2507 = vmatpush1.msra.mxu0 0.0
      %2508 = vmatprep.mubr.f32.mxu0 0.0
      %2509 = vmatmul.mubr.f32.gmra.mrb[0].mxu0 %v2442
      %v2510 = vpop.f32.mrb[0].mxu0
      %v2511 = vadd.f32 %v831, %v2510
      %v2512 = vpop.f32.mrb[0].mxu0
      %2513 = vdwg.mxu0
      %v2515 = vrot.slane %v2511, 2
      %v2517 = vadd.f32 %v2123, %v2515
      %v2518 = vxor.u32 %v2517, 2147483648
      %v2519 = vmul.f32 %v2518, 1.442695
      %v2520 = vpow.pop %v2519
      %v2521 = vadd.f32 %v2520, 1.0
      %v2522 = vrcp.pop %v2521
      %v2523 = vmul.f32 1.0, %v2522
      %2524 = vrot.lane.b32.xlu0 %v2515, 64
      %v2525 = vpop.permute.xlu0 %2524
      %v2527 = vmul.f32 %v2523, %v2525
      %2529 = vrot.lane.b32.xlu0 %v2527, 64
      %v2530 = vpop.permute.xlu0 %2529
      %v2532 = vadd.f32 %v2123, %v2530
      %v2533 = vtanh.pop %v2532
      %v2534 = vsub.f32 1.0, %v2523
      %2536 = vrot.lane.b32.xlu0 %v2533, 96
      %v2537 = vpop.permute.xlu0 %2536
      %v2539 = vmul.f32 %v2534, %v2537
      %v2540 = vrot.slane %v2437, 6
      %v2542 = vmul.f32 %v2523, %v2540
      %v2543 = vadd.f32 %v2539, %v2542
      %v2544 = vsel %vm1249, %v2226, %v2331
      %v2545 = vsel %vm1251, %v2544, %v2437
      %v2546 = vsel %vm1253, %v2545, %v2543
      %2548 = vrot.lane.b32.xlu0 %v2546, 96
      %v2549 = vpop.permute.xlu0 %2548
      %s2551 = scalar_lea.vmem [#allocation2], 24
      %2552 = vst.msk [vmem:[%s2551] sm:$0xff] %vm600, %v2549
      %s2553 = scalar_lea.vmem [#allocation3], 32
      %v2554 = vld [vmem:[%s2553] sm:$0xff]
      %v2556 = vrot.slane %v2543, 6
      %2557 = vrot.lane.b32.xlu0 %v2556, 96
      %v2558 = vpop.permute.xlu0 %2557
      %v2559 = vsel %vm600, %v2558, 0
      %2561 = vmatprep.subr.mxu0 0.0
      %2562 = vmatpush1.msra.mxu0 %v821
      %2563 = vmatprep.subr.mxu0 0.0
      %2564 = vmatpush1.msra.mxu0 %v822
      %2565 = vmatprep.subr.mxu0 0.0
      %2566 = vmatpush1.msra.mxu0 %v823
      %2567 = vmatprep.subr.mxu0 0.0
      %2568 = vmatpush1.msra.mxu0 %v824
      %2569 = vmatprep.subr.mxu0 0.0
      %2570 = vmatpush1.msra.mxu0 0.0
      %2571 = vmatprep.subr.mxu0 0.0
      %2572 = vmatpush1.msra.mxu0 0.0
      %2573 = vmatprep.subr.mxu0 0.0
      %2574 = vmatpush1.msra.mxu0 0.0
      %2575 = vmatprep.subr.mxu0 0.0
      %2576 = vmatpush1.msra.mxu0 0.0
      %2577 = vmatprep.subr.mxu0 0.0
      %2578 = vmatpush1.msra.mxu0 0.0
      %2579 = vmatprep.subr.mxu0 0.0
      %2580 = vmatpush1.msra.mxu0 0.0
      %2581 = vmatprep.subr.mxu0 0.0
      %2582 = vmatpush1.msra.mxu0 0.0
      %2583 = vmatprep.subr.mxu0 0.0
      %2584 = vmatpush1.msra.mxu0 0.0
      %2585 = vmatprep.subr.mxu0 0.0
      %2586 = vmatpush1.msra.mxu0 0.0
      %2587 = vmatprep.subr.mxu0 0.0
      %2588 = vmatpush1.msra.mxu0 0.0
      %2589 = vmatprep.subr.mxu0 0.0
      %2590 = vmatpush1.msra.mxu0 0.0
      %2591 = vmatprep.subr.mxu0 0.0
      %2592 = vmatpush1.msra.mxu0 0.0
      %2593 = vmatprep.subr.mxu0 0.0
      %2594 = vmatpush1.msra.mxu0 0.0
      %2595 = vmatprep.subr.mxu0 0.0
      %2596 = vmatpush1.msra.mxu0 0.0
      %2597 = vmatprep.subr.mxu0 0.0
      %2598 = vmatpush1.msra.mxu0 0.0
      %2599 = vmatprep.subr.mxu0 0.0
      %2600 = vmatpush1.msra.mxu0 0.0
      %2601 = vmatprep.subr.mxu0 0.0
      %2602 = vmatpush1.msra.mxu0 0.0
      %2603 = vmatprep.subr.mxu0 0.0
      %2604 = vmatpush1.msra.mxu0 0.0
      %2605 = vmatprep.subr.mxu0 0.0
      %2606 = vmatpush1.msra.mxu0 0.0
      %2607 = vmatprep.subr.mxu0 0.0
      %2608 = vmatpush1.msra.mxu0 0.0
      %2609 = vmatprep.subr.mxu0 0.0
      %2610 = vmatpush1.msra.mxu0 0.0
      %2611 = vmatprep.subr.mxu0 0.0
      %2612 = vmatpush1.msra.mxu0 0.0
      %2613 = vmatprep.subr.mxu0 0.0
      %2614 = vmatpush1.msra.mxu0 0.0
      %2615 = vmatprep.subr.mxu0 0.0
      %2616 = vmatpush1.msra.mxu0 0.0
      %2617 = vmatprep.subr.mxu0 0.0
      %2618 = vmatpush1.msra.mxu0 0.0
      %2619 = vmatprep.subr.mxu0 0.0
      %2620 = vmatpush1.msra.mxu0 0.0
      %2621 = vmatprep.subr.mxu0 0.0
      %2622 = vmatpush1.msra.mxu0 0.0
      %2623 = vmatprep.subr.mxu0 0.0
      %2624 = vmatpush1.msra.mxu0 0.0
      %2625 = vmatprep.mubr.f32.mxu0 0.0
      %2626 = vmatmul.mubr.f32.gmra.mrb[0].mxu0 %v2559
      %v2627 = vpop.f32.mrb[0].mxu0
      %v2628 = vadd.f32 %v831, %v2627
      %v2629 = vpop.f32.mrb[0].mxu0
      %2630 = vdwg.mxu0
      %v2631 = vadd.f32 %v2554, %v2628
      %v2632 = vxor.u32 %v2631, 2147483648
      %v2633 = vmul.f32 %v2632, 1.442695
      %v2634 = vpow.pop %v2633
      %v2635 = vadd.f32 %v2634, 1.0
      %v2636 = vrcp.pop %v2635
      %v2637 = vmul.f32 1.0, %v2636
      %2639 = vrot.lane.b32.xlu0 %v2628, 64
      %v2640 = vpop.permute.xlu0 %2639
      %v2642 = vmul.f32 %v2637, %v2640
      %2644 = vrot.lane.b32.xlu0 %v2642, 64
      %v2645 = vpop.permute.xlu0 %2644
      %v2647 = vadd.f32 %v2554, %v2645
      %v2648 = vtanh.pop %v2647
      %v2649 = vsub.f32 1.0, %v2637
      %2651 = vrot.lane.b32.xlu0 %v2648, 96
      %v2652 = vpop.permute.xlu0 %2651
      %v2654 = vmul.f32 %v2649, %v2652
      %v2656 = vmul.f32 %v2637, %v2556
      %v2657 = vadd.f32 %v2654, %v2656
      %2659 = vrot.lane.b32.xlu0 %v2657, 96
      %v2660 = vpop.permute.xlu0 %2659
      %v2661 = vsel %vm600, %v2660, 0
      %2663 = vmatprep.subr.mxu0 0.0
      %2664 = vmatpush1.msra.mxu0 %v821
      %2665 = vmatprep.subr.mxu0 0.0
      %2666 = vmatpush1.msra.mxu0 %v822
      %2667 = vmatprep.subr.mxu0 0.0
      %2668 = vmatpush1.msra.mxu0 %v823
      %2669 = vmatprep.subr.mxu0 0.0
      %2670 = vmatpush1.msra.mxu0 %v824
      %2671 = vmatprep.subr.mxu0 0.0
      %2672 = vmatpush1.msra.mxu0 0.0
      %2673 = vmatprep.subr.mxu0 0.0
      %2674 = vmatpush1.msra.mxu0 0.0
      %2675 = vmatprep.subr.mxu0 0.0
      %2676 = vmatpush1.msra.mxu0 0.0
      %2677 = vmatprep.subr.mxu0 0.0
      %2678 = vmatpush1.msra.mxu0 0.0
      %2679 = vmatprep.subr.mxu0 0.0
      %2680 = vmatpush1.msra.mxu0 0.0
      %2681 = vmatprep.subr.mxu0 0.0
      %2682 = vmatpush1.msra.mxu0 0.0
      %2683 = vmatprep.subr.mxu0 0.0
      %2684 = vmatpush1.msra.mxu0 0.0
      %2685 = vmatprep.subr.mxu0 0.0
      %2686 = vmatpush1.msra.mxu0 0.0
      %2687 = vmatprep.subr.mxu0 0.0
      %2688 = vmatpush1.msra.mxu0 0.0
      %2689 = vmatprep.subr.mxu0 0.0
      %2690 = vmatpush1.msra.mxu0 0.0
      %2691 = vmatprep.subr.mxu0 0.0
      %2692 = vmatpush1.msra.mxu0 0.0
      %2693 = vmatprep.subr.mxu0 0.0
      %2694 = vmatpush1.msra.mxu0 0.0
      %2695 = vmatprep.subr.mxu0 0.0
      %2696 = vmatpush1.msra.mxu0 0.0
      %2697 = vmatprep.subr.mxu0 0.0
      %2698 = vmatpush1.msra.mxu0 0.0
      %2699 = vmatprep.subr.mxu0 0.0
      %2700 = vmatpush1.msra.mxu0 0.0
      %2701 = vmatprep.subr.mxu0 0.0
      %2702 = vmatpush1.msra.mxu0 0.0
      %2703 = vmatprep.subr.mxu0 0.0
      %2704 = vmatpush1.msra.mxu0 0.0
      %2705 = vmatprep.subr.mxu0 0.0
      %2706 = vmatpush1.msra.mxu0 0.0
      %2707 = vmatprep.subr.mxu0 0.0
      %2708 = vmatpush1.msra.mxu0 0.0
      %2709 = vmatprep.subr.mxu0 0.0
      %2710 = vmatpush1.msra.mxu0 0.0
      %2711 = vmatprep.subr.mxu0 0.0
      %2712 = vmatpush1.msra.mxu0 0.0
      %2713 = vmatprep.subr.mxu0 0.0
      %2714 = vmatpush1.msra.mxu0 0.0
      %2715 = vmatprep.subr.mxu0 0.0
      %2716 = vmatpush1.msra.mxu0 0.0
      %2717 = vmatprep.subr.mxu0 0.0
      %2718 = vmatpush1.msra.mxu0 0.0
      %2719 = vmatprep.subr.mxu0 0.0
      %2720 = vmatpush1.msra.mxu0 0.0
      %2721 = vmatprep.subr.mxu0 0.0
      %2722 = vmatpush1.msra.mxu0 0.0
      %2723 = vmatprep.subr.mxu0 0.0
      %2724 = vmatpush1.msra.mxu0 0.0
      %2725 = vmatprep.subr.mxu0 0.0
      %2726 = vmatpush1.msra.mxu0 0.0
      %2727 = vmatprep.mubr.f32.mxu0 0.0
      %2728 = vmatmul.mubr.f32.gmra.mrb[0].mxu0 %v2661
      %v2729 = vpop.f32.mrb[0].mxu0
      %v2730 = vadd.f32 %v831, %v2729
      %v2731 = vpop.f32.mrb[0].mxu0
      %2732 = vdwg.mxu0
      %v2734 = vrot.slane %v2730, 6
      %v2736 = vadd.f32 %v2554, %v2734
      %v2737 = vxor.u32 %v2736, 2147483648
      %v2738 = vmul.f32 %v2737, 1.442695
      %v2739 = vpow.pop %v2738
      %v2740 = vadd.f32 %v2739, 1.0
      %v2741 = vrcp.pop %v2740
      %v2742 = vmul.f32 1.0, %v2741
      %2743 = vrot.lane.b32.xlu0 %v2734, 64
      %v2744 = vpop.permute.xlu0 %2743
      %v2746 = vmul.f32 %v2742, %v2744
      %2748 = vrot.lane.b32.xlu0 %v2746, 64
      %v2749 = vpop.permute.xlu0 %2748
      %v2751 = vadd.f32 %v2554, %v2749
      %v2752 = vtanh.pop %v2751
      %v2753 = vsub.f32 1.0, %v2742
      %2755 = vrot.lane.b32.xlu0 %v2752, 96
      %v2756 = vpop.permute.xlu0 %2755
      %v2758 = vmul.f32 %v2753, %v2756
      %v2759 = vrot.slane %v2657, 6
      %v2761 = vmul.f32 %v2742, %v2759
      %v2762 = vadd.f32 %v2758, %v2761
      %v2764 = vrot.slane %v2762, 2
      %2765 = vrot.lane.b32.xlu0 %v2764, 96
      %v2766 = vpop.permute.xlu0 %2765
      %v2767 = vsel %vm600, %v2766, 0
      %2769 = vmatprep.subr.mxu0 0.0
      %2770 = vmatpush1.msra.mxu0 %v821
      %2771 = vmatprep.subr.mxu0 0.0
      %2772 = vmatpush1.msra.mxu0 %v822
      %2773 = vmatprep.subr.mxu0 0.0
      %2774 = vmatpush1.msra.mxu0 %v823
      %2775 = vmatprep.subr.mxu0 0.0
      %2776 = vmatpush1.msra.mxu0 %v824
      %2777 = vmatprep.subr.mxu0 0.0
      %2778 = vmatpush1.msra.mxu0 0.0
      %2779 = vmatprep.subr.mxu0 0.0
      %2780 = vmatpush1.msra.mxu0 0.0
      %2781 = vmatprep.subr.mxu0 0.0
      %2782 = vmatpush1.msra.mxu0 0.0
      %2783 = vmatprep.subr.mxu0 0.0
      %2784 = vmatpush1.msra.mxu0 0.0
      %2785 = vmatprep.subr.mxu0 0.0
      %2786 = vmatpush1.msra.mxu0 0.0
      %2787 = vmatprep.subr.mxu0 0.0
      %2788 = vmatpush1.msra.mxu0 0.0
      %2789 = vmatprep.subr.mxu0 0.0
      %2790 = vmatpush1.msra.mxu0 0.0
      %2791 = vmatprep.subr.mxu0 0.0
      %2792 = vmatpush1.msra.mxu0 0.0
      %2793 = vmatprep.subr.mxu0 0.0
      %2794 = vmatpush1.msra.mxu0 0.0
      %2795 = vmatprep.subr.mxu0 0.0
      %2796 = vmatpush1.msra.mxu0 0.0
      %2797 = vmatprep.subr.mxu0 0.0
      %2798 = vmatpush1.msra.mxu0 0.0
      %2799 = vmatprep.subr.mxu0 0.0
      %2800 = vmatpush1.msra.mxu0 0.0
      %2801 = vmatprep.subr.mxu0 0.0
      %2802 = vmatpush1.msra.mxu0 0.0
      %2803 = vmatprep.subr.mxu0 0.0
      %2804 = vmatpush1.msra.mxu0 0.0
      %2805 = vmatprep.subr.mxu0 0.0
      %2806 = vmatpush1.msra.mxu0 0.0
      %2807 = vmatprep.subr.mxu0 0.0
      %2808 = vmatpush1.msra.mxu0 0.0
      %2809 = vmatprep.subr.mxu0 0.0
      %2810 = vmatpush1.msra.mxu0 0.0
      %2811 = vmatprep.subr.mxu0 0.0
      %2812 = vmatpush1.msra.mxu0 0.0
      %2813 = vmatprep.subr.mxu0 0.0
      %2814 = vmatpush1.msra.mxu0 0.0
      %2815 = vmatprep.subr.mxu0 0.0
      %2816 = vmatpush1.msra.mxu0 0.0
      %2817 = vmatprep.subr.mxu0 0.0
      %2818 = vmatpush1.msra.mxu0 0.0
      %2819 = vmatprep.subr.mxu0 0.0
      %2820 = vmatpush1.msra.mxu0 0.0
      %2821 = vmatprep.subr.mxu0 0.0
      %2822 = vmatpush1.msra.mxu0 0.0
      %2823 = vmatprep.subr.mxu0 0.0
      %2824 = vmatpush1.msra.mxu0 0.0
      %2825 = vmatprep.subr.mxu0 0.0
      %2826 = vmatpush1.msra.mxu0 0.0
      %2827 = vmatprep.subr.mxu0 0.0
      %2828 = vmatpush1.msra.mxu0 0.0
      %2829 = vmatprep.subr.mxu0 0.0
      %2830 = vmatpush1.msra.mxu0 0.0
      %2831 = vmatprep.subr.mxu0 0.0
      %2832 = vmatpush1.msra.mxu0 0.0
      %2833 = vmatprep.mubr.f32.mxu0 0.0
      %2834 = vmatmul.mubr.f32.gmra.mrb[0].mxu0 %v2767
      %v2835 = vpop.f32.mrb[0].mxu0
      %v2836 = vadd.f32 %v831, %v2835
      %v2837 = vpop.f32.mrb[0].mxu0
      %2838 = vdwg.mxu0
      %v2840 = vrot.slane %v2836, 4
      %v2842 = vadd.f32 %v2554, %v2840
      %v2843 = vxor.u32 %v2842, 2147483648
      %v2844 = vmul.f32 %v2843, 1.442695
      %v2845 = vpow.pop %v2844
      %v2846 = vadd.f32 %v2845, 1.0
      %v2847 = vrcp.pop %v2846
      %v2848 = vmul.f32 1.0, %v2847
      %2849 = vrot.lane.b32.xlu0 %v2840, 64
      %v2850 = vpop.permute.xlu0 %2849
      %v2852 = vmul.f32 %v2848, %v2850
      %2854 = vrot.lane.b32.xlu0 %v2852, 64
      %v2855 = vpop.permute.xlu0 %2854
      %v2857 = vadd.f32 %v2554, %v2855
      %v2858 = vtanh.pop %v2857
      %v2859 = vsub.f32 1.0, %v2848
      %2861 = vrot.lane.b32.xlu0 %v2858, 96
      %v2862 = vpop.permute.xlu0 %2861
      %v2864 = vmul.f32 %v2859, %v2862
      %v2865 = vrot.slane %v2762, 6
      %v2867 = vmul.f32 %v2848, %v2865
      %v2868 = vadd.f32 %v2864, %v2867
      %v2870 = vrot.slane %v2868, 4
      %2871 = vrot.lane.b32.xlu0 %v2870, 96
      %v2872 = vpop.permute.xlu0 %2871
      %v2873 = vsel %vm600, %v2872, 0
      %2875 = vmatprep.subr.mxu0 0.0
      %2876 = vmatpush1.msra.mxu0 %v821
      %2877 = vmatprep.subr.mxu0 0.0
      %2878 = vmatpush1.msra.mxu0 %v822
      %2879 = vmatprep.subr.mxu0 0.0
      %2880 = vmatpush1.msra.mxu0 %v823
      %2881 = vmatprep.subr.mxu0 0.0
      %2882 = vmatpush1.msra.mxu0 %v824
      %2883 = vmatprep.subr.mxu0 0.0
      %2884 = vmatpush1.msra.mxu0 0.0
      %2885 = vmatprep.subr.mxu0 0.0
      %2886 = vmatpush1.msra.mxu0 0.0
      %2887 = vmatprep.subr.mxu0 0.0
      %2888 = vmatpush1.msra.mxu0 0.0
      %2889 = vmatprep.subr.mxu0 0.0
      %2890 = vmatpush1.msra.mxu0 0.0
      %2891 = vmatprep.subr.mxu0 0.0
      %2892 = vmatpush1.msra.mxu0 0.0
      %2893 = vmatprep.subr.mxu0 0.0
      %2894 = vmatpush1.msra.mxu0 0.0
      %2895 = vmatprep.subr.mxu0 0.0
      %2896 = vmatpush1.msra.mxu0 0.0
      %2897 = vmatprep.subr.mxu0 0.0
      %2898 = vmatpush1.msra.mxu0 0.0
      %2899 = vmatprep.subr.mxu0 0.0
      %2900 = vmatpush1.msra.mxu0 0.0
      %2901 = vmatprep.subr.mxu0 0.0
      %2902 = vmatpush1.msra.mxu0 0.0
      %2903 = vmatprep.subr.mxu0 0.0
      %2904 = vmatpush1.msra.mxu0 0.0
      %2905 = vmatprep.subr.mxu0 0.0
      %2906 = vmatpush1.msra.mxu0 0.0
      %2907 = vmatprep.subr.mxu0 0.0
      %2908 = vmatpush1.msra.mxu0 0.0
      %2909 = vmatprep.subr.mxu0 0.0
      %2910 = vmatpush1.msra.mxu0 0.0
      %2911 = vmatprep.subr.mxu0 0.0
      %2912 = vmatpush1.msra.mxu0 0.0
      %2913 = vmatprep.subr.mxu0 0.0
      %2914 = vmatpush1.msra.mxu0 0.0
      %2915 = vmatprep.subr.mxu0 0.0
      %2916 = vmatpush1.msra.mxu0 0.0
      %2917 = vmatprep.subr.mxu0 0.0
      %2918 = vmatpush1.msra.mxu0 0.0
      %2919 = vmatprep.subr.mxu0 0.0
      %2920 = vmatpush1.msra.mxu0 0.0
      %2921 = vmatprep.subr.mxu0 0.0
      %2922 = vmatpush1.msra.mxu0 0.0
      %2923 = vmatprep.subr.mxu0 0.0
      %2924 = vmatpush1.msra.mxu0 0.0
      %2925 = vmatprep.subr.mxu0 0.0
      %2926 = vmatpush1.msra.mxu0 0.0
      %2927 = vmatprep.subr.mxu0 0.0
      %2928 = vmatpush1.msra.mxu0 0.0
      %2929 = vmatprep.subr.mxu0 0.0
      %2930 = vmatpush1.msra.mxu0 0.0
      %2931 = vmatprep.subr.mxu0 0.0
      %2932 = vmatpush1.msra.mxu0 0.0
      %2933 = vmatprep.subr.mxu0 0.0
      %2934 = vmatpush1.msra.mxu0 0.0
      %2935 = vmatprep.subr.mxu0 0.0
      %2936 = vmatpush1.msra.mxu0 0.0
      %2937 = vmatprep.subr.mxu0 0.0
      %2938 = vmatpush1.msra.mxu0 0.0
      %2939 = vmatprep.mubr.f32.mxu0 0.0
      %2940 = vmatmul.mubr.f32.gmra.mrb[0].mxu0 %v2873
      %v2941 = vpop.f32.mrb[0].mxu0
      %v2942 = vadd.f32 %v831, %v2941
      %v2943 = vpop.f32.mrb[0].mxu0
      %2944 = vdwg.mxu0
      %v2946 = vrot.slane %v2942, 2
      %v2948 = vadd.f32 %v2554, %v2946
      %v2949 = vxor.u32 %v2948, 2147483648
      %v2950 = vmul.f32 %v2949, 1.442695
      %v2951 = vpow.pop %v2950
      %v2952 = vadd.f32 %v2951, 1.0
      %v2953 = vrcp.pop %v2952
      %v2954 = vmul.f32 1.0, %v2953
      %2955 = vrot.lane.b32.xlu0 %v2946, 64
      %v2956 = vpop.permute.xlu0 %2955
      %v2958 = vmul.f32 %v2954, %v2956
      %2960 = vrot.lane.b32.xlu0 %v2958, 64
      %v2961 = vpop.permute.xlu0 %2960
      %v2963 = vadd.f32 %v2554, %v2961
      %v2964 = vtanh.pop %v2963
      %v2965 = vsub.f32 1.0, %v2954
      %2967 = vrot.lane.b32.xlu0 %v2964, 96
      %v2968 = vpop.permute.xlu0 %2967
      %v2970 = vmul.f32 %v2965, %v2968
      %v2971 = vrot.slane %v2868, 6
      %v2973 = vmul.f32 %v2954, %v2971
      %v2974 = vadd.f32 %v2970, %v2973
      %v2975 = vsel %vm1249, %v2657, %v2762
      %v2976 = vsel %vm1251, %v2975, %v2868
      %v2977 = vsel %vm1253, %v2976, %v2974
      %2979 = vrot.lane.b32.xlu0 %v2977, 96
      %v2980 = vpop.permute.xlu0 %2979
      %s2982 = scalar_lea.vmem [#allocation2], 32
      %2983 = vst.msk [vmem:[%s2982] sm:$0xff] %vm600, %v2980
      %v2984 = vld [vmem:[#allocation2] sm:$0xff]
      %v2985 = vld [vmem:[#allocation2 + $0x8] sm:$0xff]
      %v2986 = vld [vmem:[#allocation2 + $0x10] sm:$0xff]
      %v2987 = vld [vmem:[#allocation2 + $0x18] sm:$0xff]
      %v2988 = vld [vmem:[#allocation2 + $0x20] sm:$0xff]
      %s2989 = scalar_lea.vmem %s5, 32
      %v2990 = vld [vmem:[%s2989] sm:$0xff]
      %v2991 = vld [vmem:[%s2989 + $0x8] sm:$0xff]
      %v2992 = vld [vmem:[%s2989 + $0x10] sm:$0xff]
      %v2993 = vld [vmem:[%s2989 + $0x18] sm:$0xff]
      %s2994 = scalar_lea.vmem %s7, 1
      %v2995 = vld [vmem:[%s2994] sm:$0x1]
      %v2997 = vlaneseq
      %v2998 = vshrl.u32 %v2997, 7
      %v2999 = vsub.s32 0, %v2998
      %v3000 = vrot.slane %v2995, %v2999
      %v3003 = vsel %vm600, %v2984, 0
      %v3006 = vsel %vm600, %v2985, 0
      %v3009 = vsel %vm600, %v2986, 0
      %v3012 = vsel %vm600, %v2987, 0
      %v3015 = vsel %vm600, %v2988, 0
      %3017 = vmatprep.subr.mxu0 0.0
      %3018 = vmatpush1.msra.mxu0 %v2990
      %3019 = vmatprep.subr.mxu0 0.0
      %3020 = vmatpush1.msra.mxu0 %v2991
      %3021 = vmatprep.subr.mxu0 0.0
      %3022 = vmatpush1.msra.mxu0 %v2992
      %3023 = vmatprep.subr.mxu0 0.0
      %3024 = vmatpush1.msra.mxu0 %v2993
      %3025 = vmatprep.subr.mxu0 0.0
      %3026 = vmatpush1.msra.mxu0 0.0
      %3027 = vmatprep.subr.mxu0 0.0
      %3028 = vmatpush1.msra.mxu0 0.0
      %3029 = vmatprep.subr.mxu0 0.0
      %3030 = vmatpush1.msra.mxu0 0.0
      %3031 = vmatprep.subr.mxu0 0.0
      %3032 = vmatpush1.msra.mxu0 0.0
      %3033 = vmatprep.subr.mxu0 0.0
      %3034 = vmatpush1.msra.mxu0 0.0
      %3035 = vmatprep.subr.mxu0 0.0
      %3036 = vmatpush1.msra.mxu0 0.0
      %3037 = vmatprep.subr.mxu0 0.0
      %3038 = vmatpush1.msra.mxu0 0.0
      %3039 = vmatprep.subr.mxu0 0.0
      %3040 = vmatpush1.msra.mxu0 0.0
      %3041 = vmatprep.subr.mxu0 0.0
      %3042 = vmatpush1.msra.mxu0 0.0
      %3043 = vmatprep.subr.mxu0 0.0
      %3044 = vmatpush1.msra.mxu0 0.0
      %3045 = vmatprep.subr.mxu0 0.0
      %3046 = vmatpush1.msra.mxu0 0.0
      %3047 = vmatprep.subr.mxu0 0.0
      %3048 = vmatpush1.msra.mxu0 0.0
      %3049 = vmatprep.subr.mxu0 0.0
      %3050 = vmatpush1.msra.mxu0 0.0
      %3051 = vmatprep.subr.mxu0 0.0
      %3052 = vmatpush1.msra.mxu0 0.0
      %3053 = vmatprep.subr.mxu0 0.0
      %3054 = vmatpush1.msra.mxu0 0.0
      %3055 = vmatprep.subr.mxu0 0.0
      %3056 = vmatpush1.msra.mxu0 0.0
      %3057 = vmatprep.subr.mxu0 0.0
      %3058 = vmatpush1.msra.mxu0 0.0
      %3059 = vmatprep.subr.mxu0 0.0
      %3060 = vmatpush1.msra.mxu0 0.0
      %3061 = vmatprep.subr.mxu0 0.0
      %3062 = vmatpush1.msra.mxu0 0.0
      %3063 = vmatprep.subr.mxu0 0.0
      %3064 = vmatpush1.msra.mxu0 0.0
      %3065 = vmatprep.subr.mxu0 0.0
      %3066 = vmatpush1.msra.mxu0 0.0
      %3067 = vmatprep.subr.mxu0 0.0
      %3068 = vmatpush1.msra.mxu0 0.0
      %3069 = vmatprep.subr.mxu0 0.0
      %3070 = vmatpush1.msra.mxu0 0.0
      %3071 = vmatprep.subr.mxu0 0.0
      %3072 = vmatpush1.msra.mxu0 0.0
      %3073 = vmatprep.subr.mxu0 0.0
      %3074 = vmatpush1.msra.mxu0 0.0
      %3075 = vmatprep.subr.mxu0 0.0
      %3076 = vmatpush1.msra.mxu0 0.0
      %3077 = vmatprep.subr.mxu0 0.0
      %3078 = vmatpush1.msra.mxu0 0.0
      %3079 = vmatprep.subr.mxu0 0.0
      %3080 = vmatpush1.msra.mxu0 0.0
      %3081 = vmatprep.mubr.f32.mxu0 0.0
      %3082 = vmatmul.mubr.f32.gmra.mrb[0].mxu0 %v3003
      %v3083 = vpop.f32.mrb[0].mxu0
      %v3084 = vadd.f32 %v3000, %v3083
      %v3085 = vpop.f32.mrb[0].mxu0
      %3086 = vmatprep.mubr.f32.mxu0 0.0
      %3087 = vmatmul.mubr.f32.gmra.mrb[0].mxu0 %v3006
      %v3088 = vpop.f32.mrb[0].mxu0
      %v3089 = vadd.f32 %v3000, %v3088
      %v3090 = vpop.f32.mrb[0].mxu0
      %3091 = vmatprep.mubr.f32.mxu0 0.0
      %3092 = vmatmul.mubr.f32.gmra.mrb[0].mxu0 %v3009
      %v3093 = vpop.f32.mrb[0].mxu0
      %v3094 = vadd.f32 %v3000, %v3093
      %v3095 = vpop.f32.mrb[0].mxu0
      %3096 = vmatprep.mubr.f32.mxu0 0.0
      %3097 = vmatmul.mubr.f32.gmra.mrb[0].mxu0 %v3012
      %v3098 = vpop.f32.mrb[0].mxu0
      %v3099 = vadd.f32 %v3000, %v3098
      %v3100 = vpop.f32.mrb[0].mxu0
      %3101 = vmatprep.mubr.f32.mxu0 0.0
      %3102 = vmatmul.mubr.f32.gmra.mrb[0].mxu0 %v3015
      %v3103 = vpop.f32.mrb[0].mxu0
      %v3104 = vadd.f32 %v3000, %v3103
      %v3105 = vpop.f32.mrb[0].mxu0
      %3106 = vdwg.mxu0
      %3107 = vst.msk [vmem:[#allocation3] sm:$0xff] %vm815, %v3084
      %3108 = vst.msk [vmem:[#allocation3 + $0x8] sm:$0xff] %vm815, %v3089
      %3109 = vst.msk [vmem:[#allocation3 + $0x10] sm:$0xff] %vm815, %v3094
      %3110 = vst.msk [vmem:[#allocation3 + $0x18] sm:$0xff] %vm815, %v3099
      %3111 = vst.msk [vmem:[#allocation3 + $0x20] sm:$0xff] %vm815, %v3104
      %s3112 = scalar_lea.vmem %s6, 32
      %v3113 = vld [vmem:[%s3112] sm:$0xff]
      %v3114 = vld [vmem:[%s3112 + $0x8] sm:$0xff]
      %v3115 = vld [vmem:[%s3112 + $0x10] sm:$0xff]
      %v3116 = vld [vmem:[%s3112 + $0x18] sm:$0xff]
      %s3117 = scalar_lea.vmem %s8, 1
      %v3118 = vld [vmem:[%s3117] sm:$0x1]
      %v3119 = vld [vmem:[#allocation3] sm:$0xff]
      %v3121 = vlaneseq
      %v3122 = vshrl.u32 %v3121, 7
      %v3123 = vsub.s32 0, %v3122
      %v3124 = vrot.slane %v3118, %v3123
      %3126 = vmatprep.subr.mxu0 0.0
      %3127 = vmatpush1.msra.mxu0 %v3113
      %3128 = vmatprep.subr.mxu0 0.0
      %3129 = vmatpush1.msra.mxu0 %v3114
      %3130 = vmatprep.subr.mxu0 0.0
      %3131 = vmatpush1.msra.mxu0 %v3115
      %3132 = vmatprep.subr.mxu0 0.0
      %3133 = vmatpush1.msra.mxu0 %v3116
      %3134 = vmatprep.subr.mxu0 0.0
      %3135 = vmatpush1.msra.mxu0 0.0
      %3136 = vmatprep.subr.mxu0 0.0
      %3137 = vmatpush1.msra.mxu0 0.0
      %3138 = vmatprep.subr.mxu0 0.0
      %3139 = vmatpush1.msra.mxu0 0.0
      %3140 = vmatprep.subr.mxu0 0.0
      %3141 = vmatpush1.msra.mxu0 0.0
      %3142 = vmatprep.subr.mxu0 0.0
      %3143 = vmatpush1.msra.mxu0 0.0
      %3144 = vmatprep.subr.mxu0 0.0
      %3145 = vmatpush1.msra.mxu0 0.0
      %3146 = vmatprep.subr.mxu0 0.0
      %3147 = vmatpush1.msra.mxu0 0.0
      %3148 = vmatprep.subr.mxu0 0.0
      %3149 = vmatpush1.msra.mxu0 0.0
      %3150 = vmatprep.subr.mxu0 0.0
      %3151 = vmatpush1.msra.mxu0 0.0
      %3152 = vmatprep.subr.mxu0 0.0
      %3153 = vmatpush1.msra.mxu0 0.0
      %3154 = vmatprep.subr.mxu0 0.0
      %3155 = vmatpush1.msra.mxu0 0.0
      %3156 = vmatprep.subr.mxu0 0.0
      %3157 = vmatpush1.msra.mxu0 0.0
      %3158 = vmatprep.subr.mxu0 0.0
      %3159 = vmatpush1.msra.mxu0 0.0
      %3160 = vmatprep.subr.mxu0 0.0
      %3161 = vmatpush1.msra.mxu0 0.0
      %3162 = vmatprep.subr.mxu0 0.0
      %3163 = vmatpush1.msra.mxu0 0.0
      %3164 = vmatprep.subr.mxu0 0.0
      %3165 = vmatpush1.msra.mxu0 0.0
      %3166 = vmatprep.subr.mxu0 0.0
      %3167 = vmatpush1.msra.mxu0 0.0
      %3168 = vmatprep.subr.mxu0 0.0
      %3169 = vmatpush1.msra.mxu0 0.0
      %3170 = vmatprep.subr.mxu0 0.0
      %3171 = vmatpush1.msra.mxu0 0.0
      %3172 = vmatprep.subr.mxu0 0.0
      %3173 = vmatpush1.msra.mxu0 0.0
      %3174 = vmatprep.subr.mxu0 0.0
      %3175 = vmatpush1.msra.mxu0 0.0
      %3176 = vmatprep.subr.mxu0 0.0
      %3177 = vmatpush1.msra.mxu0 0.0
      %3178 = vmatprep.subr.mxu0 0.0
      %3179 = vmatpush1.msra.mxu0 0.0
      %3180 = vmatprep.subr.mxu0 0.0
      %3181 = vmatpush1.msra.mxu0 0.0
      %3182 = vmatprep.subr.mxu0 0.0
      %3183 = vmatpush1.msra.mxu0 0.0
      %3184 = vmatprep.subr.mxu0 0.0
      %3185 = vmatpush1.msra.mxu0 0.0
      %3186 = vmatprep.subr.mxu0 0.0
      %3187 = vmatpush1.msra.mxu0 0.0
      %3188 = vmatprep.subr.mxu0 0.0
      %3189 = vmatpush1.msra.mxu0 0.0
      %3190 = vmatprep.mubr.f32.mxu0 0.0
      %3191 = vmatmul.mubr.f32.gmra.mrb[0].mxu0 %v834
      %v3192 = vpop.f32.mrb[0].mxu0
      %v3193 = vadd.f32 %v3124, %v3192
      %v3194 = vpop.f32.mrb[0].mxu0
      %3195 = vdwg.mxu0
      %v3196 = vadd.f32 %v3119, %v3193
      %v3197 = vxor.u32 %v3196, 2147483648
      %v3198 = vmul.f32 %v3197, 1.442695
      %v3199 = vpow.pop %v3198
      %v3200 = vadd.f32 %v3199, 1.0
      %v3201 = vrcp.pop %v3200
      %v3202 = vmul.f32 1.0, %v3201
      %3204 = vrot.lane.b32.xlu0 %v3193, 64
      %v3205 = vpop.permute.xlu0 %3204
      %v3207 = vmul.f32 %v3202, %v3205
      %3209 = vrot.lane.b32.xlu0 %v3207, 64
      %v3210 = vpop.permute.xlu0 %3209
      %v3212 = vadd.f32 %v3119, %v3210
      %v3213 = vtanh.pop %v3212
      %v3214 = vsub.f32 1.0, %v3202
      %3216 = vrot.lane.b32.xlu0 %v3213, 96
      %v3217 = vpop.permute.xlu0 %3216
      %v3219 = vmul.f32 %v3214, %v3217
      %v3220 = vmul.f32 %v3202, 0.0
      %v3221 = vadd.f32 %v3219, %v3220
      %3223 = vrot.lane.b32.xlu0 %v3221, 96
      %v3224 = vpop.permute.xlu0 %3223
      %v3225 = vsel %vm600, %v3224, 0
      %3227 = vmatprep.subr.mxu0 0.0
      %3228 = vmatpush1.msra.mxu0 %v3113
      %3229 = vmatprep.subr.mxu0 0.0
      %3230 = vmatpush1.msra.mxu0 %v3114
      %3231 = vmatprep.subr.mxu0 0.0
      %3232 = vmatpush1.msra.mxu0 %v3115
      %3233 = vmatprep.subr.mxu0 0.0
      %3234 = vmatpush1.msra.mxu0 %v3116
      %3235 = vmatprep.subr.mxu0 0.0
      %3236 = vmatpush1.msra.mxu0 0.0
      %3237 = vmatprep.subr.mxu0 0.0
      %3238 = vmatpush1.msra.mxu0 0.0
      %3239 = vmatprep.subr.mxu0 0.0
      %3240 = vmatpush1.msra.mxu0 0.0
      %3241 = vmatprep.subr.mxu0 0.0
      %3242 = vmatpush1.msra.mxu0 0.0
      %3243 = vmatprep.subr.mxu0 0.0
      %3244 = vmatpush1.msra.mxu0 0.0
      %3245 = vmatprep.subr.mxu0 0.0
      %3246 = vmatpush1.msra.mxu0 0.0
      %3247 = vmatprep.subr.mxu0 0.0
      %3248 = vmatpush1.msra.mxu0 0.0
      %3249 = vmatprep.subr.mxu0 0.0
      %3250 = vmatpush1.msra.mxu0 0.0
      %3251 = vmatprep.subr.mxu0 0.0
      %3252 = vmatpush1.msra.mxu0 0.0
      %3253 = vmatprep.subr.mxu0 0.0
      %3254 = vmatpush1.msra.mxu0 0.0
      %3255 = vmatprep.subr.mxu0 0.0
      %3256 = vmatpush1.msra.mxu0 0.0
      %3257 = vmatprep.subr.mxu0 0.0
      %3258 = vmatpush1.msra.mxu0 0.0
      %3259 = vmatprep.subr.mxu0 0.0
      %3260 = vmatpush1.msra.mxu0 0.0
      %3261 = vmatprep.subr.mxu0 0.0
      %3262 = vmatpush1.msra.mxu0 0.0
      %3263 = vmatprep.subr.mxu0 0.0
      %3264 = vmatpush1.msra.mxu0 0.0
      %3265 = vmatprep.subr.mxu0 0.0
      %3266 = vmatpush1.msra.mxu0 0.0
      %3267 = vmatprep.subr.mxu0 0.0
      %3268 = vmatpush1.msra.mxu0 0.0
      %3269 = vmatprep.subr.mxu0 0.0
      %3270 = vmatpush1.msra.mxu0 0.0
      %3271 = vmatprep.subr.mxu0 0.0
      %3272 = vmatpush1.msra.mxu0 0.0
      %3273 = vmatprep.subr.mxu0 0.0
      %3274 = vmatpush1.msra.mxu0 0.0
      %3275 = vmatprep.subr.mxu0 0.0
      %3276 = vmatpush1.msra.mxu0 0.0
      %3277 = vmatprep.subr.mxu0 0.0
      %3278 = vmatpush1.msra.mxu0 0.0
      %3279 = vmatprep.subr.mxu0 0.0
      %3280 = vmatpush1.msra.mxu0 0.0
      %3281 = vmatprep.subr.mxu0 0.0
      %3282 = vmatpush1.msra.mxu0 0.0
      %3283 = vmatprep.subr.mxu0 0.0
      %3284 = vmatpush1.msra.mxu0 0.0
      %3285 = vmatprep.subr.mxu0 0.0
      %3286 = vmatpush1.msra.mxu0 0.0
      %3287 = vmatprep.subr.mxu0 0.0
      %3288 = vmatpush1.msra.mxu0 0.0
      %3289 = vmatprep.subr.mxu0 0.0
      %3290 = vmatpush1.msra.mxu0 0.0
      %3291 = vmatprep.mubr.f32.mxu0 0.0
      %3292 = vmatmul.mubr.f32.gmra.mrb[0].mxu0 %v3225
      %v3293 = vpop.f32.mrb[0].mxu0
      %v3294 = vadd.f32 %v3124, %v3293
      %v3295 = vpop.f32.mrb[0].mxu0
      %3296 = vdwg.mxu0
      %v3298 = vrot.slane %v3294, 6
      %v3300 = vadd.f32 %v3119, %v3298
      %v3301 = vxor.u32 %v3300, 2147483648
      %v3302 = vmul.f32 %v3301, 1.442695
      %v3303 = vpow.pop %v3302
      %v3304 = vadd.f32 %v3303, 1.0
      %v3305 = vrcp.pop %v3304
      %v3306 = vmul.f32 1.0, %v3305
      %3307 = vrot.lane.b32.xlu0 %v3298, 64
      %v3308 = vpop.permute.xlu0 %3307
      %v3310 = vmul.f32 %v3306, %v3308
      %3312 = vrot.lane.b32.xlu0 %v3310, 64
      %v3313 = vpop.permute.xlu0 %3312
      %v3315 = vadd.f32 %v3119, %v3313
      %v3316 = vtanh.pop %v3315
      %v3317 = vsub.f32 1.0, %v3306
      %3319 = vrot.lane.b32.xlu0 %v3316, 96
      %v3320 = vpop.permute.xlu0 %3319
      %v3322 = vmul.f32 %v3317, %v3320
      %v3323 = vrot.slane %v3221, 6
      %v3325 = vmul.f32 %v3306, %v3323
      %v3326 = vadd.f32 %v3322, %v3325
      %v3328 = vrot.slane %v3326, 2
      %3329 = vrot.lane.b32.xlu0 %v3328, 96
      %v3330 = vpop.permute.xlu0 %3329
      %v3331 = vsel %vm600, %v3330, 0
      %3333 = vmatprep.subr.mxu0 0.0
      %3334 = vmatpush1.msra.mxu0 %v3113
      %3335 = vmatprep.subr.mxu0 0.0
      %3336 = vmatpush1.msra.mxu0 %v3114
      %3337 = vmatprep.subr.mxu0 0.0
      %3338 = vmatpush1.msra.mxu0 %v3115
      %3339 = vmatprep.subr.mxu0 0.0
      %3340 = vmatpush1.msra.mxu0 %v3116
      %3341 = vmatprep.subr.mxu0 0.0
      %3342 = vmatpush1.msra.mxu0 0.0
      %3343 = vmatprep.subr.mxu0 0.0
      %3344 = vmatpush1.msra.mxu0 0.0
      %3345 = vmatprep.subr.mxu0 0.0
      %3346 = vmatpush1.msra.mxu0 0.0
      %3347 = vmatprep.subr.mxu0 0.0
      %3348 = vmatpush1.msra.mxu0 0.0
      %3349 = vmatprep.subr.mxu0 0.0
      %3350 = vmatpush1.msra.mxu0 0.0
      %3351 = vmatprep.subr.mxu0 0.0
      %3352 = vmatpush1.msra.mxu0 0.0
      %3353 = vmatprep.subr.mxu0 0.0
      %3354 = vmatpush1.msra.mxu0 0.0
      %3355 = vmatprep.subr.mxu0 0.0
      %3356 = vmatpush1.msra.mxu0 0.0
      %3357 = vmatprep.subr.mxu0 0.0
      %3358 = vmatpush1.msra.mxu0 0.0
      %3359 = vmatprep.subr.mxu0 0.0
      %3360 = vmatpush1.msra.mxu0 0.0
      %3361 = vmatprep.subr.mxu0 0.0
      %3362 = vmatpush1.msra.mxu0 0.0
      %3363 = vmatprep.subr.mxu0 0.0
      %3364 = vmatpush1.msra.mxu0 0.0
      %3365 = vmatprep.subr.mxu0 0.0
      %3366 = vmatpush1.msra.mxu0 0.0
      %3367 = vmatprep.subr.mxu0 0.0
      %3368 = vmatpush1.msra.mxu0 0.0
      %3369 = vmatprep.subr.mxu0 0.0
      %3370 = vmatpush1.msra.mxu0 0.0
      %3371 = vmatprep.subr.mxu0 0.0
      %3372 = vmatpush1.msra.mxu0 0.0
      %3373 = vmatprep.subr.mxu0 0.0
      %3374 = vmatpush1.msra.mxu0 0.0
      %3375 = vmatprep.subr.mxu0 0.0
      %3376 = vmatpush1.msra.mxu0 0.0
      %3377 = vmatprep.subr.mxu0 0.0
      %3378 = vmatpush1.msra.mxu0 0.0
      %3379 = vmatprep.subr.mxu0 0.0
      %3380 = vmatpush1.msra.mxu0 0.0
      %3381 = vmatprep.subr.mxu0 0.0
      %3382 = vmatpush1.msra.mxu0 0.0
      %3383 = vmatprep.subr.mxu0 0.0
      %3384 = vmatpush1.msra.mxu0 0.0
      %3385 = vmatprep.subr.mxu0 0.0
      %3386 = vmatpush1.msra.mxu0 0.0
      %3387 = vmatprep.subr.mxu0 0.0
      %3388 = vmatpush1.msra.mxu0 0.0
      %3389 = vmatprep.subr.mxu0 0.0
      %3390 = vmatpush1.msra.mxu0 0.0
      %3391 = vmatprep.subr.mxu0 0.0
      %3392 = vmatpush1.msra.mxu0 0.0
      %3393 = vmatprep.subr.mxu0 0.0
      %3394 = vmatpush1.msra.mxu0 0.0
      %3395 = vmatprep.subr.mxu0 0.0
      %3396 = vmatpush1.msra.mxu0 0.0
      %3397 = vmatprep.mubr.f32.mxu0 0.0
      %3398 = vmatmul.mubr.f32.gmra.mrb[0].mxu0 %v3331
      %v3399 = vpop.f32.mrb[0].mxu0
      %v3400 = vadd.f32 %v3124, %v3399
      %v3401 = vpop.f32.mrb[0].mxu0
      %3402 = vdwg.mxu0
      %v3404 = vrot.slane %v3400, 4
      %v3406 = vadd.f32 %v3119, %v3404
      %v3407 = vxor.u32 %v3406, 2147483648
      %v3408 = vmul.f32 %v3407, 1.442695
      %v3409 = vpow.pop %v3408
      %v3410 = vadd.f32 %v3409, 1.0
      %v3411 = vrcp.pop %v3410
      %v3412 = vmul.f32 1.0, %v3411
      %3413 = vrot.lane.b32.xlu0 %v3404, 64
      %v3414 = vpop.permute.xlu0 %3413
      %v3416 = vmul.f32 %v3412, %v3414
      %3418 = vrot.lane.b32.xlu0 %v3416, 64
      %v3419 = vpop.permute.xlu0 %3418
      %v3421 = vadd.f32 %v3119, %v3419
      %v3422 = vtanh.pop %v3421
      %v3423 = vsub.f32 1.0, %v3412
      %3425 = vrot.lane.b32.xlu0 %v3422, 96
      %v3426 = vpop.permute.xlu0 %3425
      %v3428 = vmul.f32 %v3423, %v3426
      %v3429 = vrot.slane %v3326, 6
      %v3431 = vmul.f32 %v3412, %v3429
      %v3432 = vadd.f32 %v3428, %v3431
      %v3434 = vrot.slane %v3432, 4
      %3435 = vrot.lane.b32.xlu0 %v3434, 96
      %v3436 = vpop.permute.xlu0 %3435
      %v3437 = vsel %vm600, %v3436, 0
      %3439 = vmatprep.subr.mxu0 0.0
      %3440 = vmatpush1.msra.mxu0 %v3113
      %3441 = vmatprep.subr.mxu0 0.0
      %3442 = vmatpush1.msra.mxu0 %v3114
      %3443 = vmatprep.subr.mxu0 0.0
      %3444 = vmatpush1.msra.mxu0 %v3115
      %3445 = vmatprep.subr.mxu0 0.0
      %3446 = vmatpush1.msra.mxu0 %v3116
      %3447 = vmatprep.subr.mxu0 0.0
      %3448 = vmatpush1.msra.mxu0 0.0
      %3449 = vmatprep.subr.mxu0 0.0
      %3450 = vmatpush1.msra.mxu0 0.0
      %3451 = vmatprep.subr.mxu0 0.0
      %3452 = vmatpush1.msra.mxu0 0.0
      %3453 = vmatprep.subr.mxu0 0.0
      %3454 = vmatpush1.msra.mxu0 0.0
      %3455 = vmatprep.subr.mxu0 0.0
      %3456 = vmatpush1.msra.mxu0 0.0
      %3457 = vmatprep.subr.mxu0 0.0
      %3458 = vmatpush1.msra.mxu0 0.0
      %3459 = vmatprep.subr.mxu0 0.0
      %3460 = vmatpush1.msra.mxu0 0.0
      %3461 = vmatprep.subr.mxu0 0.0
      %3462 = vmatpush1.msra.mxu0 0.0
      %3463 = vmatprep.subr.mxu0 0.0
      %3464 = vmatpush1.msra.mxu0 0.0
      %3465 = vmatprep.subr.mxu0 0.0
      %3466 = vmatpush1.msra.mxu0 0.0
      %3467 = vmatprep.subr.mxu0 0.0
      %3468 = vmatpush1.msra.mxu0 0.0
      %3469 = vmatprep.subr.mxu0 0.0
      %3470 = vmatpush1.msra.mxu0 0.0
      %3471 = vmatprep.subr.mxu0 0.0
      %3472 = vmatpush1.msra.mxu0 0.0
      %3473 = vmatprep.subr.mxu0 0.0
      %3474 = vmatpush1.msra.mxu0 0.0
      %3475 = vmatprep.subr.mxu0 0.0
      %3476 = vmatpush1.msra.mxu0 0.0
      %3477 = vmatprep.subr.mxu0 0.0
      %3478 = vmatpush1.msra.mxu0 0.0
      %3479 = vmatprep.subr.mxu0 0.0
      %3480 = vmatpush1.msra.mxu0 0.0
      %3481 = vmatprep.subr.mxu0 0.0
      %3482 = vmatpush1.msra.mxu0 0.0
      %3483 = vmatprep.subr.mxu0 0.0
      %3484 = vmatpush1.msra.mxu0 0.0
      %3485 = vmatprep.subr.mxu0 0.0
      %3486 = vmatpush1.msra.mxu0 0.0
      %3487 = vmatprep.subr.mxu0 0.0
      %3488 = vmatpush1.msra.mxu0 0.0
      %3489 = vmatprep.subr.mxu0 0.0
      %3490 = vmatpush1.msra.mxu0 0.0
      %3491 = vmatprep.subr.mxu0 0.0
      %3492 = vmatpush1.msra.mxu0 0.0
      %3493 = vmatprep.subr.mxu0 0.0
      %3494 = vmatpush1.msra.mxu0 0.0
      %3495 = vmatprep.subr.mxu0 0.0
      %3496 = vmatpush1.msra.mxu0 0.0
      %3497 = vmatprep.subr.mxu0 0.0
      %3498 = vmatpush1.msra.mxu0 0.0
      %3499 = vmatprep.subr.mxu0 0.0
      %3500 = vmatpush1.msra.mxu0 0.0
      %3501 = vmatprep.subr.mxu0 0.0
      %3502 = vmatpush1.msra.mxu0 0.0
      %3503 = vmatprep.mubr.f32.mxu0 0.0
      %3504 = vmatmul.mubr.f32.gmra.mrb[0].mxu0 %v3437
      %v3505 = vpop.f32.mrb[0].mxu0
      %v3506 = vadd.f32 %v3124, %v3505
      %v3507 = vpop.f32.mrb[0].mxu0
      %3508 = vdwg.mxu0
      %v3510 = vrot.slane %v3506, 2
      %v3512 = vadd.f32 %v3119, %v3510
      %v3513 = vxor.u32 %v3512, 2147483648
      %v3514 = vmul.f32 %v3513, 1.442695
      %v3515 = vpow.pop %v3514
      %v3516 = vadd.f32 %v3515, 1.0
      %v3517 = vrcp.pop %v3516
      %v3518 = vmul.f32 1.0, %v3517
      %3519 = vrot.lane.b32.xlu0 %v3510, 64
      %v3520 = vpop.permute.xlu0 %3519
      %v3522 = vmul.f32 %v3518, %v3520
      %3524 = vrot.lane.b32.xlu0 %v3522, 64
      %v3525 = vpop.permute.xlu0 %3524
      %v3527 = vadd.f32 %v3119, %v3525
      %v3528 = vtanh.pop %v3527
      %v3529 = vsub.f32 1.0, %v3518
      %3531 = vrot.lane.b32.xlu0 %v3528, 96
      %v3532 = vpop.permute.xlu0 %3531
      %v3534 = vmul.f32 %v3529, %v3532
      %v3535 = vrot.slane %v3432, 6
      %v3537 = vmul.f32 %v3518, %v3535
      %v3538 = vadd.f32 %v3534, %v3537
      %v3539 = vsel %vm1249, %v3221, %v3326
      %v3540 = vsel %vm1251, %v3539, %v3432
      %v3541 = vsel %vm1253, %v3540, %v3538
      %3543 = vrot.lane.b32.xlu0 %v3541, 96
      %v3544 = vpop.permute.xlu0 %3543
      %3546 = vst.msk [vmem:[#allocation2] sm:$0xff] %vm600, %v3544
      %v3547 = vld [vmem:[%s1260] sm:$0xff]
      %v3549 = vrot.slane %v3538, 6
      %3550 = vrot.lane.b32.xlu0 %v3549, 96
      %v3551 = vpop.permute.xlu0 %3550
      %v3552 = vsel %vm600, %v3551, 0
      %3554 = vmatprep.subr.mxu0 0.0
      %3555 = vmatpush1.msra.mxu0 %v3113
      %3556 = vmatprep.subr.mxu0 0.0
      %3557 = vmatpush1.msra.mxu0 %v3114
      %3558 = vmatprep.subr.mxu0 0.0
      %3559 = vmatpush1.msra.mxu0 %v3115
      %3560 = vmatprep.subr.mxu0 0.0
      %3561 = vmatpush1.msra.mxu0 %v3116
      %3562 = vmatprep.subr.mxu0 0.0
      %3563 = vmatpush1.msra.mxu0 0.0
      %3564 = vmatprep.subr.mxu0 0.0
      %3565 = vmatpush1.msra.mxu0 0.0
      %3566 = vmatprep.subr.mxu0 0.0
      %3567 = vmatpush1.msra.mxu0 0.0
      %3568 = vmatprep.subr.mxu0 0.0
      %3569 = vmatpush1.msra.mxu0 0.0
      %3570 = vmatprep.subr.mxu0 0.0
      %3571 = vmatpush1.msra.mxu0 0.0
      %3572 = vmatprep.subr.mxu0 0.0
      %3573 = vmatpush1.msra.mxu0 0.0
      %3574 = vmatprep.subr.mxu0 0.0
      %3575 = vmatpush1.msra.mxu0 0.0
      %3576 = vmatprep.subr.mxu0 0.0
      %3577 = vmatpush1.msra.mxu0 0.0
      %3578 = vmatprep.subr.mxu0 0.0
      %3579 = vmatpush1.msra.mxu0 0.0
      %3580 = vmatprep.subr.mxu0 0.0
      %3581 = vmatpush1.msra.mxu0 0.0
      %3582 = vmatprep.subr.mxu0 0.0
      %3583 = vmatpush1.msra.mxu0 0.0
      %3584 = vmatprep.subr.mxu0 0.0
      %3585 = vmatpush1.msra.mxu0 0.0
      %3586 = vmatprep.subr.mxu0 0.0
      %3587 = vmatpush1.msra.mxu0 0.0
      %3588 = vmatprep.subr.mxu0 0.0
      %3589 = vmatpush1.msra.mxu0 0.0
      %3590 = vmatprep.subr.mxu0 0.0
      %3591 = vmatpush1.msra.mxu0 0.0
      %3592 = vmatprep.subr.mxu0 0.0
      %3593 = vmatpush1.msra.mxu0 0.0
      %3594 = vmatprep.subr.mxu0 0.0
      %3595 = vmatpush1.msra.mxu0 0.0
      %3596 = vmatprep.subr.mxu0 0.0
      %3597 = vmatpush1.msra.mxu0 0.0
      %3598 = vmatprep.subr.mxu0 0.0
      %3599 = vmatpush1.msra.mxu0 0.0
      %3600 = vmatprep.subr.mxu0 0.0
      %3601 = vmatpush1.msra.mxu0 0.0
      %3602 = vmatprep.subr.mxu0 0.0
      %3603 = vmatpush1.msra.mxu0 0.0
      %3604 = vmatprep.subr.mxu0 0.0
      %3605 = vmatpush1.msra.mxu0 0.0
      %3606 = vmatprep.subr.mxu0 0.0
      %3607 = vmatpush1.msra.mxu0 0.0
      %3608 = vmatprep.subr.mxu0 0.0
      %3609 = vmatpush1.msra.mxu0 0.0
      %3610 = vmatprep.subr.mxu0 0.0
      %3611 = vmatpush1.msra.mxu0 0.0
      %3612 = vmatprep.subr.mxu0 0.0
      %3613 = vmatpush1.msra.mxu0 0.0
      %3614 = vmatprep.subr.mxu0 0.0
      %3615 = vmatpush1.msra.mxu0 0.0
      %3616 = vmatprep.subr.mxu0 0.0
      %3617 = vmatpush1.msra.mxu0 0.0
      %3618 = vmatprep.mubr.f32.mxu0 0.0
      %3619 = vmatmul.mubr.f32.gmra.mrb[0].mxu0 %v3552
      %v3620 = vpop.f32.mrb[0].mxu0
      %v3621 = vadd.f32 %v3124, %v3620
      %v3622 = vpop.f32.mrb[0].mxu0
      %3623 = vdwg.mxu0
      %v3624 = vadd.f32 %v3547, %v3621
      %v3625 = vxor.u32 %v3624, 2147483648
      %v3626 = vmul.f32 %v3625, 1.442695
      %v3627 = vpow.pop %v3626
      %v3628 = vadd.f32 %v3627, 1.0
      %v3629 = vrcp.pop %v3628
      %v3630 = vmul.f32 1.0, %v3629
      %3632 = vrot.lane.b32.xlu0 %v3621, 64
      %v3633 = vpop.permute.xlu0 %3632
      %v3635 = vmul.f32 %v3630, %v3633
      %3637 = vrot.lane.b32.xlu0 %v3635, 64
      %v3638 = vpop.permute.xlu0 %3637
      %v3640 = vadd.f32 %v3547, %v3638
      %v3641 = vtanh.pop %v3640
      %v3642 = vsub.f32 1.0, %v3630
      %3644 = vrot.lane.b32.xlu0 %v3641, 96
      %v3645 = vpop.permute.xlu0 %3644
      %v3647 = vmul.f32 %v3642, %v3645
      %v3649 = vmul.f32 %v3630, %v3549
      %v3650 = vadd.f32 %v3647, %v3649
      %3652 = vrot.lane.b32.xlu0 %v3650, 96
      %v3653 = vpop.permute.xlu0 %3652
      %v3654 = vsel %vm600, %v3653, 0
      %3656 = vmatprep.subr.mxu0 0.0
      %3657 = vmatpush1.msra.mxu0 %v3113
      %3658 = vmatprep.subr.mxu0 0.0
      %3659 = vmatpush1.msra.mxu0 %v3114
      %3660 = vmatprep.subr.mxu0 0.0
      %3661 = vmatpush1.msra.mxu0 %v3115
      %3662 = vmatprep.subr.mxu0 0.0
      %3663 = vmatpush1.msra.mxu0 %v3116
      %3664 = vmatprep.subr.mxu0 0.0
      %3665 = vmatpush1.msra.mxu0 0.0
      %3666 = vmatprep.subr.mxu0 0.0
      %3667 = vmatpush1.msra.mxu0 0.0
      %3668 = vmatprep.subr.mxu0 0.0
      %3669 = vmatpush1.msra.mxu0 0.0
      %3670 = vmatprep.subr.mxu0 0.0
      %3671 = vmatpush1.msra.mxu0 0.0
      %3672 = vmatprep.subr.mxu0 0.0
      %3673 = vmatpush1.msra.mxu0 0.0
      %3674 = vmatprep.subr.mxu0 0.0
      %3675 = vmatpush1.msra.mxu0 0.0
      %3676 = vmatprep.subr.mxu0 0.0
      %3677 = vmatpush1.msra.mxu0 0.0
      %3678 = vmatprep.subr.mxu0 0.0
      %3679 = vmatpush1.msra.mxu0 0.0
      %3680 = vmatprep.subr.mxu0 0.0
      %3681 = vmatpush1.msra.mxu0 0.0
      %3682 = vmatprep.subr.mxu0 0.0
      %3683 = vmatpush1.msra.mxu0 0.0
      %3684 = vmatprep.subr.mxu0 0.0
      %3685 = vmatpush1.msra.mxu0 0.0
      %3686 = vmatprep.subr.mxu0 0.0
      %3687 = vmatpush1.msra.mxu0 0.0
      %3688 = vmatprep.subr.mxu0 0.0
      %3689 = vmatpush1.msra.mxu0 0.0
      %3690 = vmatprep.subr.mxu0 0.0
      %3691 = vmatpush1.msra.mxu0 0.0
      %3692 = vmatprep.subr.mxu0 0.0
      %3693 = vmatpush1.msra.mxu0 0.0
      %3694 = vmatprep.subr.mxu0 0.0
      %3695 = vmatpush1.msra.mxu0 0.0
      %3696 = vmatprep.subr.mxu0 0.0
      %3697 = vmatpush1.msra.mxu0 0.0
      %3698 = vmatprep.subr.mxu0 0.0
      %3699 = vmatpush1.msra.mxu0 0.0
      %3700 = vmatprep.subr.mxu0 0.0
      %3701 = vmatpush1.msra.mxu0 0.0
      %3702 = vmatprep.subr.mxu0 0.0
      %3703 = vmatpush1.msra.mxu0 0.0
      %3704 = vmatprep.subr.mxu0 0.0
      %3705 = vmatpush1.msra.mxu0 0.0
      %3706 = vmatprep.subr.mxu0 0.0
      %3707 = vmatpush1.msra.mxu0 0.0
      %3708 = vmatprep.subr.mxu0 0.0
      %3709 = vmatpush1.msra.mxu0 0.0
      %3710 = vmatprep.subr.mxu0 0.0
      %3711 = vmatpush1.msra.mxu0 0.0
      %3712 = vmatprep.subr.mxu0 0.0
      %3713 = vmatpush1.msra.mxu0 0.0
      %3714 = vmatprep.subr.mxu0 0.0
      %3715 = vmatpush1.msra.mxu0 0.0
      %3716 = vmatprep.subr.mxu0 0.0
      %3717 = vmatpush1.msra.mxu0 0.0
      %3718 = vmatprep.subr.mxu0 0.0
      %3719 = vmatpush1.msra.mxu0 0.0
      %3720 = vmatprep.mubr.f32.mxu0 0.0
      %3721 = vmatmul.mubr.f32.gmra.mrb[0].mxu0 %v3654
      %v3722 = vpop.f32.mrb[0].mxu0
      %v3723 = vadd.f32 %v3124, %v3722
      %v3724 = vpop.f32.mrb[0].mxu0
      %3725 = vdwg.mxu0
      %v3727 = vrot.slane %v3723, 6
      %v3729 = vadd.f32 %v3547, %v3727
      %v3730 = vxor.u32 %v3729, 2147483648
      %v3731 = vmul.f32 %v3730, 1.442695
      %v3732 = vpow.pop %v3731
      %v3733 = vadd.f32 %v3732, 1.0
      %v3734 = vrcp.pop %v3733
      %v3735 = vmul.f32 1.0, %v3734
      %3736 = vrot.lane.b32.xlu0 %v3727, 64
      %v3737 = vpop.permute.xlu0 %3736
      %v3739 = vmul.f32 %v3735, %v3737
      %3741 = vrot.lane.b32.xlu0 %v3739, 64
      %v3742 = vpop.permute.xlu0 %3741
      %v3744 = vadd.f32 %v3547, %v3742
      %v3745 = vtanh.pop %v3744
      %v3746 = vsub.f32 1.0, %v3735
      %3748 = vrot.lane.b32.xlu0 %v3745, 96
      %v3749 = vpop.permute.xlu0 %3748
      %v3751 = vmul.f32 %v3746, %v3749
      %v3752 = vrot.slane %v3650, 6
      %v3754 = vmul.f32 %v3735, %v3752
      %v3755 = vadd.f32 %v3751, %v3754
      %v3757 = vrot.slane %v3755, 2
      %3758 = vrot.lane.b32.xlu0 %v3757, 96
      %v3759 = vpop.permute.xlu0 %3758
      %v3760 = vsel %vm600, %v3759, 0
      %3762 = vmatprep.subr.mxu0 0.0
      %3763 = vmatpush1.msra.mxu0 %v3113
      %3764 = vmatprep.subr.mxu0 0.0
      %3765 = vmatpush1.msra.mxu0 %v3114
      %3766 = vmatprep.subr.mxu0 0.0
      %3767 = vmatpush1.msra.mxu0 %v3115
      %3768 = vmatprep.subr.mxu0 0.0
      %3769 = vmatpush1.msra.mxu0 %v3116
      %3770 = vmatprep.subr.mxu0 0.0
      %3771 = vmatpush1.msra.mxu0 0.0
      %3772 = vmatprep.subr.mxu0 0.0
      %3773 = vmatpush1.msra.mxu0 0.0
      %3774 = vmatprep.subr.mxu0 0.0
      %3775 = vmatpush1.msra.mxu0 0.0
      %3776 = vmatprep.subr.mxu0 0.0
      %3777 = vmatpush1.msra.mxu0 0.0
      %3778 = vmatprep.subr.mxu0 0.0
      %3779 = vmatpush1.msra.mxu0 0.0
      %3780 = vmatprep.subr.mxu0 0.0
      %3781 = vmatpush1.msra.mxu0 0.0
      %3782 = vmatprep.subr.mxu0 0.0
      %3783 = vmatpush1.msra.mxu0 0.0
      %3784 = vmatprep.subr.mxu0 0.0
      %3785 = vmatpush1.msra.mxu0 0.0
      %3786 = vmatprep.subr.mxu0 0.0
      %3787 = vmatpush1.msra.mxu0 0.0
      %3788 = vmatprep.subr.mxu0 0.0
      %3789 = vmatpush1.msra.mxu0 0.0
      %3790 = vmatprep.subr.mxu0 0.0
      %3791 = vmatpush1.msra.mxu0 0.0
      %3792 = vmatprep.subr.mxu0 0.0
      %3793 = vmatpush1.msra.mxu0 0.0
      %3794 = vmatprep.subr.mxu0 0.0
      %3795 = vmatpush1.msra.mxu0 0.0
      %3796 = vmatprep.subr.mxu0 0.0
      %3797 = vmatpush1.msra.mxu0 0.0
      %3798 = vmatprep.subr.mxu0 0.0
      %3799 = vmatpush1.msra.mxu0 0.0
      %3800 = vmatprep.subr.mxu0 0.0
      %3801 = vmatpush1.msra.mxu0 0.0
      %3802 = vmatprep.subr.mxu0 0.0
      %3803 = vmatpush1.msra.mxu0 0.0
      %3804 = vmatprep.subr.mxu0 0.0
      %3805 = vmatpush1.msra.mxu0 0.0
      %3806 = vmatprep.subr.mxu0 0.0
      %3807 = vmatpush1.msra.mxu0 0.0
      %3808 = vmatprep.subr.mxu0 0.0
      %3809 = vmatpush1.msra.mxu0 0.0
      %3810 = vmatprep.subr.mxu0 0.0
      %3811 = vmatpush1.msra.mxu0 0.0
      %3812 = vmatprep.subr.mxu0 0.0
      %3813 = vmatpush1.msra.mxu0 0.0
      %3814 = vmatprep.subr.mxu0 0.0
      %3815 = vmatpush1.msra.mxu0 0.0
      %3816 = vmatprep.subr.mxu0 0.0
      %3817 = vmatpush1.msra.mxu0 0.0
      %3818 = vmatprep.subr.mxu0 0.0
      %3819 = vmatpush1.msra.mxu0 0.0
      %3820 = vmatprep.subr.mxu0 0.0
      %3821 = vmatpush1.msra.mxu0 0.0
      %3822 = vmatprep.subr.mxu0 0.0
      %3823 = vmatpush1.msra.mxu0 0.0
      %3824 = vmatprep.subr.mxu0 0.0
      %3825 = vmatpush1.msra.mxu0 0.0
      %3826 = vmatprep.mubr.f32.mxu0 0.0
      %3827 = vmatmul.mubr.f32.gmra.mrb[0].mxu0 %v3760
      %v3828 = vpop.f32.mrb[0].mxu0
      %v3829 = vadd.f32 %v3124, %v3828
      %v3830 = vpop.f32.mrb[0].mxu0
      %3831 = vdwg.mxu0
      %v3833 = vrot.slane %v3829, 4
      %v3835 = vadd.f32 %v3547, %v3833
      %v3836 = vxor.u32 %v3835, 2147483648
      %v3837 = vmul.f32 %v3836, 1.442695
      %v3838 = vpow.pop %v3837
      %v3839 = vadd.f32 %v3838, 1.0
      %v3840 = vrcp.pop %v3839
      %v3841 = vmul.f32 1.0, %v3840
      %3842 = vrot.lane.b32.xlu0 %v3833, 64
      %v3843 = vpop.permute.xlu0 %3842
      %v3845 = vmul.f32 %v3841, %v3843
      %3847 = vrot.lane.b32.xlu0 %v3845, 64
      %v3848 = vpop.permute.xlu0 %3847
      %v3850 = vadd.f32 %v3547, %v3848
      %v3851 = vtanh.pop %v3850
      %v3852 = vsub.f32 1.0, %v3841
      %3854 = vrot.lane.b32.xlu0 %v3851, 96
      %v3855 = vpop.permute.xlu0 %3854
      %v3857 = vmul.f32 %v3852, %v3855
      %v3858 = vrot.slane %v3755, 6
      %v3860 = vmul.f32 %v3841, %v3858
      %v3861 = vadd.f32 %v3857, %v3860
      %v3863 = vrot.slane %v3861, 4
      %3864 = vrot.lane.b32.xlu0 %v3863, 96
      %v3865 = vpop.permute.xlu0 %3864
      %v3866 = vsel %vm600, %v3865, 0
      %3868 = vmatprep.subr.mxu0 0.0
      %3869 = vmatpush1.msra.mxu0 %v3113
      %3870 = vmatprep.subr.mxu0 0.0
      %3871 = vmatpush1.msra.mxu0 %v3114
      %3872 = vmatprep.subr.mxu0 0.0
      %3873 = vmatpush1.msra.mxu0 %v3115
      %3874 = vmatprep.subr.mxu0 0.0
      %3875 = vmatpush1.msra.mxu0 %v3116
      %3876 = vmatprep.subr.mxu0 0.0
      %3877 = vmatpush1.msra.mxu0 0.0
      %3878 = vmatprep.subr.mxu0 0.0
      %3879 = vmatpush1.msra.mxu0 0.0
      %3880 = vmatprep.subr.mxu0 0.0
      %3881 = vmatpush1.msra.mxu0 0.0
      %3882 = vmatprep.subr.mxu0 0.0
      %3883 = vmatpush1.msra.mxu0 0.0
      %3884 = vmatprep.subr.mxu0 0.0
      %3885 = vmatpush1.msra.mxu0 0.0
      %3886 = vmatprep.subr.mxu0 0.0
      %3887 = vmatpush1.msra.mxu0 0.0
      %3888 = vmatprep.subr.mxu0 0.0
      %3889 = vmatpush1.msra.mxu0 0.0
      %3890 = vmatprep.subr.mxu0 0.0
      %3891 = vmatpush1.msra.mxu0 0.0
      %3892 = vmatprep.subr.mxu0 0.0
      %3893 = vmatpush1.msra.mxu0 0.0
      %3894 = vmatprep.subr.mxu0 0.0
      %3895 = vmatpush1.msra.mxu0 0.0
      %3896 = vmatprep.subr.mxu0 0.0
      %3897 = vmatpush1.msra.mxu0 0.0
      %3898 = vmatprep.subr.mxu0 0.0
      %3899 = vmatpush1.msra.mxu0 0.0
      %3900 = vmatprep.subr.mxu0 0.0
      %3901 = vmatpush1.msra.mxu0 0.0
      %3902 = vmatprep.subr.mxu0 0.0
      %3903 = vmatpush1.msra.mxu0 0.0
      %3904 = vmatprep.subr.mxu0 0.0
      %3905 = vmatpush1.msra.mxu0 0.0
      %3906 = vmatprep.subr.mxu0 0.0
      %3907 = vmatpush1.msra.mxu0 0.0
      %3908 = vmatprep.subr.mxu0 0.0
      %3909 = vmatpush1.msra.mxu0 0.0
      %3910 = vmatprep.subr.mxu0 0.0
      %3911 = vmatpush1.msra.mxu0 0.0
      %3912 = vmatprep.subr.mxu0 0.0
      %3913 = vmatpush1.msra.mxu0 0.0
      %3914 = vmatprep.subr.mxu0 0.0
      %3915 = vmatpush1.msra.mxu0 0.0
      %3916 = vmatprep.subr.mxu0 0.0
      %3917 = vmatpush1.msra.mxu0 0.0
      %3918 = vmatprep.subr.mxu0 0.0
      %3919 = vmatpush1.msra.mxu0 0.0
      %3920 = vmatprep.subr.mxu0 0.0
      %3921 = vmatpush1.msra.mxu0 0.0
      %3922 = vmatprep.subr.mxu0 0.0
      %3923 = vmatpush1.msra.mxu0 0.0
      %3924 = vmatprep.subr.mxu0 0.0
      %3925 = vmatpush1.msra.mxu0 0.0
      %3926 = vmatprep.subr.mxu0 0.0
      %3927 = vmatpush1.msra.mxu0 0.0
      %3928 = vmatprep.subr.mxu0 0.0
      %3929 = vmatpush1.msra.mxu0 0.0
      %3930 = vmatprep.subr.mxu0 0.0
      %3931 = vmatpush1.msra.mxu0 0.0
      %3932 = vmatprep.mubr.f32.mxu0 0.0
      %3933 = vmatmul.mubr.f32.gmra.mrb[0].mxu0 %v3866
      %v3934 = vpop.f32.mrb[0].mxu0
      %v3935 = vadd.f32 %v3124, %v3934
      %v3936 = vpop.f32.mrb[0].mxu0
      %3937 = vdwg.mxu0
      %v3939 = vrot.slane %v3935, 2
      %v3941 = vadd.f32 %v3547, %v3939
      %v3942 = vxor.u32 %v3941, 2147483648
      %v3943 = vmul.f32 %v3942, 1.442695
      %v3944 = vpow.pop %v3943
      %v3945 = vadd.f32 %v3944, 1.0
      %v3946 = vrcp.pop %v3945
      %v3947 = vmul.f32 1.0, %v3946
      %3948 = vrot.lane.b32.xlu0 %v3939, 64
      %v3949 = vpop.permute.xlu0 %3948
      %v3951 = vmul.f32 %v3947, %v3949
      %3953 = vrot.lane.b32.xlu0 %v3951, 64
      %v3954 = vpop.permute.xlu0 %3953
      %v3956 = vadd.f32 %v3547, %v3954
      %v3957 = vtanh.pop %v3956
      %v3958 = vsub.f32 1.0, %v3947
      %3960 = vrot.lane.b32.xlu0 %v3957, 96
      %v3961 = vpop.permute.xlu0 %3960
      %v3963 = vmul.f32 %v3958, %v3961
      %v3964 = vrot.slane %v3861, 6
      %v3966 = vmul.f32 %v3947, %v3964
      %v3967 = vadd.f32 %v3963, %v3966
      %v3968 = vsel %vm1249, %v3650, %v3755
      %v3969 = vsel %vm1251, %v3968, %v3861
      %v3970 = vsel %vm1253, %v3969, %v3967
      %3972 = vrot.lane.b32.xlu0 %v3970, 96
      %v3973 = vpop.permute.xlu0 %3972
      %3975 = vst.msk [vmem:[%s1689] sm:$0xff] %vm600, %v3973
      %v3976 = vld [vmem:[%s1691] sm:$0xff]
      %v3978 = vrot.slane %v3967, 6
      %3979 = vrot.lane.b32.xlu0 %v3978, 96
      %v3980 = vpop.permute.xlu0 %3979
      %v3981 = vsel %vm600, %v3980, 0
      %3983 = vmatprep.subr.mxu0 0.0
      %3984 = vmatpush1.msra.mxu0 %v3113
      %3985 = vmatprep.subr.mxu0 0.0
      %3986 = vmatpush1.msra.mxu0 %v3114
      %3987 = vmatprep.subr.mxu0 0.0
      %3988 = vmatpush1.msra.mxu0 %v3115
      %3989 = vmatprep.subr.mxu0 0.0
      %3990 = vmatpush1.msra.mxu0 %v3116
      %3991 = vmatprep.subr.mxu0 0.0
      %3992 = vmatpush1.msra.mxu0 0.0
      %3993 = vmatprep.subr.mxu0 0.0
      %3994 = vmatpush1.msra.mxu0 0.0
      %3995 = vmatprep.subr.mxu0 0.0
      %3996 = vmatpush1.msra.mxu0 0.0
      %3997 = vmatprep.subr.mxu0 0.0
      %3998 = vmatpush1.msra.mxu0 0.0
      %3999 = vmatprep.subr.mxu0 0.0
      %4000 = vmatpush1.msra.mxu0 0.0
      %4001 = vmatprep.subr.mxu0 0.0
      %4002 = vmatpush1.msra.mxu0 0.0
      %4003 = vmatprep.subr.mxu0 0.0
      %4004 = vmatpush1.msra.mxu0 0.0
      %4005 = vmatprep.subr.mxu0 0.0
      %4006 = vmatpush1.msra.mxu0 0.0
      %4007 = vmatprep.subr.mxu0 0.0
      %4008 = vmatpush1.msra.mxu0 0.0
      %4009 = vmatprep.subr.mxu0 0.0
      %4010 = vmatpush1.msra.mxu0 0.0
      %4011 = vmatprep.subr.mxu0 0.0
      %4012 = vmatpush1.msra.mxu0 0.0
      %4013 = vmatprep.subr.mxu0 0.0
      %4014 = vmatpush1.msra.mxu0 0.0
      %4015 = vmatprep.subr.mxu0 0.0
      %4016 = vmatpush1.msra.mxu0 0.0
      %4017 = vmatprep.subr.mxu0 0.0
      %4018 = vmatpush1.msra.mxu0 0.0
      %4019 = vmatprep.subr.mxu0 0.0
      %4020 = vmatpush1.msra.mxu0 0.0
      %4021 = vmatprep.subr.mxu0 0.0
      %4022 = vmatpush1.msra.mxu0 0.0
      %4023 = vmatprep.subr.mxu0 0.0
      %4024 = vmatpush1.msra.mxu0 0.0
      %4025 = vmatprep.subr.mxu0 0.0
      %4026 = vmatpush1.msra.mxu0 0.0
      %4027 = vmatprep.subr.mxu0 0.0
      %4028 = vmatpush1.msra.mxu0 0.0
      %4029 = vmatprep.subr.mxu0 0.0
      %4030 = vmatpush1.msra.mxu0 0.0
      %4031 = vmatprep.subr.mxu0 0.0
      %4032 = vmatpush1.msra.mxu0 0.0
      %4033 = vmatprep.subr.mxu0 0.0
      %4034 = vmatpush1.msra.mxu0 0.0
      %4035 = vmatprep.subr.mxu0 0.0
      %4036 = vmatpush1.msra.mxu0 0.0
      %4037 = vmatprep.subr.mxu0 0.0
      %4038 = vmatpush1.msra.mxu0 0.0
      %4039 = vmatprep.subr.mxu0 0.0
      %4040 = vmatpush1.msra.mxu0 0.0
      %4041 = vmatprep.subr.mxu0 0.0
      %4042 = vmatpush1.msra.mxu0 0.0
      %4043 = vmatprep.subr.mxu0 0.0
      %4044 = vmatpush1.msra.mxu0 0.0
      %4045 = vmatprep.subr.mxu0 0.0
      %4046 = vmatpush1.msra.mxu0 0.0
      %4047 = vmatprep.mubr.f32.mxu0 0.0
      %4048 = vmatmul.mubr.f32.gmra.mrb[0].mxu0 %v3981
      %v4049 = vpop.f32.mrb[0].mxu0
      %v4050 = vadd.f32 %v3124, %v4049
      %v4051 = vpop.f32.mrb[0].mxu0
      %4052 = vdwg.mxu0
      %v4053 = vadd.f32 %v3976, %v4050
      %v4054 = vxor.u32 %v4053, 2147483648
      %v4055 = vmul.f32 %v4054, 1.442695
      %v4056 = vpow.pop %v4055
      %v4057 = vadd.f32 %v4056, 1.0
      %v4058 = vrcp.pop %v4057
      %v4059 = vmul.f32 1.0, %v4058
      %4061 = vrot.lane.b32.xlu0 %v4050, 64
      %v4062 = vpop.permute.xlu0 %4061
      %v4064 = vmul.f32 %v4059, %v4062
      %4066 = vrot.lane.b32.xlu0 %v4064, 64
      %v4067 = vpop.permute.xlu0 %4066
      %v4069 = vadd.f32 %v3976, %v4067
      %v4070 = vtanh.pop %v4069
      %v4071 = vsub.f32 1.0, %v4059
      %4073 = vrot.lane.b32.xlu0 %v4070, 96
      %v4074 = vpop.permute.xlu0 %4073
      %v4076 = vmul.f32 %v4071, %v4074
      %v4078 = vmul.f32 %v4059, %v3978
      %v4079 = vadd.f32 %v4076, %v4078
      %4081 = vrot.lane.b32.xlu0 %v4079, 96
      %v4082 = vpop.permute.xlu0 %4081
      %v4083 = vsel %vm600, %v4082, 0
      %4085 = vmatprep.subr.mxu0 0.0
      %4086 = vmatpush1.msra.mxu0 %v3113
      %4087 = vmatprep.subr.mxu0 0.0
      %4088 = vmatpush1.msra.mxu0 %v3114
      %4089 = vmatprep.subr.mxu0 0.0
      %4090 = vmatpush1.msra.mxu0 %v3115
      %4091 = vmatprep.subr.mxu0 0.0
      %4092 = vmatpush1.msra.mxu0 %v3116
      %4093 = vmatprep.subr.mxu0 0.0
      %4094 = vmatpush1.msra.mxu0 0.0
      %4095 = vmatprep.subr.mxu0 0.0
      %4096 = vmatpush1.msra.mxu0 0.0
      %4097 = vmatprep.subr.mxu0 0.0
      %4098 = vmatpush1.msra.mxu0 0.0
      %4099 = vmatprep.subr.mxu0 0.0
      %4100 = vmatpush1.msra.mxu0 0.0
      %4101 = vmatprep.subr.mxu0 0.0
      %4102 = vmatpush1.msra.mxu0 0.0
      %4103 = vmatprep.subr.mxu0 0.0
      %4104 = vmatpush1.msra.mxu0 0.0
      %4105 = vmatprep.subr.mxu0 0.0
      %4106 = vmatpush1.msra.mxu0 0.0
      %4107 = vmatprep.subr.mxu0 0.0
      %4108 = vmatpush1.msra.mxu0 0.0
      %4109 = vmatprep.subr.mxu0 0.0
      %4110 = vmatpush1.msra.mxu0 0.0
      %4111 = vmatprep.subr.mxu0 0.0
      %4112 = vmatpush1.msra.mxu0 0.0
      %4113 = vmatprep.subr.mxu0 0.0
      %4114 = vmatpush1.msra.mxu0 0.0
      %4115 = vmatprep.subr.mxu0 0.0
      %4116 = vmatpush1.msra.mxu0 0.0
      %4117 = vmatprep.subr.mxu0 0.0
      %4118 = vmatpush1.msra.mxu0 0.0
      %4119 = vmatprep.subr.mxu0 0.0
      %4120 = vmatpush1.msra.mxu0 0.0
      %4121 = vmatprep.subr.mxu0 0.0
      %4122 = vmatpush1.msra.mxu0 0.0
      %4123 = vmatprep.subr.mxu0 0.0
      %4124 = vmatpush1.msra.mxu0 0.0
      %4125 = vmatprep.subr.mxu0 0.0
      %4126 = vmatpush1.msra.mxu0 0.0
      %4127 = vmatprep.subr.mxu0 0.0
      %4128 = vmatpush1.msra.mxu0 0.0
      %4129 = vmatprep.subr.mxu0 0.0
      %4130 = vmatpush1.msra.mxu0 0.0
      %4131 = vmatprep.subr.mxu0 0.0
      %4132 = vmatpush1.msra.mxu0 0.0
      %4133 = vmatprep.subr.mxu0 0.0
      %4134 = vmatpush1.msra.mxu0 0.0
      %4135 = vmatprep.subr.mxu0 0.0
      %4136 = vmatpush1.msra.mxu0 0.0
      %4137 = vmatprep.subr.mxu0 0.0
      %4138 = vmatpush1.msra.mxu0 0.0
      %4139 = vmatprep.subr.mxu0 0.0
      %4140 = vmatpush1.msra.mxu0 0.0
      %4141 = vmatprep.subr.mxu0 0.0
      %4142 = vmatpush1.msra.mxu0 0.0
      %4143 = vmatprep.subr.mxu0 0.0
      %4144 = vmatpush1.msra.mxu0 0.0
      %4145 = vmatprep.subr.mxu0 0.0
      %4146 = vmatpush1.msra.mxu0 0.0
      %4147 = vmatprep.subr.mxu0 0.0
      %4148 = vmatpush1.msra.mxu0 0.0
      %4149 = vmatprep.mubr.f32.mxu0 0.0
      %4150 = vmatmul.mubr.f32.gmra.mrb[0].mxu0 %v4083
      %v4151 = vpop.f32.mrb[0].mxu0
      %v4152 = vadd.f32 %v3124, %v4151
      %v4153 = vpop.f32.mrb[0].mxu0
      %4154 = vdwg.mxu0
      %v4156 = vrot.slane %v4152, 6
      %v4158 = vadd.f32 %v3976, %v4156
      %v4159 = vxor.u32 %v4158, 2147483648
      %v4160 = vmul.f32 %v4159, 1.442695
      %v4161 = vpow.pop %v4160
      %v4162 = vadd.f32 %v4161, 1.0
      %v4163 = vrcp.pop %v4162
      %v4164 = vmul.f32 1.0, %v4163
      %4165 = vrot.lane.b32.xlu0 %v4156, 64
      %v4166 = vpop.permute.xlu0 %4165
      %v4168 = vmul.f32 %v4164, %v4166
      %4170 = vrot.lane.b32.xlu0 %v4168, 64
      %v4171 = vpop.permute.xlu0 %4170
      %v4173 = vadd.f32 %v3976, %v4171
      %v4174 = vtanh.pop %v4173
      %v4175 = vsub.f32 1.0, %v4164
      %4177 = vrot.lane.b32.xlu0 %v4174, 96
      %v4178 = vpop.permute.xlu0 %4177
      %v4180 = vmul.f32 %v4175, %v4178
      %v4181 = vrot.slane %v4079, 6
      %v4183 = vmul.f32 %v4164, %v4181
      %v4184 = vadd.f32 %v4180, %v4183
      %v4186 = vrot.slane %v4184, 2
      %4187 = vrot.lane.b32.xlu0 %v4186, 96
      %v4188 = vpop.permute.xlu0 %4187
      %v4189 = vsel %vm600, %v4188, 0
      %4191 = vmatprep.subr.mxu0 0.0
      %4192 = vmatpush1.msra.mxu0 %v3113
      %4193 = vmatprep.subr.mxu0 0.0
      %4194 = vmatpush1.msra.mxu0 %v3114
      %4195 = vmatprep.subr.mxu0 0.0
      %4196 = vmatpush1.msra.mxu0 %v3115
      %4197 = vmatprep.subr.mxu0 0.0
      %4198 = vmatpush1.msra.mxu0 %v3116
      %4199 = vmatprep.subr.mxu0 0.0
      %4200 = vmatpush1.msra.mxu0 0.0
      %4201 = vmatprep.subr.mxu0 0.0
      %4202 = vmatpush1.msra.mxu0 0.0
      %4203 = vmatprep.subr.mxu0 0.0
      %4204 = vmatpush1.msra.mxu0 0.0
      %4205 = vmatprep.subr.mxu0 0.0
      %4206 = vmatpush1.msra.mxu0 0.0
      %4207 = vmatprep.subr.mxu0 0.0
      %4208 = vmatpush1.msra.mxu0 0.0
      %4209 = vmatprep.subr.mxu0 0.0
      %4210 = vmatpush1.msra.mxu0 0.0
      %4211 = vmatprep.subr.mxu0 0.0
      %4212 = vmatpush1.msra.mxu0 0.0
      %4213 = vmatprep.subr.mxu0 0.0
      %4214 = vmatpush1.msra.mxu0 0.0
      %4215 = vmatprep.subr.mxu0 0.0
      %4216 = vmatpush1.msra.mxu0 0.0
      %4217 = vmatprep.subr.mxu0 0.0
      %4218 = vmatpush1.msra.mxu0 0.0
      %4219 = vmatprep.subr.mxu0 0.0
      %4220 = vmatpush1.msra.mxu0 0.0
      %4221 = vmatprep.subr.mxu0 0.0
      %4222 = vmatpush1.msra.mxu0 0.0
      %4223 = vmatprep.subr.mxu0 0.0
      %4224 = vmatpush1.msra.mxu0 0.0
      %4225 = vmatprep.subr.mxu0 0.0
      %4226 = vmatpush1.msra.mxu0 0.0
      %4227 = vmatprep.subr.mxu0 0.0
      %4228 = vmatpush1.msra.mxu0 0.0
      %4229 = vmatprep.subr.mxu0 0.0
      %4230 = vmatpush1.msra.mxu0 0.0
      %4231 = vmatprep.subr.mxu0 0.0
      %4232 = vmatpush1.msra.mxu0 0.0
      %4233 = vmatprep.subr.mxu0 0.0
      %4234 = vmatpush1.msra.mxu0 0.0
      %4235 = vmatprep.subr.mxu0 0.0
      %4236 = vmatpush1.msra.mxu0 0.0
      %4237 = vmatprep.subr.mxu0 0.0
      %4238 = vmatpush1.msra.mxu0 0.0
      %4239 = vmatprep.subr.mxu0 0.0
      %4240 = vmatpush1.msra.mxu0 0.0
      %4241 = vmatprep.subr.mxu0 0.0
      %4242 = vmatpush1.msra.mxu0 0.0
      %4243 = vmatprep.subr.mxu0 0.0
      %4244 = vmatpush1.msra.mxu0 0.0
      %4245 = vmatprep.subr.mxu0 0.0
      %4246 = vmatpush1.msra.mxu0 0.0
      %4247 = vmatprep.subr.mxu0 0.0
      %4248 = vmatpush1.msra.mxu0 0.0
      %4249 = vmatprep.subr.mxu0 0.0
      %4250 = vmatpush1.msra.mxu0 0.0
      %4251 = vmatprep.subr.mxu0 0.0
      %4252 = vmatpush1.msra.mxu0 0.0
      %4253 = vmatprep.subr.mxu0 0.0
      %4254 = vmatpush1.msra.mxu0 0.0
      %4255 = vmatprep.mubr.f32.mxu0 0.0
      %4256 = vmatmul.mubr.f32.gmra.mrb[0].mxu0 %v4189
      %v4257 = vpop.f32.mrb[0].mxu0
      %v4258 = vadd.f32 %v3124, %v4257
      %v4259 = vpop.f32.mrb[0].mxu0
      %4260 = vdwg.mxu0
      %v4262 = vrot.slane %v4258, 4
      %v4264 = vadd.f32 %v3976, %v4262
      %v4265 = vxor.u32 %v4264, 2147483648
      %v4266 = vmul.f32 %v4265, 1.442695
      %v4267 = vpow.pop %v4266
      %v4268 = vadd.f32 %v4267, 1.0
      %v4269 = vrcp.pop %v4268
      %v4270 = vmul.f32 1.0, %v4269
      %4271 = vrot.lane.b32.xlu0 %v4262, 64
      %v4272 = vpop.permute.xlu0 %4271
      %v4274 = vmul.f32 %v4270, %v4272
      %4276 = vrot.lane.b32.xlu0 %v4274, 64
      %v4277 = vpop.permute.xlu0 %4276
      %v4279 = vadd.f32 %v3976, %v4277
      %v4280 = vtanh.pop %v4279
      %v4281 = vsub.f32 1.0, %v4270
      %4283 = vrot.lane.b32.xlu0 %v4280, 96
      %v4284 = vpop.permute.xlu0 %4283
      %v4286 = vmul.f32 %v4281, %v4284
      %v4287 = vrot.slane %v4184, 6
      %v4289 = vmul.f32 %v4270, %v4287
      %v4290 = vadd.f32 %v4286, %v4289
      %v4292 = vrot.slane %v4290, 4
      %4293 = vrot.lane.b32.xlu0 %v4292, 96
      %v4294 = vpop.permute.xlu0 %4293
      %v4295 = vsel %vm600, %v4294, 0
      %4297 = vmatprep.subr.mxu0 0.0
      %4298 = vmatpush1.msra.mxu0 %v3113
      %4299 = vmatprep.subr.mxu0 0.0
      %4300 = vmatpush1.msra.mxu0 %v3114
      %4301 = vmatprep.subr.mxu0 0.0
      %4302 = vmatpush1.msra.mxu0 %v3115
      %4303 = vmatprep.subr.mxu0 0.0
      %4304 = vmatpush1.msra.mxu0 %v3116
      %4305 = vmatprep.subr.mxu0 0.0
      %4306 = vmatpush1.msra.mxu0 0.0
      %4307 = vmatprep.subr.mxu0 0.0
      %4308 = vmatpush1.msra.mxu0 0.0
      %4309 = vmatprep.subr.mxu0 0.0
      %4310 = vmatpush1.msra.mxu0 0.0
      %4311 = vmatprep.subr.mxu0 0.0
      %4312 = vmatpush1.msra.mxu0 0.0
      %4313 = vmatprep.subr.mxu0 0.0
      %4314 = vmatpush1.msra.mxu0 0.0
      %4315 = vmatprep.subr.mxu0 0.0
      %4316 = vmatpush1.msra.mxu0 0.0
      %4317 = vmatprep.subr.mxu0 0.0
      %4318 = vmatpush1.msra.mxu0 0.0
      %4319 = vmatprep.subr.mxu0 0.0
      %4320 = vmatpush1.msra.mxu0 0.0
      %4321 = vmatprep.subr.mxu0 0.0
      %4322 = vmatpush1.msra.mxu0 0.0
      %4323 = vmatprep.subr.mxu0 0.0
      %4324 = vmatpush1.msra.mxu0 0.0
      %4325 = vmatprep.subr.mxu0 0.0
      %4326 = vmatpush1.msra.mxu0 0.0
      %4327 = vmatprep.subr.mxu0 0.0
      %4328 = vmatpush1.msra.mxu0 0.0
      %4329 = vmatprep.subr.mxu0 0.0
      %4330 = vmatpush1.msra.mxu0 0.0
      %4331 = vmatprep.subr.mxu0 0.0
      %4332 = vmatpush1.msra.mxu0 0.0
      %4333 = vmatprep.subr.mxu0 0.0
      %4334 = vmatpush1.msra.mxu0 0.0
      %4335 = vmatprep.subr.mxu0 0.0
      %4336 = vmatpush1.msra.mxu0 0.0
      %4337 = vmatprep.subr.mxu0 0.0
      %4338 = vmatpush1.msra.mxu0 0.0
      %4339 = vmatprep.subr.mxu0 0.0
      %4340 = vmatpush1.msra.mxu0 0.0
      %4341 = vmatprep.subr.mxu0 0.0
      %4342 = vmatpush1.msra.mxu0 0.0
      %4343 = vmatprep.subr.mxu0 0.0
      %4344 = vmatpush1.msra.mxu0 0.0
      %4345 = vmatprep.subr.mxu0 0.0
      %4346 = vmatpush1.msra.mxu0 0.0
      %4347 = vmatprep.subr.mxu0 0.0
      %4348 = vmatpush1.msra.mxu0 0.0
      %4349 = vmatprep.subr.mxu0 0.0
      %4350 = vmatpush1.msra.mxu0 0.0
      %4351 = vmatprep.subr.mxu0 0.0
      %4352 = vmatpush1.msra.mxu0 0.0
      %4353 = vmatprep.subr.mxu0 0.0
      %4354 = vmatpush1.msra.mxu0 0.0
      %4355 = vmatprep.subr.mxu0 0.0
      %4356 = vmatpush1.msra.mxu0 0.0
      %4357 = vmatprep.subr.mxu0 0.0
      %4358 = vmatpush1.msra.mxu0 0.0
      %4359 = vmatprep.subr.mxu0 0.0
      %4360 = vmatpush1.msra.mxu0 0.0
      %4361 = vmatprep.mubr.f32.mxu0 0.0
      %4362 = vmatmul.mubr.f32.gmra.mrb[0].mxu0 %v4295
      %v4363 = vpop.f32.mrb[0].mxu0
      %v4364 = vadd.f32 %v3124, %v4363
      %v4365 = vpop.f32.mrb[0].mxu0
      %4366 = vdwg.mxu0
      %v4368 = vrot.slane %v4364, 2
      %v4370 = vadd.f32 %v3976, %v4368
      %v4371 = vxor.u32 %v4370, 2147483648
      %v4372 = vmul.f32 %v4371, 1.442695
      %v4373 = vpow.pop %v4372
      %v4374 = vadd.f32 %v4373, 1.0
      %v4375 = vrcp.pop %v4374
      %v4376 = vmul.f32 1.0, %v4375
      %4377 = vrot.lane.b32.xlu0 %v4368, 64
      %v4378 = vpop.permute.xlu0 %4377
      %v4380 = vmul.f32 %v4376, %v4378
      %4382 = vrot.lane.b32.xlu0 %v4380, 64
      %v4383 = vpop.permute.xlu0 %4382
      %v4385 = vadd.f32 %v3976, %v4383
      %v4386 = vtanh.pop %v4385
      %v4387 = vsub.f32 1.0, %v4376
      %4389 = vrot.lane.b32.xlu0 %v4386, 96
      %v4390 = vpop.permute.xlu0 %4389
      %v4392 = vmul.f32 %v4387, %v4390
      %v4393 = vrot.slane %v4290, 6
      %v4395 = vmul.f32 %v4376, %v4393
      %v4396 = vadd.f32 %v4392, %v4395
      %v4397 = vsel %vm1249, %v4079, %v4184
      %v4398 = vsel %vm1251, %v4397, %v4290
      %v4399 = vsel %vm1253, %v4398, %v4396
      %4401 = vrot.lane.b32.xlu0 %v4399, 96
      %v4402 = vpop.permute.xlu0 %4401
      %4404 = vst.msk [vmem:[%s2120] sm:$0xff] %vm600, %v4402
      %v4405 = vld [vmem:[%s2122] sm:$0xff]
      %v4407 = vrot.slane %v4396, 6
      %4408 = vrot.lane.b32.xlu0 %v4407, 96
      %v4409 = vpop.permute.xlu0 %4408
      %v4410 = vsel %vm600, %v4409, 0
      %4412 = vmatprep.subr.mxu0 0.0
      %4413 = vmatpush1.msra.mxu0 %v3113
      %4414 = vmatprep.subr.mxu0 0.0
      %4415 = vmatpush1.msra.mxu0 %v3114
      %4416 = vmatprep.subr.mxu0 0.0
      %4417 = vmatpush1.msra.mxu0 %v3115
      %4418 = vmatprep.subr.mxu0 0.0
      %4419 = vmatpush1.msra.mxu0 %v3116
      %4420 = vmatprep.subr.mxu0 0.0
      %4421 = vmatpush1.msra.mxu0 0.0
      %4422 = vmatprep.subr.mxu0 0.0
      %4423 = vmatpush1.msra.mxu0 0.0
      %4424 = vmatprep.subr.mxu0 0.0
      %4425 = vmatpush1.msra.mxu0 0.0
      %4426 = vmatprep.subr.mxu0 0.0
      %4427 = vmatpush1.msra.mxu0 0.0
      %4428 = vmatprep.subr.mxu0 0.0
      %4429 = vmatpush1.msra.mxu0 0.0
      %4430 = vmatprep.subr.mxu0 0.0
      %4431 = vmatpush1.msra.mxu0 0.0
      %4432 = vmatprep.subr.mxu0 0.0
      %4433 = vmatpush1.msra.mxu0 0.0
      %4434 = vmatprep.subr.mxu0 0.0
      %4435 = vmatpush1.msra.mxu0 0.0
      %4436 = vmatprep.subr.mxu0 0.0
      %4437 = vmatpush1.msra.mxu0 0.0
      %4438 = vmatprep.subr.mxu0 0.0
      %4439 = vmatpush1.msra.mxu0 0.0
      %4440 = vmatprep.subr.mxu0 0.0
      %4441 = vmatpush1.msra.mxu0 0.0
      %4442 = vmatprep.subr.mxu0 0.0
      %4443 = vmatpush1.msra.mxu0 0.0
      %4444 = vmatprep.subr.mxu0 0.0
      %4445 = vmatpush1.msra.mxu0 0.0
      %4446 = vmatprep.subr.mxu0 0.0
      %4447 = vmatpush1.msra.mxu0 0.0
      %4448 = vmatprep.subr.mxu0 0.0
      %4449 = vmatpush1.msra.mxu0 0.0
      %4450 = vmatprep.subr.mxu0 0.0
      %4451 = vmatpush1.msra.mxu0 0.0
      %4452 = vmatprep.subr.mxu0 0.0
      %4453 = vmatpush1.msra.mxu0 0.0
      %4454 = vmatprep.subr.mxu0 0.0
      %4455 = vmatpush1.msra.mxu0 0.0
      %4456 = vmatprep.subr.mxu0 0.0
      %4457 = vmatpush1.msra.mxu0 0.0
      %4458 = vmatprep.subr.mxu0 0.0
      %4459 = vmatpush1.msra.mxu0 0.0
      %4460 = vmatprep.subr.mxu0 0.0
      %4461 = vmatpush1.msra.mxu0 0.0
      %4462 = vmatprep.subr.mxu0 0.0
      %4463 = vmatpush1.msra.mxu0 0.0
      %4464 = vmatprep.subr.mxu0 0.0
      %4465 = vmatpush1.msra.mxu0 0.0
      %4466 = vmatprep.subr.mxu0 0.0
      %4467 = vmatpush1.msra.mxu0 0.0
      %4468 = vmatprep.subr.mxu0 0.0
      %4469 = vmatpush1.msra.mxu0 0.0
      %4470 = vmatprep.subr.mxu0 0.0
      %4471 = vmatpush1.msra.mxu0 0.0
      %4472 = vmatprep.subr.mxu0 0.0
      %4473 = vmatpush1.msra.mxu0 0.0
      %4474 = vmatprep.subr.mxu0 0.0
      %4475 = vmatpush1.msra.mxu0 0.0
      %4476 = vmatprep.mubr.f32.mxu0 0.0
      %4477 = vmatmul.mubr.f32.gmra.mrb[0].mxu0 %v4410
      %v4478 = vpop.f32.mrb[0].mxu0
      %v4479 = vadd.f32 %v3124, %v4478
      %v4480 = vpop.f32.mrb[0].mxu0
      %4481 = vdwg.mxu0
      %v4482 = vadd.f32 %v4405, %v4479
      %v4483 = vxor.u32 %v4482, 2147483648
      %v4484 = vmul.f32 %v4483, 1.442695
      %v4485 = vpow.pop %v4484
      %v4486 = vadd.f32 %v4485, 1.0
      %v4487 = vrcp.pop %v4486
      %v4488 = vmul.f32 1.0, %v4487
      %4490 = vrot.lane.b32.xlu0 %v4479, 64
      %v4491 = vpop.permute.xlu0 %4490
      %v4493 = vmul.f32 %v4488, %v4491
      %4495 = vrot.lane.b32.xlu0 %v4493, 64
      %v4496 = vpop.permute.xlu0 %4495
      %v4498 = vadd.f32 %v4405, %v4496
      %v4499 = vtanh.pop %v4498
      %v4500 = vsub.f32 1.0, %v4488
      %4502 = vrot.lane.b32.xlu0 %v4499, 96
      %v4503 = vpop.permute.xlu0 %4502
      %v4505 = vmul.f32 %v4500, %v4503
      %v4507 = vmul.f32 %v4488, %v4407
      %v4508 = vadd.f32 %v4505, %v4507
      %4510 = vrot.lane.b32.xlu0 %v4508, 96
      %v4511 = vpop.permute.xlu0 %4510
      %v4512 = vsel %vm600, %v4511, 0
      %4514 = vmatprep.subr.mxu0 0.0
      %4515 = vmatpush1.msra.mxu0 %v3113
      %4516 = vmatprep.subr.mxu0 0.0
      %4517 = vmatpush1.msra.mxu0 %v3114
      %4518 = vmatprep.subr.mxu0 0.0
      %4519 = vmatpush1.msra.mxu0 %v3115
      %4520 = vmatprep.subr.mxu0 0.0
      %4521 = vmatpush1.msra.mxu0 %v3116
      %4522 = vmatprep.subr.mxu0 0.0
      %4523 = vmatpush1.msra.mxu0 0.0
      %4524 = vmatprep.subr.mxu0 0.0
      %4525 = vmatpush1.msra.mxu0 0.0
      %4526 = vmatprep.subr.mxu0 0.0
      %4527 = vmatpush1.msra.mxu0 0.0
      %4528 = vmatprep.subr.mxu0 0.0
      %4529 = vmatpush1.msra.mxu0 0.0
      %4530 = vmatprep.subr.mxu0 0.0
      %4531 = vmatpush1.msra.mxu0 0.0
      %4532 = vmatprep.subr.mxu0 0.0
      %4533 = vmatpush1.msra.mxu0 0.0
      %4534 = vmatprep.subr.mxu0 0.0
      %4535 = vmatpush1.msra.mxu0 0.0
      %4536 = vmatprep.subr.mxu0 0.0
      %4537 = vmatpush1.msra.mxu0 0.0
      %4538 = vmatprep.subr.mxu0 0.0
      %4539 = vmatpush1.msra.mxu0 0.0
      %4540 = vmatprep.subr.mxu0 0.0
      %4541 = vmatpush1.msra.mxu0 0.0
      %4542 = vmatprep.subr.mxu0 0.0
      %4543 = vmatpush1.msra.mxu0 0.0
      %4544 = vmatprep.subr.mxu0 0.0
      %4545 = vmatpush1.msra.mxu0 0.0
      %4546 = vmatprep.subr.mxu0 0.0
      %4547 = vmatpush1.msra.mxu0 0.0
      %4548 = vmatprep.subr.mxu0 0.0
      %4549 = vmatpush1.msra.mxu0 0.0
      %4550 = vmatprep.subr.mxu0 0.0
      %4551 = vmatpush1.msra.mxu0 0.0
      %4552 = vmatprep.subr.mxu0 0.0
      %4553 = vmatpush1.msra.mxu0 0.0
      %4554 = vmatprep.subr.mxu0 0.0
      %4555 = vmatpush1.msra.mxu0 0.0
      %4556 = vmatprep.subr.mxu0 0.0
      %4557 = vmatpush1.msra.mxu0 0.0
      %4558 = vmatprep.subr.mxu0 0.0
      %4559 = vmatpush1.msra.mxu0 0.0
      %4560 = vmatprep.subr.mxu0 0.0
      %4561 = vmatpush1.msra.mxu0 0.0
      %4562 = vmatprep.subr.mxu0 0.0
      %4563 = vmatpush1.msra.mxu0 0.0
      %4564 = vmatprep.subr.mxu0 0.0
      %4565 = vmatpush1.msra.mxu0 0.0
      %4566 = vmatprep.subr.mxu0 0.0
      %4567 = vmatpush1.msra.mxu0 0.0
      %4568 = vmatprep.subr.mxu0 0.0
      %4569 = vmatpush1.msra.mxu0 0.0
      %4570 = vmatprep.subr.mxu0 0.0
      %4571 = vmatpush1.msra.mxu0 0.0
      %4572 = vmatprep.subr.mxu0 0.0
      %4573 = vmatpush1.msra.mxu0 0.0
      %4574 = vmatprep.subr.mxu0 0.0
      %4575 = vmatpush1.msra.mxu0 0.0
      %4576 = vmatprep.subr.mxu0 0.0
      %4577 = vmatpush1.msra.mxu0 0.0
      %4578 = vmatprep.mubr.f32.mxu0 0.0
      %4579 = vmatmul.mubr.f32.gmra.mrb[0].mxu0 %v4512
      %v4580 = vpop.f32.mrb[0].mxu0
      %v4581 = vadd.f32 %v3124, %v4580
      %v4582 = vpop.f32.mrb[0].mxu0
      %4583 = vdwg.mxu0
      %v4585 = vrot.slane %v4581, 6
      %v4587 = vadd.f32 %v4405, %v4585
      %v4588 = vxor.u32 %v4587, 2147483648
      %v4589 = vmul.f32 %v4588, 1.442695
      %v4590 = vpow.pop %v4589
      %v4591 = vadd.f32 %v4590, 1.0
      %v4592 = vrcp.pop %v4591
      %v4593 = vmul.f32 1.0, %v4592
      %4594 = vrot.lane.b32.xlu0 %v4585, 64
      %v4595 = vpop.permute.xlu0 %4594
      %v4597 = vmul.f32 %v4593, %v4595
      %4599 = vrot.lane.b32.xlu0 %v4597, 64
      %v4600 = vpop.permute.xlu0 %4599
      %v4602 = vadd.f32 %v4405, %v4600
      %v4603 = vtanh.pop %v4602
      %v4604 = vsub.f32 1.0, %v4593
      %4606 = vrot.lane.b32.xlu0 %v4603, 96
      %v4607 = vpop.permute.xlu0 %4606
      %v4609 = vmul.f32 %v4604, %v4607
      %v4610 = vrot.slane %v4508, 6
      %v4612 = vmul.f32 %v4593, %v4610
      %v4613 = vadd.f32 %v4609, %v4612
      %v4615 = vrot.slane %v4613, 2
      %4616 = vrot.lane.b32.xlu0 %v4615, 96
      %v4617 = vpop.permute.xlu0 %4616
      %v4618 = vsel %vm600, %v4617, 0
      %4620 = vmatprep.subr.mxu0 0.0
      %4621 = vmatpush1.msra.mxu0 %v3113
      %4622 = vmatprep.subr.mxu0 0.0
      %4623 = vmatpush1.msra.mxu0 %v3114
      %4624 = vmatprep.subr.mxu0 0.0
      %4625 = vmatpush1.msra.mxu0 %v3115
      %4626 = vmatprep.subr.mxu0 0.0
      %4627 = vmatpush1.msra.mxu0 %v3116
      %4628 = vmatprep.subr.mxu0 0.0
      %4629 = vmatpush1.msra.mxu0 0.0
      %4630 = vmatprep.subr.mxu0 0.0
      %4631 = vmatpush1.msra.mxu0 0.0
      %4632 = vmatprep.subr.mxu0 0.0
      %4633 = vmatpush1.msra.mxu0 0.0
      %4634 = vmatprep.subr.mxu0 0.0
      %4635 = vmatpush1.msra.mxu0 0.0
      %4636 = vmatprep.subr.mxu0 0.0
      %4637 = vmatpush1.msra.mxu0 0.0
      %4638 = vmatprep.subr.mxu0 0.0
      %4639 = vmatpush1.msra.mxu0 0.0
      %4640 = vmatprep.subr.mxu0 0.0
      %4641 = vmatpush1.msra.mxu0 0.0
      %4642 = vmatprep.subr.mxu0 0.0
      %4643 = vmatpush1.msra.mxu0 0.0
      %4644 = vmatprep.subr.mxu0 0.0
      %4645 = vmatpush1.msra.mxu0 0.0
      %4646 = vmatprep.subr.mxu0 0.0
      %4647 = vmatpush1.msra.mxu0 0.0
      %4648 = vmatprep.subr.mxu0 0.0
      %4649 = vmatpush1.msra.mxu0 0.0
      %4650 = vmatprep.subr.mxu0 0.0
      %4651 = vmatpush1.msra.mxu0 0.0
      %4652 = vmatprep.subr.mxu0 0.0
      %4653 = vmatpush1.msra.mxu0 0.0
      %4654 = vmatprep.subr.mxu0 0.0
      %4655 = vmatpush1.msra.mxu0 0.0
      %4656 = vmatprep.subr.mxu0 0.0
      %4657 = vmatpush1.msra.mxu0 0.0
      %4658 = vmatprep.subr.mxu0 0.0
      %4659 = vmatpush1.msra.mxu0 0.0
      %4660 = vmatprep.subr.mxu0 0.0
      %4661 = vmatpush1.msra.mxu0 0.0
      %4662 = vmatprep.subr.mxu0 0.0
      %4663 = vmatpush1.msra.mxu0 0.0
      %4664 = vmatprep.subr.mxu0 0.0
      %4665 = vmatpush1.msra.mxu0 0.0
      %4666 = vmatprep.subr.mxu0 0.0
      %4667 = vmatpush1.msra.mxu0 0.0
      %4668 = vmatprep.subr.mxu0 0.0
      %4669 = vmatpush1.msra.mxu0 0.0
      %4670 = vmatprep.subr.mxu0 0.0
      %4671 = vmatpush1.msra.mxu0 0.0
      %4672 = vmatprep.subr.mxu0 0.0
      %4673 = vmatpush1.msra.mxu0 0.0
      %4674 = vmatprep.subr.mxu0 0.0
      %4675 = vmatpush1.msra.mxu0 0.0
      %4676 = vmatprep.subr.mxu0 0.0
      %4677 = vmatpush1.msra.mxu0 0.0
      %4678 = vmatprep.subr.mxu0 0.0
      %4679 = vmatpush1.msra.mxu0 0.0
      %4680 = vmatprep.subr.mxu0 0.0
      %4681 = vmatpush1.msra.mxu0 0.0
      %4682 = vmatprep.subr.mxu0 0.0
      %4683 = vmatpush1.msra.mxu0 0.0
      %4684 = vmatprep.mubr.f32.mxu0 0.0
      %4685 = vmatmul.mubr.f32.gmra.mrb[0].mxu0 %v4618
      %v4686 = vpop.f32.mrb[0].mxu0
      %v4687 = vadd.f32 %v3124, %v4686
      %v4688 = vpop.f32.mrb[0].mxu0
      %4689 = vdwg.mxu0
      %v4691 = vrot.slane %v4687, 4
      %v4693 = vadd.f32 %v4405, %v4691
      %v4694 = vxor.u32 %v4693, 2147483648
      %v4695 = vmul.f32 %v4694, 1.442695
      %v4696 = vpow.pop %v4695
      %v4697 = vadd.f32 %v4696, 1.0
      %v4698 = vrcp.pop %v4697
      %v4699 = vmul.f32 1.0, %v4698
      %4700 = vrot.lane.b32.xlu0 %v4691, 64
      %v4701 = vpop.permute.xlu0 %4700
      %v4703 = vmul.f32 %v4699, %v4701
      %4705 = vrot.lane.b32.xlu0 %v4703, 64
      %v4706 = vpop.permute.xlu0 %4705
      %v4708 = vadd.f32 %v4405, %v4706
      %v4709 = vtanh.pop %v4708
      %v4710 = vsub.f32 1.0, %v4699
      %4712 = vrot.lane.b32.xlu0 %v4709, 96
      %v4713 = vpop.permute.xlu0 %4712
      %v4715 = vmul.f32 %v4710, %v4713
      %v4716 = vrot.slane %v4613, 6
      %v4718 = vmul.f32 %v4699, %v4716
      %v4719 = vadd.f32 %v4715, %v4718
      %v4721 = vrot.slane %v4719, 4
      %4722 = vrot.lane.b32.xlu0 %v4721, 96
      %v4723 = vpop.permute.xlu0 %4722
      %v4724 = vsel %vm600, %v4723, 0
      %4726 = vmatprep.subr.mxu0 0.0
      %4727 = vmatpush1.msra.mxu0 %v3113
      %4728 = vmatprep.subr.mxu0 0.0
      %4729 = vmatpush1.msra.mxu0 %v3114
      %4730 = vmatprep.subr.mxu0 0.0
      %4731 = vmatpush1.msra.mxu0 %v3115
      %4732 = vmatprep.subr.mxu0 0.0
      %4733 = vmatpush1.msra.mxu0 %v3116
      %4734 = vmatprep.subr.mxu0 0.0
      %4735 = vmatpush1.msra.mxu0 0.0
      %4736 = vmatprep.subr.mxu0 0.0
      %4737 = vmatpush1.msra.mxu0 0.0
      %4738 = vmatprep.subr.mxu0 0.0
      %4739 = vmatpush1.msra.mxu0 0.0
      %4740 = vmatprep.subr.mxu0 0.0
      %4741 = vmatpush1.msra.mxu0 0.0
      %4742 = vmatprep.subr.mxu0 0.0
      %4743 = vmatpush1.msra.mxu0 0.0
      %4744 = vmatprep.subr.mxu0 0.0
      %4745 = vmatpush1.msra.mxu0 0.0
      %4746 = vmatprep.subr.mxu0 0.0
      %4747 = vmatpush1.msra.mxu0 0.0
      %4748 = vmatprep.subr.mxu0 0.0
      %4749 = vmatpush1.msra.mxu0 0.0
      %4750 = vmatprep.subr.mxu0 0.0
      %4751 = vmatpush1.msra.mxu0 0.0
      %4752 = vmatprep.subr.mxu0 0.0
      %4753 = vmatpush1.msra.mxu0 0.0
      %4754 = vmatprep.subr.mxu0 0.0
      %4755 = vmatpush1.msra.mxu0 0.0
      %4756 = vmatprep.subr.mxu0 0.0
      %4757 = vmatpush1.msra.mxu0 0.0
      %4758 = vmatprep.subr.mxu0 0.0
      %4759 = vmatpush1.msra.mxu0 0.0
      %4760 = vmatprep.subr.mxu0 0.0
      %4761 = vmatpush1.msra.mxu0 0.0
      %4762 = vmatprep.subr.mxu0 0.0
      %4763 = vmatpush1.msra.mxu0 0.0
      %4764 = vmatprep.subr.mxu0 0.0
      %4765 = vmatpush1.msra.mxu0 0.0
      %4766 = vmatprep.subr.mxu0 0.0
      %4767 = vmatpush1.msra.mxu0 0.0
      %4768 = vmatprep.subr.mxu0 0.0
      %4769 = vmatpush1.msra.mxu0 0.0
      %4770 = vmatprep.subr.mxu0 0.0
      %4771 = vmatpush1.msra.mxu0 0.0
      %4772 = vmatprep.subr.mxu0 0.0
      %4773 = vmatpush1.msra.mxu0 0.0
      %4774 = vmatprep.subr.mxu0 0.0
      %4775 = vmatpush1.msra.mxu0 0.0
      %4776 = vmatprep.subr.mxu0 0.0
      %4777 = vmatpush1.msra.mxu0 0.0
      %4778 = vmatprep.subr.mxu0 0.0
      %4779 = vmatpush1.msra.mxu0 0.0
      %4780 = vmatprep.subr.mxu0 0.0
      %4781 = vmatpush1.msra.mxu0 0.0
      %4782 = vmatprep.subr.mxu0 0.0
      %4783 = vmatpush1.msra.mxu0 0.0
      %4784 = vmatprep.subr.mxu0 0.0
      %4785 = vmatpush1.msra.mxu0 0.0
      %4786 = vmatprep.subr.mxu0 0.0
      %4787 = vmatpush1.msra.mxu0 0.0
      %4788 = vmatprep.subr.mxu0 0.0
      %4789 = vmatpush1.msra.mxu0 0.0
      %4790 = vmatprep.mubr.f32.mxu0 0.0
      %4791 = vmatmul.mubr.f32.gmra.mrb[0].mxu0 %v4724
      %v4792 = vpop.f32.mrb[0].mxu0
      %v4793 = vadd.f32 %v3124, %v4792
      %v4794 = vpop.f32.mrb[0].mxu0
      %4795 = vdwg.mxu0
      %v4797 = vrot.slane %v4793, 2
      %v4799 = vadd.f32 %v4405, %v4797
      %v4800 = vxor.u32 %v4799, 2147483648
      %v4801 = vmul.f32 %v4800, 1.442695
      %v4802 = vpow.pop %v4801
      %v4803 = vadd.f32 %v4802, 1.0
      %v4804 = vrcp.pop %v4803
      %v4805 = vmul.f32 1.0, %v4804
      %4806 = vrot.lane.b32.xlu0 %v4797, 64
      %v4807 = vpop.permute.xlu0 %4806
      %v4809 = vmul.f32 %v4805, %v4807
      %4811 = vrot.lane.b32.xlu0 %v4809, 64
      %v4812 = vpop.permute.xlu0 %4811
      %v4814 = vadd.f32 %v4405, %v4812
      %v4815 = vtanh.pop %v4814
      %v4816 = vsub.f32 1.0, %v4805
      %4818 = vrot.lane.b32.xlu0 %v4815, 96
      %v4819 = vpop.permute.xlu0 %4818
      %v4821 = vmul.f32 %v4816, %v4819
      %v4822 = vrot.slane %v4719, 6
      %v4824 = vmul.f32 %v4805, %v4822
      %v4825 = vadd.f32 %v4821, %v4824
      %v4826 = vsel %vm1249, %v4508, %v4613
      %v4827 = vsel %vm1251, %v4826, %v4719
      %v4828 = vsel %vm1253, %v4827, %v4825
      %4830 = vrot.lane.b32.xlu0 %v4828, 96
      %v4831 = vpop.permute.xlu0 %4830
      %4833 = vst.msk [vmem:[%s2551] sm:$0xff] %vm600, %v4831
      %v4834 = vld [vmem:[%s2553] sm:$0xff]
      %v4836 = vrot.slane %v4825, 6
      %4837 = vrot.lane.b32.xlu0 %v4836, 96
      %v4838 = vpop.permute.xlu0 %4837
      %v4839 = vsel %vm600, %v4838, 0
      %4841 = vmatprep.subr.mxu0 0.0
      %4842 = vmatpush1.msra.mxu0 %v3113
      %4843 = vmatprep.subr.mxu0 0.0
      %4844 = vmatpush1.msra.mxu0 %v3114
      %4845 = vmatprep.subr.mxu0 0.0
      %4846 = vmatpush1.msra.mxu0 %v3115
      %4847 = vmatprep.subr.mxu0 0.0
      %4848 = vmatpush1.msra.mxu0 %v3116
      %4849 = vmatprep.subr.mxu0 0.0
      %4850 = vmatpush1.msra.mxu0 0.0
      %4851 = vmatprep.subr.mxu0 0.0
      %4852 = vmatpush1.msra.mxu0 0.0
      %4853 = vmatprep.subr.mxu0 0.0
      %4854 = vmatpush1.msra.mxu0 0.0
      %4855 = vmatprep.subr.mxu0 0.0
      %4856 = vmatpush1.msra.mxu0 0.0
      %4857 = vmatprep.subr.mxu0 0.0
      %4858 = vmatpush1.msra.mxu0 0.0
      %4859 = vmatprep.subr.mxu0 0.0
      %4860 = vmatpush1.msra.mxu0 0.0
      %4861 = vmatprep.subr.mxu0 0.0
      %4862 = vmatpush1.msra.mxu0 0.0
      %4863 = vmatprep.subr.mxu0 0.0
      %4864 = vmatpush1.msra.mxu0 0.0
      %4865 = vmatprep.subr.mxu0 0.0
      %4866 = vmatpush1.msra.mxu0 0.0
      %4867 = vmatprep.subr.mxu0 0.0
      %4868 = vmatpush1.msra.mxu0 0.0
      %4869 = vmatprep.subr.mxu0 0.0
      %4870 = vmatpush1.msra.mxu0 0.0
      %4871 = vmatprep.subr.mxu0 0.0
      %4872 = vmatpush1.msra.mxu0 0.0
      %4873 = vmatprep.subr.mxu0 0.0
      %4874 = vmatpush1.msra.mxu0 0.0
      %4875 = vmatprep.subr.mxu0 0.0
      %4876 = vmatpush1.msra.mxu0 0.0
      %4877 = vmatprep.subr.mxu0 0.0
      %4878 = vmatpush1.msra.mxu0 0.0
      %4879 = vmatprep.subr.mxu0 0.0
      %4880 = vmatpush1.msra.mxu0 0.0
      %4881 = vmatprep.subr.mxu0 0.0
      %4882 = vmatpush1.msra.mxu0 0.0
      %4883 = vmatprep.subr.mxu0 0.0
      %4884 = vmatpush1.msra.mxu0 0.0
      %4885 = vmatprep.subr.mxu0 0.0
      %4886 = vmatpush1.msra.mxu0 0.0
      %4887 = vmatprep.subr.mxu0 0.0
      %4888 = vmatpush1.msra.mxu0 0.0
      %4889 = vmatprep.subr.mxu0 0.0
      %4890 = vmatpush1.msra.mxu0 0.0
      %4891 = vmatprep.subr.mxu0 0.0
      %4892 = vmatpush1.msra.mxu0 0.0
      %4893 = vmatprep.subr.mxu0 0.0
      %4894 = vmatpush1.msra.mxu0 0.0
      %4895 = vmatprep.subr.mxu0 0.0
      %4896 = vmatpush1.msra.mxu0 0.0
      %4897 = vmatprep.subr.mxu0 0.0
      %4898 = vmatpush1.msra.mxu0 0.0
      %4899 = vmatprep.subr.mxu0 0.0
      %4900 = vmatpush1.msra.mxu0 0.0
      %4901 = vmatprep.subr.mxu0 0.0
      %4902 = vmatpush1.msra.mxu0 0.0
      %4903 = vmatprep.subr.mxu0 0.0
      %4904 = vmatpush1.msra.mxu0 0.0
      %4905 = vmatprep.mubr.f32.mxu0 0.0
      %4906 = vmatmul.mubr.f32.gmra.mrb[0].mxu0 %v4839
      %v4907 = vpop.f32.mrb[0].mxu0
      %v4908 = vadd.f32 %v3124, %v4907
      %v4909 = vpop.f32.mrb[0].mxu0
      %4910 = vdwg.mxu0
      %v4911 = vadd.f32 %v4834, %v4908
      %v4912 = vxor.u32 %v4911, 2147483648
      %v4913 = vmul.f32 %v4912, 1.442695
      %v4914 = vpow.pop %v4913
      %v4915 = vadd.f32 %v4914, 1.0
      %v4916 = vrcp.pop %v4915
      %v4917 = vmul.f32 1.0, %v4916
      %4919 = vrot.lane.b32.xlu0 %v4908, 64
      %v4920 = vpop.permute.xlu0 %4919
      %v4922 = vmul.f32 %v4917, %v4920
      %4924 = vrot.lane.b32.xlu0 %v4922, 64
      %v4925 = vpop.permute.xlu0 %4924
      %v4927 = vadd.f32 %v4834, %v4925
      %v4928 = vtanh.pop %v4927
      %v4929 = vsub.f32 1.0, %v4917
      %4931 = vrot.lane.b32.xlu0 %v4928, 96
      %v4932 = vpop.permute.xlu0 %4931
      %v4934 = vmul.f32 %v4929, %v4932
      %v4936 = vmul.f32 %v4917, %v4836
      %v4937 = vadd.f32 %v4934, %v4936
      %4939 = vrot.lane.b32.xlu0 %v4937, 96
      %v4940 = vpop.permute.xlu0 %4939
      %v4941 = vsel %vm600, %v4940, 0
      %4943 = vmatprep.subr.mxu0 0.0
      %4944 = vmatpush1.msra.mxu0 %v3113
      %4945 = vmatprep.subr.mxu0 0.0
      %4946 = vmatpush1.msra.mxu0 %v3114
      %4947 = vmatprep.subr.mxu0 0.0
      %4948 = vmatpush1.msra.mxu0 %v3115
      %4949 = vmatprep.subr.mxu0 0.0
      %4950 = vmatpush1.msra.mxu0 %v3116
      %4951 = vmatprep.subr.mxu0 0.0
      %4952 = vmatpush1.msra.mxu0 0.0
      %4953 = vmatprep.subr.mxu0 0.0
      %4954 = vmatpush1.msra.mxu0 0.0
      %4955 = vmatprep.subr.mxu0 0.0
      %4956 = vmatpush1.msra.mxu0 0.0
      %4957 = vmatprep.subr.mxu0 0.0
      %4958 = vmatpush1.msra.mxu0 0.0
      %4959 = vmatprep.subr.mxu0 0.0
      %4960 = vmatpush1.msra.mxu0 0.0
      %4961 = vmatprep.subr.mxu0 0.0
      %4962 = vmatpush1.msra.mxu0 0.0
      %4963 = vmatprep.subr.mxu0 0.0
      %4964 = vmatpush1.msra.mxu0 0.0
      %4965 = vmatprep.subr.mxu0 0.0
      %4966 = vmatpush1.msra.mxu0 0.0
      %4967 = vmatprep.subr.mxu0 0.0
      %4968 = vmatpush1.msra.mxu0 0.0
      %4969 = vmatprep.subr.mxu0 0.0
      %4970 = vmatpush1.msra.mxu0 0.0
      %4971 = vmatprep.subr.mxu0 0.0
      %4972 = vmatpush1.msra.mxu0 0.0
      %4973 = vmatprep.subr.mxu0 0.0
      %4974 = vmatpush1.msra.mxu0 0.0
      %4975 = vmatprep.subr.mxu0 0.0
      %4976 = vmatpush1.msra.mxu0 0.0
      %4977 = vmatprep.subr.mxu0 0.0
      %4978 = vmatpush1.msra.mxu0 0.0
      %4979 = vmatprep.subr.mxu0 0.0
      %4980 = vmatpush1.msra.mxu0 0.0
      %4981 = vmatprep.subr.mxu0 0.0
      %4982 = vmatpush1.msra.mxu0 0.0
      %4983 = vmatprep.subr.mxu0 0.0
      %4984 = vmatpush1.msra.mxu0 0.0
      %4985 = vmatprep.subr.mxu0 0.0
      %4986 = vmatpush1.msra.mxu0 0.0
      %4987 = vmatprep.subr.mxu0 0.0
      %4988 = vmatpush1.msra.mxu0 0.0
      %4989 = vmatprep.subr.mxu0 0.0
      %4990 = vmatpush1.msra.mxu0 0.0
      %4991 = vmatprep.subr.mxu0 0.0
      %4992 = vmatpush1.msra.mxu0 0.0
      %4993 = vmatprep.subr.mxu0 0.0
      %4994 = vmatpush1.msra.mxu0 0.0
      %4995 = vmatprep.subr.mxu0 0.0
      %4996 = vmatpush1.msra.mxu0 0.0
      %4997 = vmatprep.subr.mxu0 0.0
      %4998 = vmatpush1.msra.mxu0 0.0
      %4999 = vmatprep.subr.mxu0 0.0
      %5000 = vmatpush1.msra.mxu0 0.0
      %5001 = vmatprep.subr.mxu0 0.0
      %5002 = vmatpush1.msra.mxu0 0.0
      %5003 = vmatprep.subr.mxu0 0.0
      %5004 = vmatpush1.msra.mxu0 0.0
      %5005 = vmatprep.subr.mxu0 0.0
      %5006 = vmatpush1.msra.mxu0 0.0
      %5007 = vmatprep.mubr.f32.mxu0 0.0
      %5008 = vmatmul.mubr.f32.gmra.mrb[0].mxu0 %v4941
      %v5009 = vpop.f32.mrb[0].mxu0
      %v5010 = vadd.f32 %v3124, %v5009
      %v5011 = vpop.f32.mrb[0].mxu0
      %5012 = vdwg.mxu0
      %v5014 = vrot.slane %v5010, 6
      %v5016 = vadd.f32 %v4834, %v5014
      %v5017 = vxor.u32 %v5016, 2147483648
      %v5018 = vmul.f32 %v5017, 1.442695
      %v5019 = vpow.pop %v5018
      %v5020 = vadd.f32 %v5019, 1.0
      %v5021 = vrcp.pop %v5020
      %v5022 = vmul.f32 1.0, %v5021
      %5023 = vrot.lane.b32.xlu0 %v5014, 64
      %v5024 = vpop.permute.xlu0 %5023
      %v5026 = vmul.f32 %v5022, %v5024
      %5028 = vrot.lane.b32.xlu0 %v5026, 64
      %v5029 = vpop.permute.xlu0 %5028
      %v5031 = vadd.f32 %v4834, %v5029
      %v5032 = vtanh.pop %v5031
      %v5033 = vsub.f32 1.0, %v5022
      %5035 = vrot.lane.b32.xlu0 %v5032, 96
      %v5036 = vpop.permute.xlu0 %5035
      %v5038 = vmul.f32 %v5033, %v5036
      %v5039 = vrot.slane %v4937, 6
      %v5041 = vmul.f32 %v5022, %v5039
      %v5042 = vadd.f32 %v5038, %v5041
      %v5044 = vrot.slane %v5042, 2
      %5045 = vrot.lane.b32.xlu0 %v5044, 96
      %v5046 = vpop.permute.xlu0 %5045
      %v5047 = vsel %vm600, %v5046, 0
      %5049 = vmatprep.subr.mxu0 0.0
      %5050 = vmatpush1.msra.mxu0 %v3113
      %5051 = vmatprep.subr.mxu0 0.0
      %5052 = vmatpush1.msra.mxu0 %v3114
      %5053 = vmatprep.subr.mxu0 0.0
      %5054 = vmatpush1.msra.mxu0 %v3115
      %5055 = vmatprep.subr.mxu0 0.0
      %5056 = vmatpush1.msra.mxu0 %v3116
      %5057 = vmatprep.subr.mxu0 0.0
      %5058 = vmatpush1.msra.mxu0 0.0
      %5059 = vmatprep.subr.mxu0 0.0
      %5060 = vmatpush1.msra.mxu0 0.0
      %5061 = vmatprep.subr.mxu0 0.0
      %5062 = vmatpush1.msra.mxu0 0.0
      %5063 = vmatprep.subr.mxu0 0.0
      %5064 = vmatpush1.msra.mxu0 0.0
      %5065 = vmatprep.subr.mxu0 0.0
      %5066 = vmatpush1.msra.mxu0 0.0
      %5067 = vmatprep.subr.mxu0 0.0
      %5068 = vmatpush1.msra.mxu0 0.0
      %5069 = vmatprep.subr.mxu0 0.0
      %5070 = vmatpush1.msra.mxu0 0.0
      %5071 = vmatprep.subr.mxu0 0.0
      %5072 = vmatpush1.msra.mxu0 0.0
      %5073 = vmatprep.subr.mxu0 0.0
      %5074 = vmatpush1.msra.mxu0 0.0
      %5075 = vmatprep.subr.mxu0 0.0
      %5076 = vmatpush1.msra.mxu0 0.0
      %5077 = vmatprep.subr.mxu0 0.0
      %5078 = vmatpush1.msra.mxu0 0.0
      %5079 = vmatprep.subr.mxu0 0.0
      %5080 = vmatpush1.msra.mxu0 0.0
      %5081 = vmatprep.subr.mxu0 0.0
      %5082 = vmatpush1.msra.mxu0 0.0
      %5083 = vmatprep.subr.mxu0 0.0
      %5084 = vmatpush1.msra.mxu0 0.0
      %5085 = vmatprep.subr.mxu0 0.0
      %5086 = vmatpush1.msra.mxu0 0.0
      %5087 = vmatprep.subr.mxu0 0.0
      %5088 = vmatpush1.msra.mxu0 0.0
      %5089 = vmatprep.subr.mxu0 0.0
      %5090 = vmatpush1.msra.mxu0 0.0
      %5091 = vmatprep.subr.mxu0 0.0
      %5092 = vmatpush1.msra.mxu0 0.0
      %5093 = vmatprep.subr.mxu0 0.0
      %5094 = vmatpush1.msra.mxu0 0.0
      %5095 = vmatprep.subr.mxu0 0.0
      %5096 = vmatpush1.msra.mxu0 0.0
      %5097 = vmatprep.subr.mxu0 0.0
      %5098 = vmatpush1.msra.mxu0 0.0
      %5099 = vmatprep.subr.mxu0 0.0
      %5100 = vmatpush1.msra.mxu0 0.0
      %5101 = vmatprep.subr.mxu0 0.0
      %5102 = vmatpush1.msra.mxu0 0.0
      %5103 = vmatprep.subr.mxu0 0.0
      %5104 = vmatpush1.msra.mxu0 0.0
      %5105 = vmatprep.subr.mxu0 0.0
      %5106 = vmatpush1.msra.mxu0 0.0
      %5107 = vmatprep.subr.mxu0 0.0
      %5108 = vmatpush1.msra.mxu0 0.0
      %5109 = vmatprep.subr.mxu0 0.0
      %5110 = vmatpush1.msra.mxu0 0.0
      %5111 = vmatprep.subr.mxu0 0.0
      %5112 = vmatpush1.msra.mxu0 0.0
      %5113 = vmatprep.mubr.f32.mxu0 0.0
      %5114 = vmatmul.mubr.f32.gmra.mrb[0].mxu0 %v5047
      %v5115 = vpop.f32.mrb[0].mxu0
      %v5116 = vadd.f32 %v3124, %v5115
      %v5117 = vpop.f32.mrb[0].mxu0
      %5118 = vdwg.mxu0
      %v5120 = vrot.slane %v5116, 4
      %v5122 = vadd.f32 %v4834, %v5120
      %v5123 = vxor.u32 %v5122, 2147483648
      %v5124 = vmul.f32 %v5123, 1.442695
      %v5125 = vpow.pop %v5124
      %v5126 = vadd.f32 %v5125, 1.0
      %v5127 = vrcp.pop %v5126
      %v5128 = vmul.f32 1.0, %v5127
      %5129 = vrot.lane.b32.xlu0 %v5120, 64
      %v5130 = vpop.permute.xlu0 %5129
      %v5132 = vmul.f32 %v5128, %v5130
      %5134 = vrot.lane.b32.xlu0 %v5132, 64
      %v5135 = vpop.permute.xlu0 %5134
      %v5137 = vadd.f32 %v4834, %v5135
      %v5138 = vtanh.pop %v5137
      %v5139 = vsub.f32 1.0, %v5128
      %5141 = vrot.lane.b32.xlu0 %v5138, 96
      %v5142 = vpop.permute.xlu0 %5141
      %v5144 = vmul.f32 %v5139, %v5142
      %v5145 = vrot.slane %v5042, 6
      %v5147 = vmul.f32 %v5128, %v5145
      %v5148 = vadd.f32 %v5144, %v5147
      %v5150 = vrot.slane %v5148, 4
      %5151 = vrot.lane.b32.xlu0 %v5150, 96
      %v5152 = vpop.permute.xlu0 %5151
      %v5153 = vsel %vm600, %v5152, 0
      %5155 = vmatprep.subr.mxu0 0.0
      %5156 = vmatpush1.msra.mxu0 %v3113
      %5157 = vmatprep.subr.mxu0 0.0
      %5158 = vmatpush1.msra.mxu0 %v3114
      %5159 = vmatprep.subr.mxu0 0.0
      %5160 = vmatpush1.msra.mxu0 %v3115
      %5161 = vmatprep.subr.mxu0 0.0
      %5162 = vmatpush1.msra.mxu0 %v3116
      %5163 = vmatprep.subr.mxu0 0.0
      %5164 = vmatpush1.msra.mxu0 0.0
      %5165 = vmatprep.subr.mxu0 0.0
      %5166 = vmatpush1.msra.mxu0 0.0
      %5167 = vmatprep.subr.mxu0 0.0
      %5168 = vmatpush1.msra.mxu0 0.0
      %5169 = vmatprep.subr.mxu0 0.0
      %5170 = vmatpush1.msra.mxu0 0.0
      %5171 = vmatprep.subr.mxu0 0.0
      %5172 = vmatpush1.msra.mxu0 0.0
      %5173 = vmatprep.subr.mxu0 0.0
      %5174 = vmatpush1.msra.mxu0 0.0
      %5175 = vmatprep.subr.mxu0 0.0
      %5176 = vmatpush1.msra.mxu0 0.0
      %5177 = vmatprep.subr.mxu0 0.0
      %5178 = vmatpush1.msra.mxu0 0.0
      %5179 = vmatprep.subr.mxu0 0.0
      %5180 = vmatpush1.msra.mxu0 0.0
      %5181 = vmatprep.subr.mxu0 0.0
      %5182 = vmatpush1.msra.mxu0 0.0
      %5183 = vmatprep.subr.mxu0 0.0
      %5184 = vmatpush1.msra.mxu0 0.0
      %5185 = vmatprep.subr.mxu0 0.0
      %5186 = vmatpush1.msra.mxu0 0.0
      %5187 = vmatprep.subr.mxu0 0.0
      %5188 = vmatpush1.msra.mxu0 0.0
      %5189 = vmatprep.subr.mxu0 0.0
      %5190 = vmatpush1.msra.mxu0 0.0
      %5191 = vmatprep.subr.mxu0 0.0
      %5192 = vmatpush1.msra.mxu0 0.0
      %5193 = vmatprep.subr.mxu0 0.0
      %5194 = vmatpush1.msra.mxu0 0.0
      %5195 = vmatprep.subr.mxu0 0.0
      %5196 = vmatpush1.msra.mxu0 0.0
      %5197 = vmatprep.subr.mxu0 0.0
      %5198 = vmatpush1.msra.mxu0 0.0
      %5199 = vmatprep.subr.mxu0 0.0
      %5200 = vmatpush1.msra.mxu0 0.0
      %5201 = vmatprep.subr.mxu0 0.0
      %5202 = vmatpush1.msra.mxu0 0.0
      %5203 = vmatprep.subr.mxu0 0.0
      %5204 = vmatpush1.msra.mxu0 0.0
      %5205 = vmatprep.subr.mxu0 0.0
      %5206 = vmatpush1.msra.mxu0 0.0
      %5207 = vmatprep.subr.mxu0 0.0
      %5208 = vmatpush1.msra.mxu0 0.0
      %5209 = vmatprep.subr.mxu0 0.0
      %5210 = vmatpush1.msra.mxu0 0.0
      %5211 = vmatprep.subr.mxu0 0.0
      %5212 = vmatpush1.msra.mxu0 0.0
      %5213 = vmatprep.subr.mxu0 0.0
      %5214 = vmatpush1.msra.mxu0 0.0
      %5215 = vmatprep.subr.mxu0 0.0
      %5216 = vmatpush1.msra.mxu0 0.0
      %5217 = vmatprep.subr.mxu0 0.0
      %5218 = vmatpush1.msra.mxu0 0.0
      %5219 = vmatprep.mubr.f32.mxu0 0.0
      %5220 = vmatmul.mubr.f32.gmra.mrb[0].mxu0 %v5153
      %v5221 = vpop.f32.mrb[0].mxu0
      %v5222 = vadd.f32 %v3124, %v5221
      %v5223 = vpop.f32.mrb[0].mxu0
      %5224 = vdwg.mxu0
      %v5226 = vrot.slane %v5222, 2
      %v5228 = vadd.f32 %v4834, %v5226
      %v5229 = vxor.u32 %v5228, 2147483648
      %v5230 = vmul.f32 %v5229, 1.442695
      %v5231 = vpow.pop %v5230
      %v5232 = vadd.f32 %v5231, 1.0
      %v5233 = vrcp.pop %v5232
      %v5234 = vmul.f32 1.0, %v5233
      %5235 = vrot.lane.b32.xlu0 %v5226, 64
      %v5236 = vpop.permute.xlu0 %5235
      %v5238 = vmul.f32 %v5234, %v5236
      %5240 = vrot.lane.b32.xlu0 %v5238, 64
      %v5241 = vpop.permute.xlu0 %5240
      %v5243 = vadd.f32 %v4834, %v5241
      %v5244 = vtanh.pop %v5243
      %v5245 = vsub.f32 1.0, %v5234
      %5247 = vrot.lane.b32.xlu0 %v5244, 96
      %v5248 = vpop.permute.xlu0 %5247
      %v5250 = vmul.f32 %v5245, %v5248
      %v5251 = vrot.slane %v5148, 6
      %v5253 = vmul.f32 %v5234, %v5251
      %v5254 = vadd.f32 %v5250, %v5253
      %v5255 = vsel %vm1249, %v4937, %v5042
      %v5256 = vsel %vm1251, %v5255, %v5148
      %v5257 = vsel %vm1253, %v5256, %v5254
      %5259 = vrot.lane.b32.xlu0 %v5257, 96
      %v5260 = vpop.permute.xlu0 %5259
      %5262 = vst.msk [vmem:[%s2982] sm:$0xff] %vm600, %v5260
      %v5263 = vld [vmem:[#allocation2] sm:$0xff]
      %v5264 = vld [vmem:[#allocation2 + $0x8] sm:$0xff]
      %v5265 = vld [vmem:[#allocation2 + $0x10] sm:$0xff]
      %v5266 = vld [vmem:[#allocation2 + $0x18] sm:$0xff]
      %v5267 = vld [vmem:[#allocation2 + $0x20] sm:$0xff]
      %v5268 = vld [vmem:[%s9] sm:$0x1]
      %v5269 = vld [vmem:[%s10] sm:$0x1]
      %v5270 = vsel %vm600, %v5263, 0.0
      %5271 = vadd.xlane.f32.xlu0 %v5270
      %v5272 = vpop.xlane.xlu0 %5271
      %v5273 = vsel %vm600, %v5264, 0.0
      %5274 = vadd.xlane.f32.xlu0 %v5273
      %v5275 = vpop.xlane.xlu0 %5274
      %v5276 = vsel %vm600, %v5265, 0.0
      %5277 = vadd.xlane.f32.xlu0 %v5276
      %v5278 = vpop.xlane.xlu0 %5277
      %v5279 = vsel %vm600, %v5266, 0.0
      %5280 = vadd.xlane.f32.xlu0 %v5279
      %v5281 = vpop.xlane.xlu0 %5280
      %v5282 = vsel %vm600, %v5267, 0.0
      %5283 = vadd.xlane.f32.xlu0 %v5282
      %v5284 = vpop.xlane.xlu0 %5283
      %v5285 = vmul.f32 %v5272, %v616
      %v5286 = vmul.f32 %v5275, %v616
      %v5287 = vmul.f32 %v5278, %v616
      %v5288 = vmul.f32 %v5281, %v616
      %v5289 = vmul.f32 %v5284, %v616
      %v5290 = vsub.f32 %v5263, %v5285
      %v5291 = vsub.f32 %v5264, %v5286
      %v5292 = vsub.f32 %v5265, %v5287
      %v5293 = vsub.f32 %v5266, %v5288
      %v5294 = vsub.f32 %v5267, %v5289
      %v5295 = vmul.f32 %v5290, %v5290
      %v5296 = vmul.f32 %v5291, %v5291
      %v5297 = vmul.f32 %v5292, %v5292
      %v5298 = vmul.f32 %v5293, %v5293
      %v5299 = vmul.f32 %v5294, %v5294
      %v5300 = vsel %vm600, %v5295, 0.0
      %5301 = vadd.xlane.f32.xlu0 %v5300
      %v5302 = vpop.xlane.xlu0 %5301
      %v5303 = vsel %vm600, %v5296, 0.0
      %5304 = vadd.xlane.f32.xlu0 %v5303
      %v5305 = vpop.xlane.xlu0 %5304
      %v5306 = vsel %vm600, %v5297, 0.0
      %5307 = vadd.xlane.f32.xlu0 %v5306
      %v5308 = vpop.xlane.xlu0 %5307
      %v5309 = vsel %vm600, %v5298, 0.0
      %5310 = vadd.xlane.f32.xlu0 %v5309
      %v5311 = vpop.xlane.xlu0 %5310
      %v5312 = vsel %vm600, %v5299, 0.0
      %5313 = vadd.xlane.f32.xlu0 %v5312
      %v5314 = vpop.xlane.xlu0 %5313
      %v5315 = vmul.f32 %v5302, %v616
      %v5316 = vmul.f32 %v5305, %v616
      %v5317 = vmul.f32 %v5308, %v616
      %v5318 = vmul.f32 %v5311, %v616
      %v5319 = vmul.f32 %v5314, %v616
      %v5320 = vadd.f32 %v5315, 1e-05
      %v5321 = vadd.f32 %v5316, 1e-05
      %v5322 = vadd.f32 %v5317, 1e-05
      %v5323 = vadd.f32 %v5318, 1e-05
      %v5324 = vadd.f32 %v5319, 1e-05
      %v5325 = vrsqrt.pop %v5320
      %v5326 = vrsqrt.pop %v5321
      %v5327 = vrsqrt.pop %v5322
      %v5328 = vrsqrt.pop %v5323
      %v5329 = vrsqrt.pop %v5324
      %v5330 = vmul.f32 %v5290, %v5325
      %v5331 = vmul.f32 %v5291, %v5326
      %v5332 = vmul.f32 %v5292, %v5327
      %v5333 = vmul.f32 %v5293, %v5328
      %v5334 = vmul.f32 %v5294, %v5329
      %v5336 = vlaneseq
      %v5337 = vshrl.u32 %v5336, 7
      %v5338 = vsub.s32 0, %v5337
      %v5339 = vrot.slane %v5268, %v5338
      %v5341 = vmul.f32 %v5330, %v5339
      %v5342 = vmul.f32 %v5331, %v5339
      %v5343 = vmul.f32 %v5332, %v5339
      %v5344 = vmul.f32 %v5333, %v5339
      %v5345 = vmul.f32 %v5334, %v5339
      %v5347 = vlaneseq
      %v5348 = vshrl.u32 %v5347, 7
      %v5349 = vsub.s32 0, %v5348
      %v5350 = vrot.slane %v5269, %v5349
      %v5352 = vadd.f32 %v5341, %v5350
      %v5353 = vadd.f32 %v5342, %v5350
      %v5354 = vadd.f32 %v5343, %v5350
      %v5355 = vadd.f32 %v5344, %v5350
      %v5356 = vadd.f32 %v5345, %v5350
      %v5357 = vld [vmem:[%s11] sm:$0xff]
      %v5358 = vld [vmem:[%s11 + $0x8] sm:$0xff]
      %v5359 = vld [vmem:[%s11 + $0x10] sm:$0xf]
      %vm5360 = vcmask 326656
      %v5362 = vsel %vm5360, %v5357, 0
      %v5365 = vsel %vm5360, %v5358, 0
      %v5368 = vsel %vm5360, %v5359, 0
      %5370 = vmatprep.subr.mxu0 0.0
      %5371 = vmatpush1.msra.mxu0 %v5352
      %5372 = vmatprep.subr.mxu0 0.0
      %5373 = vmatpush1.msra.mxu0 %v5353
      %5374 = vmatprep.subr.mxu0 0.0
      %5375 = vmatpush1.msra.mxu0 %v5354
      %5376 = vmatprep.subr.mxu0 0.0
      %5377 = vmatpush1.msra.mxu0 %v5355
      %5378 = vmatprep.subr.mxu0 0.0
      %5379 = vmatpush1.msra.mxu0 %v5356
      %5380 = vmatprep.subr.mxu0 0.0
      %5381 = vmatpush1.msra.mxu0 0.0
      %5382 = vmatprep.subr.mxu0 0.0
      %5383 = vmatpush1.msra.mxu0 0.0
      %5384 = vmatprep.subr.mxu0 0.0
      %5385 = vmatpush1.msra.mxu0 0.0
      %5386 = vmatprep.subr.mxu0 0.0
      %5387 = vmatpush1.msra.mxu0 0.0
      %5388 = vmatprep.subr.mxu0 0.0
      %5389 = vmatpush1.msra.mxu0 0.0
      %5390 = vmatprep.subr.mxu0 0.0
      %5391 = vmatpush1.msra.mxu0 0.0
      %5392 = vmatprep.subr.mxu0 0.0
      %5393 = vmatpush1.msra.mxu0 0.0
      %5394 = vmatprep.subr.mxu0 0.0
      %5395 = vmatpush1.msra.mxu0 0.0
      %5396 = vmatprep.subr.mxu0 0.0
      %5397 = vmatpush1.msra.mxu0 0.0
      %5398 = vmatprep.subr.mxu0 0.0
      %5399 = vmatpush1.msra.mxu0 0.0
      %5400 = vmatprep.subr.mxu0 0.0
      %5401 = vmatpush1.msra.mxu0 0.0
      %5402 = vmatprep.subr.mxu0 0.0
      %5403 = vmatpush1.msra.mxu0 0.0
      %5404 = vmatprep.subr.mxu0 0.0
      %5405 = vmatpush1.msra.mxu0 0.0
      %5406 = vmatprep.subr.mxu0 0.0
      %5407 = vmatpush1.msra.mxu0 0.0
      %5408 = vmatprep.subr.mxu0 0.0
      %5409 = vmatpush1.msra.mxu0 0.0
      %5410 = vmatprep.subr.mxu0 0.0
      %5411 = vmatpush1.msra.mxu0 0.0
      %5412 = vmatprep.subr.mxu0 0.0
      %5413 = vmatpush1.msra.mxu0 0.0
      %5414 = vmatprep.subr.mxu0 0.0
      %5415 = vmatpush1.msra.mxu0 0.0
      %5416 = vmatprep.subr.mxu0 0.0
      %5417 = vmatpush1.msra.mxu0 0.0
      %5418 = vmatprep.subr.mxu0 0.0
      %5419 = vmatpush1.msra.mxu0 0.0
      %5420 = vmatprep.subr.mxu0 0.0
      %5421 = vmatpush1.msra.mxu0 0.0
      %5422 = vmatprep.subr.mxu0 0.0
      %5423 = vmatpush1.msra.mxu0 0.0
      %5424 = vmatprep.subr.mxu0 0.0
      %5425 = vmatpush1.msra.mxu0 0.0
      %5426 = vmatprep.subr.mxu0 0.0
      %5427 = vmatpush1.msra.mxu0 0.0
      %5428 = vmatprep.subr.mxu0 0.0
      %5429 = vmatpush1.msra.mxu0 0.0
      %5430 = vmatprep.subr.mxu0 0.0
      %5431 = vmatpush1.msra.mxu0 0.0
      %5432 = vmatprep.subr.mxu0 0.0
      %5433 = vmatpush1.msra.mxu0 0.0
      %5434 = vmatprep.mubr.f32.mxu0 0.0
      %5435 = vmatmul.mubr.f32.gmra.mrb[0].mxu0 %v5362
      %v5436 = vpop.f32.mrb[0].mxu0
      %v5437 = vadd.f32 0.0, %v5436
      %v5438 = vpop.f32.mrb[0].mxu0
      %5439 = vmatprep.mubr.f32.mxu0 0.0
      %5440 = vmatmul.mubr.f32.gmra.mrb[0].mxu0 %v5365
      %v5441 = vpop.f32.mrb[0].mxu0
      %v5442 = vadd.f32 0.0, %v5441
      %v5443 = vpop.f32.mrb[0].mxu0
      %5444 = vmatprep.mubr.f32.mxu0 0.0
      %5445 = vmatmul.mubr.f32.gmra.mrb[0].mxu0 %v5368
      %v5446 = vpop.f32.mrb[0].mxu0
      %v5447 = vadd.f32 0.0, %v5446
      %v5448 = vpop.f32.mrb[0].mxu0
      %5449 = vdwg.mxu0
      %v5450 = vld [vmem:[%s12] sm:$0xff]
      %v5451 = vld [vmem:[%s12 + $0x8] sm:$0xff]
      %v5452 = vld [vmem:[%s12 + $0x10] sm:$0xff]
      %v5453 = vld [vmem:[%s12 + $0x18] sm:$0xff]
      %v5454 = vld [vmem:[%s13] sm:$0x1]
      %v5456 = vlaneseq
      %v5457 = vshrl.u32 %v5456, 7
      %v5458 = vsub.s32 0, %v5457
      %v5459 = vrot.slane %v5454, %v5458
      %v5462 = vsel %vm600, %v5437, 0
      %v5465 = vsel %vm600, %v5442, 0
      %v5468 = vsel %vm600, %v5447, 0
      %5470 = vmatprep.subr.mxu0 0.0
      %5471 = vmatpush1.msra.mxu0 %v5450
      %5472 = vmatprep.subr.mxu0 0.0
      %5473 = vmatpush1.msra.mxu0 %v5451
      %5474 = vmatprep.subr.mxu0 0.0
      %5475 = vmatpush1.msra.mxu0 %v5452
      %5476 = vmatprep.subr.mxu0 0.0
      %5477 = vmatpush1.msra.mxu0 %v5453
      %5478 = vmatprep.subr.mxu0 0.0
      %5479 = vmatpush1.msra.mxu0 0.0
      %5480 = vmatprep.subr.mxu0 0.0
      %5481 = vmatpush1.msra.mxu0 0.0
      %5482 = vmatprep.subr.mxu0 0.0
      %5483 = vmatpush1.msra.mxu0 0.0
      %5484 = vmatprep.subr.mxu0 0.0
      %5485 = vmatpush1.msra.mxu0 0.0
      %5486 = vmatprep.subr.mxu0 0.0
      %5487 = vmatpush1.msra.mxu0 0.0
      %5488 = vmatprep.subr.mxu0 0.0
      %5489 = vmatpush1.msra.mxu0 0.0
      %5490 = vmatprep.subr.mxu0 0.0
      %5491 = vmatpush1.msra.mxu0 0.0
      %5492 = vmatprep.subr.mxu0 0.0
      %5493 = vmatpush1.msra.mxu0 0.0
      %5494 = vmatprep.subr.mxu0 0.0
      %5495 = vmatpush1.msra.mxu0 0.0
      %5496 = vmatprep.subr.mxu0 0.0
      %5497 = vmatpush1.msra.mxu0 0.0
      %5498 = vmatprep.subr.mxu0 0.0
      %5499 = vmatpush1.msra.mxu0 0.0
      %5500 = vmatprep.subr.mxu0 0.0
      %5501 = vmatpush1.msra.mxu0 0.0
      %5502 = vmatprep.subr.mxu0 0.0
      %5503 = vmatpush1.msra.mxu0 0.0
      %5504 = vmatprep.subr.mxu0 0.0
      %5505 = vmatpush1.msra.mxu0 0.0
      %5506 = vmatprep.subr.mxu0 0.0
      %5507 = vmatpush1.msra.mxu0 0.0
      %5508 = vmatprep.subr.mxu0 0.0
      %5509 = vmatpush1.msra.mxu0 0.0
      %5510 = vmatprep.subr.mxu0 0.0
      %5511 = vmatpush1.msra.mxu0 0.0
      %5512 = vmatprep.subr.mxu0 0.0
      %5513 = vmatpush1.msra.mxu0 0.0
      %5514 = vmatprep.subr.mxu0 0.0
      %5515 = vmatpush1.msra.mxu0 0.0
      %5516 = vmatprep.subr.mxu0 0.0
      %5517 = vmatpush1.msra.mxu0 0.0
      %5518 = vmatprep.subr.mxu0 0.0
      %5519 = vmatpush1.msra.mxu0 0.0
      %5520 = vmatprep.subr.mxu0 0.0
      %5521 = vmatpush1.msra.mxu0 0.0
      %5522 = vmatprep.subr.mxu0 0.0
      %5523 = vmatpush1.msra.mxu0 0.0
      %5524 = vmatprep.subr.mxu0 0.0
      %5525 = vmatpush1.msra.mxu0 0.0
      %5526 = vmatprep.subr.mxu0 0.0
      %5527 = vmatpush1.msra.mxu0 0.0
      %5528 = vmatprep.subr.mxu0 0.0
      %5529 = vmatpush1.msra.mxu0 0.0
      %5530 = vmatprep.subr.mxu0 0.0
      %5531 = vmatpush1.msra.mxu0 0.0
      %5532 = vmatprep.subr.mxu0 0.0
      %5533 = vmatpush1.msra.mxu0 0.0
      %5534 = vmatprep.mubr.f32.mxu0 0.0
      %5535 = vmatmul.mubr.f32.gmra.mrb[0].mxu0 %v5462
      %v5536 = vpop.f32.mrb[0].mxu0
      %v5537 = vadd.f32 %v5459, %v5536
      %v5538 = vpop.f32.mrb[0].mxu0
      %5539 = vmatprep.mubr.f32.mxu0 0.0
      %5540 = vmatmul.mubr.f32.gmra.mrb[0].mxu0 %v5465
      %v5541 = vpop.f32.mrb[0].mxu0
      %v5542 = vadd.f32 %v5459, %v5541
      %v5543 = vpop.f32.mrb[0].mxu0
      %5544 = vmatprep.mubr.f32.mxu0 0.0
      %5545 = vmatmul.mubr.f32.gmra.mrb[0].mxu0 %v5468
      %v5546 = vpop.f32.mrb[0].mxu0
      %v5547 = vadd.f32 %v5459, %v5546
      %v5548 = vpop.f32.mrb[0].mxu0
      %5549 = vdwg.mxu0
      %5550 = vst [vmem:[%s467] sm:$0xff] %v5537
      %5551 = vst [vmem:[%s467 + $0x8] sm:$0xff] %v5542
      %5552 = vst [vmem:[%s467 + $0x10] sm:$0xf] %v5547
      %p5553 = scmp.lt.s32.totalorder %s25, 1
      %s5554 = scalar_select %p5553, %s25, 1
      %s5555 = smul.addr %s5554, 3
      %s5556 = smul.addr %s5555, 8
      %s5557 = scalar_lea.vmem %s14, %s5556
      // Predicated region
      $region77: #{fatigue_forward.1} parent=75 // pred_check
        %p5558 = pneg %p342
      $region78: #{fatigue_forward.1} parent=75 // pred_check_branch
        %5560 = sbr.rel (%p5558) target = $region80
      $region79: #{fatigue_forward.1} parent=75 // pred_region
        _
      $region80: #{fatigue_forward.1} parent=75 // pred_fallthru
        _
    $region76: #{fatigue_forward.1} parent=5 // pred_fallthru
      _
    %p5561 = scmp.le.s32.totalorder 2, %s20
    // Predicated region
    $region81: #{fatigue_forward.1} parent=5 // pred_check
      %p5562 = pneg %p5561
    $region82: #{fatigue_forward.1} parent=5 // pred_check_branch
      %5564 = sbr.rel (%p5562) target = $region84
    $region83: #{fatigue_forward.1} parent=5 // pred_region
      %s5565 = ssub.s32 %s20, 2
      // Predicated region
      $region85: #{fatigue_forward.1} parent=83 // pred_check
        %p5566 = pneg %p348
      $region86: #{fatigue_forward.1} parent=83 // pred_check_branch
        %5568 = sbr.rel (%p5566) target = $region88
      $region87: #{fatigue_forward.1} parent=83 // pred_region
        %p5569 = scmp.lt.s32.totalorder %s26, 1
        %s5570 = scalar_select %p5569, %s26, 1
        %s5571 = smul.addr %s5570, 3
        %s5572 = smul.addr %s5571, 8
        %s5573 = scalar_lea.vmem %s14, %s5572
      $region88: #{fatigue_forward.1} parent=83 // pred_fallthru
        _
    $region84: #{fatigue_forward.1} parent=5 // pred_fallthru
      _
  $region6: #{fatigue_forward.1} parent=0 // loop_footer
    %s24 = sadd.s32 1, %s20
  $region7: #{fatigue_forward.1} parent=0 // loop_footer_branch
    %19 = sbr.rel target = $region3
  $region8: #{fatigue_forward.1} parent=0 // loop_exit
    _

</llo_original>
